<compile_context>
chip_gen: v6e
topology: v6e:2x2x1
jax: 0.10.0
libtpu: 0.0.40
codegen_flags: <defaults>
</compile_context>

<pallas_src>
import functools
import math

import jax
import jax.numpy as jnp
from jax import lax
from jax.experimental import pallas as pl
from jax.experimental.pallas import tpu as pltpu


# ----------------------------------------------------------------------------
# helpers
# ----------------------------------------------------------------------------
def _full_spec(shape):
    # whole-array block (no grid) -> no (8,128) divisibility constraint
    return pl.BlockSpec(shape, lambda: (0,) * len(shape))


# ----------------------------------------------------------------------------
# fused forward kernel
# ----------------------------------------------------------------------------
def _forward_kernel(x_ref,
                    g1, be1, g2, be2, g3, be3,
                    wxf1a, wxb1a, u1a, c1a,
                    wxf1b, wxb1b, u1b, c1b,
                    wxf2a, wxb2a, u2a, c2a,
                    wxf2b, wxb2b, u2b, c2b,
                    wxf3a, wxb3a, u3a, c3a,
                    lw, lb,
                    o_ref,
                    fw_buf, bw_buf,
                    *, hidden, seq_len, batch):
    H, T, B = hidden, seq_len, batch

    def layernorm(v, gamma, beta):
        mean = jnp.mean(v, axis=-1, keepdims=True)
        var = jnp.mean(jnp.square(v - mean), axis=-1, keepdims=True)
        return (v - mean) * lax.rsqrt(var + 1e-5) * gamma[...] + beta[...]

    def bilstm(x2, wxf_ref, wxb_ref, whh_ref, bias_ref):
        # x2: (T*B, Din), time-major flattened (row = t*B + b). Returns (T*B, 2H).
        wxf = wxf_ref[...]          # (Din, 8H)  fw gate columns (bw cols zero)
        wxb = wxb_ref[...]          # (Din, 8H)  bw gate columns (fw cols zero)
        whh = whh_ref[...]          # (2H, 8H)   block-diagonal recurrent weights
        bias = bias_ref[...]        # (1, 8H)

        # Hoisted input projections: ONE MXU pass per direction covering every
        # timestep, completely off the sequential critical path.
        zf = jnp.dot(x2, wxf, preferred_element_type=jnp.float32) + bias
        zb = jnp.dot(x2, wxb, preferred_element_type=jnp.float32)

        h = jnp.zeros((B, 2 * H), jnp.float32)   # [h_fw | h_bw]
        c = jnp.zeros((B, 2 * H), jnp.float32)   # [c_fw | c_bw]
        for s in range(T):                        # fully unrolled (T static)
            lo_f, hi_f = s * B, (s + 1) * B                 # fw reads time s
            lo_b, hi_b = (T - 1 - s) * B, (T - s) * B       # bw reads time T-1-s
            z = (zf[lo_f:hi_f] + zb[lo_b:hi_b]
                 + jnp.dot(h, whh, preferred_element_type=jnp.float32))
            sig = jax.nn.sigmoid(z[:, :6 * H])    # [i_fw i_bw f_fw f_bw o_fw o_bw]
            g = jnp.tanh(z[:, 6 * H:])            # [g_fw g_bw]
            c = sig[:, 2 * H:4 * H] * c + sig[:, :2 * H] * g
            h = sig[:, 4 * H:] * jnp.tanh(c)
            fw_buf[lo_f:hi_f, :] = h[:, :H]       # fw output at timestep s
            bw_buf[lo_b:hi_b, :] = h[:, H:]       # bw output at timestep T-1-s
        return jnp.concatenate([fw_buf[...], bw_buf[...]], axis=-1)

    # ---- block 1 ----
    x = layernorm(x_ref[...], g1, be1)
    skip1 = x
    hs = bilstm(x, wxf1a, wxb1a, u1a, c1a)
    hs = bilstm(hs, wxf1b, wxb1b, u1b, c1b)
    # TODO(synk): inter-layer dropout (p=0.1) only applies in training; eval semantics used.
    x = jnp.concatenate([jnp.maximum(hs, 0.0), skip1], axis=-1)

    # ---- block 2 ----
    x = layernorm(x, g2, be2)
    skip2 = x
    hs = bilstm(x, wxf2a, wxb2a, u2a, c2a)
    hs = bilstm(hs, wxf2b, wxb2b, u2b, c2b)
    x = jnp.concatenate([jnp.maximum(hs, 0.0), skip2], axis=-1)

    # ---- block 3 ----
    x = layernorm(x, g3, be3)
    skip3 = x
    hs = bilstm(x, wxf3a, wxb3a, u3a, c3a)
    x = jnp.concatenate([jnp.maximum(hs, 0.0), skip3], axis=-1)    # (T*B, 6H+D)

    # final Linear as VPU multiply + lane reduction (avoids a (N,1) MXU pass)
    o_ref[...] = jnp.sum(x * lw[...], axis=-1, keepdims=True) + lb[...]   # (T*B, 1)


# ----------------------------------------------------------------------------
# weight packing (PyTorch layout -> fused fw/bw gate-permuted layout)
# ----------------------------------------------------------------------------
_GATE_ORDER = (0, 1, 3, 2)   # PyTorch rows [i, f, g, o] -> packed order [i, f, o, g]


def _pack_bilstm(wih_fw, whh_fw, b_fw, wih_bw, whh_bw, b_bw, hidden, d_in):
    H = hidden

    def blocks(w):           # (4H, X) -> per-gate (X, H), packed gate order
        return [w[g * H:(g + 1) * H, :].T for g in _GATE_ORDER]

    def bias_blocks(b):
        return [b[g * H:(g + 1) * H] for g in _GATE_ORDER]

    zi = jnp.zeros((d_in, H), jnp.float32)
    zh = jnp.zeros((H, H), jnp.float32)
    fi, bi = blocks(wih_fw), blocks(wih_bw)
    fh, bh = blocks(whh_fw), blocks(whh_bw)

    # column layout: [i_fw i_bw f_fw f_bw o_fw o_bw g_fw g_bw]
    wxf = jnp.concatenate([m for k in range(4) for m in (fi[k], zi)], axis=1)   # (d_in, 8H)
    wxb = jnp.concatenate([m for k in range(4) for m in (zi, bi[k])], axis=1)   # (d_in, 8H)
    whh_c = jnp.concatenate([
        jnp.concatenate([m for k in range(4) for m in (fh[k], zh)], axis=1),
        jnp.concatenate([m for k in range(4) for m in (zh, bh[k])], axis=1),
    ], axis=0)                                                                  # (2H, 8H)
    bf, bb = bias_blocks(b_fw), bias_blocks(b_bw)
    bias_c = jnp.concatenate([v for k in range(4) for v in (bf[k], bb[k])]).reshape(1, -1)
    return wxf, wxb, whh_c, bias_c


# ----------------------------------------------------------------------------
# parameter initialization (deterministic, PyTorch-style uniform(-k, k))
# ----------------------------------------------------------------------------
def _uniform(key, shape, k):
    return jax.random.uniform(key, shape, jnp.float32, -k, k)


def _make_bilstm_packed(key, d_in, hidden):
    H = hidden
    k = 1.0 / math.sqrt(H)
    ks = jax.random.split(key, 8)
    wih_fw = _uniform(ks[0], (4 * H, d_in), k)
    whh_fw = _uniform(ks[1], (4 * H, H), k)
    b_fw = _uniform(ks[2], (4 * H,), k) + _uniform(ks[3], (4 * H,), k)   # bih + bhh
    wih_bw = _uniform(ks[4], (4 * H, d_in), k)
    whh_bw = _uniform(ks[5], (4 * H, H), k)
    b_bw = _uniform(ks[6], (4 * H,), k) + _uniform(ks[7], (4 * H,), k)
    return _pack_bilstm(wih_fw, whh_fw, b_fw, wih_bw, whh_bw, b_bw, H, d_in)


def init_params(key, num_inputs, hidden):
    H, D = hidden, num_inputs
    d2, d3, d4 = 2 * H + D, 4 * H + D, 6 * H + D
    keys = jax.random.split(key, 4)
    lstm_in_dims = (D, 2 * H, d2, 2 * H, d3)   # lstm1 (2 layers), lstm2 (2), lstm3 (1)
    lstm = [_make_bilstm_packed(jax.random.fold_in(keys[0], i), din, H)
            for i, din in enumerate(lstm_in_dims)]
    k_lin = 1.0 / math.sqrt(d4)

    def ln(f):
        return (jnp.ones((1, f), jnp.float32), jnp.zeros((1, f), jnp.float32))

    return {
        "ln1": ln(D), "ln2": ln(d2), "ln3": ln(d3),
        "lstm": lstm,
        "linear_w": _uniform(keys[1], (1, d4), k_lin),
        "linear_b": _uniform(keys[2], (1, 1), k_lin),
    }


# ----------------------------------------------------------------------------
# forward pass (mirrors RegressionModel.forward) — single fused pallas_call
# ----------------------------------------------------------------------------
def regression_forward(params, x):
    B, T, D = x.shape
    H = params["lstm"][0][2].shape[0] // 2      # whh_c is (2H, 8H)
    # single host-side layout change: batch-first -> flat time-major (T*B, D)
    x_flat = jnp.transpose(x, (1, 0, 2)).reshape(T * B, D).astype(jnp.float32)

    args = [x_flat, *params["ln1"], *params["ln2"], *params["ln3"]]
    for layer in params["lstm"]:
        args.extend(layer)
    args.extend([params["linear_w"], params["linear_b"]])

    out_flat = pl.pallas_call(
        functools.partial(_forward_kernel, hidden=H, seq_len=T, batch=B),
        out_shape=jax.ShapeDtypeStruct((T * B, 1), jnp.float32),
        in_specs=[_full_spec(a.shape) for a in args],
        out_specs=_full_spec((T * B, 1)),
        scratch_shapes=[pltpu.VMEM((T * B, H), jnp.float32),   # fw outputs buffer
                        pltpu.VMEM((T * B, H), jnp.float32)],  # bw outputs buffer
    )(*args)

    # (T*B, 1) -> (B, T, 1), batch-first like PyTorch
    return jnp.transpose(out_flat.reshape(T, B, 1), (1, 0, 2))


# ----------------------------------------------------------------------------
if __name__ == "__main__":
    B, T = 2, 8
    NUM_INPUTS = 10
    HIDDEN = 32

    key = jax.random.PRNGKey(0)
    params = init_params(key, NUM_INPUTS, HIDDEN)
    x = jax.random.normal(jax.random.fold_in(key, 12345), (B, T, NUM_INPUTS), jnp.float32)

    fwd = jax.jit(regression_forward)
    out = jax.block_until_ready(fwd(params, x))

    assert out.shape == (B, T, 1), out.shape
    assert jnp.all(jnp.isfinite(out))
    print("KERNEL_OK")
</pallas_src>

<mosaic_0001>
module attributes {stable_mosaic.version = 11 : i64} {
  func.func @_forward_kernel(%arg0: memref<16x10xf32, #tpu.memory_space<vmem>>, %arg1: memref<1x10xf32, #tpu.memory_space<vmem>>, %arg2: memref<1x10xf32, #tpu.memory_space<vmem>>, %arg3: memref<1x74xf32, #tpu.memory_space<vmem>>, %arg4: memref<1x74xf32, #tpu.memory_space<vmem>>, %arg5: memref<1x138xf32, #tpu.memory_space<vmem>>, %arg6: memref<1x138xf32, #tpu.memory_space<vmem>>, %arg7: memref<10x256xf32, #tpu.memory_space<vmem>>, %arg8: memref<10x256xf32, #tpu.memory_space<vmem>>, %arg9: memref<64x256xf32, #tpu.memory_space<vmem>>, %arg10: memref<1x256xf32, #tpu.memory_space<vmem>>, %arg11: memref<64x256xf32, #tpu.memory_space<vmem>>, %arg12: memref<64x256xf32, #tpu.memory_space<vmem>>, %arg13: memref<64x256xf32, #tpu.memory_space<vmem>>, %arg14: memref<1x256xf32, #tpu.memory_space<vmem>>, %arg15: memref<74x256xf32, #tpu.memory_space<vmem>>, %arg16: memref<74x256xf32, #tpu.memory_space<vmem>>, %arg17: memref<64x256xf32, #tpu.memory_space<vmem>>, %arg18: memref<1x256xf32, #tpu.memory_space<vmem>>, %arg19: memref<64x256xf32, #tpu.memory_space<vmem>>, %arg20: memref<64x256xf32, #tpu.memory_space<vmem>>, %arg21: memref<64x256xf32, #tpu.memory_space<vmem>>, %arg22: memref<1x256xf32, #tpu.memory_space<vmem>>, %arg23: memref<138x256xf32, #tpu.memory_space<vmem>>, %arg24: memref<138x256xf32, #tpu.memory_space<vmem>>, %arg25: memref<64x256xf32, #tpu.memory_space<vmem>>, %arg26: memref<1x256xf32, #tpu.memory_space<vmem>>, %arg27: memref<1x202xf32, #tpu.memory_space<vmem>>, %arg28: memref<1x1xf32, #tpu.memory_space<vmem>>, %arg29: memref<16x1xf32, #tpu.memory_space<vmem>>, %arg30: memref<16x32xf32, #tpu.memory_space<vmem>>, %arg31: memref<16x32xf32, #tpu.memory_space<vmem>>) attributes {dimension_semantics = [], scalar_prefetch = 0 : i64, scratch_operands = 2 : i64, tpu.core_type = #tpu.core_type<tc>} {
    %c0 = arith.constant 0 : index
    %c0_0 = arith.constant 0 : index
    %0 = vector.load %arg0[%c0, %c0_0] : memref<16x10xf32, #tpu.memory_space<vmem>>, vector<16x10xf32>
    %cst = arith.constant dense<0.000000e+00> : vector<16xf32>
    %1 = vector.multi_reduction <add>, %0, %cst [1] : vector<16x10xf32> to vector<16xf32>
    %2 = vector.shape_cast %1 : vector<16xf32> to vector<16x1xf32>
    %cst_1 = arith.constant 1.000000e+01 : f32
    %3 = vector.broadcast %cst_1 : f32 to vector<16x1xf32>
    %4 = arith.divf %2, %3 : vector<16x1xf32>
    %5 = vector.broadcast %4 : vector<16x1xf32> to vector<16x10xf32>
    %6 = arith.subf %0, %5 : vector<16x10xf32>
    %7 = arith.mulf %6, %6 : vector<16x10xf32>
    %cst_2 = arith.constant dense<0.000000e+00> : vector<16xf32>
    %8 = vector.multi_reduction <add>, %7, %cst_2 [1] : vector<16x10xf32> to vector<16xf32>
    %9 = vector.shape_cast %8 : vector<16xf32> to vector<16x1xf32>
    %cst_3 = arith.constant 1.000000e+01 : f32
    %10 = vector.broadcast %cst_3 : f32 to vector<16x1xf32>
    %11 = arith.divf %9, %10 : vector<16x1xf32>
    %12 = vector.broadcast %4 : vector<16x1xf32> to vector<16x10xf32>
    %13 = arith.subf %0, %12 : vector<16x10xf32>
    %cst_4 = arith.constant 9.99999974E-6 : f32
    %14 = vector.broadcast %cst_4 : f32 to vector<16x1xf32>
    %15 = arith.addf %11, %14 : vector<16x1xf32>
    %16 = math.rsqrt %15 : vector<16x1xf32>
    %17 = vector.broadcast %16 : vector<16x1xf32> to vector<16x10xf32>
    %18 = arith.mulf %13, %17 : vector<16x10xf32>
    %c0_5 = arith.constant 0 : index
    %c0_6 = arith.constant 0 : index
    %19 = vector.load %arg1[%c0_5, %c0_6] : memref<1x10xf32, #tpu.memory_space<vmem>>, vector<1x10xf32>
    %20 = vector.broadcast %19 : vector<1x10xf32> to vector<16x10xf32>
    %21 = arith.mulf %18, %20 : vector<16x10xf32>
    %c0_7 = arith.constant 0 : index
    %c0_8 = arith.constant 0 : index
    %22 = vector.load %arg2[%c0_7, %c0_8] : memref<1x10xf32, #tpu.memory_space<vmem>>, vector<1x10xf32>
    %23 = vector.broadcast %22 : vector<1x10xf32> to vector<16x10xf32>
    %24 = arith.addf %21, %23 : vector<16x10xf32>
    %c0_9 = arith.constant 0 : index
    %c0_10 = arith.constant 0 : index
    %25 = vector.load %arg7[%c0_9, %c0_10] : memref<10x256xf32, #tpu.memory_space<vmem>>, vector<10x256xf32>
    %c0_11 = arith.constant 0 : index
    %c0_12 = arith.constant 0 : index
    %26 = vector.load %arg8[%c0_11, %c0_12] : memref<10x256xf32, #tpu.memory_space<vmem>>, vector<10x256xf32>
    %c0_13 = arith.constant 0 : index
    %c0_14 = arith.constant 0 : index
    %27 = vector.load %arg9[%c0_13, %c0_14] : memref<64x256xf32, #tpu.memory_space<vmem>>, vector<64x256xf32>
    %c0_15 = arith.constant 0 : index
    %c0_16 = arith.constant 0 : index
    %28 = vector.load %arg10[%c0_15, %c0_16] : memref<1x256xf32, #tpu.memory_space<vmem>>, vector<1x256xf32>
    %cst_17 = arith.constant dense<0.000000e+00> : vector<16x256xf32>
    %29 = tpu.matmul %24, %25, %cst_17 {dimension_numbers = #tpu.dot_dimension_numbers<[1], [0], [0], [1], [0, 0, 1, 1], [], []>} : vector<16x10xf32>, vector<10x256xf32>, vector<16x256xf32> -> vector<16x256xf32>
    %30 = vector.broadcast %28 : vector<1x256xf32> to vector<16x256xf32>
    %31 = arith.addf %29, %30 : vector<16x256xf32>
    %cst_18 = arith.constant dense<0.000000e+00> : vector<16x256xf32>
    %32 = tpu.matmul %24, %26, %cst_18 {dimension_numbers = #tpu.dot_dimension_numbers<[1], [0], [0], [1], [0, 0, 1, 1], [], []>} : vector<16x10xf32>, vector<10x256xf32>, vector<16x256xf32> -> vector<16x256xf32>
    %cst_19 = arith.constant 0.000000e+00 : f32
    %33 = vector.broadcast %cst_19 : f32 to vector<2x64xf32>
    %cst_20 = arith.constant 0.000000e+00 : f32
    %34 = vector.broadcast %cst_20 : f32 to vector<2x64xf32>
    %35 = vector.extract_strided_slice %31 {offsets = [0, 0], sizes = [2, 256], strides = [1, 1]} : vector<16x256xf32> to vector<2x256xf32>
    %36 = vector.extract_strided_slice %32 {offsets = [14, 0], sizes = [2, 256], strides = [1, 1]} : vector<16x256xf32> to vector<2x256xf32>
    %37 = arith.addf %35, %36 : vector<2x256xf32>
    %cst_21 = arith.constant dense<0.000000e+00> : vector<2x256xf32>
    %38 = tpu.matmul %33, %27, %cst_21 {dimension_numbers = #tpu.dot_dimension_numbers<[1], [0], [0], [1], [0, 0, 1, 1], [], []>} : vector<2x64xf32>, vector<64x256xf32>, vector<2x256xf32> -> vector<2x256xf32>
    %39 = arith.addf %37, %38 : vector<2x256xf32>
    %40 = vector.extract_strided_slice %39 {offsets = [0, 0], sizes = [2, 192], strides = [1, 1]} : vector<2x256xf32> to vector<2x192xf32>
    %41 = arith.negf %40 : vector<2x192xf32>
    %42 = math.exp %41 : vector<2x192xf32>
    %cst_22 = arith.constant 1.000000e+00 : f32
    %43 = vector.broadcast %cst_22 : f32 to vector<2x192xf32>
    %44 = arith.addf %43, %42 : vector<2x192xf32>
    %45 = arith.divf %43, %44 : vector<2x192xf32>
    %46 = vector.extract_strided_slice %39 {offsets = [0, 192], sizes = [2, 64], strides = [1, 1]} : vector<2x256xf32> to vector<2x64xf32>
    %47 = math.tanh %46 : vector<2x64xf32>
    %48 = vector.extract_strided_slice %45 {offsets = [0, 64], sizes = [2, 64], strides = [1, 1]} : vector<2x192xf32> to vector<2x64xf32>
    %49 = arith.mulf %48, %34 : vector<2x64xf32>
    %50 = vector.extract_strided_slice %45 {offsets = [0, 0], sizes = [2, 64], strides = [1, 1]} : vector<2x192xf32> to vector<2x64xf32>
    %51 = arith.mulf %50, %47 : vector<2x64xf32>
    %52 = arith.addf %49, %51 : vector<2x64xf32>
    %53 = vector.extract_strided_slice %45 {offsets = [0, 128], sizes = [2, 64], strides = [1, 1]} : vector<2x192xf32> to vector<2x64xf32>
    %54 = math.tanh %52 : vector<2x64xf32>
    %55 = arith.mulf %53, %54 : vector<2x64xf32>
    %56 = vector.extract_strided_slice %55 {offsets = [0, 0], sizes = [2, 32], strides = [1, 1]} : vector<2x64xf32> to vector<2x32xf32>
    %c0_23 = arith.constant 0 : index
    %c0_24 = arith.constant 0 : index
    %57 = vector.load %arg30[%c0_23, %c0_24] : memref<16x32xf32, #tpu.memory_space<vmem>>, vector<2x32xf32>
    tpu.vector_store %arg30[%c0_23, %c0_24], %56 {strides = array<i32>} : memref<16x32xf32, #tpu.memory_space<vmem>>, vector<2x32xf32>,
    %58 = vector.extract_strided_slice %55 {offsets = [0, 32], sizes = [2, 32], strides = [1, 1]} : vector<2x64xf32> to vector<2x32xf32>
    %c14 = arith.constant 14 : index
    %c0_25 = arith.constant 0 : index
    %59 = vector.load %arg31[%c14, %c0_25] : memref<16x32xf32, #tpu.memory_space<vmem>>, vector<2x32xf32>
    tpu.vector_store %arg31[%c14, %c0_25], %58 {strides = array<i32>} : memref<16x32xf32, #tpu.memory_space<vmem>>, vector<2x32xf32>,
    %60 = vector.extract_strided_slice %31 {offsets = [2, 0], sizes = [2, 256], strides = [1, 1]} : vector<16x256xf32> to vector<2x256xf32>
    %61 = vector.extract_strided_slice %32 {offsets = [12, 0], sizes = [2, 256], strides = [1, 1]} : vector<16x256xf32> to vector<2x256xf32>
    %62 = arith.addf %60, %61 : vector<2x256xf32>
    %cst_26 = arith.constant dense<0.000000e+00> : vector<2x256xf32>
    %63 = tpu.matmul %55, %27, %cst_26 {dimension_numbers = #tpu.dot_dimension_numbers<[1], [0], [0], [1], [0, 0, 1, 1], [], []>} : vector<2x64xf32>, vector<64x256xf32>, vector<2x256xf32> -> vector<2x256xf32>
    %64 = arith.addf %62, %63 : vector<2x256xf32>
    %65 = vector.extract_strided_slice %64 {offsets = [0, 0], sizes = [2, 192], strides = [1, 1]} : vector<2x256xf32> to vector<2x192xf32>
    %66 = arith.negf %65 : vector<2x192xf32>
    %67 = math.exp %66 : vector<2x192xf32>
    %cst_27 = arith.constant 1.000000e+00 : f32
    %68 = vector.broadcast %cst_27 : f32 to vector<2x192xf32>
    %69 = arith.addf %68, %67 : vector<2x192xf32>
    %70 = arith.divf %68, %69 : vector<2x192xf32>
    %71 = vector.extract_strided_slice %64 {offsets = [0, 192], sizes = [2, 64], strides = [1, 1]} : vector<2x256xf32> to vector<2x64xf32>
    %72 = math.tanh %71 : vector<2x64xf32>
    %73 = vector.extract_strided_slice %70 {offsets = [0, 64], sizes = [2, 64], strides = [1, 1]} : vector<2x192xf32> to vector<2x64xf32>
    %74 = arith.mulf %73, %52 : vector<2x64xf32>
    %75 = vector.extract_strided_slice %70 {offsets = [0, 0], sizes = [2, 64], strides = [1, 1]} : vector<2x192xf32> to vector<2x64xf32>
    %76 = arith.mulf %75, %72 : vector<2x64xf32>
    %77 = arith.addf %74, %76 : vector<2x64xf32>
    %78 = vector.extract_strided_slice %70 {offsets = [0, 128], sizes = [2, 64], strides = [1, 1]} : vector<2x192xf32> to vector<2x64xf32>
    %79 = math.tanh %77 : vector<2x64xf32>
    %80 = arith.mulf %78, %79 : vector<2x64xf32>
    %81 = vector.extract_strided_slice %80 {offsets = [0, 0], sizes = [2, 32], strides = [1, 1]} : vector<2x64xf32> to vector<2x32xf32>
    %c2 = arith.constant 2 : index
    %c0_28 = arith.constant 0 : index
    %82 = vector.load %arg30[%c2, %c0_28] : memref<16x32xf32, #tpu.memory_space<vmem>>, vector<2x32xf32>
    tpu.vector_store %arg30[%c2, %c0_28], %81 {strides = array<i32>} : memref<16x32xf32, #tpu.memory_space<vmem>>, vector<2x32xf32>,
    %83 = vector.extract_strided_slice %80 {offsets = [0, 32], sizes = [2, 32], strides = [1, 1]} : vector<2x64xf32> to vector<2x32xf32>
    %c12 = arith.constant 12 : index
    %c0_29 = arith.constant 0 : index
    %84 = vector.load %arg31[%c12, %c0_29] : memref<16x32xf32, #tpu.memory_space<vmem>>, vector<2x32xf32>
    tpu.vector_store %arg31[%c12, %c0_29], %83 {strides = array<i32>} : memref<16x32xf32, #tpu.memory_space<vmem>>, vector<2x32xf32>,
    %85 = vector.extract_strided_slice %31 {offsets = [4, 0], sizes = [2, 256], strides = [1, 1]} : vector<16x256xf32> to vector<2x256xf32>
    %86 = vector.extract_strided_slice %32 {offsets = [10, 0], sizes = [2, 256], strides = [1, 1]} : vector<16x256xf32> to vector<2x256xf32>
    %87 = arith.addf %85, %86 : vector<2x256xf32>
    %cst_30 = arith.constant dense<0.000000e+00> : vector<2x256xf32>
    %88 = tpu.matmul %80, %27, %cst_30 {dimension_numbers = #tpu.dot_dimension_numbers<[1], [0], [0], [1], [0, 0, 1, 1], [], []>} : vector<2x64xf32>, vector<64x256xf32>, vector<2x256xf32> -> vector<2x256xf32>
    %89 = arith.addf %87, %88 : vector<2x256xf32>
    %90 = vector.extract_strided_slice %89 {offsets = [0, 0], sizes = [2, 192], strides = [1, 1]} : vector<2x256xf32> to vector<2x192xf32>
    %91 = arith.negf %90 : vector<2x192xf32>
    %92 = math.exp %91 : vector<2x192xf32>
    %cst_31 = arith.constant 1.000000e+00 : f32
    %93 = vector.broadcast %cst_31 : f32 to vector<2x192xf32>
    %94 = arith.addf %93, %92 : vector<2x192xf32>
    %95 = arith.divf %93, %94 : vector<2x192xf32>
    %96 = vector.extract_strided_slice %89 {offsets = [0, 192], sizes = [2, 64], strides = [1, 1]} : vector<2x256xf32> to vector<2x64xf32>
    %97 = math.tanh %96 : vector<2x64xf32>
    %98 = vector.extract_strided_slice %95 {offsets = [0, 64], sizes = [2, 64], strides = [1, 1]} : vector<2x192xf32> to vector<2x64xf32>
    %99 = arith.mulf %98, %77 : vector<2x64xf32>
    %100 = vector.extract_strided_slice %95 {offsets = [0, 0], sizes = [2, 64], strides = [1, 1]} : vector<2x192xf32> to vector<2x64xf32>
    %101 = arith.mulf %100, %97 : vector<2x64xf32>
    %102 = arith.addf %99, %101 : vector<2x64xf32>
    %103 = vector.extract_strided_slice %95 {offsets = [0, 128], sizes = [2, 64], strides = [1, 1]} : vector<2x192xf32> to vector<2x64xf32>
    %104 = math.tanh %102 : vector<2x64xf32>
    %105 = arith.mulf %103, %104 : vector<2x64xf32>
    %106 = vector.extract_strided_slice %105 {offsets = [0, 0], sizes = [2, 32], strides = [1, 1]} : vector<2x64xf32> to vector<2x32xf32>
    %c4 = arith.constant 4 : index
    %c0_32 = arith.constant 0 : index
    %107 = vector.load %arg30[%c4, %c0_32] : memref<16x32xf32, #tpu.memory_space<vmem>>, vector<2x32xf32>
    tpu.vector_store %arg30[%c4, %c0_32], %106 {strides = array<i32>} : memref<16x32xf32, #tpu.memory_space<vmem>>, vector<2x32xf32>,
    %108 = vector.extract_strided_slice %105 {offsets = [0, 32], sizes = [2, 32], strides = [1, 1]} : vector<2x64xf32> to vector<2x32xf32>
    %c10 = arith.constant 10 : index
    %c0_33 = arith.constant 0 : index
    %109 = vector.load %arg31[%c10, %c0_33] : memref<16x32xf32, #tpu.memory_space<vmem>>, vector<2x32xf32>
    tpu.vector_store %arg31[%c10, %c0_33], %108 {strides = array<i32>} : memref<16x32xf32, #tpu.memory_space<vmem>>, vector<2x32xf32>,
    %110 = vector.extract_strided_slice %31 {offsets = [6, 0], sizes = [2, 256], strides = [1, 1]} : vector<16x256xf32> to vector<2x256xf32>
    %111 = vector.extract_strided_slice %32 {offsets = [8, 0], sizes = [2, 256], strides = [1, 1]} : vector<16x256xf32> to vector<2x256xf32>
    %112 = arith.addf %110, %111 : vector<2x256xf32>
    %cst_34 = arith.constant dense<0.000000e+00> : vector<2x256xf32>
    %113 = tpu.matmul %105, %27, %cst_34 {dimension_numbers = #tpu.dot_dimension_numbers<[1], [0], [0], [1], [0, 0, 1, 1], [], []>} : vector<2x64xf32>, vector<64x256xf32>, vector<2x256xf32> -> vector<2x256xf32>
    %114 = arith.addf %112, %113 : vector<2x256xf32>
    %115 = vector.extract_strided_slice %114 {offsets = [0, 0], sizes = [2, 192], strides = [1, 1]} : vector<2x256xf32> to vector<2x192xf32>
    %116 = arith.negf %115 : vector<2x192xf32>
    %117 = math.exp %116 : vector<2x192xf32>
    %cst_35 = arith.constant 1.000000e+00 : f32
    %118 = vector.broadcast %cst_35 : f32 to vector<2x192xf32>
    %119 = arith.addf %118, %117 : vector<2x192xf32>
    %120 = arith.divf %118, %119 : vector<2x192xf32>
    %121 = vector.extract_strided_slice %114 {offsets = [0, 192], sizes = [2, 64], strides = [1, 1]} : vector<2x256xf32> to vector<2x64xf32>
    %122 = math.tanh %121 : vector<2x64xf32>
    %123 = vector.extract_strided_slice %120 {offsets = [0, 64], sizes = [2, 64], strides = [1, 1]} : vector<2x192xf32> to vector<2x64xf32>
    %124 = arith.mulf %123, %102 : vector<2x64xf32>
    %125 = vector.extract_strided_slice %120 {offsets = [0, 0], sizes = [2, 64], strides = [1, 1]} : vector<2x192xf32> to vector<2x64xf32>
    %126 = arith.mulf %125, %122 : vector<2x64xf32>
    %127 = arith.addf %124, %126 : vector<2x64xf32>
    %128 = vector.extract_strided_slice %120 {offsets = [0, 128], sizes = [2, 64], strides = [1, 1]} : vector<2x192xf32> to vector<2x64xf32>
    %129 = math.tanh %127 : vector<2x64xf32>
    %130 = arith.mulf %128, %129 : vector<2x64xf32>
    %131 = vector.extract_strided_slice %130 {offsets = [0, 0], sizes = [2, 32], strides = [1, 1]} : vector<2x64xf32> to vector<2x32xf32>
    %c6 = arith.constant 6 : index
    %c0_36 = arith.constant 0 : index
    %132 = vector.load %arg30[%c6, %c0_36] : memref<16x32xf32, #tpu.memory_space<vmem>>, vector<2x32xf32>
    tpu.vector_store %arg30[%c6, %c0_36], %131 {strides = array<i32>} : memref<16x32xf32, #tpu.memory_space<vmem>>, vector<2x32xf32>,
    %133 = vector.extract_strided_slice %130 {offsets = [0, 32], sizes = [2, 32], strides = [1, 1]} : vector<2x64xf32> to vector<2x32xf32>
    %c8 = arith.constant 8 : index
    %c0_37 = arith.constant 0 : index
    %134 = vector.load %arg31[%c8, %c0_37] : memref<16x32xf32, #tpu.memory_space<vmem>>, vector<2x32xf32>
    tpu.vector_store %arg31[%c8, %c0_37], %133 {strides = array<i32>} : memref<16x32xf32, #tpu.memory_space<vmem>>, vector<2x32xf32>,
    %135 = vector.extract_strided_slice %31 {offsets = [8, 0], sizes = [2, 256], strides = [1, 1]} : vector<16x256xf32> to vector<2x256xf32>
    %136 = vector.extract_strided_slice %32 {offsets = [6, 0], sizes = [2, 256], strides = [1, 1]} : vector<16x256xf32> to vector<2x256xf32>
    %137 = arith.addf %135, %136 : vector<2x256xf32>
    %cst_38 = arith.constant dense<0.000000e+00> : vector<2x256xf32>
    %138 = tpu.matmul %130, %27, %cst_38 {dimension_numbers = #tpu.dot_dimension_numbers<[1], [0], [0], [1], [0, 0, 1, 1], [], []>} : vector<2x64xf32>, vector<64x256xf32>, vector<2x256xf32> -> vector<2x256xf32>
    %139 = arith.addf %137, %138 : vector<2x256xf32>
    %140 = vector.extract_strided_slice %139 {offsets = [0, 0], sizes = [2, 192], strides = [1, 1]} : vector<2x256xf32> to vector<2x192xf32>
    %141 = arith.negf %140 : vector<2x192xf32>
    %142 = math.exp %141 : vector<2x192xf32>
    %cst_39 = arith.constant 1.000000e+00 : f32
    %143 = vector.broadcast %cst_39 : f32 to vector<2x192xf32>
    %144 = arith.addf %143, %142 : vector<2x192xf32>
    %145 = arith.divf %143, %144 : vector<2x192xf32>
    %146 = vector.extract_strided_slice %139 {offsets = [0, 192], sizes = [2, 64], strides = [1, 1]} : vector<2x256xf32> to vector<2x64xf32>
    %147 = math.tanh %146 : vector<2x64xf32>
    %148 = vector.extract_strided_slice %145 {offsets = [0, 64], sizes = [2, 64], strides = [1, 1]} : vector<2x192xf32> to vector<2x64xf32>
    %149 = arith.mulf %148, %127 : vector<2x64xf32>
    %150 = vector.extract_strided_slice %145 {offsets = [0, 0], sizes = [2, 64], strides = [1, 1]} : vector<2x192xf32> to vector<2x64xf32>
    %151 = arith.mulf %150, %147 : vector<2x64xf32>
    %152 = arith.addf %149, %151 : vector<2x64xf32>
    %153 = vector.extract_strided_slice %145 {offsets = [0, 128], sizes = [2, 64], strides = [1, 1]} : vector<2x192xf32> to vector<2x64xf32>
    %154 = math.tanh %152 : vector<2x64xf32>
    %155 = arith.mulf %153, %154 : vector<2x64xf32>
    %156 = vector.extract_strided_slice %155 {offsets = [0, 0], sizes = [2, 32], strides = [1, 1]} : vector<2x64xf32> to vector<2x32xf32>
    %c8_40 = arith.constant 8 : index
    %c0_41 = arith.constant 0 : index
    %157 = vector.load %arg30[%c8_40, %c0_41] : memref<16x32xf32, #tpu.memory_space<vmem>>, vector<2x32xf32>
    tpu.vector_store %arg30[%c8_40, %c0_41], %156 {strides = array<i32>} : memref<16x32xf32, #tpu.memory_space<vmem>>, vector<2x32xf32>,
    %158 = vector.extract_strided_slice %155 {offsets = [0, 32], sizes = [2, 32], strides = [1, 1]} : vector<2x64xf32> to vector<2x32xf32>
    %c6_42 = arith.constant 6 : index
    %c0_43 = arith.constant 0 : index
    %159 = vector.load %arg31[%c6_42, %c0_43] : memref<16x32xf32, #tpu.memory_space<vmem>>, vector<2x32xf32>
    tpu.vector_store %arg31[%c6_42, %c0_43], %158 {strides = array<i32>} : memref<16x32xf32, #tpu.memory_space<vmem>>, vector<2x32xf32>,
    %160 = vector.extract_strided_slice %31 {offsets = [10, 0], sizes = [2, 256], strides = [1, 1]} : vector<16x256xf32> to vector<2x256xf32>
    %161 = vector.extract_strided_slice %32 {offsets = [4, 0], sizes = [2, 256], strides = [1, 1]} : vector<16x256xf32> to vector<2x256xf32>
    %162 = arith.addf %160, %161 : vector<2x256xf32>
    %cst_44 = arith.constant dense<0.000000e+00> : vector<2x256xf32>
    %163 = tpu.matmul %155, %27, %cst_44 {dimension_numbers = #tpu.dot_dimension_numbers<[1], [0], [0], [1], [0, 0, 1, 1], [], []>} : vector<2x64xf32>, vector<64x256xf32>, vector<2x256xf32> -> vector<2x256xf32>
    %164 = arith.addf %162, %163 : vector<2x256xf32>
    %165 = vector.extract_strided_slice %164 {offsets = [0, 0], sizes = [2, 192], strides = [1, 1]} : vector<2x256xf32> to vector<2x192xf32>
    %166 = arith.negf %165 : vector<2x192xf32>
    %167 = math.exp %166 : vector<2x192xf32>
    %cst_45 = arith.constant 1.000000e+00 : f32
    %168 = vector.broadcast %cst_45 : f32 to vector<2x192xf32>
    %169 = arith.addf %168, %167 : vector<2x192xf32>
    %170 = arith.divf %168, %169 : vector<2x192xf32>
    %171 = vector.extract_strided_slice %164 {offsets = [0, 192], sizes = [2, 64], strides = [1, 1]} : vector<2x256xf32> to vector<2x64xf32>
    %172 = math.tanh %171 : vector<2x64xf32>
    %173 = vector.extract_strided_slice %170 {offsets = [0, 64], sizes = [2, 64], strides = [1, 1]} : vector<2x192xf32> to vector<2x64xf32>
    %174 = arith.mulf %173, %152 : vector<2x64xf32>
    %175 = vector.extract_strided_slice %170 {offsets = [0, 0], sizes = [2, 64], strides = [1, 1]} : vector<2x192xf32> to vector<2x64xf32>
    %176 = arith.mulf %175, %172 : vector<2x64xf32>
    %177 = arith.addf %174, %176 : vector<2x64xf32>
    %178 = vector.extract_strided_slice %170 {offsets = [0, 128], sizes = [2, 64], strides = [1, 1]} : vector<2x192xf32> to vector<2x64xf32>
    %179 = math.tanh %177 : vector<2x64xf32>
    %180 = arith.mulf %178, %179 : vector<2x64xf32>
    %181 = vector.extract_strided_slice %180 {offsets = [0, 0], sizes = [2, 32], strides = [1, 1]} : vector<2x64xf32> to vector<2x32xf32>
    %c10_46 = arith.constant 10 : index
    %c0_47 = arith.constant 0 : index
    %182 = vector.load %arg30[%c10_46, %c0_47] : memref<16x32xf32, #tpu.memory_space<vmem>>, vector<2x32xf32>
    tpu.vector_store %arg30[%c10_46, %c0_47], %181 {strides = array<i32>} : memref<16x32xf32, #tpu.memory_space<vmem>>, vector<2x32xf32>,
    %183 = vector.extract_strided_slice %180 {offsets = [0, 32], sizes = [2, 32], strides = [1, 1]} : vector<2x64xf32> to vector<2x32xf32>
    %c4_48 = arith.constant 4 : index
    %c0_49 = arith.constant 0 : index
    %184 = vector.load %arg31[%c4_48, %c0_49] : memref<16x32xf32, #tpu.memory_space<vmem>>, vector<2x32xf32>
    tpu.vector_store %arg31[%c4_48, %c0_49], %183 {strides = array<i32>} : memref<16x32xf32, #tpu.memory_space<vmem>>, vector<2x32xf32>,
    %185 = vector.extract_strided_slice %31 {offsets = [12, 0], sizes = [2, 256], strides = [1, 1]} : vector<16x256xf32> to vector<2x256xf32>
    %186 = vector.extract_strided_slice %32 {offsets = [2, 0], sizes = [2, 256], strides = [1, 1]} : vector<16x256xf32> to vector<2x256xf32>
    %187 = arith.addf %185, %186 : vector<2x256xf32>
    %cst_50 = arith.constant dense<0.000000e+00> : vector<2x256xf32>
    %188 = tpu.matmul %180, %27, %cst_50 {dimension_numbers = #tpu.dot_dimension_numbers<[1], [0], [0], [1], [0, 0, 1, 1], [], []>} : vector<2x64xf32>, vector<64x256xf32>, vector<2x256xf32> -> vector<2x256xf32>
    %189 = arith.addf %187, %188 : vector<2x256xf32>
    %190 = vector.extract_strided_slice %189 {offsets = [0, 0], sizes = [2, 192], strides = [1, 1]} : vector<2x256xf32> to vector<2x192xf32>
    %191 = arith.negf %190 : vector<2x192xf32>
    %192 = math.exp %191 : vector<2x192xf32>
    %cst_51 = arith.constant 1.000000e+00 : f32
    %193 = vector.broadcast %cst_51 : f32 to vector<2x192xf32>
    %194 = arith.addf %193, %192 : vector<2x192xf32>
    %195 = arith.divf %193, %194 : vector<2x192xf32>
    %196 = vector.extract_strided_slice %189 {offsets = [0, 192], sizes = [2, 64], strides = [1, 1]} : vector<2x256xf32> to vector<2x64xf32>
    %197 = math.tanh %196 : vector<2x64xf32>
    %198 = vector.extract_strided_slice %195 {offsets = [0, 64], sizes = [2, 64], strides = [1, 1]} : vector<2x192xf32> to vector<2x64xf32>
    %199 = arith.mulf %198, %177 : vector<2x64xf32>
    %200 = vector.extract_strided_slice %195 {offsets = [0, 0], sizes = [2, 64], strides = [1, 1]} : vector<2x192xf32> to vector<2x64xf32>
    %201 = arith.mulf %200, %197 : vector<2x64xf32>
    %202 = arith.addf %199, %201 : vector<2x64xf32>
    %203 = vector.extract_strided_slice %195 {offsets = [0, 128], sizes = [2, 64], strides = [1, 1]} : vector<2x192xf32> to vector<2x64xf32>
    %204 = math.tanh %202 : vector<2x64xf32>
    %205 = arith.mulf %203, %204 : vector<2x64xf32>
    %206 = vector.extract_strided_slice %205 {offsets = [0, 0], sizes = [2, 32], strides = [1, 1]} : vector<2x64xf32> to vector<2x32xf32>
    %c12_52 = arith.constant 12 : index
    %c0_53 = arith.constant 0 : index
    %207 = vector.load %arg30[%c12_52, %c0_53] : memref<16x32xf32, #tpu.memory_space<vmem>>, vector<2x32xf32>
    tpu.vector_store %arg30[%c12_52, %c0_53], %206 {strides = array<i32>} : memref<16x32xf32, #tpu.memory_space<vmem>>, vector<2x32xf32>,
    %208 = vector.extract_strided_slice %205 {offsets = [0, 32], sizes = [2, 32], strides = [1, 1]} : vector<2x64xf32> to vector<2x32xf32>
    %c2_54 = arith.constant 2 : index
    %c0_55 = arith.constant 0 : index
    %209 = vector.load %arg31[%c2_54, %c0_55] : memref<16x32xf32, #tpu.memory_space<vmem>>, vector<2x32xf32>
    tpu.vector_store %arg31[%c2_54, %c0_55], %208 {strides = array<i32>} : memref<16x32xf32, #tpu.memory_space<vmem>>, vector<2x32xf32>,
    %210 = vector.extract_strided_slice %31 {offsets = [14, 0], sizes = [2, 256], strides = [1, 1]} : vector<16x256xf32> to vector<2x256xf32>
    %211 = vector.extract_strided_slice %32 {offsets = [0, 0], sizes = [2, 256], strides = [1, 1]} : vector<16x256xf32> to vector<2x256xf32>
    %212 = arith.addf %210, %211 : vector<2x256xf32>
    %cst_56 = arith.constant dense<0.000000e+00> : vector<2x256xf32>
    %213 = tpu.matmul %205, %27, %cst_56 {dimension_numbers = #tpu.dot_dimension_numbers<[1], [0], [0], [1], [0, 0, 1, 1], [], []>} : vector<2x64xf32>, vector<64x256xf32>, vector<2x256xf32> -> vector<2x256xf32>
    %214 = arith.addf %212, %213 : vector<2x256xf32>
    %215 = vector.extract_strided_slice %214 {offsets = [0, 0], sizes = [2, 192], strides = [1, 1]} : vector<2x256xf32> to vector<2x192xf32>
    %216 = arith.negf %215 : vector<2x192xf32>
    %217 = math.exp %216 : vector<2x192xf32>
    %cst_57 = arith.constant 1.000000e+00 : f32
    %218 = vector.broadcast %cst_57 : f32 to vector<2x192xf32>
    %219 = arith.addf %218, %217 : vector<2x192xf32>
    %220 = arith.divf %218, %219 : vector<2x192xf32>
    %221 = vector.extract_strided_slice %214 {offsets = [0, 192], sizes = [2, 64], strides = [1, 1]} : vector<2x256xf32> to vector<2x64xf32>
    %222 = math.tanh %221 : vector<2x64xf32>
    %223 = vector.extract_strided_slice %220 {offsets = [0, 64], sizes = [2, 64], strides = [1, 1]} : vector<2x192xf32> to vector<2x64xf32>
    %224 = arith.mulf %223, %202 : vector<2x64xf32>
    %225 = vector.extract_strided_slice %220 {offsets = [0, 0], sizes = [2, 64], strides = [1, 1]} : vector<2x192xf32> to vector<2x64xf32>
    %226 = arith.mulf %225, %222 : vector<2x64xf32>
    %227 = arith.addf %224, %226 : vector<2x64xf32>
    %228 = vector.extract_strided_slice %220 {offsets = [0, 128], sizes = [2, 64], strides = [1, 1]} : vector<2x192xf32> to vector<2x64xf32>
    %229 = math.tanh %227 : vector<2x64xf32>
    %230 = arith.mulf %228, %229 : vector<2x64xf32>
    %231 = vector.extract_strided_slice %230 {offsets = [0, 0], sizes = [2, 32], strides = [1, 1]} : vector<2x64xf32> to vector<2x32xf32>
    %c14_58 = arith.constant 14 : index
    %c0_59 = arith.constant 0 : index
    %232 = vector.load %arg30[%c14_58, %c0_59] : memref<16x32xf32, #tpu.memory_space<vmem>>, vector<2x32xf32>
    tpu.vector_store %arg30[%c14_58, %c0_59], %231 {strides = array<i32>} : memref<16x32xf32, #tpu.memory_space<vmem>>, vector<2x32xf32>,
    %233 = vector.extract_strided_slice %230 {offsets = [0, 32], sizes = [2, 32], strides = [1, 1]} : vector<2x64xf32> to vector<2x32xf32>
    %c0_60 = arith.constant 0 : index
    %c0_61 = arith.constant 0 : index
    %234 = vector.load %arg31[%c0_60, %c0_61] : memref<16x32xf32, #tpu.memory_space<vmem>>, vector<2x32xf32>
    tpu.vector_store %arg31[%c0_60, %c0_61], %233 {strides = array<i32>} : memref<16x32xf32, #tpu.memory_space<vmem>>, vector<2x32xf32>,
    %c0_62 = arith.constant 0 : index
    %c0_63 = arith.constant 0 : index
    %235 = vector.load %arg30[%c0_62, %c0_63] : memref<16x32xf32, #tpu.memory_space<vmem>>, vector<16x32xf32>
    %c0_64 = arith.constant 0 : index
    %c0_65 = arith.constant 0 : index
    %236 = vector.load %arg31[%c0_64, %c0_65] : memref<16x32xf32, #tpu.memory_space<vmem>>, vector<16x32xf32>
    %237 = tpu.concatenate %235, %236 in 1 : vector<16x32xf32>, vector<16x32xf32> -> vector<16x64xf32>
    %c0_66 = arith.constant 0 : index
    %c0_67 = arith.constant 0 : index
    %238 = vector.load %arg11[%c0_66, %c0_67] : memref<64x256xf32, #tpu.memory_space<vmem>>, vector<64x256xf32>
    %c0_68 = arith.constant 0 : index
    %c0_69 = arith.constant 0 : index
    %239 = vector.load %arg12[%c0_68, %c0_69] : memref<64x256xf32, #tpu.memory_space<vmem>>, vector<64x256xf32>
    %c0_70 = arith.constant 0 : index
    %c0_71 = arith.constant 0 : index
    %240 = vector.load %arg13[%c0_70, %c0_71] : memref<64x256xf32, #tpu.memory_space<vmem>>, vector<64x256xf32>
    %c0_72 = arith.constant 0 : index
    %c0_73 = arith.constant 0 : index
    %241 = vector.load %arg14[%c0_72, %c0_73] : memref<1x256xf32, #tpu.memory_space<vmem>>, vector<1x256xf32>
    %cst_74 = arith.constant dense<0.000000e+00> : vector<16x256xf32>
    %242 = tpu.matmul %237, %238, %cst_74 {dimension_numbers = #tpu.dot_dimension_numbers<[1], [0], [0], [1], [0, 0, 1, 1], [], []>} : vector<16x64xf32>, vector<64x256xf32>, vector<16x256xf32> -> vector<16x256xf32>
    %243 = vector.broadcast %241 : vector<1x256xf32> to vector<16x256xf32>
    %244 = arith.addf %242, %243 : vector<16x256xf32>
    %cst_75 = arith.constant dense<0.000000e+00> : vector<16x256xf32>
    %245 = tpu.matmul %237, %239, %cst_75 {dimension_numbers = #tpu.dot_dimension_numbers<[1], [0], [0], [1], [0, 0, 1, 1], [], []>} : vector<16x64xf32>, vector<64x256xf32>, vector<16x256xf32> -> vector<16x256xf32>
    %cst_76 = arith.constant 0.000000e+00 : f32
    %246 = vector.broadcast %cst_76 : f32 to vector<2x64xf32>
    %cst_77 = arith.constant 0.000000e+00 : f32
    %247 = vector.broadcast %cst_77 : f32 to vector<2x64xf32>
    %248 = vector.extract_strided_slice %244 {offsets = [0, 0], sizes = [2, 256], strides = [1, 1]} : vector<16x256xf32> to vector<2x256xf32>
    %249 = vector.extract_strided_slice %245 {offsets = [14, 0], sizes = [2, 256], strides = [1, 1]} : vector<16x256xf32> to vector<2x256xf32>
    %250 = arith.addf %248, %249 : vector<2x256xf32>
    %cst_78 = arith.constant dense<0.000000e+00> : vector<2x256xf32>
    %251 = tpu.matmul %246, %240, %cst_78 {dimension_numbers = #tpu.dot_dimension_numbers<[1], [0], [0], [1], [0, 0, 1, 1], [], []>} : vector<2x64xf32>, vector<64x256xf32>, vector<2x256xf32> -> vector<2x256xf32>
    %252 = arith.addf %250, %251 : vector<2x256xf32>
    %253 = vector.extract_strided_slice %252 {offsets = [0, 0], sizes = [2, 192], strides = [1, 1]} : vector<2x256xf32> to vector<2x192xf32>
    %254 = arith.negf %253 : vector<2x192xf32>
    %255 = math.exp %254 : vector<2x192xf32>
    %cst_79 = arith.constant 1.000000e+00 : f32
    %256 = vector.broadcast %cst_79 : f32 to vector<2x192xf32>
    %257 = arith.addf %256, %255 : vector<2x192xf32>
    %258 = arith.divf %256, %257 : vector<2x192xf32>
    %259 = vector.extract_strided_slice %252 {offsets = [0, 192], sizes = [2, 64], strides = [1, 1]} : vector<2x256xf32> to vector<2x64xf32>
    %260 = math.tanh %259 : vector<2x64xf32>
    %261 = vector.extract_strided_slice %258 {offsets = [0, 64], sizes = [2, 64], strides = [1, 1]} : vector<2x192xf32> to vector<2x64xf32>
    %262 = arith.mulf %261, %247 : vector<2x64xf32>
    %263 = vector.extract_strided_slice %258 {offsets = [0, 0], sizes = [2, 64], strides = [1, 1]} : vector<2x192xf32> to vector<2x64xf32>
    %264 = arith.mulf %263, %260 : vector<2x64xf32>
    %265 = arith.addf %262, %264 : vector<2x64xf32>
    %266 = vector.extract_strided_slice %258 {offsets = [0, 128], sizes = [2, 64], strides = [1, 1]} : vector<2x192xf32> to vector<2x64xf32>
    %267 = math.tanh %265 : vector<2x64xf32>
    %268 = arith.mulf %266, %267 : vector<2x64xf32>
    %269 = vector.extract_strided_slice %268 {offsets = [0, 0], sizes = [2, 32], strides = [1, 1]} : vector<2x64xf32> to vector<2x32xf32>
    %c0_80 = arith.constant 0 : index
    %c0_81 = arith.constant 0 : index
    %270 = vector.load %arg30[%c0_80, %c0_81] : memref<16x32xf32, #tpu.memory_space<vmem>>, vector<2x32xf32>
    tpu.vector_store %arg30[%c0_80, %c0_81], %269 {strides = array<i32>} : memref<16x32xf32, #tpu.memory_space<vmem>>, vector<2x32xf32>,
    %271 = vector.extract_strided_slice %268 {offsets = [0, 32], sizes = [2, 32], strides = [1, 1]} : vector<2x64xf32> to vector<2x32xf32>
    %c14_82 = arith.constant 14 : index
    %c0_83 = arith.constant 0 : index
    %272 = vector.load %arg31[%c14_82, %c0_83] : memref<16x32xf32, #tpu.memory_space<vmem>>, vector<2x32xf32>
    tpu.vector_store %arg31[%c14_82, %c0_83], %271 {strides = array<i32>} : memref<16x32xf32, #tpu.memory_space<vmem>>, vector<2x32xf32>,
    %273 = vector.extract_strided_slice %244 {offsets = [2, 0], sizes = [2, 256], strides = [1, 1]} : vector<16x256xf32> to vector<2x256xf32>
    %274 = vector.extract_strided_slice %245 {offsets = [12, 0], sizes = [2, 256], strides = [1, 1]} : vector<16x256xf32> to vector<2x256xf32>
    %275 = arith.addf %273, %274 : vector<2x256xf32>
    %cst_84 = arith.constant dense<0.000000e+00> : vector<2x256xf32>
    %276 = tpu.matmul %268, %240, %cst_84 {dimension_numbers = #tpu.dot_dimension_numbers<[1], [0], [0], [1], [0, 0, 1, 1], [], []>} : vector<2x64xf32>, vector<64x256xf32>, vector<2x256xf32> -> vector<2x256xf32>
    %277 = arith.addf %275, %276 : vector<2x256xf32>
    %278 = vector.extract_strided_slice %277 {offsets = [0, 0], sizes = [2, 192], strides = [1, 1]} : vector<2x256xf32> to vector<2x192xf32>
    %279 = arith.negf %278 : vector<2x192xf32>
    %280 = math.exp %279 : vector<2x192xf32>
    %cst_85 = arith.constant 1.000000e+00 : f32
    %281 = vector.broadcast %cst_85 : f32 to vector<2x192xf32>
    %282 = arith.addf %281, %280 : vector<2x192xf32>
    %283 = arith.divf %281, %282 : vector<2x192xf32>
    %284 = vector.extract_strided_slice %277 {offsets = [0, 192], sizes = [2, 64], strides = [1, 1]} : vector<2x256xf32> to vector<2x64xf32>
    %285 = math.tanh %284 : vector<2x64xf32>
    %286 = vector.extract_strided_slice %283 {offsets = [0, 64], sizes = [2, 64], strides = [1, 1]} : vector<2x192xf32> to vector<2x64xf32>
    %287 = arith.mulf %286, %265 : vector<2x64xf32>
    %288 = vector.extract_strided_slice %283 {offsets = [0, 0], sizes = [2, 64], strides = [1, 1]} : vector<2x192xf32> to vector<2x64xf32>
    %289 = arith.mulf %288, %285 : vector<2x64xf32>
    %290 = arith.addf %287, %289 : vector<2x64xf32>
    %291 = vector.extract_strided_slice %283 {offsets = [0, 128], sizes = [2, 64], strides = [1, 1]} : vector<2x192xf32> to vector<2x64xf32>
    %292 = math.tanh %290 : vector<2x64xf32>
    %293 = arith.mulf %291, %292 : vector<2x64xf32>
    %294 = vector.extract_strided_slice %293 {offsets = [0, 0], sizes = [2, 32], strides = [1, 1]} : vector<2x64xf32> to vector<2x32xf32>
    %c2_86 = arith.constant 2 : index
    %c0_87 = arith.constant 0 : index
    %295 = vector.load %arg30[%c2_86, %c0_87] : memref<16x32xf32, #tpu.memory_space<vmem>>, vector<2x32xf32>
    tpu.vector_store %arg30[%c2_86, %c0_87], %294 {strides = array<i32>} : memref<16x32xf32, #tpu.memory_space<vmem>>, vector<2x32xf32>,
    %296 = vector.extract_strided_slice %293 {offsets = [0, 32], sizes = [2, 32], strides = [1, 1]} : vector<2x64xf32> to vector<2x32xf32>
    %c12_88 = arith.constant 12 : index
    %c0_89 = arith.constant 0 : index
    %297 = vector.load %arg31[%c12_88, %c0_89] : memref<16x32xf32, #tpu.memory_space<vmem>>, vector<2x32xf32>
    tpu.vector_store %arg31[%c12_88, %c0_89], %296 {strides = array<i32>} : memref<16x32xf32, #tpu.memory_space<vmem>>, vector<2x32xf32>,
    %298 = vector.extract_strided_slice %244 {offsets = [4, 0], sizes = [2, 256], strides = [1, 1]} : vector<16x256xf32> to vector<2x256xf32>
    %299 = vector.extract_strided_slice %245 {offsets = [10, 0], sizes = [2, 256], strides = [1, 1]} : vector<16x256xf32> to vector<2x256xf32>
    %300 = arith.addf %298, %299 : vector<2x256xf32>
    %cst_90 = arith.constant dense<0.000000e+00> : vector<2x256xf32>
    %301 = tpu.matmul %293, %240, %cst_90 {dimension_numbers = #tpu.dot_dimension_numbers<[1], [0], [0], [1], [0, 0, 1, 1], [], []>} : vector<2x64xf32>, vector<64x256xf32>, vector<2x256xf32> -> vector<2x256xf32>
    %302 = arith.addf %300, %301 : vector<2x256xf32>
    %303 = vector.extract_strided_slice %302 {offsets = [0, 0], sizes = [2, 192], strides = [1, 1]} : vector<2x256xf32> to vector<2x192xf32>
    %304 = arith.negf %303 : vector<2x192xf32>
    %305 = math.exp %304 : vector<2x192xf32>
    %cst_91 = arith.constant 1.000000e+00 : f32
    %306 = vector.broadcast %cst_91 : f32 to vector<2x192xf32>
    %307 = arith.addf %306, %305 : vector<2x192xf32>
    %308 = arith.divf %306, %307 : vector<2x192xf32>
    %309 = vector.extract_strided_slice %302 {offsets = [0, 192], sizes = [2, 64], strides = [1, 1]} : vector<2x256xf32> to vector<2x64xf32>
    %310 = math.tanh %309 : vector<2x64xf32>
    %311 = vector.extract_strided_slice %308 {offsets = [0, 64], sizes = [2, 64], strides = [1, 1]} : vector<2x192xf32> to vector<2x64xf32>
    %312 = arith.mulf %311, %290 : vector<2x64xf32>
    %313 = vector.extract_strided_slice %308 {offsets = [0, 0], sizes = [2, 64], strides = [1, 1]} : vector<2x192xf32> to vector<2x64xf32>
    %314 = arith.mulf %313, %310 : vector<2x64xf32>
    %315 = arith.addf %312, %314 : vector<2x64xf32>
    %316 = vector.extract_strided_slice %308 {offsets = [0, 128], sizes = [2, 64], strides = [1, 1]} : vector<2x192xf32> to vector<2x64xf32>
    %317 = math.tanh %315 : vector<2x64xf32>
    %318 = arith.mulf %316, %317 : vector<2x64xf32>
    %319 = vector.extract_strided_slice %318 {offsets = [0, 0], sizes = [2, 32], strides = [1, 1]} : vector<2x64xf32> to vector<2x32xf32>
    %c4_92 = arith.constant 4 : index
    %c0_93 = arith.constant 0 : index
    %320 = vector.load %arg30[%c4_92, %c0_93] : memref<16x32xf32, #tpu.memory_space<vmem>>, vector<2x32xf32>
    tpu.vector_store %arg30[%c4_92, %c0_93], %319 {strides = array<i32>} : memref<16x32xf32, #tpu.memory_space<vmem>>, vector<2x32xf32>,
    %321 = vector.extract_strided_slice %318 {offsets = [0, 32], sizes = [2, 32], strides = [1, 1]} : vector<2x64xf32> to vector<2x32xf32>
    %c10_94 = arith.constant 10 : index
    %c0_95 = arith.constant 0 : index
    %322 = vector.load %arg31[%c10_94, %c0_95] : memref<16x32xf32, #tpu.memory_space<vmem>>, vector<2x32xf32>
    tpu.vector_store %arg31[%c10_94, %c0_95], %321 {strides = array<i32>} : memref<16x32xf32, #tpu.memory_space<vmem>>, vector<2x32xf32>,
    %323 = vector.extract_strided_slice %244 {offsets = [6, 0], sizes = [2, 256], strides = [1, 1]} : vector<16x256xf32> to vector<2x256xf32>
    %324 = vector.extract_strided_slice %245 {offsets = [8, 0], sizes = [2, 256], strides = [1, 1]} : vector<16x256xf32> to vector<2x256xf32>
    %325 = arith.addf %323, %324 : vector<2x256xf32>
    %cst_96 = arith.constant dense<0.000000e+00> : vector<2x256xf32>
    %326 = tpu.matmul %318, %240, %cst_96 {dimension_numbers = #tpu.dot_dimension_numbers<[1], [0], [0], [1], [0, 0, 1, 1], [], []>} : vector<2x64xf32>, vector<64x256xf32>, vector<2x256xf32> -> vector<2x256xf32>
    %327 = arith.addf %325, %326 : vector<2x256xf32>
    %328 = vector.extract_strided_slice %327 {offsets = [0, 0], sizes = [2, 192], strides = [1, 1]} : vector<2x256xf32> to vector<2x192xf32>
    %329 = arith.negf %328 : vector<2x192xf32>
    %330 = math.exp %329 : vector<2x192xf32>
    %cst_97 = arith.constant 1.000000e+00 : f32
    %331 = vector.broadcast %cst_97 : f32 to vector<2x192xf32>
    %332 = arith.addf %331, %330 : vector<2x192xf32>
    %333 = arith.divf %331, %332 : vector<2x192xf32>
    %334 = vector.extract_strided_slice %327 {offsets = [0, 192], sizes = [2, 64], strides = [1, 1]} : vector<2x256xf32> to vector<2x64xf32>
    %335 = math.tanh %334 : vector<2x64xf32>
    %336 = vector.extract_strided_slice %333 {offsets = [0, 64], sizes = [2, 64], strides = [1, 1]} : vector<2x192xf32> to vector<2x64xf32>
    %337 = arith.mulf %336, %315 : vector<2x64xf32>
    %338 = vector.extract_strided_slice %333 {offsets = [0, 0], sizes = [2, 64], strides = [1, 1]} : vector<2x192xf32> to vector<2x64xf32>
    %339 = arith.mulf %338, %335 : vector<2x64xf32>
    %340 = arith.addf %337, %339 : vector<2x64xf32>
    %341 = vector.extract_strided_slice %333 {offsets = [0, 128], sizes = [2, 64], strides = [1, 1]} : vector<2x192xf32> to vector<2x64xf32>
    %342 = math.tanh %340 : vector<2x64xf32>
    %343 = arith.mulf %341, %342 : vector<2x64xf32>
    %344 = vector.extract_strided_slice %343 {offsets = [0, 0], sizes = [2, 32], strides = [1, 1]} : vector<2x64xf32> to vector<2x32xf32>
    %c6_98 = arith.constant 6 : index
    %c0_99 = arith.constant 0 : index
    %345 = vector.load %arg30[%c6_98, %c0_99] : memref<16x32xf32, #tpu.memory_space<vmem>>, vector<2x32xf32>
    tpu.vector_store %arg30[%c6_98, %c0_99], %344 {strides = array<i32>} : memref<16x32xf32, #tpu.memory_space<vmem>>, vector<2x32xf32>,
    %346 = vector.extract_strided_slice %343 {offsets = [0, 32], sizes = [2, 32], strides = [1, 1]} : vector<2x64xf32> to vector<2x32xf32>
    %c8_100 = arith.constant 8 : index
    %c0_101 = arith.constant 0 : index
    %347 = vector.load %arg31[%c8_100, %c0_101] : memref<16x32xf32, #tpu.memory_space<vmem>>, vector<2x32xf32>
    tpu.vector_store %arg31[%c8_100, %c0_101], %346 {strides = array<i32>} : memref<16x32xf32, #tpu.memory_space<vmem>>, vector<2x32xf32>,
    %348 = vector.extract_strided_slice %244 {offsets = [8, 0], sizes = [2, 256], strides = [1, 1]} : vector<16x256xf32> to vector<2x256xf32>
    %349 = vector.extract_strided_slice %245 {offsets = [6, 0], sizes = [2, 256], strides = [1, 1]} : vector<16x256xf32> to vector<2x256xf32>
    %350 = arith.addf %348, %349 : vector<2x256xf32>
    %cst_102 = arith.constant dense<0.000000e+00> : vector<2x256xf32>
    %351 = tpu.matmul %343, %240, %cst_102 {dimension_numbers = #tpu.dot_dimension_numbers<[1], [0], [0], [1], [0, 0, 1, 1], [], []>} : vector<2x64xf32>, vector<64x256xf32>, vector<2x256xf32> -> vector<2x256xf32>
    %352 = arith.addf %350, %351 : vector<2x256xf32>
    %353 = vector.extract_strided_slice %352 {offsets = [0, 0], sizes = [2, 192], strides = [1, 1]} : vector<2x256xf32> to vector<2x192xf32>
    %354 = arith.negf %353 : vector<2x192xf32>
    %355 = math.exp %354 : vector<2x192xf32>
    %cst_103 = arith.constant 1.000000e+00 : f32
    %356 = vector.broadcast %cst_103 : f32 to vector<2x192xf32>
    %357 = arith.addf %356, %355 : vector<2x192xf32>
    %358 = arith.divf %356, %357 : vector<2x192xf32>
    %359 = vector.extract_strided_slice %352 {offsets = [0, 192], sizes = [2, 64], strides = [1, 1]} : vector<2x256xf32> to vector<2x64xf32>
    %360 = math.tanh %359 : vector<2x64xf32>
    %361 = vector.extract_strided_slice %358 {offsets = [0, 64], sizes = [2, 64], strides = [1, 1]} : vector<2x192xf32> to vector<2x64xf32>
    %362 = arith.mulf %361, %340 : vector<2x64xf32>
    %363 = vector.extract_strided_slice %358 {offsets = [0, 0], sizes = [2, 64], strides = [1, 1]} : vector<2x192xf32> to vector<2x64xf32>
    %364 = arith.mulf %363, %360 : vector<2x64xf32>
    %365 = arith.addf %362, %364 : vector<2x64xf32>
    %366 = vector.extract_strided_slice %358 {offsets = [0, 128], sizes = [2, 64], strides = [1, 1]} : vector<2x192xf32> to vector<2x64xf32>
    %367 = math.tanh %365 : vector<2x64xf32>
    %368 = arith.mulf %366, %367 : vector<2x64xf32>
    %369 = vector.extract_strided_slice %368 {offsets = [0, 0], sizes = [2, 32], strides = [1, 1]} : vector<2x64xf32> to vector<2x32xf32>
    %c8_104 = arith.constant 8 : index
    %c0_105 = arith.constant 0 : index
    %370 = vector.load %arg30[%c8_104, %c0_105] : memref<16x32xf32, #tpu.memory_space<vmem>>, vector<2x32xf32>
    tpu.vector_store %arg30[%c8_104, %c0_105], %369 {strides = array<i32>} : memref<16x32xf32, #tpu.memory_space<vmem>>, vector<2x32xf32>,
    %371 = vector.extract_strided_slice %368 {offsets = [0, 32], sizes = [2, 32], strides = [1, 1]} : vector<2x64xf32> to vector<2x32xf32>
    %c6_106 = arith.constant 6 : index
    %c0_107 = arith.constant 0 : index
    %372 = vector.load %arg31[%c6_106, %c0_107] : memref<16x32xf32, #tpu.memory_space<vmem>>, vector<2x32xf32>
    tpu.vector_store %arg31[%c6_106, %c0_107], %371 {strides = array<i32>} : memref<16x32xf32, #tpu.memory_space<vmem>>, vector<2x32xf32>,
    %373 = vector.extract_strided_slice %244 {offsets = [10, 0], sizes = [2, 256], strides = [1, 1]} : vector<16x256xf32> to vector<2x256xf32>
    %374 = vector.extract_strided_slice %245 {offsets = [4, 0], sizes = [2, 256], strides = [1, 1]} : vector<16x256xf32> to vector<2x256xf32>
    %375 = arith.addf %373, %374 : vector<2x256xf32>
    %cst_108 = arith.constant dense<0.000000e+00> : vector<2x256xf32>
    %376 = tpu.matmul %368, %240, %cst_108 {dimension_numbers = #tpu.dot_dimension_numbers<[1], [0], [0], [1], [0, 0, 1, 1], [], []>} : vector<2x64xf32>, vector<64x256xf32>, vector<2x256xf32> -> vector<2x256xf32>
    %377 = arith.addf %375, %376 : vector<2x256xf32>
    %378 = vector.extract_strided_slice %377 {offsets = [0, 0], sizes = [2, 192], strides = [1, 1]} : vector<2x256xf32> to vector<2x192xf32>
    %379 = arith.negf %378 : vector<2x192xf32>
    %380 = math.exp %379 : vector<2x192xf32>
    %cst_109 = arith.constant 1.000000e+00 : f32
    %381 = vector.broadcast %cst_109 : f32 to vector<2x192xf32>
    %382 = arith.addf %381, %380 : vector<2x192xf32>
    %383 = arith.divf %381, %382 : vector<2x192xf32>
    %384 = vector.extract_strided_slice %377 {offsets = [0, 192], sizes = [2, 64], strides = [1, 1]} : vector<2x256xf32> to vector<2x64xf32>
    %385 = math.tanh %384 : vector<2x64xf32>
    %386 = vector.extract_strided_slice %383 {offsets = [0, 64], sizes = [2, 64], strides = [1, 1]} : vector<2x192xf32> to vector<2x64xf32>
    %387 = arith.mulf %386, %365 : vector<2x64xf32>
    %388 = vector.extract_strided_slice %383 {offsets = [0, 0], sizes = [2, 64], strides = [1, 1]} : vector<2x192xf32> to vector<2x64xf32>
    %389 = arith.mulf %388, %385 : vector<2x64xf32>
    %390 = arith.addf %387, %389 : vector<2x64xf32>
    %391 = vector.extract_strided_slice %383 {offsets = [0, 128], sizes = [2, 64], strides = [1, 1]} : vector<2x192xf32> to vector<2x64xf32>
    %392 = math.tanh %390 : vector<2x64xf32>
    %393 = arith.mulf %391, %392 : vector<2x64xf32>
    %394 = vector.extract_strided_slice %393 {offsets = [0, 0], sizes = [2, 32], strides = [1, 1]} : vector<2x64xf32> to vector<2x32xf32>
    %c10_110 = arith.constant 10 : index
    %c0_111 = arith.constant 0 : index
    %395 = vector.load %arg30[%c10_110, %c0_111] : memref<16x32xf32, #tpu.memory_space<vmem>>, vector<2x32xf32>
    tpu.vector_store %arg30[%c10_110, %c0_111], %394 {strides = array<i32>} : memref<16x32xf32, #tpu.memory_space<vmem>>, vector<2x32xf32>,
    %396 = vector.extract_strided_slice %393 {offsets = [0, 32], sizes = [2, 32], strides = [1, 1]} : vector<2x64xf32> to vector<2x32xf32>
    %c4_112 = arith.constant 4 : index
    %c0_113 = arith.constant 0 : index
    %397 = vector.load %arg31[%c4_112, %c0_113] : memref<16x32xf32, #tpu.memory_space<vmem>>, vector<2x32xf32>
    tpu.vector_store %arg31[%c4_112, %c0_113], %396 {strides = array<i32>} : memref<16x32xf32, #tpu.memory_space<vmem>>, vector<2x32xf32>,
    %398 = vector.extract_strided_slice %244 {offsets = [12, 0], sizes = [2, 256], strides = [1, 1]} : vector<16x256xf32> to vector<2x256xf32>
    %399 = vector.extract_strided_slice %245 {offsets = [2, 0], sizes = [2, 256], strides = [1, 1]} : vector<16x256xf32> to vector<2x256xf32>
    %400 = arith.addf %398, %399 : vector<2x256xf32>
    %cst_114 = arith.constant dense<0.000000e+00> : vector<2x256xf32>
    %401 = tpu.matmul %393, %240, %cst_114 {dimension_numbers = #tpu.dot_dimension_numbers<[1], [0], [0], [1], [0, 0, 1, 1], [], []>} : vector<2x64xf32>, vector<64x256xf32>, vector<2x256xf32> -> vector<2x256xf32>
    %402 = arith.addf %400, %401 : vector<2x256xf32>
    %403 = vector.extract_strided_slice %402 {offsets = [0, 0], sizes = [2, 192], strides = [1, 1]} : vector<2x256xf32> to vector<2x192xf32>
    %404 = arith.negf %403 : vector<2x192xf32>
    %405 = math.exp %404 : vector<2x192xf32>
    %cst_115 = arith.constant 1.000000e+00 : f32
    %406 = vector.broadcast %cst_115 : f32 to vector<2x192xf32>
    %407 = arith.addf %406, %405 : vector<2x192xf32>
    %408 = arith.divf %406, %407 : vector<2x192xf32>
    %409 = vector.extract_strided_slice %402 {offsets = [0, 192], sizes = [2, 64], strides = [1, 1]} : vector<2x256xf32> to vector<2x64xf32>
    %410 = math.tanh %409 : vector<2x64xf32>
    %411 = vector.extract_strided_slice %408 {offsets = [0, 64], sizes = [2, 64], strides = [1, 1]} : vector<2x192xf32> to vector<2x64xf32>
    %412 = arith.mulf %411, %390 : vector<2x64xf32>
    %413 = vector.extract_strided_slice %408 {offsets = [0, 0], sizes = [2, 64], strides = [1, 1]} : vector<2x192xf32> to vector<2x64xf32>
    %414 = arith.mulf %413, %410 : vector<2x64xf32>
    %415 = arith.addf %412, %414 : vector<2x64xf32>
    %416 = vector.extract_strided_slice %408 {offsets = [0, 128], sizes = [2, 64], strides = [1, 1]} : vector<2x192xf32> to vector<2x64xf32>
    %417 = math.tanh %415 : vector<2x64xf32>
    %418 = arith.mulf %416, %417 : vector<2x64xf32>
    %419 = vector.extract_strided_slice %418 {offsets = [0, 0], sizes = [2, 32], strides = [1, 1]} : vector<2x64xf32> to vector<2x32xf32>
    %c12_116 = arith.constant 12 : index
    %c0_117 = arith.constant 0 : index
    %420 = vector.load %arg30[%c12_116, %c0_117] : memref<16x32xf32, #tpu.memory_space<vmem>>, vector<2x32xf32>
    tpu.vector_store %arg30[%c12_116, %c0_117], %419 {strides = array<i32>} : memref<16x32xf32, #tpu.memory_space<vmem>>, vector<2x32xf32>,
    %421 = vector.extract_strided_slice %418 {offsets = [0, 32], sizes = [2, 32], strides = [1, 1]} : vector<2x64xf32> to vector<2x32xf32>
    %c2_118 = arith.constant 2 : index
    %c0_119 = arith.constant 0 : index
    %422 = vector.load %arg31[%c2_118, %c0_119] : memref<16x32xf32, #tpu.memory_space<vmem>>, vector<2x32xf32>
    tpu.vector_store %arg31[%c2_118, %c0_119], %421 {strides = array<i32>} : memref<16x32xf32, #tpu.memory_space<vmem>>, vector<2x32xf32>,
    %423 = vector.extract_strided_slice %244 {offsets = [14, 0], sizes = [2, 256], strides = [1, 1]} : vector<16x256xf32> to vector<2x256xf32>
    %424 = vector.extract_strided_slice %245 {offsets = [0, 0], sizes = [2, 256], strides = [1, 1]} : vector<16x256xf32> to vector<2x256xf32>
    %425 = arith.addf %423, %424 : vector<2x256xf32>
    %cst_120 = arith.constant dense<0.000000e+00> : vector<2x256xf32>
    %426 = tpu.matmul %418, %240, %cst_120 {dimension_numbers = #tpu.dot_dimension_numbers<[1], [0], [0], [1], [0, 0, 1, 1], [], []>} : vector<2x64xf32>, vector<64x256xf32>, vector<2x256xf32> -> vector<2x256xf32>
    %427 = arith.addf %425, %426 : vector<2x256xf32>
    %428 = vector.extract_strided_slice %427 {offsets = [0, 0], sizes = [2, 192], strides = [1, 1]} : vector<2x256xf32> to vector<2x192xf32>
    %429 = arith.negf %428 : vector<2x192xf32>
    %430 = math.exp %429 : vector<2x192xf32>
    %cst_121 = arith.constant 1.000000e+00 : f32
    %431 = vector.broadcast %cst_121 : f32 to vector<2x192xf32>
    %432 = arith.addf %431, %430 : vector<2x192xf32>
    %433 = arith.divf %431, %432 : vector<2x192xf32>
    %434 = vector.extract_strided_slice %427 {offsets = [0, 192], sizes = [2, 64], strides = [1, 1]} : vector<2x256xf32> to vector<2x64xf32>
    %435 = math.tanh %434 : vector<2x64xf32>
    %436 = vector.extract_strided_slice %433 {offsets = [0, 64], sizes = [2, 64], strides = [1, 1]} : vector<2x192xf32> to vector<2x64xf32>
    %437 = arith.mulf %436, %415 : vector<2x64xf32>
    %438 = vector.extract_strided_slice %433 {offsets = [0, 0], sizes = [2, 64], strides = [1, 1]} : vector<2x192xf32> to vector<2x64xf32>
    %439 = arith.mulf %438, %435 : vector<2x64xf32>
    %440 = arith.addf %437, %439 : vector<2x64xf32>
    %441 = vector.extract_strided_slice %433 {offsets = [0, 128], sizes = [2, 64], strides = [1, 1]} : vector<2x192xf32> to vector<2x64xf32>
    %442 = math.tanh %440 : vector<2x64xf32>
    %443 = arith.mulf %441, %442 : vector<2x64xf32>
    %444 = vector.extract_strided_slice %443 {offsets = [0, 0], sizes = [2, 32], strides = [1, 1]} : vector<2x64xf32> to vector<2x32xf32>
    %c14_122 = arith.constant 14 : index
    %c0_123 = arith.constant 0 : index
    %445 = vector.load %arg30[%c14_122, %c0_123] : memref<16x32xf32, #tpu.memory_space<vmem>>, vector<2x32xf32>
    tpu.vector_store %arg30[%c14_122, %c0_123], %444 {strides = array<i32>} : memref<16x32xf32, #tpu.memory_space<vmem>>, vector<2x32xf32>,
    %446 = vector.extract_strided_slice %443 {offsets = [0, 32], sizes = [2, 32], strides = [1, 1]} : vector<2x64xf32> to vector<2x32xf32>
    %c0_124 = arith.constant 0 : index
    %c0_125 = arith.constant 0 : index
    %447 = vector.load %arg31[%c0_124, %c0_125] : memref<16x32xf32, #tpu.memory_space<vmem>>, vector<2x32xf32>
    tpu.vector_store %arg31[%c0_124, %c0_125], %446 {strides = array<i32>} : memref<16x32xf32, #tpu.memory_space<vmem>>, vector<2x32xf32>,
    %c0_126 = arith.constant 0 : index
    %c0_127 = arith.constant 0 : index
    %448 = vector.load %arg30[%c0_126, %c0_127] : memref<16x32xf32, #tpu.memory_space<vmem>>, vector<16x32xf32>
    %c0_128 = arith.constant 0 : index
    %c0_129 = arith.constant 0 : index
    %449 = vector.load %arg31[%c0_128, %c0_129] : memref<16x32xf32, #tpu.memory_space<vmem>>, vector<16x32xf32>
    %450 = tpu.concatenate %448, %449 in 1 : vector<16x32xf32>, vector<16x32xf32> -> vector<16x64xf32>
    %cst_130 = arith.constant 0.000000e+00 : f32
    %451 = vector.broadcast %cst_130 : f32 to vector<16x64xf32>
    %452 = arith.maximumf %450, %451 : vector<16x64xf32>
    %453 = tpu.concatenate %452, %24 in 1 : vector<16x64xf32>, vector<16x10xf32> -> vector<16x74xf32>
    %cst_131 = arith.constant dense<0.000000e+00> : vector<16xf32>
    %454 = vector.multi_reduction <add>, %453, %cst_131 [1] : vector<16x74xf32> to vector<16xf32>
    %455 = vector.shape_cast %454 : vector<16xf32> to vector<16x1xf32>
    %cst_132 = arith.constant 7.400000e+01 : f32
    %456 = vector.broadcast %cst_132 : f32 to vector<16x1xf32>
    %457 = arith.divf %455, %456 : vector<16x1xf32>
    %458 = vector.broadcast %457 : vector<16x1xf32> to vector<16x74xf32>
    %459 = arith.subf %453, %458 : vector<16x74xf32>
    %460 = arith.mulf %459, %459 : vector<16x74xf32>
    %cst_133 = arith.constant dense<0.000000e+00> : vector<16xf32>
    %461 = vector.multi_reduction <add>, %460, %cst_133 [1] : vector<16x74xf32> to vector<16xf32>
    %462 = vector.shape_cast %461 : vector<16xf32> to vector<16x1xf32>
    %cst_134 = arith.constant 7.400000e+01 : f32
    %463 = vector.broadcast %cst_134 : f32 to vector<16x1xf32>
    %464 = arith.divf %462, %463 : vector<16x1xf32>
    %465 = vector.broadcast %457 : vector<16x1xf32> to vector<16x74xf32>
    %466 = arith.subf %453, %465 : vector<16x74xf32>
    %cst_135 = arith.constant 9.99999974E-6 : f32
    %467 = vector.broadcast %cst_135 : f32 to vector<16x1xf32>
    %468 = arith.addf %464, %467 : vector<16x1xf32>
    %469 = math.rsqrt %468 : vector<16x1xf32>
    %470 = vector.broadcast %469 : vector<16x1xf32> to vector<16x74xf32>
    %471 = arith.mulf %466, %470 : vector<16x74xf32>
    %c0_136 = arith.constant 0 : index
    %c0_137 = arith.constant 0 : index
    %472 = vector.load %arg3[%c0_136, %c0_137] : memref<1x74xf32, #tpu.memory_space<vmem>>, vector<1x74xf32>
    %473 = vector.broadcast %472 : vector<1x74xf32> to vector<16x74xf32>
    %474 = arith.mulf %471, %473 : vector<16x74xf32>
    %c0_138 = arith.constant 0 : index
    %c0_139 = arith.constant 0 : index
    %475 = vector.load %arg4[%c0_138, %c0_139] : memref<1x74xf32, #tpu.memory_space<vmem>>, vector<1x74xf32>
    %476 = vector.broadcast %475 : vector<1x74xf32> to vector<16x74xf32>
    %477 = arith.addf %474, %476 : vector<16x74xf32>
    %c0_140 = arith.constant 0 : index
    %c0_141 = arith.constant 0 : index
    %478 = vector.load %arg15[%c0_140, %c0_141] : memref<74x256xf32, #tpu.memory_space<vmem>>, vector<74x256xf32>
    %c0_142 = arith.constant 0 : index
    %c0_143 = arith.constant 0 : index
    %479 = vector.load %arg16[%c0_142, %c0_143] : memref<74x256xf32, #tpu.memory_space<vmem>>, vector<74x256xf32>
    %c0_144 = arith.constant 0 : index
    %c0_145 = arith.constant 0 : index
    %480 = vector.load %arg17[%c0_144, %c0_145] : memref<64x256xf32, #tpu.memory_space<vmem>>, vector<64x256xf32>
    %c0_146 = arith.constant 0 : index
    %c0_147 = arith.constant 0 : index
    %481 = vector.load %arg18[%c0_146, %c0_147] : memref<1x256xf32, #tpu.memory_space<vmem>>, vector<1x256xf32>
    %cst_148 = arith.constant dense<0.000000e+00> : vector<16x256xf32>
    %482 = tpu.matmul %477, %478, %cst_148 {dimension_numbers = #tpu.dot_dimension_numbers<[1], [0], [0], [1], [0, 0, 1, 1], [], []>} : vector<16x74xf32>, vector<74x256xf32>, vector<16x256xf32> -> vector<16x256xf32>
    %483 = vector.broadcast %481 : vector<1x256xf32> to vector<16x256xf32>
    %484 = arith.addf %482, %483 : vector<16x256xf32>
    %cst_149 = arith.constant dense<0.000000e+00> : vector<16x256xf32>
    %485 = tpu.matmul %477, %479, %cst_149 {dimension_numbers = #tpu.dot_dimension_numbers<[1], [0], [0], [1], [0, 0, 1, 1], [], []>} : vector<16x74xf32>, vector<74x256xf32>, vector<16x256xf32> -> vector<16x256xf32>
    %cst_150 = arith.constant 0.000000e+00 : f32
    %486 = vector.broadcast %cst_150 : f32 to vector<2x64xf32>
    %cst_151 = arith.constant 0.000000e+00 : f32
    %487 = vector.broadcast %cst_151 : f32 to vector<2x64xf32>
    %488 = vector.extract_strided_slice %484 {offsets = [0, 0], sizes = [2, 256], strides = [1, 1]} : vector<16x256xf32> to vector<2x256xf32>
    %489 = vector.extract_strided_slice %485 {offsets = [14, 0], sizes = [2, 256], strides = [1, 1]} : vector<16x256xf32> to vector<2x256xf32>
    %490 = arith.addf %488, %489 : vector<2x256xf32>
    %cst_152 = arith.constant dense<0.000000e+00> : vector<2x256xf32>
    %491 = tpu.matmul %486, %480, %cst_152 {dimension_numbers = #tpu.dot_dimension_numbers<[1], [0], [0], [1], [0, 0, 1, 1], [], []>} : vector<2x64xf32>, vector<64x256xf32>, vector<2x256xf32> -> vector<2x256xf32>
    %492 = arith.addf %490, %491 : vector<2x256xf32>
    %493 = vector.extract_strided_slice %492 {offsets = [0, 0], sizes = [2, 192], strides = [1, 1]} : vector<2x256xf32> to vector<2x192xf32>
    %494 = arith.negf %493 : vector<2x192xf32>
    %495 = math.exp %494 : vector<2x192xf32>
    %cst_153 = arith.constant 1.000000e+00 : f32
    %496 = vector.broadcast %cst_153 : f32 to vector<2x192xf32>
    %497 = arith.addf %496, %495 : vector<2x192xf32>
    %498 = arith.divf %496, %497 : vector<2x192xf32>
    %499 = vector.extract_strided_slice %492 {offsets = [0, 192], sizes = [2, 64], strides = [1, 1]} : vector<2x256xf32> to vector<2x64xf32>
    %500 = math.tanh %499 : vector<2x64xf32>
    %501 = vector.extract_strided_slice %498 {offsets = [0, 64], sizes = [2, 64], strides = [1, 1]} : vector<2x192xf32> to vector<2x64xf32>
    %502 = arith.mulf %501, %487 : vector<2x64xf32>
    %503 = vector.extract_strided_slice %498 {offsets = [0, 0], sizes = [2, 64], strides = [1, 1]} : vector<2x192xf32> to vector<2x64xf32>
    %504 = arith.mulf %503, %500 : vector<2x64xf32>
    %505 = arith.addf %502, %504 : vector<2x64xf32>
    %506 = vector.extract_strided_slice %498 {offsets = [0, 128], sizes = [2, 64], strides = [1, 1]} : vector<2x192xf32> to vector<2x64xf32>
    %507 = math.tanh %505 : vector<2x64xf32>
    %508 = arith.mulf %506, %507 : vector<2x64xf32>
    %509 = vector.extract_strided_slice %508 {offsets = [0, 0], sizes = [2, 32], strides = [1, 1]} : vector<2x64xf32> to vector<2x32xf32>
    %c0_154 = arith.constant 0 : index
    %c0_155 = arith.constant 0 : index
    %510 = vector.load %arg30[%c0_154, %c0_155] : memref<16x32xf32, #tpu.memory_space<vmem>>, vector<2x32xf32>
    tpu.vector_store %arg30[%c0_154, %c0_155], %509 {strides = array<i32>} : memref<16x32xf32, #tpu.memory_space<vmem>>, vector<2x32xf32>,
    %511 = vector.extract_strided_slice %508 {offsets = [0, 32], sizes = [2, 32], strides = [1, 1]} : vector<2x64xf32> to vector<2x32xf32>
    %c14_156 = arith.constant 14 : index
    %c0_157 = arith.constant 0 : index
    %512 = vector.load %arg31[%c14_156, %c0_157] : memref<16x32xf32, #tpu.memory_space<vmem>>, vector<2x32xf32>
    tpu.vector_store %arg31[%c14_156, %c0_157], %511 {strides = array<i32>} : memref<16x32xf32, #tpu.memory_space<vmem>>, vector<2x32xf32>,
    %513 = vector.extract_strided_slice %484 {offsets = [2, 0], sizes = [2, 256], strides = [1, 1]} : vector<16x256xf32> to vector<2x256xf32>
    %514 = vector.extract_strided_slice %485 {offsets = [12, 0], sizes = [2, 256], strides = [1, 1]} : vector<16x256xf32> to vector<2x256xf32>
    %515 = arith.addf %513, %514 : vector<2x256xf32>
    %cst_158 = arith.constant dense<0.000000e+00> : vector<2x256xf32>
    %516 = tpu.matmul %508, %480, %cst_158 {dimension_numbers = #tpu.dot_dimension_numbers<[1], [0], [0], [1], [0, 0, 1, 1], [], []>} : vector<2x64xf32>, vector<64x256xf32>, vector<2x256xf32> -> vector<2x256xf32>
    %517 = arith.addf %515, %516 : vector<2x256xf32>
    %518 = vector.extract_strided_slice %517 {offsets = [0, 0], sizes = [2, 192], strides = [1, 1]} : vector<2x256xf32> to vector<2x192xf32>
    %519 = arith.negf %518 : vector<2x192xf32>
    %520 = math.exp %519 : vector<2x192xf32>
    %cst_159 = arith.constant 1.000000e+00 : f32
    %521 = vector.broadcast %cst_159 : f32 to vector<2x192xf32>
    %522 = arith.addf %521, %520 : vector<2x192xf32>
    %523 = arith.divf %521, %522 : vector<2x192xf32>
    %524 = vector.extract_strided_slice %517 {offsets = [0, 192], sizes = [2, 64], strides = [1, 1]} : vector<2x256xf32> to vector<2x64xf32>
    %525 = math.tanh %524 : vector<2x64xf32>
    %526 = vector.extract_strided_slice %523 {offsets = [0, 64], sizes = [2, 64], strides = [1, 1]} : vector<2x192xf32> to vector<2x64xf32>
    %527 = arith.mulf %526, %505 : vector<2x64xf32>
    %528 = vector.extract_strided_slice %523 {offsets = [0, 0], sizes = [2, 64], strides = [1, 1]} : vector<2x192xf32> to vector<2x64xf32>
    %529 = arith.mulf %528, %525 : vector<2x64xf32>
    %530 = arith.addf %527, %529 : vector<2x64xf32>
    %531 = vector.extract_strided_slice %523 {offsets = [0, 128], sizes = [2, 64], strides = [1, 1]} : vector<2x192xf32> to vector<2x64xf32>
    %532 = math.tanh %530 : vector<2x64xf32>
    %533 = arith.mulf %531, %532 : vector<2x64xf32>
    %534 = vector.extract_strided_slice %533 {offsets = [0, 0], sizes = [2, 32], strides = [1, 1]} : vector<2x64xf32> to vector<2x32xf32>
    %c2_160 = arith.constant 2 : index
    %c0_161 = arith.constant 0 : index
    %535 = vector.load %arg30[%c2_160, %c0_161] : memref<16x32xf32, #tpu.memory_space<vmem>>, vector<2x32xf32>
    tpu.vector_store %arg30[%c2_160, %c0_161], %534 {strides = array<i32>} : memref<16x32xf32, #tpu.memory_space<vmem>>, vector<2x32xf32>,
    %536 = vector.extract_strided_slice %533 {offsets = [0, 32], sizes = [2, 32], strides = [1, 1]} : vector<2x64xf32> to vector<2x32xf32>
    %c12_162 = arith.constant 12 : index
    %c0_163 = arith.constant 0 : index
    %537 = vector.load %arg31[%c12_162, %c0_163] : memref<16x32xf32, #tpu.memory_space<vmem>>, vector<2x32xf32>
    tpu.vector_store %arg31[%c12_162, %c0_163], %536 {strides = array<i32>} : memref<16x32xf32, #tpu.memory_space<vmem>>, vector<2x32xf32>,
    %538 = vector.extract_strided_slice %484 {offsets = [4, 0], sizes = [2, 256], strides = [1, 1]} : vector<16x256xf32> to vector<2x256xf32>
    %539 = vector.extract_strided_slice %485 {offsets = [10, 0], sizes = [2, 256], strides = [1, 1]} : vector<16x256xf32> to vector<2x256xf32>
    %540 = arith.addf %538, %539 : vector<2x256xf32>
    %cst_164 = arith.constant dense<0.000000e+00> : vector<2x256xf32>
    %541 = tpu.matmul %533, %480, %cst_164 {dimension_numbers = #tpu.dot_dimension_numbers<[1], [0], [0], [1], [0, 0, 1, 1], [], []>} : vector<2x64xf32>, vector<64x256xf32>, vector<2x256xf32> -> vector<2x256xf32>
    %542 = arith.addf %540, %541 : vector<2x256xf32>
    %543 = vector.extract_strided_slice %542 {offsets = [0, 0], sizes = [2, 192], strides = [1, 1]} : vector<2x256xf32> to vector<2x192xf32>
    %544 = arith.negf %543 : vector<2x192xf32>
    %545 = math.exp %544 : vector<2x192xf32>
    %cst_165 = arith.constant 1.000000e+00 : f32
    %546 = vector.broadcast %cst_165 : f32 to vector<2x192xf32>
    %547 = arith.addf %546, %545 : vector<2x192xf32>
    %548 = arith.divf %546, %547 : vector<2x192xf32>
    %549 = vector.extract_strided_slice %542 {offsets = [0, 192], sizes = [2, 64], strides = [1, 1]} : vector<2x256xf32> to vector<2x64xf32>
    %550 = math.tanh %549 : vector<2x64xf32>
    %551 = vector.extract_strided_slice %548 {offsets = [0, 64], sizes = [2, 64], strides = [1, 1]} : vector<2x192xf32> to vector<2x64xf32>
    %552 = arith.mulf %551, %530 : vector<2x64xf32>
    %553 = vector.extract_strided_slice %548 {offsets = [0, 0], sizes = [2, 64], strides = [1, 1]} : vector<2x192xf32> to vector<2x64xf32>
    %554 = arith.mulf %553, %550 : vector<2x64xf32>
    %555 = arith.addf %552, %554 : vector<2x64xf32>
    %556 = vector.extract_strided_slice %548 {offsets = [0, 128], sizes = [2, 64], strides = [1, 1]} : vector<2x192xf32> to vector<2x64xf32>
    %557 = math.tanh %555 : vector<2x64xf32>
    %558 = arith.mulf %556, %557 : vector<2x64xf32>
    %559 = vector.extract_strided_slice %558 {offsets = [0, 0], sizes = [2, 32], strides = [1, 1]} : vector<2x64xf32> to vector<2x32xf32>
    %c4_166 = arith.constant 4 : index
    %c0_167 = arith.constant 0 : index
    %560 = vector.load %arg30[%c4_166, %c0_167] : memref<16x32xf32, #tpu.memory_space<vmem>>, vector<2x32xf32>
    tpu.vector_store %arg30[%c4_166, %c0_167], %559 {strides = array<i32>} : memref<16x32xf32, #tpu.memory_space<vmem>>, vector<2x32xf32>,
    %561 = vector.extract_strided_slice %558 {offsets = [0, 32], sizes = [2, 32], strides = [1, 1]} : vector<2x64xf32> to vector<2x32xf32>
    %c10_168 = arith.constant 10 : index
    %c0_169 = arith.constant 0 : index
    %562 = vector.load %arg31[%c10_168, %c0_169] : memref<16x32xf32, #tpu.memory_space<vmem>>, vector<2x32xf32>
    tpu.vector_store %arg31[%c10_168, %c0_169], %561 {strides = array<i32>} : memref<16x32xf32, #tpu.memory_space<vmem>>, vector<2x32xf32>,
    %563 = vector.extract_strided_slice %484 {offsets = [6, 0], sizes = [2, 256], strides = [1, 1]} : vector<16x256xf32> to vector<2x256xf32>
    %564 = vector.extract_strided_slice %485 {offsets = [8, 0], sizes = [2, 256], strides = [1, 1]} : vector<16x256xf32> to vector<2x256xf32>
    %565 = arith.addf %563, %564 : vector<2x256xf32>
    %cst_170 = arith.constant dense<0.000000e+00> : vector<2x256xf32>
    %566 = tpu.matmul %558, %480, %cst_170 {dimension_numbers = #tpu.dot_dimension_numbers<[1], [0], [0], [1], [0, 0, 1, 1], [], []>} : vector<2x64xf32>, vector<64x256xf32>, vector<2x256xf32> -> vector<2x256xf32>
    %567 = arith.addf %565, %566 : vector<2x256xf32>
    %568 = vector.extract_strided_slice %567 {offsets = [0, 0], sizes = [2, 192], strides = [1, 1]} : vector<2x256xf32> to vector<2x192xf32>
    %569 = arith.negf %568 : vector<2x192xf32>
    %570 = math.exp %569 : vector<2x192xf32>
    %cst_171 = arith.constant 1.000000e+00 : f32
    %571 = vector.broadcast %cst_171 : f32 to vector<2x192xf32>
    %572 = arith.addf %571, %570 : vector<2x192xf32>
    %573 = arith.divf %571, %572 : vector<2x192xf32>
    %574 = vector.extract_strided_slice %567 {offsets = [0, 192], sizes = [2, 64], strides = [1, 1]} : vector<2x256xf32> to vector<2x64xf32>
    %575 = math.tanh %574 : vector<2x64xf32>
    %576 = vector.extract_strided_slice %573 {offsets = [0, 64], sizes = [2, 64], strides = [1, 1]} : vector<2x192xf32> to vector<2x64xf32>
    %577 = arith.mulf %576, %555 : vector<2x64xf32>
    %578 = vector.extract_strided_slice %573 {offsets = [0, 0], sizes = [2, 64], strides = [1, 1]} : vector<2x192xf32> to vector<2x64xf32>
    %579 = arith.mulf %578, %575 : vector<2x64xf32>
    %580 = arith.addf %577, %579 : vector<2x64xf32>
    %581 = vector.extract_strided_slice %573 {offsets = [0, 128], sizes = [2, 64], strides = [1, 1]} : vector<2x192xf32> to vector<2x64xf32>
    %582 = math.tanh %580 : vector<2x64xf32>
    %583 = arith.mulf %581, %582 : vector<2x64xf32>
    %584 = vector.extract_strided_slice %583 {offsets = [0, 0], sizes = [2, 32], strides = [1, 1]} : vector<2x64xf32> to vector<2x32xf32>
    %c6_172 = arith.constant 6 : index
    %c0_173 = arith.constant 0 : index
    %585 = vector.load %arg30[%c6_172, %c0_173] : memref<16x32xf32, #tpu.memory_space<vmem>>, vector<2x32xf32>
    tpu.vector_store %arg30[%c6_172, %c0_173], %584 {strides = array<i32>} : memref<16x32xf32, #tpu.memory_space<vmem>>, vector<2x32xf32>,
    %586 = vector.extract_strided_slice %583 {offsets = [0, 32], sizes = [2, 32], strides = [1, 1]} : vector<2x64xf32> to vector<2x32xf32>
    %c8_174 = arith.constant 8 : index
    %c0_175 = arith.constant 0 : index
    %587 = vector.load %arg31[%c8_174, %c0_175] : memref<16x32xf32, #tpu.memory_space<vmem>>, vector<2x32xf32>
    tpu.vector_store %arg31[%c8_174, %c0_175], %586 {strides = array<i32>} : memref<16x32xf32, #tpu.memory_space<vmem>>, vector<2x32xf32>,
    %588 = vector.extract_strided_slice %484 {offsets = [8, 0], sizes = [2, 256], strides = [1, 1]} : vector<16x256xf32> to vector<2x256xf32>
    %589 = vector.extract_strided_slice %485 {offsets = [6, 0], sizes = [2, 256], strides = [1, 1]} : vector<16x256xf32> to vector<2x256xf32>
    %590 = arith.addf %588, %589 : vector<2x256xf32>
    %cst_176 = arith.constant dense<0.000000e+00> : vector<2x256xf32>
    %591 = tpu.matmul %583, %480, %cst_176 {dimension_numbers = #tpu.dot_dimension_numbers<[1], [0], [0], [1], [0, 0, 1, 1], [], []>} : vector<2x64xf32>, vector<64x256xf32>, vector<2x256xf32> -> vector<2x256xf32>
    %592 = arith.addf %590, %591 : vector<2x256xf32>
    %593 = vector.extract_strided_slice %592 {offsets = [0, 0], sizes = [2, 192], strides = [1, 1]} : vector<2x256xf32> to vector<2x192xf32>
    %594 = arith.negf %593 : vector<2x192xf32>
    %595 = math.exp %594 : vector<2x192xf32>
    %cst_177 = arith.constant 1.000000e+00 : f32
    %596 = vector.broadcast %cst_177 : f32 to vector<2x192xf32>
    %597 = arith.addf %596, %595 : vector<2x192xf32>
    %598 = arith.divf %596, %597 : vector<2x192xf32>
    %599 = vector.extract_strided_slice %592 {offsets = [0, 192], sizes = [2, 64], strides = [1, 1]} : vector<2x256xf32> to vector<2x64xf32>
    %600 = math.tanh %599 : vector<2x64xf32>
    %601 = vector.extract_strided_slice %598 {offsets = [0, 64], sizes = [2, 64], strides = [1, 1]} : vector<2x192xf32> to vector<2x64xf32>
    %602 = arith.mulf %601, %580 : vector<2x64xf32>
    %603 = vector.extract_strided_slice %598 {offsets = [0, 0], sizes = [2, 64], strides = [1, 1]} : vector<2x192xf32> to vector<2x64xf32>
    %604 = arith.mulf %603, %600 : vector<2x64xf32>
    %605 = arith.addf %602, %604 : vector<2x64xf32>
    %606 = vector.extract_strided_slice %598 {offsets = [0, 128], sizes = [2, 64], strides = [1, 1]} : vector<2x192xf32> to vector<2x64xf32>
    %607 = math.tanh %605 : vector<2x64xf32>
    %608 = arith.mulf %606, %607 : vector<2x64xf32>
    %609 = vector.extract_strided_slice %608 {offsets = [0, 0], sizes = [2, 32], strides = [1, 1]} : vector<2x64xf32> to vector<2x32xf32>
    %c8_178 = arith.constant 8 : index
    %c0_179 = arith.constant 0 : index
    %610 = vector.load %arg30[%c8_178, %c0_179] : memref<16x32xf32, #tpu.memory_space<vmem>>, vector<2x32xf32>
    tpu.vector_store %arg30[%c8_178, %c0_179], %609 {strides = array<i32>} : memref<16x32xf32, #tpu.memory_space<vmem>>, vector<2x32xf32>,
    %611 = vector.extract_strided_slice %608 {offsets = [0, 32], sizes = [2, 32], strides = [1, 1]} : vector<2x64xf32> to vector<2x32xf32>
    %c6_180 = arith.constant 6 : index
    %c0_181 = arith.constant 0 : index
    %612 = vector.load %arg31[%c6_180, %c0_181] : memref<16x32xf32, #tpu.memory_space<vmem>>, vector<2x32xf32>
    tpu.vector_store %arg31[%c6_180, %c0_181], %611 {strides = array<i32>} : memref<16x32xf32, #tpu.memory_space<vmem>>, vector<2x32xf32>,
    %613 = vector.extract_strided_slice %484 {offsets = [10, 0], sizes = [2, 256], strides = [1, 1]} : vector<16x256xf32> to vector<2x256xf32>
    %614 = vector.extract_strided_slice %485 {offsets = [4, 0], sizes = [2, 256], strides = [1, 1]} : vector<16x256xf32> to vector<2x256xf32>
    %615 = arith.addf %613, %614 : vector<2x256xf32>
    %cst_182 = arith.constant dense<0.000000e+00> : vector<2x256xf32>
    %616 = tpu.matmul %608, %480, %cst_182 {dimension_numbers = #tpu.dot_dimension_numbers<[1], [0], [0], [1], [0, 0, 1, 1], [], []>} : vector<2x64xf32>, vector<64x256xf32>, vector<2x256xf32> -> vector<2x256xf32>
    %617 = arith.addf %615, %616 : vector<2x256xf32>
    %618 = vector.extract_strided_slice %617 {offsets = [0, 0], sizes = [2, 192], strides = [1, 1]} : vector<2x256xf32> to vector<2x192xf32>
    %619 = arith.negf %618 : vector<2x192xf32>
    %620 = math.exp %619 : vector<2x192xf32>
    %cst_183 = arith.constant 1.000000e+00 : f32
    %621 = vector.broadcast %cst_183 : f32 to vector<2x192xf32>
    %622 = arith.addf %621, %620 : vector<2x192xf32>
    %623 = arith.divf %621, %622 : vector<2x192xf32>
    %624 = vector.extract_strided_slice %617 {offsets = [0, 192], sizes = [2, 64], strides = [1, 1]} : vector<2x256xf32> to vector<2x64xf32>
    %625 = math.tanh %624 : vector<2x64xf32>
    %626 = vector.extract_strided_slice %623 {offsets = [0, 64], sizes = [2, 64], strides = [1, 1]} : vector<2x192xf32> to vector<2x64xf32>
    %627 = arith.mulf %626, %605 : vector<2x64xf32>
    %628 = vector.extract_strided_slice %623 {offsets = [0, 0], sizes = [2, 64], strides = [1, 1]} : vector<2x192xf32> to vector<2x64xf32>
    %629 = arith.mulf %628, %625 : vector<2x64xf32>
    %630 = arith.addf %627, %629 : vector<2x64xf32>
    %631 = vector.extract_strided_slice %623 {offsets = [0, 128], sizes = [2, 64], strides = [1, 1]} : vector<2x192xf32> to vector<2x64xf32>
    %632 = math.tanh %630 : vector<2x64xf32>
    %633 = arith.mulf %631, %632 : vector<2x64xf32>
    %634 = vector.extract_strided_slice %633 {offsets = [0, 0], sizes = [2, 32], strides = [1, 1]} : vector<2x64xf32> to vector<2x32xf32>
    %c10_184 = arith.constant 10 : index
    %c0_185 = arith.constant 0 : index
    %635 = vector.load %arg30[%c10_184, %c0_185] : memref<16x32xf32, #tpu.memory_space<vmem>>, vector<2x32xf32>
    tpu.vector_store %arg30[%c10_184, %c0_185], %634 {strides = array<i32>} : memref<16x32xf32, #tpu.memory_space<vmem>>, vector<2x32xf32>,
    %636 = vector.extract_strided_slice %633 {offsets = [0, 32], sizes = [2, 32], strides = [1, 1]} : vector<2x64xf32> to vector<2x32xf32>
    %c4_186 = arith.constant 4 : index
    %c0_187 = arith.constant 0 : index
    %637 = vector.load %arg31[%c4_186, %c0_187] : memref<16x32xf32, #tpu.memory_space<vmem>>, vector<2x32xf32>
    tpu.vector_store %arg31[%c4_186, %c0_187], %636 {strides = array<i32>} : memref<16x32xf32, #tpu.memory_space<vmem>>, vector<2x32xf32>,
    %638 = vector.extract_strided_slice %484 {offsets = [12, 0], sizes = [2, 256], strides = [1, 1]} : vector<16x256xf32> to vector<2x256xf32>
    %639 = vector.extract_strided_slice %485 {offsets = [2, 0], sizes = [2, 256], strides = [1, 1]} : vector<16x256xf32> to vector<2x256xf32>
    %640 = arith.addf %638, %639 : vector<2x256xf32>
    %cst_188 = arith.constant dense<0.000000e+00> : vector<2x256xf32>
    %641 = tpu.matmul %633, %480, %cst_188 {dimension_numbers = #tpu.dot_dimension_numbers<[1], [0], [0], [1], [0, 0, 1, 1], [], []>} : vector<2x64xf32>, vector<64x256xf32>, vector<2x256xf32> -> vector<2x256xf32>
    %642 = arith.addf %640, %641 : vector<2x256xf32>
    %643 = vector.extract_strided_slice %642 {offsets = [0, 0], sizes = [2, 192], strides = [1, 1]} : vector<2x256xf32> to vector<2x192xf32>
    %644 = arith.negf %643 : vector<2x192xf32>
    %645 = math.exp %644 : vector<2x192xf32>
    %cst_189 = arith.constant 1.000000e+00 : f32
    %646 = vector.broadcast %cst_189 : f32 to vector<2x192xf32>
    %647 = arith.addf %646, %645 : vector<2x192xf32>
    %648 = arith.divf %646, %647 : vector<2x192xf32>
    %649 = vector.extract_strided_slice %642 {offsets = [0, 192], sizes = [2, 64], strides = [1, 1]} : vector<2x256xf32> to vector<2x64xf32>
    %650 = math.tanh %649 : vector<2x64xf32>
    %651 = vector.extract_strided_slice %648 {offsets = [0, 64], sizes = [2, 64], strides = [1, 1]} : vector<2x192xf32> to vector<2x64xf32>
    %652 = arith.mulf %651, %630 : vector<2x64xf32>
    %653 = vector.extract_strided_slice %648 {offsets = [0, 0], sizes = [2, 64], strides = [1, 1]} : vector<2x192xf32> to vector<2x64xf32>
    %654 = arith.mulf %653, %650 : vector<2x64xf32>
    %655 = arith.addf %652, %654 : vector<2x64xf32>
    %656 = vector.extract_strided_slice %648 {offsets = [0, 128], sizes = [2, 64], strides = [1, 1]} : vector<2x192xf32> to vector<2x64xf32>
    %657 = math.tanh %655 : vector<2x64xf32>
    %658 = arith.mulf %656, %657 : vector<2x64xf32>
    %659 = vector.extract_strided_slice %658 {offsets = [0, 0], sizes = [2, 32], strides = [1, 1]} : vector<2x64xf32> to vector<2x32xf32>
    %c12_190 = arith.constant 12 : index
    %c0_191 = arith.constant 0 : index
    %660 = vector.load %arg30[%c12_190, %c0_191] : memref<16x32xf32, #tpu.memory_space<vmem>>, vector<2x32xf32>
    tpu.vector_store %arg30[%c12_190, %c0_191], %659 {strides = array<i32>} : memref<16x32xf32, #tpu.memory_space<vmem>>, vector<2x32xf32>,
    %661 = vector.extract_strided_slice %658 {offsets = [0, 32], sizes = [2, 32], strides = [1, 1]} : vector<2x64xf32> to vector<2x32xf32>
    %c2_192 = arith.constant 2 : index
    %c0_193 = arith.constant 0 : index
    %662 = vector.load %arg31[%c2_192, %c0_193] : memref<16x32xf32, #tpu.memory_space<vmem>>, vector<2x32xf32>
    tpu.vector_store %arg31[%c2_192, %c0_193], %661 {strides = array<i32>} : memref<16x32xf32, #tpu.memory_space<vmem>>, vector<2x32xf32>,
    %663 = vector.extract_strided_slice %484 {offsets = [14, 0], sizes = [2, 256], strides = [1, 1]} : vector<16x256xf32> to vector<2x256xf32>
    %664 = vector.extract_strided_slice %485 {offsets = [0, 0], sizes = [2, 256], strides = [1, 1]} : vector<16x256xf32> to vector<2x256xf32>
    %665 = arith.addf %663, %664 : vector<2x256xf32>
    %cst_194 = arith.constant dense<0.000000e+00> : vector<2x256xf32>
    %666 = tpu.matmul %658, %480, %cst_194 {dimension_numbers = #tpu.dot_dimension_numbers<[1], [0], [0], [1], [0, 0, 1, 1], [], []>} : vector<2x64xf32>, vector<64x256xf32>, vector<2x256xf32> -> vector<2x256xf32>
    %667 = arith.addf %665, %666 : vector<2x256xf32>
    %668 = vector.extract_strided_slice %667 {offsets = [0, 0], sizes = [2, 192], strides = [1, 1]} : vector<2x256xf32> to vector<2x192xf32>
    %669 = arith.negf %668 : vector<2x192xf32>
    %670 = math.exp %669 : vector<2x192xf32>
    %cst_195 = arith.constant 1.000000e+00 : f32
    %671 = vector.broadcast %cst_195 : f32 to vector<2x192xf32>
    %672 = arith.addf %671, %670 : vector<2x192xf32>
    %673 = arith.divf %671, %672 : vector<2x192xf32>
    %674 = vector.extract_strided_slice %667 {offsets = [0, 192], sizes = [2, 64], strides = [1, 1]} : vector<2x256xf32> to vector<2x64xf32>
    %675 = math.tanh %674 : vector<2x64xf32>
    %676 = vector.extract_strided_slice %673 {offsets = [0, 64], sizes = [2, 64], strides = [1, 1]} : vector<2x192xf32> to vector<2x64xf32>
    %677 = arith.mulf %676, %655 : vector<2x64xf32>
    %678 = vector.extract_strided_slice %673 {offsets = [0, 0], sizes = [2, 64], strides = [1, 1]} : vector<2x192xf32> to vector<2x64xf32>
    %679 = arith.mulf %678, %675 : vector<2x64xf32>
    %680 = arith.addf %677, %679 : vector<2x64xf32>
    %681 = vector.extract_strided_slice %673 {offsets = [0, 128], sizes = [2, 64], strides = [1, 1]} : vector<2x192xf32> to vector<2x64xf32>
    %682 = math.tanh %680 : vector<2x64xf32>
    %683 = arith.mulf %681, %682 : vector<2x64xf32>
    %684 = vector.extract_strided_slice %683 {offsets = [0, 0], sizes = [2, 32], strides = [1, 1]} : vector<2x64xf32> to vector<2x32xf32>
    %c14_196 = arith.constant 14 : index
    %c0_197 = arith.constant 0 : index
    %685 = vector.load %arg30[%c14_196, %c0_197] : memref<16x32xf32, #tpu.memory_space<vmem>>, vector<2x32xf32>
    tpu.vector_store %arg30[%c14_196, %c0_197], %684 {strides = array<i32>} : memref<16x32xf32, #tpu.memory_space<vmem>>, vector<2x32xf32>,
    %686 = vector.extract_strided_slice %683 {offsets = [0, 32], sizes = [2, 32], strides = [1, 1]} : vector<2x64xf32> to vector<2x32xf32>
    %c0_198 = arith.constant 0 : index
    %c0_199 = arith.constant 0 : index
    %687 = vector.load %arg31[%c0_198, %c0_199] : memref<16x32xf32, #tpu.memory_space<vmem>>, vector<2x32xf32>
    tpu.vector_store %arg31[%c0_198, %c0_199], %686 {strides = array<i32>} : memref<16x32xf32, #tpu.memory_space<vmem>>, vector<2x32xf32>,
    %c0_200 = arith.constant 0 : index
    %c0_201 = arith.constant 0 : index
    %688 = vector.load %arg30[%c0_200, %c0_201] : memref<16x32xf32, #tpu.memory_space<vmem>>, vector<16x32xf32>
    %c0_202 = arith.constant 0 : index
    %c0_203 = arith.constant 0 : index
    %689 = vector.load %arg31[%c0_202, %c0_203] : memref<16x32xf32, #tpu.memory_space<vmem>>, vector<16x32xf32>
    %690 = tpu.concatenate %688, %689 in 1 : vector<16x32xf32>, vector<16x32xf32> -> vector<16x64xf32>
    %c0_204 = arith.constant 0 : index
    %c0_205 = arith.constant 0 : index
    %691 = vector.load %arg19[%c0_204, %c0_205] : memref<64x256xf32, #tpu.memory_space<vmem>>, vector<64x256xf32>
    %c0_206 = arith.constant 0 : index
    %c0_207 = arith.constant 0 : index
    %692 = vector.load %arg20[%c0_206, %c0_207] : memref<64x256xf32, #tpu.memory_space<vmem>>, vector<64x256xf32>
    %c0_208 = arith.constant 0 : index
    %c0_209 = arith.constant 0 : index
    %693 = vector.load %arg21[%c0_208, %c0_209] : memref<64x256xf32, #tpu.memory_space<vmem>>, vector<64x256xf32>
    %c0_210 = arith.constant 0 : index
    %c0_211 = arith.constant 0 : index
    %694 = vector.load %arg22[%c0_210, %c0_211] : memref<1x256xf32, #tpu.memory_space<vmem>>, vector<1x256xf32>
    %cst_212 = arith.constant dense<0.000000e+00> : vector<16x256xf32>
    %695 = tpu.matmul %690, %691, %cst_212 {dimension_numbers = #tpu.dot_dimension_numbers<[1], [0], [0], [1], [0, 0, 1, 1], [], []>} : vector<16x64xf32>, vector<64x256xf32>, vector<16x256xf32> -> vector<16x256xf32>
    %696 = vector.broadcast %694 : vector<1x256xf32> to vector<16x256xf32>
    %697 = arith.addf %695, %696 : vector<16x256xf32>
    %cst_213 = arith.constant dense<0.000000e+00> : vector<16x256xf32>
    %698 = tpu.matmul %690, %692, %cst_213 {dimension_numbers = #tpu.dot_dimension_numbers<[1], [0], [0], [1], [0, 0, 1, 1], [], []>} : vector<16x64xf32>, vector<64x256xf32>, vector<16x256xf32> -> vector<16x256xf32>
    %cst_214 = arith.constant 0.000000e+00 : f32
    %699 = vector.broadcast %cst_214 : f32 to vector<2x64xf32>
    %cst_215 = arith.constant 0.000000e+00 : f32
    %700 = vector.broadcast %cst_215 : f32 to vector<2x64xf32>
    %701 = vector.extract_strided_slice %697 {offsets = [0, 0], sizes = [2, 256], strides = [1, 1]} : vector<16x256xf32> to vector<2x256xf32>
    %702 = vector.extract_strided_slice %698 {offsets = [14, 0], sizes = [2, 256], strides = [1, 1]} : vector<16x256xf32> to vector<2x256xf32>
    %703 = arith.addf %701, %702 : vector<2x256xf32>
    %cst_216 = arith.constant dense<0.000000e+00> : vector<2x256xf32>
    %704 = tpu.matmul %699, %693, %cst_216 {dimension_numbers = #tpu.dot_dimension_numbers<[1], [0], [0], [1], [0, 0, 1, 1], [], []>} : vector<2x64xf32>, vector<64x256xf32>, vector<2x256xf32> -> vector<2x256xf32>
    %705 = arith.addf %703, %704 : vector<2x256xf32>
    %706 = vector.extract_strided_slice %705 {offsets = [0, 0], sizes = [2, 192], strides = [1, 1]} : vector<2x256xf32> to vector<2x192xf32>
    %707 = arith.negf %706 : vector<2x192xf32>
    %708 = math.exp %707 : vector<2x192xf32>
    %cst_217 = arith.constant 1.000000e+00 : f32
    %709 = vector.broadcast %cst_217 : f32 to vector<2x192xf32>
    %710 = arith.addf %709, %708 : vector<2x192xf32>
    %711 = arith.divf %709, %710 : vector<2x192xf32>
    %712 = vector.extract_strided_slice %705 {offsets = [0, 192], sizes = [2, 64], strides = [1, 1]} : vector<2x256xf32> to vector<2x64xf32>
    %713 = math.tanh %712 : vector<2x64xf32>
    %714 = vector.extract_strided_slice %711 {offsets = [0, 64], sizes = [2, 64], strides = [1, 1]} : vector<2x192xf32> to vector<2x64xf32>
    %715 = arith.mulf %714, %700 : vector<2x64xf32>
    %716 = vector.extract_strided_slice %711 {offsets = [0, 0], sizes = [2, 64], strides = [1, 1]} : vector<2x192xf32> to vector<2x64xf32>
    %717 = arith.mulf %716, %713 : vector<2x64xf32>
    %718 = arith.addf %715, %717 : vector<2x64xf32>
    %719 = vector.extract_strided_slice %711 {offsets = [0, 128], sizes = [2, 64], strides = [1, 1]} : vector<2x192xf32> to vector<2x64xf32>
    %720 = math.tanh %718 : vector<2x64xf32>
    %721 = arith.mulf %719, %720 : vector<2x64xf32>
    %722 = vector.extract_strided_slice %721 {offsets = [0, 0], sizes = [2, 32], strides = [1, 1]} : vector<2x64xf32> to vector<2x32xf32>
    %c0_218 = arith.constant 0 : index
    %c0_219 = arith.constant 0 : index
    %723 = vector.load %arg30[%c0_218, %c0_219] : memref<16x32xf32, #tpu.memory_space<vmem>>, vector<2x32xf32>
    tpu.vector_store %arg30[%c0_218, %c0_219], %722 {strides = array<i32>} : memref<16x32xf32, #tpu.memory_space<vmem>>, vector<2x32xf32>,
    %724 = vector.extract_strided_slice %721 {offsets = [0, 32], sizes = [2, 32], strides = [1, 1]} : vector<2x64xf32> to vector<2x32xf32>
    %c14_220 = arith.constant 14 : index
    %c0_221 = arith.constant 0 : index
    %725 = vector.load %arg31[%c14_220, %c0_221] : memref<16x32xf32, #tpu.memory_space<vmem>>, vector<2x32xf32>
    tpu.vector_store %arg31[%c14_220, %c0_221], %724 {strides = array<i32>} : memref<16x32xf32, #tpu.memory_space<vmem>>, vector<2x32xf32>,
    %726 = vector.extract_strided_slice %697 {offsets = [2, 0], sizes = [2, 256], strides = [1, 1]} : vector<16x256xf32> to vector<2x256xf32>
    %727 = vector.extract_strided_slice %698 {offsets = [12, 0], sizes = [2, 256], strides = [1, 1]} : vector<16x256xf32> to vector<2x256xf32>
    %728 = arith.addf %726, %727 : vector<2x256xf32>
    %cst_222 = arith.constant dense<0.000000e+00> : vector<2x256xf32>
    %729 = tpu.matmul %721, %693, %cst_222 {dimension_numbers = #tpu.dot_dimension_numbers<[1], [0], [0], [1], [0, 0, 1, 1], [], []>} : vector<2x64xf32>, vector<64x256xf32>, vector<2x256xf32> -> vector<2x256xf32>
    %730 = arith.addf %728, %729 : vector<2x256xf32>
    %731 = vector.extract_strided_slice %730 {offsets = [0, 0], sizes = [2, 192], strides = [1, 1]} : vector<2x256xf32> to vector<2x192xf32>
    %732 = arith.negf %731 : vector<2x192xf32>
    %733 = math.exp %732 : vector<2x192xf32>
    %cst_223 = arith.constant 1.000000e+00 : f32
    %734 = vector.broadcast %cst_223 : f32 to vector<2x192xf32>
    %735 = arith.addf %734, %733 : vector<2x192xf32>
    %736 = arith.divf %734, %735 : vector<2x192xf32>
    %737 = vector.extract_strided_slice %730 {offsets = [0, 192], sizes = [2, 64], strides = [1, 1]} : vector<2x256xf32> to vector<2x64xf32>
    %738 = math.tanh %737 : vector<2x64xf32>
    %739 = vector.extract_strided_slice %736 {offsets = [0, 64], sizes = [2, 64], strides = [1, 1]} : vector<2x192xf32> to vector<2x64xf32>
    %740 = arith.mulf %739, %718 : vector<2x64xf32>
    %741 = vector.extract_strided_slice %736 {offsets = [0, 0], sizes = [2, 64], strides = [1, 1]} : vector<2x192xf32> to vector<2x64xf32>
    %742 = arith.mulf %741, %738 : vector<2x64xf32>
    %743 = arith.addf %740, %742 : vector<2x64xf32>
    %744 = vector.extract_strided_slice %736 {offsets = [0, 128], sizes = [2, 64], strides = [1, 1]} : vector<2x192xf32> to vector<2x64xf32>
    %745 = math.tanh %743 : vector<2x64xf32>
    %746 = arith.mulf %744, %745 : vector<2x64xf32>
    %747 = vector.extract_strided_slice %746 {offsets = [0, 0], sizes = [2, 32], strides = [1, 1]} : vector<2x64xf32> to vector<2x32xf32>
    %c2_224 = arith.constant 2 : index
    %c0_225 = arith.constant 0 : index
    %748 = vector.load %arg30[%c2_224, %c0_225] : memref<16x32xf32, #tpu.memory_space<vmem>>, vector<2x32xf32>
    tpu.vector_store %arg30[%c2_224, %c0_225], %747 {strides = array<i32>} : memref<16x32xf32, #tpu.memory_space<vmem>>, vector<2x32xf32>,
    %749 = vector.extract_strided_slice %746 {offsets = [0, 32], sizes = [2, 32], strides = [1, 1]} : vector<2x64xf32> to vector<2x32xf32>
    %c12_226 = arith.constant 12 : index
    %c0_227 = arith.constant 0 : index
    %750 = vector.load %arg31[%c12_226, %c0_227] : memref<16x32xf32, #tpu.memory_space<vmem>>, vector<2x32xf32>
    tpu.vector_store %arg31[%c12_226, %c0_227], %749 {strides = array<i32>} : memref<16x32xf32, #tpu.memory_space<vmem>>, vector<2x32xf32>,
    %751 = vector.extract_strided_slice %697 {offsets = [4, 0], sizes = [2, 256], strides = [1, 1]} : vector<16x256xf32> to vector<2x256xf32>
    %752 = vector.extract_strided_slice %698 {offsets = [10, 0], sizes = [2, 256], strides = [1, 1]} : vector<16x256xf32> to vector<2x256xf32>
    %753 = arith.addf %751, %752 : vector<2x256xf32>
    %cst_228 = arith.constant dense<0.000000e+00> : vector<2x256xf32>
    %754 = tpu.matmul %746, %693, %cst_228 {dimension_numbers = #tpu.dot_dimension_numbers<[1], [0], [0], [1], [0, 0, 1, 1], [], []>} : vector<2x64xf32>, vector<64x256xf32>, vector<2x256xf32> -> vector<2x256xf32>
    %755 = arith.addf %753, %754 : vector<2x256xf32>
    %756 = vector.extract_strided_slice %755 {offsets = [0, 0], sizes = [2, 192], strides = [1, 1]} : vector<2x256xf32> to vector<2x192xf32>
    %757 = arith.negf %756 : vector<2x192xf32>
    %758 = math.exp %757 : vector<2x192xf32>
    %cst_229 = arith.constant 1.000000e+00 : f32
    %759 = vector.broadcast %cst_229 : f32 to vector<2x192xf32>
    %760 = arith.addf %759, %758 : vector<2x192xf32>
    %761 = arith.divf %759, %760 : vector<2x192xf32>
    %762 = vector.extract_strided_slice %755 {offsets = [0, 192], sizes = [2, 64], strides = [1, 1]} : vector<2x256xf32> to vector<2x64xf32>
    %763 = math.tanh %762 : vector<2x64xf32>
    %764 = vector.extract_strided_slice %761 {offsets = [0, 64], sizes = [2, 64], strides = [1, 1]} : vector<2x192xf32> to vector<2x64xf32>
    %765 = arith.mulf %764, %743 : vector<2x64xf32>
    %766 = vector.extract_strided_slice %761 {offsets = [0, 0], sizes = [2, 64], strides = [1, 1]} : vector<2x192xf32> to vector<2x64xf32>
    %767 = arith.mulf %766, %763 : vector<2x64xf32>
    %768 = arith.addf %765, %767 : vector<2x64xf32>
    %769 = vector.extract_strided_slice %761 {offsets = [0, 128], sizes = [2, 64], strides = [1, 1]} : vector<2x192xf32> to vector<2x64xf32>
    %770 = math.tanh %768 : vector<2x64xf32>
    %771 = arith.mulf %769, %770 : vector<2x64xf32>
    %772 = vector.extract_strided_slice %771 {offsets = [0, 0], sizes = [2, 32], strides = [1, 1]} : vector<2x64xf32> to vector<2x32xf32>
    %c4_230 = arith.constant 4 : index
    %c0_231 = arith.constant 0 : index
    %773 = vector.load %arg30[%c4_230, %c0_231] : memref<16x32xf32, #tpu.memory_space<vmem>>, vector<2x32xf32>
    tpu.vector_store %arg30[%c4_230, %c0_231], %772 {strides = array<i32>} : memref<16x32xf32, #tpu.memory_space<vmem>>, vector<2x32xf32>,
    %774 = vector.extract_strided_slice %771 {offsets = [0, 32], sizes = [2, 32], strides = [1, 1]} : vector<2x64xf32> to vector<2x32xf32>
    %c10_232 = arith.constant 10 : index
    %c0_233 = arith.constant 0 : index
    %775 = vector.load %arg31[%c10_232, %c0_233] : memref<16x32xf32, #tpu.memory_space<vmem>>, vector<2x32xf32>
    tpu.vector_store %arg31[%c10_232, %c0_233], %774 {strides = array<i32>} : memref<16x32xf32, #tpu.memory_space<vmem>>, vector<2x32xf32>,
    %776 = vector.extract_strided_slice %697 {offsets = [6, 0], sizes = [2, 256], strides = [1, 1]} : vector<16x256xf32> to vector<2x256xf32>
    %777 = vector.extract_strided_slice %698 {offsets = [8, 0], sizes = [2, 256], strides = [1, 1]} : vector<16x256xf32> to vector<2x256xf32>
    %778 = arith.addf %776, %777 : vector<2x256xf32>
    %cst_234 = arith.constant dense<0.000000e+00> : vector<2x256xf32>
    %779 = tpu.matmul %771, %693, %cst_234 {dimension_numbers = #tpu.dot_dimension_numbers<[1], [0], [0], [1], [0, 0, 1, 1], [], []>} : vector<2x64xf32>, vector<64x256xf32>, vector<2x256xf32> -> vector<2x256xf32>
    %780 = arith.addf %778, %779 : vector<2x256xf32>
    %781 = vector.extract_strided_slice %780 {offsets = [0, 0], sizes = [2, 192], strides = [1, 1]} : vector<2x256xf32> to vector<2x192xf32>
    %782 = arith.negf %781 : vector<2x192xf32>
    %783 = math.exp %782 : vector<2x192xf32>
    %cst_235 = arith.constant 1.000000e+00 : f32
    %784 = vector.broadcast %cst_235 : f32 to vector<2x192xf32>
    %785 = arith.addf %784, %783 : vector<2x192xf32>
    %786 = arith.divf %784, %785 : vector<2x192xf32>
    %787 = vector.extract_strided_slice %780 {offsets = [0, 192], sizes = [2, 64], strides = [1, 1]} : vector<2x256xf32> to vector<2x64xf32>
    %788 = math.tanh %787 : vector<2x64xf32>
    %789 = vector.extract_strided_slice %786 {offsets = [0, 64], sizes = [2, 64], strides = [1, 1]} : vector<2x192xf32> to vector<2x64xf32>
    %790 = arith.mulf %789, %768 : vector<2x64xf32>
    %791 = vector.extract_strided_slice %786 {offsets = [0, 0], sizes = [2, 64], strides = [1, 1]} : vector<2x192xf32> to vector<2x64xf32>
    %792 = arith.mulf %791, %788 : vector<2x64xf32>
    %793 = arith.addf %790, %792 : vector<2x64xf32>
    %794 = vector.extract_strided_slice %786 {offsets = [0, 128], sizes = [2, 64], strides = [1, 1]} : vector<2x192xf32> to vector<2x64xf32>
    %795 = math.tanh %793 : vector<2x64xf32>
    %796 = arith.mulf %794, %795 : vector<2x64xf32>
    %797 = vector.extract_strided_slice %796 {offsets = [0, 0], sizes = [2, 32], strides = [1, 1]} : vector<2x64xf32> to vector<2x32xf32>
    %c6_236 = arith.constant 6 : index
    %c0_237 = arith.constant 0 : index
    %798 = vector.load %arg30[%c6_236, %c0_237] : memref<16x32xf32, #tpu.memory_space<vmem>>, vector<2x32xf32>
    tpu.vector_store %arg30[%c6_236, %c0_237], %797 {strides = array<i32>} : memref<16x32xf32, #tpu.memory_space<vmem>>, vector<2x32xf32>,
    %799 = vector.extract_strided_slice %796 {offsets = [0, 32], sizes = [2, 32], strides = [1, 1]} : vector<2x64xf32> to vector<2x32xf32>
    %c8_238 = arith.constant 8 : index
    %c0_239 = arith.constant 0 : index
    %800 = vector.load %arg31[%c8_238, %c0_239] : memref<16x32xf32, #tpu.memory_space<vmem>>, vector<2x32xf32>
    tpu.vector_store %arg31[%c8_238, %c0_239], %799 {strides = array<i32>} : memref<16x32xf32, #tpu.memory_space<vmem>>, vector<2x32xf32>,
    %801 = vector.extract_strided_slice %697 {offsets = [8, 0], sizes = [2, 256], strides = [1, 1]} : vector<16x256xf32> to vector<2x256xf32>
    %802 = vector.extract_strided_slice %698 {offsets = [6, 0], sizes = [2, 256], strides = [1, 1]} : vector<16x256xf32> to vector<2x256xf32>
    %803 = arith.addf %801, %802 : vector<2x256xf32>
    %cst_240 = arith.constant dense<0.000000e+00> : vector<2x256xf32>
    %804 = tpu.matmul %796, %693, %cst_240 {dimension_numbers = #tpu.dot_dimension_numbers<[1], [0], [0], [1], [0, 0, 1, 1], [], []>} : vector<2x64xf32>, vector<64x256xf32>, vector<2x256xf32> -> vector<2x256xf32>
    %805 = arith.addf %803, %804 : vector<2x256xf32>
    %806 = vector.extract_strided_slice %805 {offsets = [0, 0], sizes = [2, 192], strides = [1, 1]} : vector<2x256xf32> to vector<2x192xf32>
    %807 = arith.negf %806 : vector<2x192xf32>
    %808 = math.exp %807 : vector<2x192xf32>
    %cst_241 = arith.constant 1.000000e+00 : f32
    %809 = vector.broadcast %cst_241 : f32 to vector<2x192xf32>
    %810 = arith.addf %809, %808 : vector<2x192xf32>
    %811 = arith.divf %809, %810 : vector<2x192xf32>
    %812 = vector.extract_strided_slice %805 {offsets = [0, 192], sizes = [2, 64], strides = [1, 1]} : vector<2x256xf32> to vector<2x64xf32>
    %813 = math.tanh %812 : vector<2x64xf32>
    %814 = vector.extract_strided_slice %811 {offsets = [0, 64], sizes = [2, 64], strides = [1, 1]} : vector<2x192xf32> to vector<2x64xf32>
    %815 = arith.mulf %814, %793 : vector<2x64xf32>
    %816 = vector.extract_strided_slice %811 {offsets = [0, 0], sizes = [2, 64], strides = [1, 1]} : vector<2x192xf32> to vector<2x64xf32>
    %817 = arith.mulf %816, %813 : vector<2x64xf32>
    %818 = arith.addf %815, %817 : vector<2x64xf32>
    %819 = vector.extract_strided_slice %811 {offsets = [0, 128], sizes = [2, 64], strides = [1, 1]} : vector<2x192xf32> to vector<2x64xf32>
    %820 = math.tanh %818 : vector<2x64xf32>
    %821 = arith.mulf %819, %820 : vector<2x64xf32>
    %822 = vector.extract_strided_slice %821 {offsets = [0, 0], sizes = [2, 32], strides = [1, 1]} : vector<2x64xf32> to vector<2x32xf32>
    %c8_242 = arith.constant 8 : index
    %c0_243 = arith.constant 0 : index
    %823 = vector.load %arg30[%c8_242, %c0_243] : memref<16x32xf32, #tpu.memory_space<vmem>>, vector<2x32xf32>
    tpu.vector_store %arg30[%c8_242, %c0_243], %822 {strides = array<i32>} : memref<16x32xf32, #tpu.memory_space<vmem>>, vector<2x32xf32>,
    %824 = vector.extract_strided_slice %821 {offsets = [0, 32], sizes = [2, 32], strides = [1, 1]} : vector<2x64xf32> to vector<2x32xf32>
    %c6_244 = arith.constant 6 : index
    %c0_245 = arith.constant 0 : index
    %825 = vector.load %arg31[%c6_244, %c0_245] : memref<16x32xf32, #tpu.memory_space<vmem>>, vector<2x32xf32>
    tpu.vector_store %arg31[%c6_244, %c0_245], %824 {strides = array<i32>} : memref<16x32xf32, #tpu.memory_space<vmem>>, vector<2x32xf32>,
    %826 = vector.extract_strided_slice %697 {offsets = [10, 0], sizes = [2, 256], strides = [1, 1]} : vector<16x256xf32> to vector<2x256xf32>
    %827 = vector.extract_strided_slice %698 {offsets = [4, 0], sizes = [2, 256], strides = [1, 1]} : vector<16x256xf32> to vector<2x256xf32>
    %828 = arith.addf %826, %827 : vector<2x256xf32>
    %cst_246 = arith.constant dense<0.000000e+00> : vector<2x256xf32>
    %829 = tpu.matmul %821, %693, %cst_246 {dimension_numbers = #tpu.dot_dimension_numbers<[1], [0], [0], [1], [0, 0, 1, 1], [], []>} : vector<2x64xf32>, vector<64x256xf32>, vector<2x256xf32> -> vector<2x256xf32>
    %830 = arith.addf %828, %829 : vector<2x256xf32>
    %831 = vector.extract_strided_slice %830 {offsets = [0, 0], sizes = [2, 192], strides = [1, 1]} : vector<2x256xf32> to vector<2x192xf32>
    %832 = arith.negf %831 : vector<2x192xf32>
    %833 = math.exp %832 : vector<2x192xf32>
    %cst_247 = arith.constant 1.000000e+00 : f32
    %834 = vector.broadcast %cst_247 : f32 to vector<2x192xf32>
    %835 = arith.addf %834, %833 : vector<2x192xf32>
    %836 = arith.divf %834, %835 : vector<2x192xf32>
    %837 = vector.extract_strided_slice %830 {offsets = [0, 192], sizes = [2, 64], strides = [1, 1]} : vector<2x256xf32> to vector<2x64xf32>
    %838 = math.tanh %837 : vector<2x64xf32>
    %839 = vector.extract_strided_slice %836 {offsets = [0, 64], sizes = [2, 64], strides = [1, 1]} : vector<2x192xf32> to vector<2x64xf32>
    %840 = arith.mulf %839, %818 : vector<2x64xf32>
    %841 = vector.extract_strided_slice %836 {offsets = [0, 0], sizes = [2, 64], strides = [1, 1]} : vector<2x192xf32> to vector<2x64xf32>
    %842 = arith.mulf %841, %838 : vector<2x64xf32>
    %843 = arith.addf %840, %842 : vector<2x64xf32>
    %844 = vector.extract_strided_slice %836 {offsets = [0, 128], sizes = [2, 64], strides = [1, 1]} : vector<2x192xf32> to vector<2x64xf32>
    %845 = math.tanh %843 : vector<2x64xf32>
    %846 = arith.mulf %844, %845 : vector<2x64xf32>
    %847 = vector.extract_strided_slice %846 {offsets = [0, 0], sizes = [2, 32], strides = [1, 1]} : vector<2x64xf32> to vector<2x32xf32>
    %c10_248 = arith.constant 10 : index
    %c0_249 = arith.constant 0 : index
    %848 = vector.load %arg30[%c10_248, %c0_249] : memref<16x32xf32, #tpu.memory_space<vmem>>, vector<2x32xf32>
    tpu.vector_store %arg30[%c10_248, %c0_249], %847 {strides = array<i32>} : memref<16x32xf32, #tpu.memory_space<vmem>>, vector<2x32xf32>,
    %849 = vector.extract_strided_slice %846 {offsets = [0, 32], sizes = [2, 32], strides = [1, 1]} : vector<2x64xf32> to vector<2x32xf32>
    %c4_250 = arith.constant 4 : index
    %c0_251 = arith.constant 0 : index
    %850 = vector.load %arg31[%c4_250, %c0_251] : memref<16x32xf32, #tpu.memory_space<vmem>>, vector<2x32xf32>
    tpu.vector_store %arg31[%c4_250, %c0_251], %849 {strides = array<i32>} : memref<16x32xf32, #tpu.memory_space<vmem>>, vector<2x32xf32>,
    %851 = vector.extract_strided_slice %697 {offsets = [12, 0], sizes = [2, 256], strides = [1, 1]} : vector<16x256xf32> to vector<2x256xf32>
    %852 = vector.extract_strided_slice %698 {offsets = [2, 0], sizes = [2, 256], strides = [1, 1]} : vector<16x256xf32> to vector<2x256xf32>
    %853 = arith.addf %851, %852 : vector<2x256xf32>
    %cst_252 = arith.constant dense<0.000000e+00> : vector<2x256xf32>
    %854 = tpu.matmul %846, %693, %cst_252 {dimension_numbers = #tpu.dot_dimension_numbers<[1], [0], [0], [1], [0, 0, 1, 1], [], []>} : vector<2x64xf32>, vector<64x256xf32>, vector<2x256xf32> -> vector<2x256xf32>
    %855 = arith.addf %853, %854 : vector<2x256xf32>
    %856 = vector.extract_strided_slice %855 {offsets = [0, 0], sizes = [2, 192], strides = [1, 1]} : vector<2x256xf32> to vector<2x192xf32>
    %857 = arith.negf %856 : vector<2x192xf32>
    %858 = math.exp %857 : vector<2x192xf32>
    %cst_253 = arith.constant 1.000000e+00 : f32
    %859 = vector.broadcast %cst_253 : f32 to vector<2x192xf32>
    %860 = arith.addf %859, %858 : vector<2x192xf32>
    %861 = arith.divf %859, %860 : vector<2x192xf32>
    %862 = vector.extract_strided_slice %855 {offsets = [0, 192], sizes = [2, 64], strides = [1, 1]} : vector<2x256xf32> to vector<2x64xf32>
    %863 = math.tanh %862 : vector<2x64xf32>
    %864 = vector.extract_strided_slice %861 {offsets = [0, 64], sizes = [2, 64], strides = [1, 1]} : vector<2x192xf32> to vector<2x64xf32>
    %865 = arith.mulf %864, %843 : vector<2x64xf32>
    %866 = vector.extract_strided_slice %861 {offsets = [0, 0], sizes = [2, 64], strides = [1, 1]} : vector<2x192xf32> to vector<2x64xf32>
    %867 = arith.mulf %866, %863 : vector<2x64xf32>
    %868 = arith.addf %865, %867 : vector<2x64xf32>
    %869 = vector.extract_strided_slice %861 {offsets = [0, 128], sizes = [2, 64], strides = [1, 1]} : vector<2x192xf32> to vector<2x64xf32>
    %870 = math.tanh %868 : vector<2x64xf32>
    %871 = arith.mulf %869, %870 : vector<2x64xf32>
    %872 = vector.extract_strided_slice %871 {offsets = [0, 0], sizes = [2, 32], strides = [1, 1]} : vector<2x64xf32> to vector<2x32xf32>
    %c12_254 = arith.constant 12 : index
    %c0_255 = arith.constant 0 : index
    %873 = vector.load %arg30[%c12_254, %c0_255] : memref<16x32xf32, #tpu.memory_space<vmem>>, vector<2x32xf32>
    tpu.vector_store %arg30[%c12_254, %c0_255], %872 {strides = array<i32>} : memref<16x32xf32, #tpu.memory_space<vmem>>, vector<2x32xf32>,
    %874 = vector.extract_strided_slice %871 {offsets = [0, 32], sizes = [2, 32], strides = [1, 1]} : vector<2x64xf32> to vector<2x32xf32>
    %c2_256 = arith.constant 2 : index
    %c0_257 = arith.constant 0 : index
    %875 = vector.load %arg31[%c2_256, %c0_257] : memref<16x32xf32, #tpu.memory_space<vmem>>, vector<2x32xf32>
    tpu.vector_store %arg31[%c2_256, %c0_257], %874 {strides = array<i32>} : memref<16x32xf32, #tpu.memory_space<vmem>>, vector<2x32xf32>,
    %876 = vector.extract_strided_slice %697 {offsets = [14, 0], sizes = [2, 256], strides = [1, 1]} : vector<16x256xf32> to vector<2x256xf32>
    %877 = vector.extract_strided_slice %698 {offsets = [0, 0], sizes = [2, 256], strides = [1, 1]} : vector<16x256xf32> to vector<2x256xf32>
    %878 = arith.addf %876, %877 : vector<2x256xf32>
    %cst_258 = arith.constant dense<0.000000e+00> : vector<2x256xf32>
    %879 = tpu.matmul %871, %693, %cst_258 {dimension_numbers = #tpu.dot_dimension_numbers<[1], [0], [0], [1], [0, 0, 1, 1], [], []>} : vector<2x64xf32>, vector<64x256xf32>, vector<2x256xf32> -> vector<2x256xf32>
    %880 = arith.addf %878, %879 : vector<2x256xf32>
    %881 = vector.extract_strided_slice %880 {offsets = [0, 0], sizes = [2, 192], strides = [1, 1]} : vector<2x256xf32> to vector<2x192xf32>
    %882 = arith.negf %881 : vector<2x192xf32>
    %883 = math.exp %882 : vector<2x192xf32>
    %cst_259 = arith.constant 1.000000e+00 : f32
    %884 = vector.broadcast %cst_259 : f32 to vector<2x192xf32>
    %885 = arith.addf %884, %883 : vector<2x192xf32>
    %886 = arith.divf %884, %885 : vector<2x192xf32>
    %887 = vector.extract_strided_slice %880 {offsets = [0, 192], sizes = [2, 64], strides = [1, 1]} : vector<2x256xf32> to vector<2x64xf32>
    %888 = math.tanh %887 : vector<2x64xf32>
    %889 = vector.extract_strided_slice %886 {offsets = [0, 64], sizes = [2, 64], strides = [1, 1]} : vector<2x192xf32> to vector<2x64xf32>
    %890 = arith.mulf %889, %868 : vector<2x64xf32>
    %891 = vector.extract_strided_slice %886 {offsets = [0, 0], sizes = [2, 64], strides = [1, 1]} : vector<2x192xf32> to vector<2x64xf32>
    %892 = arith.mulf %891, %888 : vector<2x64xf32>
    %893 = arith.addf %890, %892 : vector<2x64xf32>
    %894 = vector.extract_strided_slice %886 {offsets = [0, 128], sizes = [2, 64], strides = [1, 1]} : vector<2x192xf32> to vector<2x64xf32>
    %895 = math.tanh %893 : vector<2x64xf32>
    %896 = arith.mulf %894, %895 : vector<2x64xf32>
    %897 = vector.extract_strided_slice %896 {offsets = [0, 0], sizes = [2, 32], strides = [1, 1]} : vector<2x64xf32> to vector<2x32xf32>
    %c14_260 = arith.constant 14 : index
    %c0_261 = arith.constant 0 : index
    %898 = vector.load %arg30[%c14_260, %c0_261] : memref<16x32xf32, #tpu.memory_space<vmem>>, vector<2x32xf32>
    tpu.vector_store %arg30[%c14_260, %c0_261], %897 {strides = array<i32>} : memref<16x32xf32, #tpu.memory_space<vmem>>, vector<2x32xf32>,
    %899 = vector.extract_strided_slice %896 {offsets = [0, 32], sizes = [2, 32], strides = [1, 1]} : vector<2x64xf32> to vector<2x32xf32>
    %c0_262 = arith.constant 0 : index
    %c0_263 = arith.constant 0 : index
    %900 = vector.load %arg31[%c0_262, %c0_263] : memref<16x32xf32, #tpu.memory_space<vmem>>, vector<2x32xf32>
    tpu.vector_store %arg31[%c0_262, %c0_263], %899 {strides = array<i32>} : memref<16x32xf32, #tpu.memory_space<vmem>>, vector<2x32xf32>,
    %c0_264 = arith.constant 0 : index
    %c0_265 = arith.constant 0 : index
    %901 = vector.load %arg30[%c0_264, %c0_265] : memref<16x32xf32, #tpu.memory_space<vmem>>, vector<16x32xf32>
    %c0_266 = arith.constant 0 : index
    %c0_267 = arith.constant 0 : index
    %902 = vector.load %arg31[%c0_266, %c0_267] : memref<16x32xf32, #tpu.memory_space<vmem>>, vector<16x32xf32>
    %903 = tpu.concatenate %901, %902 in 1 : vector<16x32xf32>, vector<16x32xf32> -> vector<16x64xf32>
    %cst_268 = arith.constant 0.000000e+00 : f32
    %904 = vector.broadcast %cst_268 : f32 to vector<16x64xf32>
    %905 = arith.maximumf %903, %904 : vector<16x64xf32>
    %906 = tpu.concatenate %905, %477 in 1 : vector<16x64xf32>, vector<16x74xf32> -> vector<16x138xf32>
    %cst_269 = arith.constant dense<0.000000e+00> : vector<16xf32>
    %907 = vector.multi_reduction <add>, %906, %cst_269 [1] : vector<16x138xf32> to vector<16xf32>
    %908 = vector.shape_cast %907 : vector<16xf32> to vector<16x1xf32>
    %cst_270 = arith.constant 1.380000e+02 : f32
    %909 = vector.broadcast %cst_270 : f32 to vector<16x1xf32>
    %910 = arith.divf %908, %909 : vector<16x1xf32>
    %911 = vector.broadcast %910 : vector<16x1xf32> to vector<16x138xf32>
    %912 = arith.subf %906, %911 : vector<16x138xf32>
    %913 = arith.mulf %912, %912 : vector<16x138xf32>
    %cst_271 = arith.constant dense<0.000000e+00> : vector<16xf32>
    %914 = vector.multi_reduction <add>, %913, %cst_271 [1] : vector<16x138xf32> to vector<16xf32>
    %915 = vector.shape_cast %914 : vector<16xf32> to vector<16x1xf32>
    %cst_272 = arith.constant 1.380000e+02 : f32
    %916 = vector.broadcast %cst_272 : f32 to vector<16x1xf32>
    %917 = arith.divf %915, %916 : vector<16x1xf32>
    %918 = vector.broadcast %910 : vector<16x1xf32> to vector<16x138xf32>
    %919 = arith.subf %906, %918 : vector<16x138xf32>
    %cst_273 = arith.constant 9.99999974E-6 : f32
    %920 = vector.broadcast %cst_273 : f32 to vector<16x1xf32>
    %921 = arith.addf %917, %920 : vector<16x1xf32>
    %922 = math.rsqrt %921 : vector<16x1xf32>
    %923 = vector.broadcast %922 : vector<16x1xf32> to vector<16x138xf32>
    %924 = arith.mulf %919, %923 : vector<16x138xf32>
    %c0_274 = arith.constant 0 : index
    %c0_275 = arith.constant 0 : index
    %925 = vector.load %arg5[%c0_274, %c0_275] : memref<1x138xf32, #tpu.memory_space<vmem>>, vector<1x138xf32>
    %926 = vector.broadcast %925 : vector<1x138xf32> to vector<16x138xf32>
    %927 = arith.mulf %924, %926 : vector<16x138xf32>
    %c0_276 = arith.constant 0 : index
    %c0_277 = arith.constant 0 : index
    %928 = vector.load %arg6[%c0_276, %c0_277] : memref<1x138xf32, #tpu.memory_space<vmem>>, vector<1x138xf32>
    %929 = vector.broadcast %928 : vector<1x138xf32> to vector<16x138xf32>
    %930 = arith.addf %927, %929 : vector<16x138xf32>
    %c0_278 = arith.constant 0 : index
    %c0_279 = arith.constant 0 : index
    %931 = vector.load %arg23[%c0_278, %c0_279] : memref<138x256xf32, #tpu.memory_space<vmem>>, vector<138x256xf32>
    %c0_280 = arith.constant 0 : index
    %c0_281 = arith.constant 0 : index
    %932 = vector.load %arg24[%c0_280, %c0_281] : memref<138x256xf32, #tpu.memory_space<vmem>>, vector<138x256xf32>
    %c0_282 = arith.constant 0 : index
    %c0_283 = arith.constant 0 : index
    %933 = vector.load %arg25[%c0_282, %c0_283] : memref<64x256xf32, #tpu.memory_space<vmem>>, vector<64x256xf32>
    %c0_284 = arith.constant 0 : index
    %c0_285 = arith.constant 0 : index
    %934 = vector.load %arg26[%c0_284, %c0_285] : memref<1x256xf32, #tpu.memory_space<vmem>>, vector<1x256xf32>
    %cst_286 = arith.constant dense<0.000000e+00> : vector<16x256xf32>
    %935 = tpu.matmul %930, %931, %cst_286 {dimension_numbers = #tpu.dot_dimension_numbers<[1], [0], [0], [1], [0, 0, 1, 1], [], []>} : vector<16x138xf32>, vector<138x256xf32>, vector<16x256xf32> -> vector<16x256xf32>
    %936 = vector.broadcast %934 : vector<1x256xf32> to vector<16x256xf32>
    %937 = arith.addf %935, %936 : vector<16x256xf32>
    %cst_287 = arith.constant dense<0.000000e+00> : vector<16x256xf32>
    %938 = tpu.matmul %930, %932, %cst_287 {dimension_numbers = #tpu.dot_dimension_numbers<[1], [0], [0], [1], [0, 0, 1, 1], [], []>} : vector<16x138xf32>, vector<138x256xf32>, vector<16x256xf32> -> vector<16x256xf32>
    %cst_288 = arith.constant 0.000000e+00 : f32
    %939 = vector.broadcast %cst_288 : f32 to vector<2x64xf32>
    %cst_289 = arith.constant 0.000000e+00 : f32
    %940 = vector.broadcast %cst_289 : f32 to vector<2x64xf32>
    %941 = vector.extract_strided_slice %937 {offsets = [0, 0], sizes = [2, 256], strides = [1, 1]} : vector<16x256xf32> to vector<2x256xf32>
    %942 = vector.extract_strided_slice %938 {offsets = [14, 0], sizes = [2, 256], strides = [1, 1]} : vector<16x256xf32> to vector<2x256xf32>
    %943 = arith.addf %941, %942 : vector<2x256xf32>
    %cst_290 = arith.constant dense<0.000000e+00> : vector<2x256xf32>
    %944 = tpu.matmul %939, %933, %cst_290 {dimension_numbers = #tpu.dot_dimension_numbers<[1], [0], [0], [1], [0, 0, 1, 1], [], []>} : vector<2x64xf32>, vector<64x256xf32>, vector<2x256xf32> -> vector<2x256xf32>
    %945 = arith.addf %943, %944 : vector<2x256xf32>
    %946 = vector.extract_strided_slice %945 {offsets = [0, 0], sizes = [2, 192], strides = [1, 1]} : vector<2x256xf32> to vector<2x192xf32>
    %947 = arith.negf %946 : vector<2x192xf32>
    %948 = math.exp %947 : vector<2x192xf32>
    %cst_291 = arith.constant 1.000000e+00 : f32
    %949 = vector.broadcast %cst_291 : f32 to vector<2x192xf32>
    %950 = arith.addf %949, %948 : vector<2x192xf32>
    %951 = arith.divf %949, %950 : vector<2x192xf32>
    %952 = vector.extract_strided_slice %945 {offsets = [0, 192], sizes = [2, 64], strides = [1, 1]} : vector<2x256xf32> to vector<2x64xf32>
    %953 = math.tanh %952 : vector<2x64xf32>
    %954 = vector.extract_strided_slice %951 {offsets = [0, 64], sizes = [2, 64], strides = [1, 1]} : vector<2x192xf32> to vector<2x64xf32>
    %955 = arith.mulf %954, %940 : vector<2x64xf32>
    %956 = vector.extract_strided_slice %951 {offsets = [0, 0], sizes = [2, 64], strides = [1, 1]} : vector<2x192xf32> to vector<2x64xf32>
    %957 = arith.mulf %956, %953 : vector<2x64xf32>
    %958 = arith.addf %955, %957 : vector<2x64xf32>
    %959 = vector.extract_strided_slice %951 {offsets = [0, 128], sizes = [2, 64], strides = [1, 1]} : vector<2x192xf32> to vector<2x64xf32>
    %960 = math.tanh %958 : vector<2x64xf32>
    %961 = arith.mulf %959, %960 : vector<2x64xf32>
    %962 = vector.extract_strided_slice %961 {offsets = [0, 0], sizes = [2, 32], strides = [1, 1]} : vector<2x64xf32> to vector<2x32xf32>
    %c0_292 = arith.constant 0 : index
    %c0_293 = arith.constant 0 : index
    %963 = vector.load %arg30[%c0_292, %c0_293] : memref<16x32xf32, #tpu.memory_space<vmem>>, vector<2x32xf32>
    tpu.vector_store %arg30[%c0_292, %c0_293], %962 {strides = array<i32>} : memref<16x32xf32, #tpu.memory_space<vmem>>, vector<2x32xf32>,
    %964 = vector.extract_strided_slice %961 {offsets = [0, 32], sizes = [2, 32], strides = [1, 1]} : vector<2x64xf32> to vector<2x32xf32>
    %c14_294 = arith.constant 14 : index
    %c0_295 = arith.constant 0 : index
    %965 = vector.load %arg31[%c14_294, %c0_295] : memref<16x32xf32, #tpu.memory_space<vmem>>, vector<2x32xf32>
    tpu.vector_store %arg31[%c14_294, %c0_295], %964 {strides = array<i32>} : memref<16x32xf32, #tpu.memory_space<vmem>>, vector<2x32xf32>,
    %966 = vector.extract_strided_slice %937 {offsets = [2, 0], sizes = [2, 256], strides = [1, 1]} : vector<16x256xf32> to vector<2x256xf32>
    %967 = vector.extract_strided_slice %938 {offsets = [12, 0], sizes = [2, 256], strides = [1, 1]} : vector<16x256xf32> to vector<2x256xf32>
    %968 = arith.addf %966, %967 : vector<2x256xf32>
    %cst_296 = arith.constant dense<0.000000e+00> : vector<2x256xf32>
    %969 = tpu.matmul %961, %933, %cst_296 {dimension_numbers = #tpu.dot_dimension_numbers<[1], [0], [0], [1], [0, 0, 1, 1], [], []>} : vector<2x64xf32>, vector<64x256xf32>, vector<2x256xf32> -> vector<2x256xf32>
    %970 = arith.addf %968, %969 : vector<2x256xf32>
    %971 = vector.extract_strided_slice %970 {offsets = [0, 0], sizes = [2, 192], strides = [1, 1]} : vector<2x256xf32> to vector<2x192xf32>
    %972 = arith.negf %971 : vector<2x192xf32>
    %973 = math.exp %972 : vector<2x192xf32>
    %cst_297 = arith.constant 1.000000e+00 : f32
    %974 = vector.broadcast %cst_297 : f32 to vector<2x192xf32>
    %975 = arith.addf %974, %973 : vector<2x192xf32>
    %976 = arith.divf %974, %975 : vector<2x192xf32>
    %977 = vector.extract_strided_slice %970 {offsets = [0, 192], sizes = [2, 64], strides = [1, 1]} : vector<2x256xf32> to vector<2x64xf32>
    %978 = math.tanh %977 : vector<2x64xf32>
    %979 = vector.extract_strided_slice %976 {offsets = [0, 64], sizes = [2, 64], strides = [1, 1]} : vector<2x192xf32> to vector<2x64xf32>
    %980 = arith.mulf %979, %958 : vector<2x64xf32>
    %981 = vector.extract_strided_slice %976 {offsets = [0, 0], sizes = [2, 64], strides = [1, 1]} : vector<2x192xf32> to vector<2x64xf32>
    %982 = arith.mulf %981, %978 : vector<2x64xf32>
    %983 = arith.addf %980, %982 : vector<2x64xf32>
    %984 = vector.extract_strided_slice %976 {offsets = [0, 128], sizes = [2, 64], strides = [1, 1]} : vector<2x192xf32> to vector<2x64xf32>
    %985 = math.tanh %983 : vector<2x64xf32>
    %986 = arith.mulf %984, %985 : vector<2x64xf32>
    %987 = vector.extract_strided_slice %986 {offsets = [0, 0], sizes = [2, 32], strides = [1, 1]} : vector<2x64xf32> to vector<2x32xf32>
    %c2_298 = arith.constant 2 : index
    %c0_299 = arith.constant 0 : index
    %988 = vector.load %arg30[%c2_298, %c0_299] : memref<16x32xf32, #tpu.memory_space<vmem>>, vector<2x32xf32>
    tpu.vector_store %arg30[%c2_298, %c0_299], %987 {strides = array<i32>} : memref<16x32xf32, #tpu.memory_space<vmem>>, vector<2x32xf32>,
    %989 = vector.extract_strided_slice %986 {offsets = [0, 32], sizes = [2, 32], strides = [1, 1]} : vector<2x64xf32> to vector<2x32xf32>
    %c12_300 = arith.constant 12 : index
    %c0_301 = arith.constant 0 : index
    %990 = vector.load %arg31[%c12_300, %c0_301] : memref<16x32xf32, #tpu.memory_space<vmem>>, vector<2x32xf32>
    tpu.vector_store %arg31[%c12_300, %c0_301], %989 {strides = array<i32>} : memref<16x32xf32, #tpu.memory_space<vmem>>, vector<2x32xf32>,
    %991 = vector.extract_strided_slice %937 {offsets = [4, 0], sizes = [2, 256], strides = [1, 1]} : vector<16x256xf32> to vector<2x256xf32>
    %992 = vector.extract_strided_slice %938 {offsets = [10, 0], sizes = [2, 256], strides = [1, 1]} : vector<16x256xf32> to vector<2x256xf32>
    %993 = arith.addf %991, %992 : vector<2x256xf32>
    %cst_302 = arith.constant dense<0.000000e+00> : vector<2x256xf32>
    %994 = tpu.matmul %986, %933, %cst_302 {dimension_numbers = #tpu.dot_dimension_numbers<[1], [0], [0], [1], [0, 0, 1, 1], [], []>} : vector<2x64xf32>, vector<64x256xf32>, vector<2x256xf32> -> vector<2x256xf32>
    %995 = arith.addf %993, %994 : vector<2x256xf32>
    %996 = vector.extract_strided_slice %995 {offsets = [0, 0], sizes = [2, 192], strides = [1, 1]} : vector<2x256xf32> to vector<2x192xf32>
    %997 = arith.negf %996 : vector<2x192xf32>
    %998 = math.exp %997 : vector<2x192xf32>
    %cst_303 = arith.constant 1.000000e+00 : f32
    %999 = vector.broadcast %cst_303 : f32 to vector<2x192xf32>
    %1000 = arith.addf %999, %998 : vector<2x192xf32>
    %1001 = arith.divf %999, %1000 : vector<2x192xf32>
    %1002 = vector.extract_strided_slice %995 {offsets = [0, 192], sizes = [2, 64], strides = [1, 1]} : vector<2x256xf32> to vector<2x64xf32>
    %1003 = math.tanh %1002 : vector<2x64xf32>
    %1004 = vector.extract_strided_slice %1001 {offsets = [0, 64], sizes = [2, 64], strides = [1, 1]} : vector<2x192xf32> to vector<2x64xf32>
    %1005 = arith.mulf %1004, %983 : vector<2x64xf32>
    %1006 = vector.extract_strided_slice %1001 {offsets = [0, 0], sizes = [2, 64], strides = [1, 1]} : vector<2x192xf32> to vector<2x64xf32>
    %1007 = arith.mulf %1006, %1003 : vector<2x64xf32>
    %1008 = arith.addf %1005, %1007 : vector<2x64xf32>
    %1009 = vector.extract_strided_slice %1001 {offsets = [0, 128], sizes = [2, 64], strides = [1, 1]} : vector<2x192xf32> to vector<2x64xf32>
    %1010 = math.tanh %1008 : vector<2x64xf32>
    %1011 = arith.mulf %1009, %1010 : vector<2x64xf32>
    %1012 = vector.extract_strided_slice %1011 {offsets = [0, 0], sizes = [2, 32], strides = [1, 1]} : vector<2x64xf32> to vector<2x32xf32>
    %c4_304 = arith.constant 4 : index
    %c0_305 = arith.constant 0 : index
    %1013 = vector.load %arg30[%c4_304, %c0_305] : memref<16x32xf32, #tpu.memory_space<vmem>>, vector<2x32xf32>
    tpu.vector_store %arg30[%c4_304, %c0_305], %1012 {strides = array<i32>} : memref<16x32xf32, #tpu.memory_space<vmem>>, vector<2x32xf32>,
    %1014 = vector.extract_strided_slice %1011 {offsets = [0, 32], sizes = [2, 32], strides = [1, 1]} : vector<2x64xf32> to vector<2x32xf32>
    %c10_306 = arith.constant 10 : index
    %c0_307 = arith.constant 0 : index
    %1015 = vector.load %arg31[%c10_306, %c0_307] : memref<16x32xf32, #tpu.memory_space<vmem>>, vector<2x32xf32>
    tpu.vector_store %arg31[%c10_306, %c0_307], %1014 {strides = array<i32>} : memref<16x32xf32, #tpu.memory_space<vmem>>, vector<2x32xf32>,
    %1016 = vector.extract_strided_slice %937 {offsets = [6, 0], sizes = [2, 256], strides = [1, 1]} : vector<16x256xf32> to vector<2x256xf32>
    %1017 = vector.extract_strided_slice %938 {offsets = [8, 0], sizes = [2, 256], strides = [1, 1]} : vector<16x256xf32> to vector<2x256xf32>
    %1018 = arith.addf %1016, %1017 : vector<2x256xf32>
    %cst_308 = arith.constant dense<0.000000e+00> : vector<2x256xf32>
    %1019 = tpu.matmul %1011, %933, %cst_308 {dimension_numbers = #tpu.dot_dimension_numbers<[1], [0], [0], [1], [0, 0, 1, 1], [], []>} : vector<2x64xf32>, vector<64x256xf32>, vector<2x256xf32> -> vector<2x256xf32>
    %1020 = arith.addf %1018, %1019 : vector<2x256xf32>
    %1021 = vector.extract_strided_slice %1020 {offsets = [0, 0], sizes = [2, 192], strides = [1, 1]} : vector<2x256xf32> to vector<2x192xf32>
    %1022 = arith.negf %1021 : vector<2x192xf32>
    %1023 = math.exp %1022 : vector<2x192xf32>
    %cst_309 = arith.constant 1.000000e+00 : f32
    %1024 = vector.broadcast %cst_309 : f32 to vector<2x192xf32>
    %1025 = arith.addf %1024, %1023 : vector<2x192xf32>
    %1026 = arith.divf %1024, %1025 : vector<2x192xf32>
    %1027 = vector.extract_strided_slice %1020 {offsets = [0, 192], sizes = [2, 64], strides = [1, 1]} : vector<2x256xf32> to vector<2x64xf32>
    %1028 = math.tanh %1027 : vector<2x64xf32>
    %1029 = vector.extract_strided_slice %1026 {offsets = [0, 64], sizes = [2, 64], strides = [1, 1]} : vector<2x192xf32> to vector<2x64xf32>
    %1030 = arith.mulf %1029, %1008 : vector<2x64xf32>
    %1031 = vector.extract_strided_slice %1026 {offsets = [0, 0], sizes = [2, 64], strides = [1, 1]} : vector<2x192xf32> to vector<2x64xf32>
    %1032 = arith.mulf %1031, %1028 : vector<2x64xf32>
    %1033 = arith.addf %1030, %1032 : vector<2x64xf32>
    %1034 = vector.extract_strided_slice %1026 {offsets = [0, 128], sizes = [2, 64], strides = [1, 1]} : vector<2x192xf32> to vector<2x64xf32>
    %1035 = math.tanh %1033 : vector<2x64xf32>
    %1036 = arith.mulf %1034, %1035 : vector<2x64xf32>
    %1037 = vector.extract_strided_slice %1036 {offsets = [0, 0], sizes = [2, 32], strides = [1, 1]} : vector<2x64xf32> to vector<2x32xf32>
    %c6_310 = arith.constant 6 : index
    %c0_311 = arith.constant 0 : index
    %1038 = vector.load %arg30[%c6_310, %c0_311] : memref<16x32xf32, #tpu.memory_space<vmem>>, vector<2x32xf32>
    tpu.vector_store %arg30[%c6_310, %c0_311], %1037 {strides = array<i32>} : memref<16x32xf32, #tpu.memory_space<vmem>>, vector<2x32xf32>,
    %1039 = vector.extract_strided_slice %1036 {offsets = [0, 32], sizes = [2, 32], strides = [1, 1]} : vector<2x64xf32> to vector<2x32xf32>
    %c8_312 = arith.constant 8 : index
    %c0_313 = arith.constant 0 : index
    %1040 = vector.load %arg31[%c8_312, %c0_313] : memref<16x32xf32, #tpu.memory_space<vmem>>, vector<2x32xf32>
    tpu.vector_store %arg31[%c8_312, %c0_313], %1039 {strides = array<i32>} : memref<16x32xf32, #tpu.memory_space<vmem>>, vector<2x32xf32>,
    %1041 = vector.extract_strided_slice %937 {offsets = [8, 0], sizes = [2, 256], strides = [1, 1]} : vector<16x256xf32> to vector<2x256xf32>
    %1042 = vector.extract_strided_slice %938 {offsets = [6, 0], sizes = [2, 256], strides = [1, 1]} : vector<16x256xf32> to vector<2x256xf32>
    %1043 = arith.addf %1041, %1042 : vector<2x256xf32>
    %cst_314 = arith.constant dense<0.000000e+00> : vector<2x256xf32>
    %1044 = tpu.matmul %1036, %933, %cst_314 {dimension_numbers = #tpu.dot_dimension_numbers<[1], [0], [0], [1], [0, 0, 1, 1], [], []>} : vector<2x64xf32>, vector<64x256xf32>, vector<2x256xf32> -> vector<2x256xf32>
    %1045 = arith.addf %1043, %1044 : vector<2x256xf32>
    %1046 = vector.extract_strided_slice %1045 {offsets = [0, 0], sizes = [2, 192], strides = [1, 1]} : vector<2x256xf32> to vector<2x192xf32>
    %1047 = arith.negf %1046 : vector<2x192xf32>
    %1048 = math.exp %1047 : vector<2x192xf32>
    %cst_315 = arith.constant 1.000000e+00 : f32
    %1049 = vector.broadcast %cst_315 : f32 to vector<2x192xf32>
    %1050 = arith.addf %1049, %1048 : vector<2x192xf32>
    %1051 = arith.divf %1049, %1050 : vector<2x192xf32>
    %1052 = vector.extract_strided_slice %1045 {offsets = [0, 192], sizes = [2, 64], strides = [1, 1]} : vector<2x256xf32> to vector<2x64xf32>
    %1053 = math.tanh %1052 : vector<2x64xf32>
    %1054 = vector.extract_strided_slice %1051 {offsets = [0, 64], sizes = [2, 64], strides = [1, 1]} : vector<2x192xf32> to vector<2x64xf32>
    %1055 = arith.mulf %1054, %1033 : vector<2x64xf32>
    %1056 = vector.extract_strided_slice %1051 {offsets = [0, 0], sizes = [2, 64], strides = [1, 1]} : vector<2x192xf32> to vector<2x64xf32>
    %1057 = arith.mulf %1056, %1053 : vector<2x64xf32>
    %1058 = arith.addf %1055, %1057 : vector<2x64xf32>
    %1059 = vector.extract_strided_slice %1051 {offsets = [0, 128], sizes = [2, 64], strides = [1, 1]} : vector<2x192xf32> to vector<2x64xf32>
    %1060 = math.tanh %1058 : vector<2x64xf32>
    %1061 = arith.mulf %1059, %1060 : vector<2x64xf32>
    %1062 = vector.extract_strided_slice %1061 {offsets = [0, 0], sizes = [2, 32], strides = [1, 1]} : vector<2x64xf32> to vector<2x32xf32>
    %c8_316 = arith.constant 8 : index
    %c0_317 = arith.constant 0 : index
    %1063 = vector.load %arg30[%c8_316, %c0_317] : memref<16x32xf32, #tpu.memory_space<vmem>>, vector<2x32xf32>
    tpu.vector_store %arg30[%c8_316, %c0_317], %1062 {strides = array<i32>} : memref<16x32xf32, #tpu.memory_space<vmem>>, vector<2x32xf32>,
    %1064 = vector.extract_strided_slice %1061 {offsets = [0, 32], sizes = [2, 32], strides = [1, 1]} : vector<2x64xf32> to vector<2x32xf32>
    %c6_318 = arith.constant 6 : index
    %c0_319 = arith.constant 0 : index
    %1065 = vector.load %arg31[%c6_318, %c0_319] : memref<16x32xf32, #tpu.memory_space<vmem>>, vector<2x32xf32>
    tpu.vector_store %arg31[%c6_318, %c0_319], %1064 {strides = array<i32>} : memref<16x32xf32, #tpu.memory_space<vmem>>, vector<2x32xf32>,
    %1066 = vector.extract_strided_slice %937 {offsets = [10, 0], sizes = [2, 256], strides = [1, 1]} : vector<16x256xf32> to vector<2x256xf32>
    %1067 = vector.extract_strided_slice %938 {offsets = [4, 0], sizes = [2, 256], strides = [1, 1]} : vector<16x256xf32> to vector<2x256xf32>
    %1068 = arith.addf %1066, %1067 : vector<2x256xf32>
    %cst_320 = arith.constant dense<0.000000e+00> : vector<2x256xf32>
    %1069 = tpu.matmul %1061, %933, %cst_320 {dimension_numbers = #tpu.dot_dimension_numbers<[1], [0], [0], [1], [0, 0, 1, 1], [], []>} : vector<2x64xf32>, vector<64x256xf32>, vector<2x256xf32> -> vector<2x256xf32>
    %1070 = arith.addf %1068, %1069 : vector<2x256xf32>
    %1071 = vector.extract_strided_slice %1070 {offsets = [0, 0], sizes = [2, 192], strides = [1, 1]} : vector<2x256xf32> to vector<2x192xf32>
    %1072 = arith.negf %1071 : vector<2x192xf32>
    %1073 = math.exp %1072 : vector<2x192xf32>
    %cst_321 = arith.constant 1.000000e+00 : f32
    %1074 = vector.broadcast %cst_321 : f32 to vector<2x192xf32>
    %1075 = arith.addf %1074, %1073 : vector<2x192xf32>
    %1076 = arith.divf %1074, %1075 : vector<2x192xf32>
    %1077 = vector.extract_strided_slice %1070 {offsets = [0, 192], sizes = [2, 64], strides = [1, 1]} : vector<2x256xf32> to vector<2x64xf32>
    %1078 = math.tanh %1077 : vector<2x64xf32>
    %1079 = vector.extract_strided_slice %1076 {offsets = [0, 64], sizes = [2, 64], strides = [1, 1]} : vector<2x192xf32> to vector<2x64xf32>
    %1080 = arith.mulf %1079, %1058 : vector<2x64xf32>
    %1081 = vector.extract_strided_slice %1076 {offsets = [0, 0], sizes = [2, 64], strides = [1, 1]} : vector<2x192xf32> to vector<2x64xf32>
    %1082 = arith.mulf %1081, %1078 : vector<2x64xf32>
    %1083 = arith.addf %1080, %1082 : vector<2x64xf32>
    %1084 = vector.extract_strided_slice %1076 {offsets = [0, 128], sizes = [2, 64], strides = [1, 1]} : vector<2x192xf32> to vector<2x64xf32>
    %1085 = math.tanh %1083 : vector<2x64xf32>
    %1086 = arith.mulf %1084, %1085 : vector<2x64xf32>
    %1087 = vector.extract_strided_slice %1086 {offsets = [0, 0], sizes = [2, 32], strides = [1, 1]} : vector<2x64xf32> to vector<2x32xf32>
    %c10_322 = arith.constant 10 : index
    %c0_323 = arith.constant 0 : index
    %1088 = vector.load %arg30[%c10_322, %c0_323] : memref<16x32xf32, #tpu.memory_space<vmem>>, vector<2x32xf32>
    tpu.vector_store %arg30[%c10_322, %c0_323], %1087 {strides = array<i32>} : memref<16x32xf32, #tpu.memory_space<vmem>>, vector<2x32xf32>,
    %1089 = vector.extract_strided_slice %1086 {offsets = [0, 32], sizes = [2, 32], strides = [1, 1]} : vector<2x64xf32> to vector<2x32xf32>
    %c4_324 = arith.constant 4 : index
    %c0_325 = arith.constant 0 : index
    %1090 = vector.load %arg31[%c4_324, %c0_325] : memref<16x32xf32, #tpu.memory_space<vmem>>, vector<2x32xf32>
    tpu.vector_store %arg31[%c4_324, %c0_325], %1089 {strides = array<i32>} : memref<16x32xf32, #tpu.memory_space<vmem>>, vector<2x32xf32>,
    %1091 = vector.extract_strided_slice %937 {offsets = [12, 0], sizes = [2, 256], strides = [1, 1]} : vector<16x256xf32> to vector<2x256xf32>
    %1092 = vector.extract_strided_slice %938 {offsets = [2, 0], sizes = [2, 256], strides = [1, 1]} : vector<16x256xf32> to vector<2x256xf32>
    %1093 = arith.addf %1091, %1092 : vector<2x256xf32>
    %cst_326 = arith.constant dense<0.000000e+00> : vector<2x256xf32>
    %1094 = tpu.matmul %1086, %933, %cst_326 {dimension_numbers = #tpu.dot_dimension_numbers<[1], [0], [0], [1], [0, 0, 1, 1], [], []>} : vector<2x64xf32>, vector<64x256xf32>, vector<2x256xf32> -> vector<2x256xf32>
    %1095 = arith.addf %1093, %1094 : vector<2x256xf32>
    %1096 = vector.extract_strided_slice %1095 {offsets = [0, 0], sizes = [2, 192], strides = [1, 1]} : vector<2x256xf32> to vector<2x192xf32>
    %1097 = arith.negf %1096 : vector<2x192xf32>
    %1098 = math.exp %1097 : vector<2x192xf32>
    %cst_327 = arith.constant 1.000000e+00 : f32
    %1099 = vector.broadcast %cst_327 : f32 to vector<2x192xf32>
    %1100 = arith.addf %1099, %1098 : vector<2x192xf32>
    %1101 = arith.divf %1099, %1100 : vector<2x192xf32>
    %1102 = vector.extract_strided_slice %1095 {offsets = [0, 192], sizes = [2, 64], strides = [1, 1]} : vector<2x256xf32> to vector<2x64xf32>
    %1103 = math.tanh %1102 : vector<2x64xf32>
    %1104 = vector.extract_strided_slice %1101 {offsets = [0, 64], sizes = [2, 64], strides = [1, 1]} : vector<2x192xf32> to vector<2x64xf32>
    %1105 = arith.mulf %1104, %1083 : vector<2x64xf32>
    %1106 = vector.extract_strided_slice %1101 {offsets = [0, 0], sizes = [2, 64], strides = [1, 1]} : vector<2x192xf32> to vector<2x64xf32>
    %1107 = arith.mulf %1106, %1103 : vector<2x64xf32>
    %1108 = arith.addf %1105, %1107 : vector<2x64xf32>
    %1109 = vector.extract_strided_slice %1101 {offsets = [0, 128], sizes = [2, 64], strides = [1, 1]} : vector<2x192xf32> to vector<2x64xf32>
    %1110 = math.tanh %1108 : vector<2x64xf32>
    %1111 = arith.mulf %1109, %1110 : vector<2x64xf32>
    %1112 = vector.extract_strided_slice %1111 {offsets = [0, 0], sizes = [2, 32], strides = [1, 1]} : vector<2x64xf32> to vector<2x32xf32>
    %c12_328 = arith.constant 12 : index
    %c0_329 = arith.constant 0 : index
    %1113 = vector.load %arg30[%c12_328, %c0_329] : memref<16x32xf32, #tpu.memory_space<vmem>>, vector<2x32xf32>
    tpu.vector_store %arg30[%c12_328, %c0_329], %1112 {strides = array<i32>} : memref<16x32xf32, #tpu.memory_space<vmem>>, vector<2x32xf32>,
    %1114 = vector.extract_strided_slice %1111 {offsets = [0, 32], sizes = [2, 32], strides = [1, 1]} : vector<2x64xf32> to vector<2x32xf32>
    %c2_330 = arith.constant 2 : index
    %c0_331 = arith.constant 0 : index
    %1115 = vector.load %arg31[%c2_330, %c0_331] : memref<16x32xf32, #tpu.memory_space<vmem>>, vector<2x32xf32>
    tpu.vector_store %arg31[%c2_330, %c0_331], %1114 {strides = array<i32>} : memref<16x32xf32, #tpu.memory_space<vmem>>, vector<2x32xf32>,
    %1116 = vector.extract_strided_slice %937 {offsets = [14, 0], sizes = [2, 256], strides = [1, 1]} : vector<16x256xf32> to vector<2x256xf32>
    %1117 = vector.extract_strided_slice %938 {offsets = [0, 0], sizes = [2, 256], strides = [1, 1]} : vector<16x256xf32> to vector<2x256xf32>
    %1118 = arith.addf %1116, %1117 : vector<2x256xf32>
    %cst_332 = arith.constant dense<0.000000e+00> : vector<2x256xf32>
    %1119 = tpu.matmul %1111, %933, %cst_332 {dimension_numbers = #tpu.dot_dimension_numbers<[1], [0], [0], [1], [0, 0, 1, 1], [], []>} : vector<2x64xf32>, vector<64x256xf32>, vector<2x256xf32> -> vector<2x256xf32>
    %1120 = arith.addf %1118, %1119 : vector<2x256xf32>
    %1121 = vector.extract_strided_slice %1120 {offsets = [0, 0], sizes = [2, 192], strides = [1, 1]} : vector<2x256xf32> to vector<2x192xf32>
    %1122 = arith.negf %1121 : vector<2x192xf32>
    %1123 = math.exp %1122 : vector<2x192xf32>
    %cst_333 = arith.constant 1.000000e+00 : f32
    %1124 = vector.broadcast %cst_333 : f32 to vector<2x192xf32>
    %1125 = arith.addf %1124, %1123 : vector<2x192xf32>
    %1126 = arith.divf %1124, %1125 : vector<2x192xf32>
    %1127 = vector.extract_strided_slice %1120 {offsets = [0, 192], sizes = [2, 64], strides = [1, 1]} : vector<2x256xf32> to vector<2x64xf32>
    %1128 = math.tanh %1127 : vector<2x64xf32>
    %1129 = vector.extract_strided_slice %1126 {offsets = [0, 64], sizes = [2, 64], strides = [1, 1]} : vector<2x192xf32> to vector<2x64xf32>
    %1130 = arith.mulf %1129, %1108 : vector<2x64xf32>
    %1131 = vector.extract_strided_slice %1126 {offsets = [0, 0], sizes = [2, 64], strides = [1, 1]} : vector<2x192xf32> to vector<2x64xf32>
    %1132 = arith.mulf %1131, %1128 : vector<2x64xf32>
    %1133 = arith.addf %1130, %1132 : vector<2x64xf32>
    %1134 = vector.extract_strided_slice %1126 {offsets = [0, 128], sizes = [2, 64], strides = [1, 1]} : vector<2x192xf32> to vector<2x64xf32>
    %1135 = math.tanh %1133 : vector<2x64xf32>
    %1136 = arith.mulf %1134, %1135 : vector<2x64xf32>
    %1137 = vector.extract_strided_slice %1136 {offsets = [0, 0], sizes = [2, 32], strides = [1, 1]} : vector<2x64xf32> to vector<2x32xf32>
    %c14_334 = arith.constant 14 : index
    %c0_335 = arith.constant 0 : index
    %1138 = vector.load %arg30[%c14_334, %c0_335] : memref<16x32xf32, #tpu.memory_space<vmem>>, vector<2x32xf32>
    tpu.vector_store %arg30[%c14_334, %c0_335], %1137 {strides = array<i32>} : memref<16x32xf32, #tpu.memory_space<vmem>>, vector<2x32xf32>,
    %1139 = vector.extract_strided_slice %1136 {offsets = [0, 32], sizes = [2, 32], strides = [1, 1]} : vector<2x64xf32> to vector<2x32xf32>
    %c0_336 = arith.constant 0 : index
    %c0_337 = arith.constant 0 : index
    %1140 = vector.load %arg31[%c0_336, %c0_337] : memref<16x32xf32, #tpu.memory_space<vmem>>, vector<2x32xf32>
    tpu.vector_store %arg31[%c0_336, %c0_337], %1139 {strides = array<i32>} : memref<16x32xf32, #tpu.memory_space<vmem>>, vector<2x32xf32>,
    %c0_338 = arith.constant 0 : index
    %c0_339 = arith.constant 0 : index
    %1141 = vector.load %arg30[%c0_338, %c0_339] : memref<16x32xf32, #tpu.memory_space<vmem>>, vector<16x32xf32>
    %c0_340 = arith.constant 0 : index
    %c0_341 = arith.constant 0 : index
    %1142 = vector.load %arg31[%c0_340, %c0_341] : memref<16x32xf32, #tpu.memory_space<vmem>>, vector<16x32xf32>
    %1143 = tpu.concatenate %1141, %1142 in 1 : vector<16x32xf32>, vector<16x32xf32> -> vector<16x64xf32>
    %cst_342 = arith.constant 0.000000e+00 : f32
    %1144 = vector.broadcast %cst_342 : f32 to vector<16x64xf32>
    %1145 = arith.maximumf %1143, %1144 : vector<16x64xf32>
    %1146 = tpu.concatenate %1145, %930 in 1 : vector<16x64xf32>, vector<16x138xf32> -> vector<16x202xf32>
    %c0_343 = arith.constant 0 : index
    %c0_344 = arith.constant 0 : index
    %1147 = vector.load %arg27[%c0_343, %c0_344] : memref<1x202xf32, #tpu.memory_space<vmem>>, vector<1x202xf32>
    %1148 = vector.broadcast %1147 : vector<1x202xf32> to vector<16x202xf32>
    %1149 = arith.mulf %1146, %1148 : vector<16x202xf32>
    %cst_345 = arith.constant dense<0.000000e+00> : vector<16xf32>
    %1150 = vector.multi_reduction <add>, %1149, %cst_345 [1] : vector<16x202xf32> to vector<16xf32>
    %1151 = vector.shape_cast %1150 : vector<16xf32> to vector<16x1xf32>
    %c0_346 = arith.constant 0 : index
    %c0_347 = arith.constant 0 : index
    %1152 = vector.load %arg28[%c0_346, %c0_347] : memref<1x1xf32, #tpu.memory_space<vmem>>, vector<1x1xf32>
    %1153 = vector.broadcast %1152 : vector<1x1xf32> to vector<16x1xf32>
    %1154 = arith.addf %1151, %1153 : vector<16x1xf32>
    %c0_348 = arith.constant 0 : index
    %c0_349 = arith.constant 0 : index
    %1155 = vector.load %arg29[%c0_348, %c0_349] : memref<16x1xf32, #tpu.memory_space<vmem>>, vector<16x1xf32>
    tpu.vector_store %arg29[%c0_348, %c0_349], %1154 {strides = array<i32>} : memref<16x1xf32, #tpu.memory_space<vmem>>, vector<16x1xf32>,
    return
  }
}

</mosaic_0001>

<llo_original>
// kernel: regression_forward.1
$region0: #{regression_forward.1}
  #allocation0 [shape = 'u32[]', space=smem, size = 0x4, offset = 0x4, fixed_abs, tag = 'smem constant byte address 0x4 - core index']
  #allocation1 [shape = 'u32[144,128]{1,0:T(1,128)}', space=vmem, size = 0x12000, scoped, tag = 'internal scratch']
  #allocation2 [shape = 'f32[16,32]{1,0:T(8,128)}', space=vmem, size = 0x2000, scoped, tag = 'scratch operand']
  #allocation3 [shape = 'f32[16,32]{1,0:T(8,128)}', space=vmem, size = 0x2000, scoped, tag = 'scratch operand']
  #allocation4 [shape = 'f32[1,1]{1,0:T(1,128)S(1)}', space=vmem, size = 0x200, scoped, tag = 'scoped memory for regression_forward.1']
  %s0 = inlined_call_operand.smem [shape: u32[30], index: -1, kind: input, shape index: {}]
  %s1 = sld [smem:[%s0]]
  %s2 = scalar_lea.smem %s0, 1
  %s3 = sld [smem:[%s2]]
  %s4 = scalar_lea.smem %s0, 2
  %s5 = sld [smem:[%s4]]
  %s6 = scalar_lea.smem %s0, 3
  %s7 = sld [smem:[%s6]]
  %s8 = scalar_lea.smem %s0, 4
  %s9 = sld [smem:[%s8]]
  %s10 = scalar_lea.smem %s0, 5
  %s11 = sld [smem:[%s10]]
  %s12 = scalar_lea.smem %s0, 6
  %s13 = sld [smem:[%s12]]
  %s14 = scalar_lea.smem %s0, 7
  %s15 = sld [smem:[%s14]]
  %s16 = scalar_lea.smem %s0, 8
  %s17 = sld [smem:[%s16]]
  %s18 = scalar_lea.smem %s0, 9
  %s19 = sld [smem:[%s18]]
  %s20 = scalar_lea.smem %s0, 10
  %s21 = sld [smem:[%s20]]
  %s22 = scalar_lea.smem %s0, 11
  %s23 = sld [smem:[%s22]]
  %s24 = scalar_lea.smem %s0, 12
  %s25 = sld [smem:[%s24]]
  %s26 = scalar_lea.smem %s0, 13
  %s27 = sld [smem:[%s26]]
  %s28 = scalar_lea.smem %s0, 14
  %s29 = sld [smem:[%s28]]
  %s30 = scalar_lea.smem %s0, 15
  %s31 = sld [smem:[%s30]]
  %s32 = scalar_lea.smem %s0, 16
  %s33 = sld [smem:[%s32]]
  %s34 = scalar_lea.smem %s0, 17
  %s35 = sld [smem:[%s34]]
  %s36 = scalar_lea.smem %s0, 18
  %s37 = sld [smem:[%s36]]
  %s38 = scalar_lea.smem %s0, 19
  %s39 = sld [smem:[%s38]]
  %s40 = scalar_lea.smem %s0, 20
  %s41 = sld [smem:[%s40]]
  %s42 = scalar_lea.smem %s0, 21
  %s43 = sld [smem:[%s42]]
  %s44 = scalar_lea.smem %s0, 22
  %s45 = sld [smem:[%s44]]
  %s46 = scalar_lea.smem %s0, 23
  %s47 = sld [smem:[%s46]]
  %s48 = scalar_lea.smem %s0, 24
  %s49 = sld [smem:[%s48]]
  %s50 = scalar_lea.smem %s0, 25
  %s51 = sld [smem:[%s50]]
  %s52 = scalar_lea.smem %s0, 26
  %s53 = sld [smem:[%s52]]
  %s54 = scalar_lea.smem %s0, 27
  %s55 = sld [smem:[%s54]]
  %s56 = scalar_lea.smem %s0, 28
  %s57 = sld [smem:[%s56]]
  %s58 = scalar_lea.smem %s0, 29
  %s59 = sld [smem:[%s58]]
  %s60 = sld [smem:[#allocation0]]
  $region194: #{regression_forward.1} parent=0
    _
  %s62 = ssub.s32 1, %s60
  %s63 = scalar_select 0, %s62, %s60
  %v64 = vstv %s57
  %65 = vst [vmem:[#allocation4] sm:$0x1] %v64
  $region1: #{regression_forward.1} parent=0
    #allocation5 [shape = 'u8[512]{0}', space=vmem, size = 0x400, scoped, tag = 'input window, operand 2, single buffered']
    #allocation6 [shape = 's32[1]{0}', space=sflag, size = 0x4, scoped, tag = 'scoped memory for regression_forward.1']
    #allocation7 [shape = 'u8[512]{0}', space=vmem, size = 0x400, scoped, tag = 'input window, operand 3, single buffered']
    #allocation8 [shape = 's32[1]{0}', space=sflag, size = 0x4, scoped, tag = 'scoped memory for regression_forward.1']
    #allocation9 [shape = 'u8[512]{0}', space=vmem, size = 0x400, scoped, tag = 'input window, operand 4, single buffered']
    #allocation10 [shape = 'u8[16384]{0}', space=vmem, size = 0x4000, scoped, tag = 'input window, operand 8, single buffered']
    #allocation11 [shape = 's32[1]{0}', space=sflag, size = 0x4, scoped, tag = 'scoped memory for regression_forward.1']
    #allocation12 [shape = 'u8[65536]{0}', space=vmem, size = 0x10000, scoped, tag = 'input window, operand 9, single buffered']
    #allocation13 [shape = 'u8[65536]{0}', space=vmem, size = 0x10000, scoped, tag = 'input window, operand 11, single buffered']
    #allocation14 [shape = 's32[1]{0}', space=sflag, size = 0x4, scoped, tag = 'scoped memory for regression_forward.1']
    #allocation15 [shape = 'u8[65536]{0}', space=vmem, size = 0x10000, scoped, tag = 'input window, operand 12, single buffered']
    #allocation16 [shape = 'u8[65536]{0}', space=vmem, size = 0x10000, scoped, tag = 'input window, operand 13, single buffered']
    #allocation17 [shape = 's32[1]{0}', space=sflag, size = 0x4, scoped, tag = 'scoped memory for regression_forward.1']
    #allocation18 [shape = 'u8[81920]{0}', space=vmem, size = 0x14000, scoped, tag = 'input window, operand 15, single buffered']
    #allocation19 [shape = 'u8[81920]{0}', space=vmem, size = 0x14000, scoped, tag = 'input window, operand 16, single buffered']
    #allocation20 [shape = 's32[1]{0}', space=sflag, size = 0x4, scoped, tag = 'scoped memory for regression_forward.1']
    #allocation21 [shape = 'u8[65536]{0}', space=vmem, size = 0x10000, scoped, tag = 'input window, operand 17, single buffered']
    #allocation22 [shape = 'u8[65536]{0}', space=vmem, size = 0x10000, scoped, tag = 'input window, operand 19, single buffered']
    #allocation23 [shape = 's32[1]{0}', space=sflag, size = 0x4, scoped, tag = 'scoped memory for regression_forward.1']
    #allocation24 [shape = 'u8[65536]{0}', space=vmem, size = 0x10000, scoped, tag = 'input window, operand 20, single buffered']
    #allocation25 [shape = 'u8[65536]{0}', space=vmem, size = 0x10000, scoped, tag = 'input window, operand 21, single buffered']
    #allocation26 [shape = 's32[1]{0}', space=sflag, size = 0x4, scoped, tag = 'scoped memory for regression_forward.1']
    #allocation27 [shape = 'u8[147456]{0}', space=vmem, size = 0x24000, scoped, tag = 'input window, operand 23, single buffered']
    #allocation28 [shape = 'u8[147456]{0}', space=vmem, size = 0x24000, scoped, tag = 'input window, operand 24, single buffered']
    #allocation29 [shape = 's32[1]{0}', space=sflag, size = 0x4, scoped, tag = 'scoped memory for regression_forward.1']
    #allocation30 [shape = 'u8[65536]{0}', space=vmem, size = 0x10000, scoped, tag = 'input window, operand 25, single buffered']
    %66 = vsyncpa [#allocation6], 0
    %67 = vsyncpa [#allocation8], 0
    %68 = vsyncpa [#allocation11], 0
    %69 = vsyncpa [#allocation14], 0
    %70 = vsyncpa [#allocation17], 0
    %71 = vsyncpa [#allocation20], 0
    %72 = vsyncpa [#allocation23], 0
    %73 = vsyncpa [#allocation26], 0
    %74 = vsyncpa [#allocation29], 0
    // Predicated region
    $region2: #{regression_forward.1} parent=1 // pred_check
      _
    $region3: #{regression_forward.1} parent=1 // pred_check_branch
      %76 = sbr.rel (0) target = $region5
    $region4: #{regression_forward.1} parent=1 // pred_region
      _
    $region5: #{regression_forward.1} parent=1 // pred_fallthru
      _
    // Predicated region
    $region6: #{regression_forward.1} parent=1 // pred_check
      _
    $region7: #{regression_forward.1} parent=1 // pred_check_branch
      %78 = sbr.rel (0) target = $region9
    $region8: #{regression_forward.1} parent=1 // pred_region
      _
    $region9: #{regression_forward.1} parent=1 // pred_fallthru
      _
    // Predicated region
    $region10: #{regression_forward.1} parent=1 // pred_check
      _
    $region11: #{regression_forward.1} parent=1 // pred_check_branch
      %80 = sbr.rel (0) target = $region13
    $region12: #{regression_forward.1} parent=1 // pred_region
      %s82 = ssub.s32 16, 16
      %83 = vsyncadd [#allocation6], %s82
      %s85 = sshll.u32 [#allocation5], 4
      %s86 = int_to_ptr.vmem [resolvable:$true] %s85
      %88 = dma.hbm_to_vmem [thread:$0]  %s5, 16, %s86, [#allocation6]
    $region13: #{regression_forward.1} parent=1 // pred_fallthru
      _
    // Predicated region
    $region14: #{regression_forward.1} parent=1 // pred_check
      _
    $region15: #{regression_forward.1} parent=1 // pred_check_branch
      %90 = sbr.rel (0) target = $region17
    $region16: #{regression_forward.1} parent=1 // pred_region
      %s92 = ssub.s32 16, 16
      %93 = vsyncadd [#allocation8], %s92
      %s95 = sshll.u32 [#allocation7], 4
      %s96 = int_to_ptr.vmem [resolvable:$true] %s95
      %98 = dma.hbm_to_vmem [thread:$0]  %s7, 16, %s96, [#allocation8]
    $region17: #{regression_forward.1} parent=1 // pred_fallthru
      _
    // Predicated region
    $region18: #{regression_forward.1} parent=1 // pred_check
      _
    $region19: #{regression_forward.1} parent=1 // pred_check_branch
      %100 = sbr.rel (0) target = $region21
    $region20: #{regression_forward.1} parent=1 // pred_region
      %s102 = ssub.s32 16, 16
      %103 = vsyncadd [#allocation8], %s102
      %s105 = sshll.u32 [#allocation9], 4
      %s106 = int_to_ptr.vmem [resolvable:$true] %s105
      %108 = dma.hbm_to_vmem [thread:$0]  %s9, 16, %s106, [#allocation8]
    $region21: #{regression_forward.1} parent=1 // pred_fallthru
      _
    // Predicated region
    $region22: #{regression_forward.1} parent=1 // pred_check
      _
    $region23: #{regression_forward.1} parent=1 // pred_check_branch
      %110 = sbr.rel (0) target = $region25
    $region24: #{regression_forward.1} parent=1 // pred_region
      _
    $region25: #{regression_forward.1} parent=1 // pred_fallthru
      _
    // Predicated region
    $region26: #{regression_forward.1} parent=1 // pred_check
      _
    $region27: #{regression_forward.1} parent=1 // pred_check_branch
      %112 = sbr.rel (0) target = $region29
    $region28: #{regression_forward.1} parent=1 // pred_region
      _
    $region29: #{regression_forward.1} parent=1 // pred_fallthru
      _
    // Predicated region
    $region30: #{regression_forward.1} parent=1 // pred_check
      _
    $region31: #{regression_forward.1} parent=1 // pred_check_branch
      %114 = sbr.rel (0) target = $region33
    $region32: #{regression_forward.1} parent=1 // pred_region
      _
    $region33: #{regression_forward.1} parent=1 // pred_fallthru
      _
    // Predicated region
    $region34: #{regression_forward.1} parent=1 // pred_check
      _
    $region35: #{regression_forward.1} parent=1 // pred_check_branch
      %116 = sbr.rel (0) target = $region37
    $region36: #{regression_forward.1} parent=1 // pred_region
      %s118 = ssub.s32 512, 512
      %119 = vsyncadd [#allocation11], %s118
      %s120 = sshll.u32 [#allocation10], 4
      %s121 = int_to_ptr.vmem [resolvable:$true] %s120
      %126 = dma.hbm_to_vmem [thread:$0]  %s17, 512, %s121, [#allocation11], 256, 256, 16
    $region37: #{regression_forward.1} parent=1 // pred_fallthru
      _
    // Predicated region
    $region38: #{regression_forward.1} parent=1 // pred_check
      _
    $region39: #{regression_forward.1} parent=1 // pred_check_branch
      %128 = sbr.rel (0) target = $region41
    $region40: #{regression_forward.1} parent=1 // pred_region
      %s130 = ssub.s32 2048, 2048
      %131 = vsyncadd [#allocation11], %s130
      %s132 = sshll.u32 [#allocation12], 4
      %s133 = int_to_ptr.vmem [resolvable:$true] %s132
      %138 = dma.hbm_to_vmem [thread:$0]  %s19, 2048, %s133, [#allocation11], 256, 256, 16
    $region41: #{regression_forward.1} parent=1 // pred_fallthru
      _
    // Predicated region
    $region42: #{regression_forward.1} parent=1 // pred_check
      _
    $region43: #{regression_forward.1} parent=1 // pred_check_branch
      %140 = sbr.rel (0) target = $region45
    $region44: #{regression_forward.1} parent=1 // pred_region
      _
    $region45: #{regression_forward.1} parent=1 // pred_fallthru
      _
    // Predicated region
    $region46: #{regression_forward.1} parent=1 // pred_check
      _
    $region47: #{regression_forward.1} parent=1 // pred_check_branch
      %142 = sbr.rel (0) target = $region49
    $region48: #{regression_forward.1} parent=1 // pred_region
      %s144 = ssub.s32 2048, 2048
      %145 = vsyncadd [#allocation14], %s144
      %s146 = sshll.u32 [#allocation13], 4
      %s147 = int_to_ptr.vmem [resolvable:$true] %s146
      %152 = dma.hbm_to_vmem [thread:$0]  %s23, 2048, %s147, [#allocation14], 256, 256, 16
    $region49: #{regression_forward.1} parent=1 // pred_fallthru
      _
    // Predicated region
    $region50: #{regression_forward.1} parent=1 // pred_check
      _
    $region51: #{regression_forward.1} parent=1 // pred_check_branch
      %154 = sbr.rel (0) target = $region53
    $region52: #{regression_forward.1} parent=1 // pred_region
      %s156 = ssub.s32 2048, 2048
      %157 = vsyncadd [#allocation14], %s156
      %s158 = sshll.u32 [#allocation15], 4
      %s159 = int_to_ptr.vmem [resolvable:$true] %s158
      %164 = dma.hbm_to_vmem [thread:$0]  %s25, 2048, %s159, [#allocation14], 256, 256, 16
    $region53: #{regression_forward.1} parent=1 // pred_fallthru
      _
    // Predicated region
    $region54: #{regression_forward.1} parent=1 // pred_check
      _
    $region55: #{regression_forward.1} parent=1 // pred_check_branch
      %166 = sbr.rel (0) target = $region57
    $region56: #{regression_forward.1} parent=1 // pred_region
      %s168 = ssub.s32 2048, 2048
      %169 = vsyncadd [#allocation17], %s168
      %s170 = sshll.u32 [#allocation16], 4
      %s171 = int_to_ptr.vmem [resolvable:$true] %s170
      %176 = dma.hbm_to_vmem [thread:$0]  %s27, 2048, %s171, [#allocation17], 256, 256, 16
    $region57: #{regression_forward.1} parent=1 // pred_fallthru
      _
    // Predicated region
    $region58: #{regression_forward.1} parent=1 // pred_check
      _
    $region59: #{regression_forward.1} parent=1 // pred_check_branch
      %178 = sbr.rel (0) target = $region61
    $region60: #{regression_forward.1} parent=1 // pred_region
      _
    $region61: #{regression_forward.1} parent=1 // pred_fallthru
      _
    // Predicated region
    $region62: #{regression_forward.1} parent=1 // pred_check
      _
    $region63: #{regression_forward.1} parent=1 // pred_check_branch
      %180 = sbr.rel (0) target = $region65
    $region64: #{regression_forward.1} parent=1 // pred_region
      %s182 = ssub.s32 2560, 2560
      %183 = vsyncadd [#allocation17], %s182
      %s184 = sshll.u32 [#allocation18], 4
      %s185 = int_to_ptr.vmem [resolvable:$true] %s184
      %190 = dma.hbm_to_vmem [thread:$0]  %s31, 2560, %s185, [#allocation17], 256, 256, 16
    $region65: #{regression_forward.1} parent=1 // pred_fallthru
      _
    // Predicated region
    $region66: #{regression_forward.1} parent=1 // pred_check
      _
    $region67: #{regression_forward.1} parent=1 // pred_check_branch
      %192 = sbr.rel (0) target = $region69
    $region68: #{regression_forward.1} parent=1 // pred_region
      %s194 = ssub.s32 2560, 2560
      %195 = vsyncadd [#allocation20], %s194
      %s196 = sshll.u32 [#allocation19], 4
      %s197 = int_to_ptr.vmem [resolvable:$true] %s196
      %202 = dma.hbm_to_vmem [thread:$0]  %s33, 2560, %s197, [#allocation20], 256, 256, 16
    $region69: #{regression_forward.1} parent=1 // pred_fallthru
      _
    // Predicated region
    $region70: #{regression_forward.1} parent=1 // pred_check
      _
    $region71: #{regression_forward.1} parent=1 // pred_check_branch
      %204 = sbr.rel (0) target = $region73
    $region72: #{regression_forward.1} parent=1 // pred_region
      %s206 = ssub.s32 2048, 2048
      %207 = vsyncadd [#allocation20], %s206
      %s208 = sshll.u32 [#allocation21], 4
      %s209 = int_to_ptr.vmem [resolvable:$true] %s208
      %214 = dma.hbm_to_vmem [thread:$0]  %s35, 2048, %s209, [#allocation20], 256, 256, 16
    $region73: #{regression_forward.1} parent=1 // pred_fallthru
      _
    // Predicated region
    $region74: #{regression_forward.1} parent=1 // pred_check
      _
    $region75: #{regression_forward.1} parent=1 // pred_check_branch
      %216 = sbr.rel (0) target = $region77
    $region76: #{regression_forward.1} parent=1 // pred_region
      _
    $region77: #{regression_forward.1} parent=1 // pred_fallthru
      _
    // Predicated region
    $region78: #{regression_forward.1} parent=1 // pred_check
      _
    $region79: #{regression_forward.1} parent=1 // pred_check_branch
      %218 = sbr.rel (0) target = $region81
    $region80: #{regression_forward.1} parent=1 // pred_region
      %s220 = ssub.s32 2048, 2048
      %221 = vsyncadd [#allocation23], %s220
      %s222 = sshll.u32 [#allocation22], 4
      %s223 = int_to_ptr.vmem [resolvable:$true] %s222
      %228 = dma.hbm_to_vmem [thread:$0]  %s39, 2048, %s223, [#allocation23], 256, 256, 16
    $region81: #{regression_forward.1} parent=1 // pred_fallthru
      _
    // Predicated region
    $region82: #{regression_forward.1} parent=1 // pred_check
      _
    $region83: #{regression_forward.1} parent=1 // pred_check_branch
      %230 = sbr.rel (0) target = $region85
    $region84: #{regression_forward.1} parent=1 // pred_region
      %s232 = ssub.s32 2048, 2048
      %233 = vsyncadd [#allocation23], %s232
      %s234 = sshll.u32 [#allocation24], 4
      %s235 = int_to_ptr.vmem [resolvable:$true] %s234
      %240 = dma.hbm_to_vmem [thread:$0]  %s41, 2048, %s235, [#allocation23], 256, 256, 16
    $region85: #{regression_forward.1} parent=1 // pred_fallthru
      _
    // Predicated region
    $region86: #{regression_forward.1} parent=1 // pred_check
      _
    $region87: #{regression_forward.1} parent=1 // pred_check_branch
      %242 = sbr.rel (0) target = $region89
    $region88: #{regression_forward.1} parent=1 // pred_region
      %s244 = ssub.s32 2048, 2048
      %245 = vsyncadd [#allocation26], %s244
      %s246 = sshll.u32 [#allocation25], 4
      %s247 = int_to_ptr.vmem [resolvable:$true] %s246
      %252 = dma.hbm_to_vmem [thread:$0]  %s43, 2048, %s247, [#allocation26], 256, 256, 16
    $region89: #{regression_forward.1} parent=1 // pred_fallthru
      _
    // Predicated region
    $region90: #{regression_forward.1} parent=1 // pred_check
      _
    $region91: #{regression_forward.1} parent=1 // pred_check_branch
      %254 = sbr.rel (0) target = $region93
    $region92: #{regression_forward.1} parent=1 // pred_region
      _
    $region93: #{regression_forward.1} parent=1 // pred_fallthru
      _
    // Predicated region
    $region94: #{regression_forward.1} parent=1 // pred_check
      _
    $region95: #{regression_forward.1} parent=1 // pred_check_branch
      %256 = sbr.rel (0) target = $region97
    $region96: #{regression_forward.1} parent=1 // pred_region
      %s258 = ssub.s32 4608, 4608
      %259 = vsyncadd [#allocation26], %s258
      %s260 = sshll.u32 [#allocation27], 4
      %s261 = int_to_ptr.vmem [resolvable:$true] %s260
      %266 = dma.hbm_to_vmem [thread:$0]  %s47, 4608, %s261, [#allocation26], 256, 256, 16
    $region97: #{regression_forward.1} parent=1 // pred_fallthru
      _
    // Predicated region
    $region98: #{regression_forward.1} parent=1 // pred_check
      _
    $region99: #{regression_forward.1} parent=1 // pred_check_branch
      %268 = sbr.rel (0) target = $region101
    $region100: #{regression_forward.1} parent=1 // pred_region
      %s270 = ssub.s32 4608, 4608
      %271 = vsyncadd [#allocation29], %s270
      %s272 = sshll.u32 [#allocation28], 4
      %s273 = int_to_ptr.vmem [resolvable:$true] %s272
      %278 = dma.hbm_to_vmem [thread:$0]  %s49, 4608, %s273, [#allocation29], 256, 256, 16
    $region101: #{regression_forward.1} parent=1 // pred_fallthru
      _
    // Predicated region
    $region102: #{regression_forward.1} parent=1 // pred_check
      _
    $region103: #{regression_forward.1} parent=1 // pred_check_branch
      %280 = sbr.rel (0) target = $region105
    $region104: #{regression_forward.1} parent=1 // pred_region
      %s282 = ssub.s32 2048, 2048
      %283 = vsyncadd [#allocation29], %s282
      %s284 = sshll.u32 [#allocation30], 4
      %s285 = int_to_ptr.vmem [resolvable:$true] %s284
      %290 = dma.hbm_to_vmem [thread:$0]  %s51, 2048, %s285, [#allocation29], 256, 256, 16
    $region105: #{regression_forward.1} parent=1 // pred_fallthru
      _
    // Predicated region
    $region106: #{regression_forward.1} parent=1 // pred_check
      _
    $region107: #{regression_forward.1} parent=1 // pred_check_branch
      %292 = sbr.rel (0) target = $region109
    $region108: #{regression_forward.1} parent=1 // pred_region
      _
    $region109: #{regression_forward.1} parent=1 // pred_fallthru
      _
    // Predicated region
    $region110: #{regression_forward.1} parent=1 // pred_check
      _
    $region111: #{regression_forward.1} parent=1 // pred_check_branch
      %294 = sbr.rel (0) target = $region113
    $region112: #{regression_forward.1} parent=1 // pred_region
      _
    $region113: #{regression_forward.1} parent=1 // pred_fallthru
      _
    // Predicated region
    $region114: #{regression_forward.1} parent=1 // pred_check
      _
    $region115: #{regression_forward.1} parent=1 // pred_check_branch
      %296 = sbr.rel (0) target = $region117
    $region116: #{regression_forward.1} parent=1 // pred_region
      _
    $region117: #{regression_forward.1} parent=1 // pred_fallthru
      _
    // Predicated region
    $region118: #{regression_forward.1} parent=1 // pred_check
      _
    $region119: #{regression_forward.1} parent=1 // pred_check_branch
      %298 = sbr.rel (0) target = $region121
    $region120: #{regression_forward.1} parent=1 // pred_region
      %299 = dma.done [#allocation6], 16
    $region121: #{regression_forward.1} parent=1 // pred_fallthru
      _
    // Predicated region
    $region122: #{regression_forward.1} parent=1 // pred_check
      _
    $region123: #{regression_forward.1} parent=1 // pred_check_branch
      %301 = sbr.rel (0) target = $region125
    $region124: #{regression_forward.1} parent=1 // pred_region
      %302 = dma.done [#allocation8], 16
    $region125: #{regression_forward.1} parent=1 // pred_fallthru
      _
    // Predicated region
    $region126: #{regression_forward.1} parent=1 // pred_check
      _
    $region127: #{regression_forward.1} parent=1 // pred_check_branch
      %304 = sbr.rel (0) target = $region129
    $region128: #{regression_forward.1} parent=1 // pred_region
      %305 = dma.done [#allocation8], 16
    $region129: #{regression_forward.1} parent=1 // pred_fallthru
      _
    // Predicated region
    $region130: #{regression_forward.1} parent=1 // pred_check
      _
    $region131: #{regression_forward.1} parent=1 // pred_check_branch
      %307 = sbr.rel (0) target = $region133
    $region132: #{regression_forward.1} parent=1 // pred_region
      %308 = dma.done [#allocation11], 512
    $region133: #{regression_forward.1} parent=1 // pred_fallthru
      _
    // Predicated region
    $region134: #{regression_forward.1} parent=1 // pred_check
      _
    $region135: #{regression_forward.1} parent=1 // pred_check_branch
      %310 = sbr.rel (0) target = $region137
    $region136: #{regression_forward.1} parent=1 // pred_region
      %311 = dma.done [#allocation11], 2048
    $region137: #{regression_forward.1} parent=1 // pred_fallthru
      _
    // Predicated region
    $region138: #{regression_forward.1} parent=1 // pred_check
      _
    $region139: #{regression_forward.1} parent=1 // pred_check_branch
      %313 = sbr.rel (0) target = $region141
    $region140: #{regression_forward.1} parent=1 // pred_region
      %314 = dma.done [#allocation14], 2048
    $region141: #{regression_forward.1} parent=1 // pred_fallthru
      _
    // Predicated region
    $region142: #{regression_forward.1} parent=1 // pred_check
      _
    $region143: #{regression_forward.1} parent=1 // pred_check_branch
      %316 = sbr.rel (0) target = $region145
    $region144: #{regression_forward.1} parent=1 // pred_region
      %317 = dma.done [#allocation14], 2048
    $region145: #{regression_forward.1} parent=1 // pred_fallthru
      _
    // Predicated region
    $region146: #{regression_forward.1} parent=1 // pred_check
      _
    $region147: #{regression_forward.1} parent=1 // pred_check_branch
      %319 = sbr.rel (0) target = $region149
    $region148: #{regression_forward.1} parent=1 // pred_region
      %320 = dma.done [#allocation17], 2048
    $region149: #{regression_forward.1} parent=1 // pred_fallthru
      _
    // Predicated region
    $region150: #{regression_forward.1} parent=1 // pred_check
      _
    $region151: #{regression_forward.1} parent=1 // pred_check_branch
      %322 = sbr.rel (0) target = $region153
    $region152: #{regression_forward.1} parent=1 // pred_region
      %323 = dma.done [#allocation17], 2560
    $region153: #{regression_forward.1} parent=1 // pred_fallthru
      _
    // Predicated region
    $region154: #{regression_forward.1} parent=1 // pred_check
      _
    $region155: #{regression_forward.1} parent=1 // pred_check_branch
      %325 = sbr.rel (0) target = $region157
    $region156: #{regression_forward.1} parent=1 // pred_region
      %326 = dma.done [#allocation20], 2560
    $region157: #{regression_forward.1} parent=1 // pred_fallthru
      _
    // Predicated region
    $region158: #{regression_forward.1} parent=1 // pred_check
      _
    $region159: #{regression_forward.1} parent=1 // pred_check_branch
      %328 = sbr.rel (0) target = $region161
    $region160: #{regression_forward.1} parent=1 // pred_region
      %329 = dma.done [#allocation20], 2048
    $region161: #{regression_forward.1} parent=1 // pred_fallthru
      _
    // Predicated region
    $region162: #{regression_forward.1} parent=1 // pred_check
      _
    $region163: #{regression_forward.1} parent=1 // pred_check_branch
      %331 = sbr.rel (0) target = $region165
    $region164: #{regression_forward.1} parent=1 // pred_region
      %332 = dma.done [#allocation23], 2048
    $region165: #{regression_forward.1} parent=1 // pred_fallthru
      _
    // Predicated region
    $region166: #{regression_forward.1} parent=1 // pred_check
      _
    $region167: #{regression_forward.1} parent=1 // pred_check_branch
      %334 = sbr.rel (0) target = $region169
    $region168: #{regression_forward.1} parent=1 // pred_region
      %335 = dma.done [#allocation23], 2048
    $region169: #{regression_forward.1} parent=1 // pred_fallthru
      _
    // Predicated region
    $region170: #{regression_forward.1} parent=1 // pred_check
      _
    $region171: #{regression_forward.1} parent=1 // pred_check_branch
      %337 = sbr.rel (0) target = $region173
    $region172: #{regression_forward.1} parent=1 // pred_region
      %338 = dma.done [#allocation26], 2048
    $region173: #{regression_forward.1} parent=1 // pred_fallthru
      _
    // Predicated region
    $region174: #{regression_forward.1} parent=1 // pred_check
      _
    $region175: #{regression_forward.1} parent=1 // pred_check_branch
      %340 = sbr.rel (0) target = $region177
    $region176: #{regression_forward.1} parent=1 // pred_region
      %341 = dma.done [#allocation26], 4608
    $region177: #{regression_forward.1} parent=1 // pred_fallthru
      _
    // Predicated region
    $region178: #{regression_forward.1} parent=1 // pred_check
      _
    $region179: #{regression_forward.1} parent=1 // pred_check_branch
      %343 = sbr.rel (0) target = $region181
    $region180: #{regression_forward.1} parent=1 // pred_region
      %344 = dma.done [#allocation29], 4608
    $region181: #{regression_forward.1} parent=1 // pred_fallthru
      _
    // Predicated region
    $region182: #{regression_forward.1} parent=1 // pred_check
      _
    $region183: #{regression_forward.1} parent=1 // pred_check_branch
      %346 = sbr.rel (0) target = $region185
    $region184: #{regression_forward.1} parent=1 // pred_region
      %347 = dma.done [#allocation29], 2048
    $region185: #{regression_forward.1} parent=1 // pred_fallthru
      _
    %v348 = vld [vmem:[%s1] sm:$0xff]
    %v349 = vld [vmem:[%s1 + $0x8] sm:$0xff]
    %vm350 = vcmask 80896
    %v351 = vsel %vm350, %v348, 0.0
    %352 = vadd.xlane.f32.xlu0 %v351
    %v353 = vpop.xlane.xlu0 %352
    %v354 = vsel %vm350, %v349, 0.0
    %355 = vadd.xlane.f32.xlu0 %v354
    %v356 = vpop.xlane.xlu0 %355
    %v357 = vrcp.pop 10.0
    %v358 = vmul.f32 %v353, %v357
    %v359 = vmul.f32 %v356, %v357
    %v360 = vsub.f32 %v348, %v358
    %v361 = vsub.f32 %v349, %v359
    %v362 = vmul.f32 %v360, %v360
    %v363 = vmul.f32 %v361, %v361
    %v364 = vsel %vm350, %v362, 0.0
    %365 = vadd.xlane.f32.xlu0 %v364
    %v366 = vpop.xlane.xlu0 %365
    %v367 = vsel %vm350, %v363, 0.0
    %368 = vadd.xlane.f32.xlu0 %v367
    %v369 = vpop.xlane.xlu0 %368
    %v370 = vmul.f32 %v366, %v357
    %v371 = vmul.f32 %v369, %v357
    %v372 = vadd.f32 %v370, 1e-05
    %v373 = vadd.f32 %v371, 1e-05
    %v374 = vrsqrt.pop %v372
    %v375 = vrsqrt.pop %v373
    %v376 = vmul.f32 %v360, %v374
    %v377 = vmul.f32 %v361, %v375
    %v378 = vld [vmem:[%s3] sm:$0x1]
    %v380 = vlaneseq
    %v381 = vshrl.u32 %v380, 7
    %v382 = vsub.s32 0, %v381
    %v383 = vrot.slane %v378, %v382
    %v385 = vmul.f32 %v376, %v383
    %v386 = vmul.f32 %v377, %v383
    %v387 = vld [vmem:[#allocation5] sm:$0x1]
    %v389 = vlaneseq
    %v390 = vshrl.u32 %v389, 7
    %v391 = vsub.s32 0, %v390
    %v392 = vrot.slane %v387, %v391
    %v394 = vadd.f32 %v385, %v392
    %v395 = vadd.f32 %v386, %v392
    %v396 = vld [vmem:[%s15] sm:$0xff]
    %v397 = vld [vmem:[%s15 + $0x8] sm:$0xff]
    %v398 = vld [vmem:[%s15 + $0x10] sm:$0x3]
    %v399 = vld [vmem:[%s15 + $0x18] sm:$0x3]
    %v400 = vld [vmem:[#allocation10] sm:$0xff]
    %v401 = vld [vmem:[#allocation10 + $0x8] sm:$0xff]
    %v402 = vld [vmem:[#allocation10 + $0x10] sm:$0x3]
    %v403 = vld [vmem:[#allocation10 + $0x18] sm:$0x3]
    %v404 = vld [vmem:[#allocation12] sm:$0xff]
    %v405 = vld [vmem:[#allocation12 + $0x8] sm:$0xff]
    %v406 = vld [vmem:[#allocation12 + $0x10] sm:$0xff]
    %v407 = vld [vmem:[#allocation12 + $0x18] sm:$0xff]
    %v408 = vld [vmem:[#allocation12 + $0x20] sm:$0xff]
    %v409 = vld [vmem:[#allocation12 + $0x28] sm:$0xff]
    %v410 = vld [vmem:[#allocation12 + $0x30] sm:$0xff]
    %v411 = vld [vmem:[#allocation12 + $0x38] sm:$0xff]
    %v412 = vld [vmem:[#allocation12 + $0x40] sm:$0xff]
    %v413 = vld [vmem:[#allocation12 + $0x48] sm:$0xff]
    %v414 = vld [vmem:[#allocation12 + $0x50] sm:$0xff]
    %v415 = vld [vmem:[#allocation12 + $0x58] sm:$0xff]
    %v416 = vld [vmem:[#allocation12 + $0x60] sm:$0xff]
    %v417 = vld [vmem:[#allocation12 + $0x68] sm:$0xff]
    %v418 = vld [vmem:[#allocation12 + $0x70] sm:$0xff]
    %v419 = vld [vmem:[#allocation12 + $0x78] sm:$0xff]
    %v420 = vld [vmem:[%s21] sm:$0x3]
    %v422 = vlaneseq
    %v423 = vshrl.u32 %v422, 7
    %v424 = vsub.s32 0, %v423
    %v425 = vrot.slane %v420, %v424
    %v426 = vlaneseq
    %v427 = vshrl.u32 %v426, 7
    %v428 = vsub.s32 1, %v427
    %v429 = vrot.slane %v420, %v428
    %v433 = vsel %vm350, %v394, 0
    %v436 = vsel %vm350, %v395, 0
    %vm438 = vcmask 1041408
    %v440 = vsel %vm438, %v398, 0
    %v443 = vsel %vm438, %v399, 0
    %445 = vmatprep.subr.mxu0 0.0
    %446 = vmatpush1.msra.mxu0 0.0
    %447 = vmatprep.subr.mxu0 0.0
    %448 = vmatpush1.msra.mxu0 0.0
    %449 = vmatprep.subr.mxu0 0.0
    %450 = vmatpush1.msra.mxu0 0.0
    %451 = vmatprep.subr.mxu0 0.0
    %452 = vmatpush1.msra.mxu0 0.0
    %453 = vmatprep.subr.mxu0 0.0
    %454 = vmatpush1.msra.mxu0 0.0
    %455 = vmatprep.subr.mxu0 0.0
    %456 = vmatpush1.msra.mxu0 0.0
    %457 = vmatprep.subr.mxu0 0.0
    %458 = vmatpush1.msra.mxu0 0.0
    %459 = vmatprep.subr.mxu0 0.0
    %460 = vmatpush1.msra.mxu0 0.0
    %461 = vmatprep.subr.mxu0 0.0
    %462 = vmatpush1.msra.mxu0 0.0
    %463 = vmatprep.subr.mxu0 0.0
    %464 = vmatpush1.msra.mxu0 0.0
    %465 = vmatprep.subr.mxu0 0.0
    %466 = vmatpush1.msra.mxu0 0.0
    %467 = vmatprep.subr.mxu0 0.0
    %468 = vmatpush1.msra.mxu0 0.0
    %469 = vmatprep.subr.mxu0 0.0
    %470 = vmatpush1.msra.mxu0 0.0
    %471 = vmatprep.subr.mxu0 0.0
    %472 = vmatpush1.msra.mxu0 0.0
    %473 = vmatprep.subr.mxu0 %v443
    %474 = vmatpush1.msra.mxu0 %v440
    %475 = vmatprep.subr.mxu0 %v397
    %476 = vmatpush1.msra.mxu0 %v396
    %477 = vmatprep.subr.mxu0 0.0
    %478 = vmatpush2.msra.mxu0 0.0
    %479 = vmatprep.subr.mxu0 0.0
    %480 = vmatpush2.msra.mxu0 0.0
    %481 = vmatprep.subr.mxu0 0.0
    %482 = vmatpush2.msra.mxu0 0.0
    %483 = vmatprep.subr.mxu0 0.0
    %484 = vmatpush2.msra.mxu0 0.0
    %485 = vmatprep.subr.mxu0 0.0
    %486 = vmatpush2.msra.mxu0 0.0
    %487 = vmatprep.subr.mxu0 0.0
    %488 = vmatpush2.msra.mxu0 0.0
    %489 = vmatprep.subr.mxu0 0.0
    %490 = vmatpush2.msra.mxu0 0.0
    %491 = vmatprep.subr.mxu0 0.0
    %492 = vmatpush2.msra.mxu0 0.0
    %493 = vmatprep.subr.mxu0 0.0
    %494 = vmatpush2.msra.mxu0 0.0
    %495 = vmatprep.subr.mxu0 0.0
    %496 = vmatpush2.msra.mxu0 0.0
    %497 = vmatprep.subr.mxu0 0.0
    %498 = vmatpush2.msra.mxu0 0.0
    %499 = vmatprep.subr.mxu0 0.0
    %500 = vmatpush2.msra.mxu0 0.0
    %501 = vmatprep.subr.mxu0 0.0
    %502 = vmatpush2.msra.mxu0 0.0
    %503 = vmatprep.subr.mxu0 0.0
    %504 = vmatpush2.msra.mxu0 0.0
    %505 = vmatprep.subr.mxu0 0.0
    %506 = vmatpush2.msra.mxu0 0.0
    %507 = vmatprep.subr.mxu0 0.0
    %508 = vmatpush2.msra.mxu0 0.0
    %509 = vmatprep.mubr.f32.mxu0 0.0
    %510 = vmatmul.mubr.f32.gmra.mxu0 %v433
    %v511 = vpop.f32.mrf.mxu0
    %v512 = vadd.f32 %v425, %v511
    %v513 = vpop.f32.mrf.mxu0
    %v514 = vadd.f32 %v429, %v513
    %515 = vmatprep.mubr.f32.mxu0 0.0
    %516 = vmatmul.mubr.f32.gmra.mxu0 %v436
    %v517 = vpop.f32.mrf.mxu0
    %v518 = vadd.f32 %v425, %v517
    %v519 = vpop.f32.mrf.mxu0
    %v520 = vadd.f32 %v429, %v519
    %521 = vdwg.mxu0
    %v523 = vsel %vm438, %v402, 0
    %v526 = vsel %vm438, %v403, 0
    %528 = vmatprep.subr.mxu0 0.0
    %529 = vmatpush1.msra.mxu0 0.0
    %530 = vmatprep.subr.mxu0 0.0
    %531 = vmatpush1.msra.mxu0 0.0
    %532 = vmatprep.subr.mxu0 0.0
    %533 = vmatpush1.msra.mxu0 0.0
    %534 = vmatprep.subr.mxu0 0.0
    %535 = vmatpush1.msra.mxu0 0.0
    %536 = vmatprep.subr.mxu0 0.0
    %537 = vmatpush1.msra.mxu0 0.0
    %538 = vmatprep.subr.mxu0 0.0
    %539 = vmatpush1.msra.mxu0 0.0
    %540 = vmatprep.subr.mxu0 0.0
    %541 = vmatpush1.msra.mxu0 0.0
    %542 = vmatprep.subr.mxu0 0.0
    %543 = vmatpush1.msra.mxu0 0.0
    %544 = vmatprep.subr.mxu0 0.0
    %545 = vmatpush1.msra.mxu0 0.0
    %546 = vmatprep.subr.mxu0 0.0
    %547 = vmatpush1.msra.mxu0 0.0
    %548 = vmatprep.subr.mxu0 0.0
    %549 = vmatpush1.msra.mxu0 0.0
    %550 = vmatprep.subr.mxu0 0.0
    %551 = vmatpush1.msra.mxu0 0.0
    %552 = vmatprep.subr.mxu0 0.0
    %553 = vmatpush1.msra.mxu0 0.0
    %554 = vmatprep.subr.mxu0 0.0
    %555 = vmatpush1.msra.mxu0 0.0
    %556 = vmatprep.subr.mxu0 %v526
    %557 = vmatpush1.msra.mxu0 %v523
    %558 = vmatprep.subr.mxu0 %v401
    %559 = vmatpush1.msra.mxu0 %v400
    %560 = vmatprep.subr.mxu0 0.0
    %561 = vmatpush2.msra.mxu0 0.0
    %562 = vmatprep.subr.mxu0 0.0
    %563 = vmatpush2.msra.mxu0 0.0
    %564 = vmatprep.subr.mxu0 0.0
    %565 = vmatpush2.msra.mxu0 0.0
    %566 = vmatprep.subr.mxu0 0.0
    %567 = vmatpush2.msra.mxu0 0.0
    %568 = vmatprep.subr.mxu0 0.0
    %569 = vmatpush2.msra.mxu0 0.0
    %570 = vmatprep.subr.mxu0 0.0
    %571 = vmatpush2.msra.mxu0 0.0
    %572 = vmatprep.subr.mxu0 0.0
    %573 = vmatpush2.msra.mxu0 0.0
    %574 = vmatprep.subr.mxu0 0.0
    %575 = vmatpush2.msra.mxu0 0.0
    %576 = vmatprep.subr.mxu0 0.0
    %577 = vmatpush2.msra.mxu0 0.0
    %578 = vmatprep.subr.mxu0 0.0
    %579 = vmatpush2.msra.mxu0 0.0
    %580 = vmatprep.subr.mxu0 0.0
    %581 = vmatpush2.msra.mxu0 0.0
    %582 = vmatprep.subr.mxu0 0.0
    %583 = vmatpush2.msra.mxu0 0.0
    %584 = vmatprep.subr.mxu0 0.0
    %585 = vmatpush2.msra.mxu0 0.0
    %586 = vmatprep.subr.mxu0 0.0
    %587 = vmatpush2.msra.mxu0 0.0
    %588 = vmatprep.subr.mxu0 0.0
    %589 = vmatpush2.msra.mxu0 0.0
    %590 = vmatprep.subr.mxu0 0.0
    %591 = vmatpush2.msra.mxu0 0.0
    %592 = vmatprep.mubr.f32.mxu0 0.0
    %593 = vmatmul.mubr.f32.gmra.mxu0 %v433
    %v594 = vpop.f32.mrf.mxu0
    %v595 = vadd.f32 0.0, %v594
    %v596 = vpop.f32.mrf.mxu0
    %v597 = vadd.f32 0.0, %v596
    %598 = vmatprep.mubr.f32.mxu0 0.0
    %599 = vmatmul.mubr.f32.gmra.mxu0 %v436
    %v600 = vpop.f32.mrf.mxu0
    %v601 = vadd.f32 0.0, %v600
    %v602 = vpop.f32.mrf.mxu0
    %v603 = vadd.f32 0.0, %v602
    %604 = vdwg.mxu0
    %v607 = vrot.slane %v601, 6
    %v608 = vrot.slane %v603, 6
    %v611 = vadd.f32 %v512, %v607
    %v612 = vadd.f32 %v514, %v608
    %vm613 = vcmask 523264
    %v615 = vsel %vm613, 0.0, 0
    %617 = vmatprep.subr.mxu0 0.0
    %618 = vmatpush1.msra.mxu0 0.0
    %619 = vmatprep.subr.mxu0 0.0
    %620 = vmatpush1.msra.mxu0 0.0
    %621 = vmatprep.subr.mxu0 0.0
    %622 = vmatpush1.msra.mxu0 0.0
    %623 = vmatprep.subr.mxu0 0.0
    %624 = vmatpush1.msra.mxu0 0.0
    %625 = vmatprep.subr.mxu0 0.0
    %626 = vmatpush1.msra.mxu0 0.0
    %627 = vmatprep.subr.mxu0 0.0
    %628 = vmatpush1.msra.mxu0 0.0
    %629 = vmatprep.subr.mxu0 0.0
    %630 = vmatpush1.msra.mxu0 0.0
    %631 = vmatprep.subr.mxu0 0.0
    %632 = vmatpush1.msra.mxu0 0.0
    %633 = vmatprep.subr.mxu0 %v419
    %634 = vmatpush1.msra.mxu0 %v418
    %635 = vmatprep.subr.mxu0 %v417
    %636 = vmatpush1.msra.mxu0 %v416
    %637 = vmatprep.subr.mxu0 %v415
    %638 = vmatpush1.msra.mxu0 %v414
    %639 = vmatprep.subr.mxu0 %v413
    %640 = vmatpush1.msra.mxu0 %v412
    %641 = vmatprep.subr.mxu0 %v411
    %642 = vmatpush1.msra.mxu0 %v410
    %643 = vmatprep.subr.mxu0 %v409
    %644 = vmatpush1.msra.mxu0 %v408
    %645 = vmatprep.subr.mxu0 %v407
    %646 = vmatpush1.msra.mxu0 %v406
    %647 = vmatprep.subr.mxu0 %v405
    %648 = vmatpush1.msra.mxu0 %v404
    %649 = vmatprep.subr.mxu0 0.0
    %650 = vmatpush2.msra.mxu0 0.0
    %651 = vmatprep.subr.mxu0 0.0
    %652 = vmatpush2.msra.mxu0 0.0
    %653 = vmatprep.subr.mxu0 0.0
    %654 = vmatpush2.msra.mxu0 0.0
    %655 = vmatprep.subr.mxu0 0.0
    %656 = vmatpush2.msra.mxu0 0.0
    %657 = vmatprep.subr.mxu0 0.0
    %658 = vmatpush2.msra.mxu0 0.0
    %659 = vmatprep.subr.mxu0 0.0
    %660 = vmatpush2.msra.mxu0 0.0
    %661 = vmatprep.subr.mxu0 0.0
    %662 = vmatpush2.msra.mxu0 0.0
    %663 = vmatprep.subr.mxu0 0.0
    %664 = vmatpush2.msra.mxu0 0.0
    %665 = vmatprep.subr.mxu0 0.0
    %666 = vmatpush2.msra.mxu0 0.0
    %667 = vmatprep.subr.mxu0 0.0
    %668 = vmatpush2.msra.mxu0 0.0
    %669 = vmatprep.subr.mxu0 0.0
    %670 = vmatpush2.msra.mxu0 0.0
    %671 = vmatprep.subr.mxu0 0.0
    %672 = vmatpush2.msra.mxu0 0.0
    %673 = vmatprep.subr.mxu0 0.0
    %674 = vmatpush2.msra.mxu0 0.0
    %675 = vmatprep.subr.mxu0 0.0
    %676 = vmatpush2.msra.mxu0 0.0
    %677 = vmatprep.subr.mxu0 0.0
    %678 = vmatpush2.msra.mxu0 0.0
    %679 = vmatprep.subr.mxu0 0.0
    %680 = vmatpush2.msra.mxu0 0.0
    %681 = vmatprep.mubr.f32.mxu0 0.0
    %682 = vmatmul.mubr.f32.gmra.mxu0 %v615
    %v683 = vpop.f32.mrf.mxu0
    %v684 = vadd.f32 0.0, %v683
    %v685 = vpop.f32.mrf.mxu0
    %v686 = vadd.f32 0.0, %v685
    %687 = vdwg.mxu0
    %v688 = vadd.f32 %v611, %v684
    %v689 = vadd.f32 %v612, %v686
    %v690 = vxor.u32 %v688, 2147483648
    %v691 = vxor.u32 %v689, 2147483648
    %v692 = vmul.f32 %v690, 1.442695
    %v693 = vpow.pop %v692
    %v694 = vmul.f32 %v691, 1.442695
    %v695 = vpow.pop %v694
    %v696 = vadd.f32 %v693, 1.0
    %v697 = vadd.f32 %v695, 1.0
    %v698 = vrcp.pop %v696
    %v699 = vmul.f32 1.0, %v698
    %v700 = vrcp.pop %v697
    %v701 = vmul.f32 1.0, %v700
    %v702 = vtanh.pop %v689
    %v703 = vmul.f32 %v699, 0.0
    %705 = vrot.lane.b32.xlu0 %v702, 64
    %v706 = vpop.permute.xlu0 %705
    %v708 = vmul.f32 %v699, %v706
    %710 = vrot.lane.b32.xlu0 %v708, 64
    %v711 = vpop.permute.xlu0 %710
    %v713 = vadd.f32 %v703, %v711
    %v714 = vtanh.pop %v713
    %716 = vrot.lane.b32.xlu0 %v714, 64
    %v717 = vpop.permute.xlu0 %716
    %v719 = vmul.f32 %v701, %v717
    %vm720 = vcmask 254976
    %721 = vst.msk [vmem:[#allocation2] sm:$0x3] %vm720, %v719
    %723 = vrot.lane.b32.xlu0 %v719, 96
    %v724 = vpop.permute.xlu0 %723
    %726 = vst.msk [vmem:[#allocation3 + $0xe] sm:$0x3] %vm720, %v724
    %v727 = vrot.slane %v601, 2
    %v728 = vrot.slane %v603, 2
    %v731 = vadd.f32 %v512, %v727
    %v732 = vadd.f32 %v514, %v728
    %v733 = vsel %vm613, %v719, 0
    %735 = vmatprep.subr.mxu0 0.0
    %736 = vmatpush1.msra.mxu0 0.0
    %737 = vmatprep.subr.mxu0 0.0
    %738 = vmatpush1.msra.mxu0 0.0
    %739 = vmatprep.subr.mxu0 0.0
    %740 = vmatpush1.msra.mxu0 0.0
    %741 = vmatprep.subr.mxu0 0.0
    %742 = vmatpush1.msra.mxu0 0.0
    %743 = vmatprep.subr.mxu0 0.0
    %744 = vmatpush1.msra.mxu0 0.0
    %745 = vmatprep.subr.mxu0 0.0
    %746 = vmatpush1.msra.mxu0 0.0
    %747 = vmatprep.subr.mxu0 0.0
    %748 = vmatpush1.msra.mxu0 0.0
    %749 = vmatprep.subr.mxu0 0.0
    %750 = vmatpush1.msra.mxu0 0.0
    %751 = vmatprep.subr.mxu0 %v419
    %752 = vmatpush1.msra.mxu0 %v418
    %753 = vmatprep.subr.mxu0 %v417
    %754 = vmatpush1.msra.mxu0 %v416
    %755 = vmatprep.subr.mxu0 %v415
    %756 = vmatpush1.msra.mxu0 %v414
    %757 = vmatprep.subr.mxu0 %v413
    %758 = vmatpush1.msra.mxu0 %v412
    %759 = vmatprep.subr.mxu0 %v411
    %760 = vmatpush1.msra.mxu0 %v410
    %761 = vmatprep.subr.mxu0 %v409
    %762 = vmatpush1.msra.mxu0 %v408
    %763 = vmatprep.subr.mxu0 %v407
    %764 = vmatpush1.msra.mxu0 %v406
    %765 = vmatprep.subr.mxu0 %v405
    %766 = vmatpush1.msra.mxu0 %v404
    %767 = vmatprep.subr.mxu0 0.0
    %768 = vmatpush2.msra.mxu0 0.0
    %769 = vmatprep.subr.mxu0 0.0
    %770 = vmatpush2.msra.mxu0 0.0
    %771 = vmatprep.subr.mxu0 0.0
    %772 = vmatpush2.msra.mxu0 0.0
    %773 = vmatprep.subr.mxu0 0.0
    %774 = vmatpush2.msra.mxu0 0.0
    %775 = vmatprep.subr.mxu0 0.0
    %776 = vmatpush2.msra.mxu0 0.0
    %777 = vmatprep.subr.mxu0 0.0
    %778 = vmatpush2.msra.mxu0 0.0
    %779 = vmatprep.subr.mxu0 0.0
    %780 = vmatpush2.msra.mxu0 0.0
    %781 = vmatprep.subr.mxu0 0.0
    %782 = vmatpush2.msra.mxu0 0.0
    %783 = vmatprep.subr.mxu0 0.0
    %784 = vmatpush2.msra.mxu0 0.0
    %785 = vmatprep.subr.mxu0 0.0
    %786 = vmatpush2.msra.mxu0 0.0
    %787 = vmatprep.subr.mxu0 0.0
    %788 = vmatpush2.msra.mxu0 0.0
    %789 = vmatprep.subr.mxu0 0.0
    %790 = vmatpush2.msra.mxu0 0.0
    %791 = vmatprep.subr.mxu0 0.0
    %792 = vmatpush2.msra.mxu0 0.0
    %793 = vmatprep.subr.mxu0 0.0
    %794 = vmatpush2.msra.mxu0 0.0
    %795 = vmatprep.subr.mxu0 0.0
    %796 = vmatpush2.msra.mxu0 0.0
    %797 = vmatprep.subr.mxu0 0.0
    %798 = vmatpush2.msra.mxu0 0.0
    %799 = vmatprep.mubr.f32.mxu0 0.0
    %800 = vmatmul.mubr.f32.gmra.mxu0 %v733
    %v801 = vpop.f32.mrf.mxu0
    %v802 = vadd.f32 0.0, %v801
    %v803 = vpop.f32.mrf.mxu0
    %v804 = vadd.f32 0.0, %v803
    %805 = vdwg.mxu0
    %v808 = vrot.slane %v802, 6
    %v809 = vrot.slane %v804, 6
    %v812 = vadd.f32 %v731, %v808
    %v813 = vadd.f32 %v732, %v809
    %v814 = vxor.u32 %v812, 2147483648
    %v815 = vxor.u32 %v813, 2147483648
    %v816 = vmul.f32 %v814, 1.442695
    %v817 = vpow.pop %v816
    %v818 = vmul.f32 %v815, 1.442695
    %v819 = vpow.pop %v818
    %v820 = vadd.f32 %v817, 1.0
    %v821 = vadd.f32 %v819, 1.0
    %v822 = vrcp.pop %v820
    %v823 = vmul.f32 1.0, %v822
    %v824 = vrcp.pop %v821
    %v825 = vmul.f32 1.0, %v824
    %v826 = vtanh.pop %v813
    %v828 = vrot.slane %v713, 6
    %v830 = vmul.f32 %v823, %v828
    %832 = vrot.lane.b32.xlu0 %v826, 64
    %v833 = vpop.permute.xlu0 %832
    %v835 = vmul.f32 %v823, %v833
    %837 = vrot.lane.b32.xlu0 %v835, 64
    %v838 = vpop.permute.xlu0 %837
    %v840 = vadd.f32 %v830, %v838
    %v841 = vtanh.pop %v840
    %843 = vrot.lane.b32.xlu0 %v841, 64
    %v844 = vpop.permute.xlu0 %843
    %v846 = vmul.f32 %v825, %v844
    %vm847 = vcmask 257026
    %848 = vst.msk [vmem:[#allocation2] sm:$0xc] %vm847, %v846
    %850 = vrot.lane.b32.xlu0 %v846, 96
    %v851 = vpop.permute.xlu0 %850
    %853 = vst.msk [vmem:[#allocation3 + $0xa] sm:$0xc] %vm847, %v851
    %v854 = vrot.slane %v846, 2
    %v855 = vsel %vm613, %v854, 0
    %857 = vmatprep.subr.mxu0 0.0
    %858 = vmatpush1.msra.mxu0 0.0
    %859 = vmatprep.subr.mxu0 0.0
    %860 = vmatpush1.msra.mxu0 0.0
    %861 = vmatprep.subr.mxu0 0.0
    %862 = vmatpush1.msra.mxu0 0.0
    %863 = vmatprep.subr.mxu0 0.0
    %864 = vmatpush1.msra.mxu0 0.0
    %865 = vmatprep.subr.mxu0 0.0
    %866 = vmatpush1.msra.mxu0 0.0
    %867 = vmatprep.subr.mxu0 0.0
    %868 = vmatpush1.msra.mxu0 0.0
    %869 = vmatprep.subr.mxu0 0.0
    %870 = vmatpush1.msra.mxu0 0.0
    %871 = vmatprep.subr.mxu0 0.0
    %872 = vmatpush1.msra.mxu0 0.0
    %873 = vmatprep.subr.mxu0 %v419
    %874 = vmatpush1.msra.mxu0 %v418
    %875 = vmatprep.subr.mxu0 %v417
    %876 = vmatpush1.msra.mxu0 %v416
    %877 = vmatprep.subr.mxu0 %v415
    %878 = vmatpush1.msra.mxu0 %v414
    %879 = vmatprep.subr.mxu0 %v413
    %880 = vmatpush1.msra.mxu0 %v412
    %881 = vmatprep.subr.mxu0 %v411
    %882 = vmatpush1.msra.mxu0 %v410
    %883 = vmatprep.subr.mxu0 %v409
    %884 = vmatpush1.msra.mxu0 %v408
    %885 = vmatprep.subr.mxu0 %v407
    %886 = vmatpush1.msra.mxu0 %v406
    %887 = vmatprep.subr.mxu0 %v405
    %888 = vmatpush1.msra.mxu0 %v404
    %889 = vmatprep.subr.mxu0 0.0
    %890 = vmatpush2.msra.mxu0 0.0
    %891 = vmatprep.subr.mxu0 0.0
    %892 = vmatpush2.msra.mxu0 0.0
    %893 = vmatprep.subr.mxu0 0.0
    %894 = vmatpush2.msra.mxu0 0.0
    %895 = vmatprep.subr.mxu0 0.0
    %896 = vmatpush2.msra.mxu0 0.0
    %897 = vmatprep.subr.mxu0 0.0
    %898 = vmatpush2.msra.mxu0 0.0
    %899 = vmatprep.subr.mxu0 0.0
    %900 = vmatpush2.msra.mxu0 0.0
    %901 = vmatprep.subr.mxu0 0.0
    %902 = vmatpush2.msra.mxu0 0.0
    %903 = vmatprep.subr.mxu0 0.0
    %904 = vmatpush2.msra.mxu0 0.0
    %905 = vmatprep.subr.mxu0 0.0
    %906 = vmatpush2.msra.mxu0 0.0
    %907 = vmatprep.subr.mxu0 0.0
    %908 = vmatpush2.msra.mxu0 0.0
    %909 = vmatprep.subr.mxu0 0.0
    %910 = vmatpush2.msra.mxu0 0.0
    %911 = vmatprep.subr.mxu0 0.0
    %912 = vmatpush2.msra.mxu0 0.0
    %913 = vmatprep.subr.mxu0 0.0
    %914 = vmatpush2.msra.mxu0 0.0
    %915 = vmatprep.subr.mxu0 0.0
    %916 = vmatpush2.msra.mxu0 0.0
    %917 = vmatprep.subr.mxu0 0.0
    %918 = vmatpush2.msra.mxu0 0.0
    %919 = vmatprep.subr.mxu0 0.0
    %920 = vmatpush2.msra.mxu0 0.0
    %921 = vmatprep.mubr.f32.mxu0 0.0
    %922 = vmatmul.mubr.f32.gmra.mxu0 %v855
    %v923 = vpop.f32.mrf.mxu0
    %v924 = vadd.f32 0.0, %v923
    %v925 = vpop.f32.mrf.mxu0
    %v926 = vadd.f32 0.0, %v925
    %927 = vdwg.mxu0
    %v930 = vrot.slane %v924, 4
    %v931 = vrot.slane %v926, 4
    %v934 = vadd.f32 %v611, %v930
    %v935 = vadd.f32 %v612, %v931
    %v936 = vxor.u32 %v934, 2147483648
    %v937 = vxor.u32 %v935, 2147483648
    %v938 = vmul.f32 %v936, 1.442695
    %v939 = vpow.pop %v938
    %v940 = vmul.f32 %v937, 1.442695
    %v941 = vpow.pop %v940
    %v942 = vadd.f32 %v939, 1.0
    %v943 = vadd.f32 %v941, 1.0
    %v944 = vrcp.pop %v942
    %v945 = vmul.f32 1.0, %v944
    %v946 = vrcp.pop %v943
    %v947 = vmul.f32 1.0, %v946
    %v948 = vtanh.pop %v935
    %v950 = vrot.slane %v840, 6
    %v952 = vmul.f32 %v945, %v950
    %954 = vrot.lane.b32.xlu0 %v948, 64
    %v955 = vpop.permute.xlu0 %954
    %v957 = vmul.f32 %v945, %v955
    %959 = vrot.lane.b32.xlu0 %v957, 64
    %v960 = vpop.permute.xlu0 %959
    %v962 = vadd.f32 %v952, %v960
    %v963 = vtanh.pop %v962
    %965 = vrot.lane.b32.xlu0 %v963, 64
    %v966 = vpop.permute.xlu0 %965
    %v968 = vmul.f32 %v947, %v966
    %vm969 = vcmask 259076
    %970 = vst.msk [vmem:[#allocation2] sm:$0x30] %vm969, %v968
    %972 = vrot.lane.b32.xlu0 %v968, 96
    %v973 = vpop.permute.xlu0 %972
    %975 = vst.msk [vmem:[#allocation3 + $0x6] sm:$0x30] %vm969, %v973
    %v976 = vrot.slane %v968, 4
    %v977 = vsel %vm613, %v976, 0
    %979 = vmatprep.subr.mxu0 0.0
    %980 = vmatpush1.msra.mxu0 0.0
    %981 = vmatprep.subr.mxu0 0.0
    %982 = vmatpush1.msra.mxu0 0.0
    %983 = vmatprep.subr.mxu0 0.0
    %984 = vmatpush1.msra.mxu0 0.0
    %985 = vmatprep.subr.mxu0 0.0
    %986 = vmatpush1.msra.mxu0 0.0
    %987 = vmatprep.subr.mxu0 0.0
    %988 = vmatpush1.msra.mxu0 0.0
    %989 = vmatprep.subr.mxu0 0.0
    %990 = vmatpush1.msra.mxu0 0.0
    %991 = vmatprep.subr.mxu0 0.0
    %992 = vmatpush1.msra.mxu0 0.0
    %993 = vmatprep.subr.mxu0 0.0
    %994 = vmatpush1.msra.mxu0 0.0
    %995 = vmatprep.subr.mxu0 %v419
    %996 = vmatpush1.msra.mxu0 %v418
    %997 = vmatprep.subr.mxu0 %v417
    %998 = vmatpush1.msra.mxu0 %v416
    %999 = vmatprep.subr.mxu0 %v415
    %1000 = vmatpush1.msra.mxu0 %v414
    %1001 = vmatprep.subr.mxu0 %v413
    %1002 = vmatpush1.msra.mxu0 %v412
    %1003 = vmatprep.subr.mxu0 %v411
    %1004 = vmatpush1.msra.mxu0 %v410
    %1005 = vmatprep.subr.mxu0 %v409
    %1006 = vmatpush1.msra.mxu0 %v408
    %1007 = vmatprep.subr.mxu0 %v407
    %1008 = vmatpush1.msra.mxu0 %v406
    %1009 = vmatprep.subr.mxu0 %v405
    %1010 = vmatpush1.msra.mxu0 %v404
    %1011 = vmatprep.subr.mxu0 0.0
    %1012 = vmatpush2.msra.mxu0 0.0
    %1013 = vmatprep.subr.mxu0 0.0
    %1014 = vmatpush2.msra.mxu0 0.0
    %1015 = vmatprep.subr.mxu0 0.0
    %1016 = vmatpush2.msra.mxu0 0.0
    %1017 = vmatprep.subr.mxu0 0.0
    %1018 = vmatpush2.msra.mxu0 0.0
    %1019 = vmatprep.subr.mxu0 0.0
    %1020 = vmatpush2.msra.mxu0 0.0
    %1021 = vmatprep.subr.mxu0 0.0
    %1022 = vmatpush2.msra.mxu0 0.0
    %1023 = vmatprep.subr.mxu0 0.0
    %1024 = vmatpush2.msra.mxu0 0.0
    %1025 = vmatprep.subr.mxu0 0.0
    %1026 = vmatpush2.msra.mxu0 0.0
    %1027 = vmatprep.subr.mxu0 0.0
    %1028 = vmatpush2.msra.mxu0 0.0
    %1029 = vmatprep.subr.mxu0 0.0
    %1030 = vmatpush2.msra.mxu0 0.0
    %1031 = vmatprep.subr.mxu0 0.0
    %1032 = vmatpush2.msra.mxu0 0.0
    %1033 = vmatprep.subr.mxu0 0.0
    %1034 = vmatpush2.msra.mxu0 0.0
    %1035 = vmatprep.subr.mxu0 0.0
    %1036 = vmatpush2.msra.mxu0 0.0
    %1037 = vmatprep.subr.mxu0 0.0
    %1038 = vmatpush2.msra.mxu0 0.0
    %1039 = vmatprep.subr.mxu0 0.0
    %1040 = vmatpush2.msra.mxu0 0.0
    %1041 = vmatprep.subr.mxu0 0.0
    %1042 = vmatpush2.msra.mxu0 0.0
    %1043 = vmatprep.mubr.f32.mxu0 0.0
    %1044 = vmatmul.mubr.f32.gmra.mxu0 %v977
    %v1045 = vpop.f32.mrf.mxu0
    %v1046 = vadd.f32 0.0, %v1045
    %v1047 = vpop.f32.mrf.mxu0
    %v1048 = vadd.f32 0.0, %v1047
    %1049 = vdwg.mxu0
    %v1052 = vrot.slane %v1046, 2
    %v1053 = vrot.slane %v1048, 2
    %v1056 = vadd.f32 %v731, %v1052
    %v1057 = vadd.f32 %v732, %v1053
    %v1058 = vxor.u32 %v1056, 2147483648
    %v1059 = vxor.u32 %v1057, 2147483648
    %v1060 = vmul.f32 %v1058, 1.442695
    %v1061 = vpow.pop %v1060
    %v1062 = vmul.f32 %v1059, 1.442695
    %v1063 = vpow.pop %v1062
    %v1064 = vadd.f32 %v1061, 1.0
    %v1065 = vadd.f32 %v1063, 1.0
    %v1066 = vrcp.pop %v1064
    %v1067 = vmul.f32 1.0, %v1066
    %v1068 = vrcp.pop %v1065
    %v1069 = vmul.f32 1.0, %v1068
    %v1070 = vtanh.pop %v1057
    %v1072 = vrot.slane %v962, 6
    %v1074 = vmul.f32 %v1067, %v1072
    %1076 = vrot.lane.b32.xlu0 %v1070, 64
    %v1077 = vpop.permute.xlu0 %1076
    %v1079 = vmul.f32 %v1067, %v1077
    %1081 = vrot.lane.b32.xlu0 %v1079, 64
    %v1082 = vpop.permute.xlu0 %1081
    %v1084 = vadd.f32 %v1074, %v1082
    %v1085 = vtanh.pop %v1084
    %1087 = vrot.lane.b32.xlu0 %v1085, 64
    %v1088 = vpop.permute.xlu0 %1087
    %v1090 = vmul.f32 %v1069, %v1088
    %vm1091 = vcmask 261126
    %1092 = vst.msk [vmem:[#allocation2] sm:$0xc0] %vm1091, %v1090
    %1094 = vrot.lane.b32.xlu0 %v1090, 96
    %v1095 = vpop.permute.xlu0 %1094
    %1097 = vst.msk [vmem:[#allocation3 + $0x2] sm:$0xc0] %vm1091, %v1095
    %v1100 = vrot.slane %v595, 6
    %v1101 = vrot.slane %v597, 6
    %v1104 = vadd.f32 %v518, %v1100
    %v1105 = vadd.f32 %v520, %v1101
    %v1106 = vrot.slane %v1090, 6
    %v1107 = vsel %vm613, %v1106, 0
    %1109 = vmatprep.subr.mxu0 0.0
    %1110 = vmatpush1.msra.mxu0 0.0
    %1111 = vmatprep.subr.mxu0 0.0
    %1112 = vmatpush1.msra.mxu0 0.0
    %1113 = vmatprep.subr.mxu0 0.0
    %1114 = vmatpush1.msra.mxu0 0.0
    %1115 = vmatprep.subr.mxu0 0.0
    %1116 = vmatpush1.msra.mxu0 0.0
    %1117 = vmatprep.subr.mxu0 0.0
    %1118 = vmatpush1.msra.mxu0 0.0
    %1119 = vmatprep.subr.mxu0 0.0
    %1120 = vmatpush1.msra.mxu0 0.0
    %1121 = vmatprep.subr.mxu0 0.0
    %1122 = vmatpush1.msra.mxu0 0.0
    %1123 = vmatprep.subr.mxu0 0.0
    %1124 = vmatpush1.msra.mxu0 0.0
    %1125 = vmatprep.subr.mxu0 %v419
    %1126 = vmatpush1.msra.mxu0 %v418
    %1127 = vmatprep.subr.mxu0 %v417
    %1128 = vmatpush1.msra.mxu0 %v416
    %1129 = vmatprep.subr.mxu0 %v415
    %1130 = vmatpush1.msra.mxu0 %v414
    %1131 = vmatprep.subr.mxu0 %v413
    %1132 = vmatpush1.msra.mxu0 %v412
    %1133 = vmatprep.subr.mxu0 %v411
    %1134 = vmatpush1.msra.mxu0 %v410
    %1135 = vmatprep.subr.mxu0 %v409
    %1136 = vmatpush1.msra.mxu0 %v408
    %1137 = vmatprep.subr.mxu0 %v407
    %1138 = vmatpush1.msra.mxu0 %v406
    %1139 = vmatprep.subr.mxu0 %v405
    %1140 = vmatpush1.msra.mxu0 %v404
    %1141 = vmatprep.subr.mxu0 0.0
    %1142 = vmatpush2.msra.mxu0 0.0
    %1143 = vmatprep.subr.mxu0 0.0
    %1144 = vmatpush2.msra.mxu0 0.0
    %1145 = vmatprep.subr.mxu0 0.0
    %1146 = vmatpush2.msra.mxu0 0.0
    %1147 = vmatprep.subr.mxu0 0.0
    %1148 = vmatpush2.msra.mxu0 0.0
    %1149 = vmatprep.subr.mxu0 0.0
    %1150 = vmatpush2.msra.mxu0 0.0
    %1151 = vmatprep.subr.mxu0 0.0
    %1152 = vmatpush2.msra.mxu0 0.0
    %1153 = vmatprep.subr.mxu0 0.0
    %1154 = vmatpush2.msra.mxu0 0.0
    %1155 = vmatprep.subr.mxu0 0.0
    %1156 = vmatpush2.msra.mxu0 0.0
    %1157 = vmatprep.subr.mxu0 0.0
    %1158 = vmatpush2.msra.mxu0 0.0
    %1159 = vmatprep.subr.mxu0 0.0
    %1160 = vmatpush2.msra.mxu0 0.0
    %1161 = vmatprep.subr.mxu0 0.0
    %1162 = vmatpush2.msra.mxu0 0.0
    %1163 = vmatprep.subr.mxu0 0.0
    %1164 = vmatpush2.msra.mxu0 0.0
    %1165 = vmatprep.subr.mxu0 0.0
    %1166 = vmatpush2.msra.mxu0 0.0
    %1167 = vmatprep.subr.mxu0 0.0
    %1168 = vmatpush2.msra.mxu0 0.0
    %1169 = vmatprep.subr.mxu0 0.0
    %1170 = vmatpush2.msra.mxu0 0.0
    %1171 = vmatprep.subr.mxu0 0.0
    %1172 = vmatpush2.msra.mxu0 0.0
    %1173 = vmatprep.mubr.f32.mxu0 0.0
    %1174 = vmatmul.mubr.f32.gmra.mxu0 %v1107
    %v1175 = vpop.f32.mrf.mxu0
    %v1176 = vadd.f32 0.0, %v1175
    %v1177 = vpop.f32.mrf.mxu0
    %v1178 = vadd.f32 0.0, %v1177
    %1179 = vdwg.mxu0
    %v1180 = vadd.f32 %v1104, %v1176
    %v1181 = vadd.f32 %v1105, %v1178
    %v1182 = vxor.u32 %v1180, 2147483648
    %v1183 = vxor.u32 %v1181, 2147483648
    %v1184 = vmul.f32 %v1182, 1.442695
    %v1185 = vpow.pop %v1184
    %v1186 = vmul.f32 %v1183, 1.442695
    %v1187 = vpow.pop %v1186
    %v1188 = vadd.f32 %v1185, 1.0
    %v1189 = vadd.f32 %v1187, 1.0
    %v1190 = vrcp.pop %v1188
    %v1191 = vmul.f32 1.0, %v1190
    %v1192 = vrcp.pop %v1189
    %v1193 = vmul.f32 1.0, %v1192
    %v1194 = vtanh.pop %v1181
    %v1196 = vrot.slane %v1084, 6
    %v1198 = vmul.f32 %v1191, %v1196
    %1200 = vrot.lane.b32.xlu0 %v1194, 64
    %v1201 = vpop.permute.xlu0 %1200
    %v1203 = vmul.f32 %v1191, %v1201
    %1205 = vrot.lane.b32.xlu0 %v1203, 64
    %v1206 = vpop.permute.xlu0 %1205
    %v1208 = vadd.f32 %v1198, %v1206
    %v1209 = vtanh.pop %v1208
    %1211 = vrot.lane.b32.xlu0 %v1209, 64
    %v1212 = vpop.permute.xlu0 %1211
    %v1214 = vmul.f32 %v1193, %v1212
    %1215 = vst.msk [vmem:[#allocation2 + $0x8] sm:$0x3] %vm720, %v1214
    %1217 = vrot.lane.b32.xlu0 %v1214, 96
    %v1218 = vpop.permute.xlu0 %1217
    %1220 = vst.msk [vmem:[#allocation3 + $0x6] sm:$0x3] %vm720, %v1218
    %v1221 = vrot.slane %v595, 2
    %v1222 = vrot.slane %v597, 2
    %v1225 = vadd.f32 %v518, %v1221
    %v1226 = vadd.f32 %v520, %v1222
    %v1227 = vsel %vm613, %v1214, 0
    %1229 = vmatprep.subr.mxu0 0.0
    %1230 = vmatpush1.msra.mxu0 0.0
    %1231 = vmatprep.subr.mxu0 0.0
    %1232 = vmatpush1.msra.mxu0 0.0
    %1233 = vmatprep.subr.mxu0 0.0
    %1234 = vmatpush1.msra.mxu0 0.0
    %1235 = vmatprep.subr.mxu0 0.0
    %1236 = vmatpush1.msra.mxu0 0.0
    %1237 = vmatprep.subr.mxu0 0.0
    %1238 = vmatpush1.msra.mxu0 0.0
    %1239 = vmatprep.subr.mxu0 0.0
    %1240 = vmatpush1.msra.mxu0 0.0
    %1241 = vmatprep.subr.mxu0 0.0
    %1242 = vmatpush1.msra.mxu0 0.0
    %1243 = vmatprep.subr.mxu0 0.0
    %1244 = vmatpush1.msra.mxu0 0.0
    %1245 = vmatprep.subr.mxu0 %v419
    %1246 = vmatpush1.msra.mxu0 %v418
    %1247 = vmatprep.subr.mxu0 %v417
    %1248 = vmatpush1.msra.mxu0 %v416
    %1249 = vmatprep.subr.mxu0 %v415
    %1250 = vmatpush1.msra.mxu0 %v414
    %1251 = vmatprep.subr.mxu0 %v413
    %1252 = vmatpush1.msra.mxu0 %v412
    %1253 = vmatprep.subr.mxu0 %v411
    %1254 = vmatpush1.msra.mxu0 %v410
    %1255 = vmatprep.subr.mxu0 %v409
    %1256 = vmatpush1.msra.mxu0 %v408
    %1257 = vmatprep.subr.mxu0 %v407
    %1258 = vmatpush1.msra.mxu0 %v406
    %1259 = vmatprep.subr.mxu0 %v405
    %1260 = vmatpush1.msra.mxu0 %v404
    %1261 = vmatprep.subr.mxu0 0.0
    %1262 = vmatpush2.msra.mxu0 0.0
    %1263 = vmatprep.subr.mxu0 0.0
    %1264 = vmatpush2.msra.mxu0 0.0
    %1265 = vmatprep.subr.mxu0 0.0
    %1266 = vmatpush2.msra.mxu0 0.0
    %1267 = vmatprep.subr.mxu0 0.0
    %1268 = vmatpush2.msra.mxu0 0.0
    %1269 = vmatprep.subr.mxu0 0.0
    %1270 = vmatpush2.msra.mxu0 0.0
    %1271 = vmatprep.subr.mxu0 0.0
    %1272 = vmatpush2.msra.mxu0 0.0
    %1273 = vmatprep.subr.mxu0 0.0
    %1274 = vmatpush2.msra.mxu0 0.0
    %1275 = vmatprep.subr.mxu0 0.0
    %1276 = vmatpush2.msra.mxu0 0.0
    %1277 = vmatprep.subr.mxu0 0.0
    %1278 = vmatpush2.msra.mxu0 0.0
    %1279 = vmatprep.subr.mxu0 0.0
    %1280 = vmatpush2.msra.mxu0 0.0
    %1281 = vmatprep.subr.mxu0 0.0
    %1282 = vmatpush2.msra.mxu0 0.0
    %1283 = vmatprep.subr.mxu0 0.0
    %1284 = vmatpush2.msra.mxu0 0.0
    %1285 = vmatprep.subr.mxu0 0.0
    %1286 = vmatpush2.msra.mxu0 0.0
    %1287 = vmatprep.subr.mxu0 0.0
    %1288 = vmatpush2.msra.mxu0 0.0
    %1289 = vmatprep.subr.mxu0 0.0
    %1290 = vmatpush2.msra.mxu0 0.0
    %1291 = vmatprep.subr.mxu0 0.0
    %1292 = vmatpush2.msra.mxu0 0.0
    %1293 = vmatprep.mubr.f32.mxu0 0.0
    %1294 = vmatmul.mubr.f32.gmra.mxu0 %v1227
    %v1295 = vpop.f32.mrf.mxu0
    %v1296 = vadd.f32 0.0, %v1295
    %v1297 = vpop.f32.mrf.mxu0
    %v1298 = vadd.f32 0.0, %v1297
    %1299 = vdwg.mxu0
    %v1302 = vrot.slane %v1296, 6
    %v1303 = vrot.slane %v1298, 6
    %v1306 = vadd.f32 %v1225, %v1302
    %v1307 = vadd.f32 %v1226, %v1303
    %v1308 = vxor.u32 %v1306, 2147483648
    %v1309 = vxor.u32 %v1307, 2147483648
    %v1310 = vmul.f32 %v1308, 1.442695
    %v1311 = vpow.pop %v1310
    %v1312 = vmul.f32 %v1309, 1.442695
    %v1313 = vpow.pop %v1312
    %v1314 = vadd.f32 %v1311, 1.0
    %v1315 = vadd.f32 %v1313, 1.0
    %v1316 = vrcp.pop %v1314
    %v1317 = vmul.f32 1.0, %v1316
    %v1318 = vrcp.pop %v1315
    %v1319 = vmul.f32 1.0, %v1318
    %v1320 = vtanh.pop %v1307
    %v1322 = vrot.slane %v1208, 6
    %v1324 = vmul.f32 %v1317, %v1322
    %1326 = vrot.lane.b32.xlu0 %v1320, 64
    %v1327 = vpop.permute.xlu0 %1326
    %v1329 = vmul.f32 %v1317, %v1327
    %1331 = vrot.lane.b32.xlu0 %v1329, 64
    %v1332 = vpop.permute.xlu0 %1331
    %v1334 = vadd.f32 %v1324, %v1332
    %v1335 = vtanh.pop %v1334
    %1337 = vrot.lane.b32.xlu0 %v1335, 64
    %v1338 = vpop.permute.xlu0 %1337
    %v1340 = vmul.f32 %v1319, %v1338
    %1341 = vst.msk [vmem:[#allocation2 + $0x8] sm:$0xc] %vm847, %v1340
    %1343 = vrot.lane.b32.xlu0 %v1340, 96
    %v1344 = vpop.permute.xlu0 %1343
    %1346 = vst.msk [vmem:[#allocation3 + $0x2] sm:$0xc] %vm847, %v1344
    %v1347 = vrot.slane %v1340, 2
    %v1348 = vsel %vm613, %v1347, 0
    %1350 = vmatprep.subr.mxu0 0.0
    %1351 = vmatpush1.msra.mxu0 0.0
    %1352 = vmatprep.subr.mxu0 0.0
    %1353 = vmatpush1.msra.mxu0 0.0
    %1354 = vmatprep.subr.mxu0 0.0
    %1355 = vmatpush1.msra.mxu0 0.0
    %1356 = vmatprep.subr.mxu0 0.0
    %1357 = vmatpush1.msra.mxu0 0.0
    %1358 = vmatprep.subr.mxu0 0.0
    %1359 = vmatpush1.msra.mxu0 0.0
    %1360 = vmatprep.subr.mxu0 0.0
    %1361 = vmatpush1.msra.mxu0 0.0
    %1362 = vmatprep.subr.mxu0 0.0
    %1363 = vmatpush1.msra.mxu0 0.0
    %1364 = vmatprep.subr.mxu0 0.0
    %1365 = vmatpush1.msra.mxu0 0.0
    %1366 = vmatprep.subr.mxu0 %v419
    %1367 = vmatpush1.msra.mxu0 %v418
    %1368 = vmatprep.subr.mxu0 %v417
    %1369 = vmatpush1.msra.mxu0 %v416
    %1370 = vmatprep.subr.mxu0 %v415
    %1371 = vmatpush1.msra.mxu0 %v414
    %1372 = vmatprep.subr.mxu0 %v413
    %1373 = vmatpush1.msra.mxu0 %v412
    %1374 = vmatprep.subr.mxu0 %v411
    %1375 = vmatpush1.msra.mxu0 %v410
    %1376 = vmatprep.subr.mxu0 %v409
    %1377 = vmatpush1.msra.mxu0 %v408
    %1378 = vmatprep.subr.mxu0 %v407
    %1379 = vmatpush1.msra.mxu0 %v406
    %1380 = vmatprep.subr.mxu0 %v405
    %1381 = vmatpush1.msra.mxu0 %v404
    %1382 = vmatprep.subr.mxu0 0.0
    %1383 = vmatpush2.msra.mxu0 0.0
    %1384 = vmatprep.subr.mxu0 0.0
    %1385 = vmatpush2.msra.mxu0 0.0
    %1386 = vmatprep.subr.mxu0 0.0
    %1387 = vmatpush2.msra.mxu0 0.0
    %1388 = vmatprep.subr.mxu0 0.0
    %1389 = vmatpush2.msra.mxu0 0.0
    %1390 = vmatprep.subr.mxu0 0.0
    %1391 = vmatpush2.msra.mxu0 0.0
    %1392 = vmatprep.subr.mxu0 0.0
    %1393 = vmatpush2.msra.mxu0 0.0
    %1394 = vmatprep.subr.mxu0 0.0
    %1395 = vmatpush2.msra.mxu0 0.0
    %1396 = vmatprep.subr.mxu0 0.0
    %1397 = vmatpush2.msra.mxu0 0.0
    %1398 = vmatprep.subr.mxu0 0.0
    %1399 = vmatpush2.msra.mxu0 0.0
    %1400 = vmatprep.subr.mxu0 0.0
    %1401 = vmatpush2.msra.mxu0 0.0
    %1402 = vmatprep.subr.mxu0 0.0
    %1403 = vmatpush2.msra.mxu0 0.0
    %1404 = vmatprep.subr.mxu0 0.0
    %1405 = vmatpush2.msra.mxu0 0.0
    %1406 = vmatprep.subr.mxu0 0.0
    %1407 = vmatpush2.msra.mxu0 0.0
    %1408 = vmatprep.subr.mxu0 0.0
    %1409 = vmatpush2.msra.mxu0 0.0
    %1410 = vmatprep.subr.mxu0 0.0
    %1411 = vmatpush2.msra.mxu0 0.0
    %1412 = vmatprep.subr.mxu0 0.0
    %1413 = vmatpush2.msra.mxu0 0.0
    %1414 = vmatprep.mubr.f32.mxu0 0.0
    %1415 = vmatmul.mubr.f32.gmra.mxu0 %v1348
    %v1416 = vpop.f32.mrf.mxu0
    %v1417 = vadd.f32 0.0, %v1416
    %v1418 = vpop.f32.mrf.mxu0
    %v1419 = vadd.f32 0.0, %v1418
    %1420 = vdwg.mxu0
    %v1423 = vrot.slane %v1417, 4
    %v1424 = vrot.slane %v1419, 4
    %v1427 = vadd.f32 %v1104, %v1423
    %v1428 = vadd.f32 %v1105, %v1424
    %v1429 = vxor.u32 %v1427, 2147483648
    %v1430 = vxor.u32 %v1428, 2147483648
    %v1431 = vmul.f32 %v1429, 1.442695
    %v1432 = vpow.pop %v1431
    %v1433 = vmul.f32 %v1430, 1.442695
    %v1434 = vpow.pop %v1433
    %v1435 = vadd.f32 %v1432, 1.0
    %v1436 = vadd.f32 %v1434, 1.0
    %v1437 = vrcp.pop %v1435
    %v1438 = vmul.f32 1.0, %v1437
    %v1439 = vrcp.pop %v1436
    %v1440 = vmul.f32 1.0, %v1439
    %v1441 = vtanh.pop %v1428
    %v1443 = vrot.slane %v1334, 6
    %v1445 = vmul.f32 %v1438, %v1443
    %1447 = vrot.lane.b32.xlu0 %v1441, 64
    %v1448 = vpop.permute.xlu0 %1447
    %v1450 = vmul.f32 %v1438, %v1448
    %1452 = vrot.lane.b32.xlu0 %v1450, 64
    %v1453 = vpop.permute.xlu0 %1452
    %v1455 = vadd.f32 %v1445, %v1453
    %v1456 = vtanh.pop %v1455
    %1458 = vrot.lane.b32.xlu0 %v1456, 64
    %v1459 = vpop.permute.xlu0 %1458
    %v1461 = vmul.f32 %v1440, %v1459
    %1462 = vst.msk [vmem:[#allocation2 + $0x8] sm:$0x30] %vm969, %v1461
    %1464 = vrot.lane.b32.xlu0 %v1461, 96
    %v1465 = vpop.permute.xlu0 %1464
    %1467 = vst.msk [vmem:[#allocation3 - $0x2] sm:$0x30] %vm969, %v1465
    %v1468 = vrot.slane %v1461, 4
    %v1469 = vsel %vm613, %v1468, 0
    %1471 = vmatprep.subr.mxu0 0.0
    %1472 = vmatpush1.msra.mxu0 0.0
    %1473 = vmatprep.subr.mxu0 0.0
    %1474 = vmatpush1.msra.mxu0 0.0
    %1475 = vmatprep.subr.mxu0 0.0
    %1476 = vmatpush1.msra.mxu0 0.0
    %1477 = vmatprep.subr.mxu0 0.0
    %1478 = vmatpush1.msra.mxu0 0.0
    %1479 = vmatprep.subr.mxu0 0.0
    %1480 = vmatpush1.msra.mxu0 0.0
    %1481 = vmatprep.subr.mxu0 0.0
    %1482 = vmatpush1.msra.mxu0 0.0
    %1483 = vmatprep.subr.mxu0 0.0
    %1484 = vmatpush1.msra.mxu0 0.0
    %1485 = vmatprep.subr.mxu0 0.0
    %1486 = vmatpush1.msra.mxu0 0.0
    %1487 = vmatprep.subr.mxu0 %v419
    %1488 = vmatpush1.msra.mxu0 %v418
    %1489 = vmatprep.subr.mxu0 %v417
    %1490 = vmatpush1.msra.mxu0 %v416
    %1491 = vmatprep.subr.mxu0 %v415
    %1492 = vmatpush1.msra.mxu0 %v414
    %1493 = vmatprep.subr.mxu0 %v413
    %1494 = vmatpush1.msra.mxu0 %v412
    %1495 = vmatprep.subr.mxu0 %v411
    %1496 = vmatpush1.msra.mxu0 %v410
    %1497 = vmatprep.subr.mxu0 %v409
    %1498 = vmatpush1.msra.mxu0 %v408
    %1499 = vmatprep.subr.mxu0 %v407
    %1500 = vmatpush1.msra.mxu0 %v406
    %1501 = vmatprep.subr.mxu0 %v405
    %1502 = vmatpush1.msra.mxu0 %v404
    %1503 = vmatprep.subr.mxu0 0.0
    %1504 = vmatpush2.msra.mxu0 0.0
    %1505 = vmatprep.subr.mxu0 0.0
    %1506 = vmatpush2.msra.mxu0 0.0
    %1507 = vmatprep.subr.mxu0 0.0
    %1508 = vmatpush2.msra.mxu0 0.0
    %1509 = vmatprep.subr.mxu0 0.0
    %1510 = vmatpush2.msra.mxu0 0.0
    %1511 = vmatprep.subr.mxu0 0.0
    %1512 = vmatpush2.msra.mxu0 0.0
    %1513 = vmatprep.subr.mxu0 0.0
    %1514 = vmatpush2.msra.mxu0 0.0
    %1515 = vmatprep.subr.mxu0 0.0
    %1516 = vmatpush2.msra.mxu0 0.0
    %1517 = vmatprep.subr.mxu0 0.0
    %1518 = vmatpush2.msra.mxu0 0.0
    %1519 = vmatprep.subr.mxu0 0.0
    %1520 = vmatpush2.msra.mxu0 0.0
    %1521 = vmatprep.subr.mxu0 0.0
    %1522 = vmatpush2.msra.mxu0 0.0
    %1523 = vmatprep.subr.mxu0 0.0
    %1524 = vmatpush2.msra.mxu0 0.0
    %1525 = vmatprep.subr.mxu0 0.0
    %1526 = vmatpush2.msra.mxu0 0.0
    %1527 = vmatprep.subr.mxu0 0.0
    %1528 = vmatpush2.msra.mxu0 0.0
    %1529 = vmatprep.subr.mxu0 0.0
    %1530 = vmatpush2.msra.mxu0 0.0
    %1531 = vmatprep.subr.mxu0 0.0
    %1532 = vmatpush2.msra.mxu0 0.0
    %1533 = vmatprep.subr.mxu0 0.0
    %1534 = vmatpush2.msra.mxu0 0.0
    %1535 = vmatprep.mubr.f32.mxu0 0.0
    %1536 = vmatmul.mubr.f32.gmra.mxu0 %v1469
    %v1537 = vpop.f32.mrf.mxu0
    %v1538 = vadd.f32 0.0, %v1537
    %v1539 = vpop.f32.mrf.mxu0
    %v1540 = vadd.f32 0.0, %v1539
    %1541 = vdwg.mxu0
    %v1544 = vrot.slane %v1538, 2
    %v1545 = vrot.slane %v1540, 2
    %v1548 = vadd.f32 %v1225, %v1544
    %v1549 = vadd.f32 %v1226, %v1545
    %v1550 = vxor.u32 %v1548, 2147483648
    %v1551 = vxor.u32 %v1549, 2147483648
    %v1552 = vmul.f32 %v1550, 1.442695
    %v1553 = vpow.pop %v1552
    %v1554 = vmul.f32 %v1551, 1.442695
    %v1555 = vpow.pop %v1554
    %v1556 = vadd.f32 %v1553, 1.0
    %v1557 = vadd.f32 %v1555, 1.0
    %v1558 = vrcp.pop %v1556
    %v1559 = vmul.f32 1.0, %v1558
    %v1560 = vrcp.pop %v1557
    %v1561 = vmul.f32 1.0, %v1560
    %v1562 = vtanh.pop %v1549
    %v1564 = vrot.slane %v1455, 6
    %v1566 = vmul.f32 %v1559, %v1564
    %1568 = vrot.lane.b32.xlu0 %v1562, 64
    %v1569 = vpop.permute.xlu0 %1568
    %v1571 = vmul.f32 %v1559, %v1569
    %1573 = vrot.lane.b32.xlu0 %v1571, 64
    %v1574 = vpop.permute.xlu0 %1573
    %v1576 = vadd.f32 %v1566, %v1574
    %v1577 = vtanh.pop %v1576
    %1579 = vrot.lane.b32.xlu0 %v1577, 64
    %v1580 = vpop.permute.xlu0 %1579
    %v1582 = vmul.f32 %v1561, %v1580
    %1583 = vst.msk [vmem:[#allocation2 + $0x8] sm:$0xc0] %vm1091, %v1582
    %1585 = vrot.lane.b32.xlu0 %v1582, 96
    %v1586 = vpop.permute.xlu0 %1585
    %1588 = vst.msk [vmem:[#allocation3 - $0x6] sm:$0xc0] %vm1091, %v1586
    %v1589 = vld [vmem:[#allocation2] sm:$0xff]
    %v1590 = vld [vmem:[#allocation2 + $0x8] sm:$0xff]
    %v1591 = vld [vmem:[#allocation3] sm:$0xff]
    %v1592 = vld [vmem:[#allocation3 + $0x8] sm:$0xff]
    %1595 = vrot.lane.b32.xlu0 %v1591, 32
    %v1596 = vpop.permute.xlu0 %1595
    %1597 = vrot.lane.b32.xlu0 %v1592, 32
    %v1598 = vpop.permute.xlu0 %1597
    %vm1601 = vcmask 261120
    %v1602 = vsel %vm1601, %v1589, %v1596
    %v1603 = vsel %vm1601, %v1590, %v1598
    %v1604 = vld [vmem:[#allocation13] sm:$0xff]
    %v1605 = vld [vmem:[#allocation13 + $0x8] sm:$0xff]
    %v1606 = vld [vmem:[#allocation13 + $0x10] sm:$0xff]
    %v1607 = vld [vmem:[#allocation13 + $0x18] sm:$0xff]
    %v1608 = vld [vmem:[#allocation13 + $0x20] sm:$0xff]
    %v1609 = vld [vmem:[#allocation13 + $0x28] sm:$0xff]
    %v1610 = vld [vmem:[#allocation13 + $0x30] sm:$0xff]
    %v1611 = vld [vmem:[#allocation13 + $0x38] sm:$0xff]
    %v1612 = vld [vmem:[#allocation13 + $0x40] sm:$0xff]
    %v1613 = vld [vmem:[#allocation13 + $0x48] sm:$0xff]
    %v1614 = vld [vmem:[#allocation13 + $0x50] sm:$0xff]
    %v1615 = vld [vmem:[#allocation13 + $0x58] sm:$0xff]
    %v1616 = vld [vmem:[#allocation13 + $0x60] sm:$0xff]
    %v1617 = vld [vmem:[#allocation13 + $0x68] sm:$0xff]
    %v1618 = vld [vmem:[#allocation13 + $0x70] sm:$0xff]
    %v1619 = vld [vmem:[#allocation13 + $0x78] sm:$0xff]
    %v1620 = vld [vmem:[#allocation15] sm:$0xff]
    %v1621 = vld [vmem:[#allocation15 + $0x8] sm:$0xff]
    %v1622 = vld [vmem:[#allocation15 + $0x10] sm:$0xff]
    %v1623 = vld [vmem:[#allocation15 + $0x18] sm:$0xff]
    %v1624 = vld [vmem:[#allocation15 + $0x20] sm:$0xff]
    %v1625 = vld [vmem:[#allocation15 + $0x28] sm:$0xff]
    %v1626 = vld [vmem:[#allocation15 + $0x30] sm:$0xff]
    %v1627 = vld [vmem:[#allocation15 + $0x38] sm:$0xff]
    %v1628 = vld [vmem:[#allocation15 + $0x40] sm:$0xff]
    %v1629 = vld [vmem:[#allocation15 + $0x48] sm:$0xff]
    %v1630 = vld [vmem:[#allocation15 + $0x50] sm:$0xff]
    %v1631 = vld [vmem:[#allocation15 + $0x58] sm:$0xff]
    %v1632 = vld [vmem:[#allocation15 + $0x60] sm:$0xff]
    %v1633 = vld [vmem:[#allocation15 + $0x68] sm:$0xff]
    %v1634 = vld [vmem:[#allocation15 + $0x70] sm:$0xff]
    %v1635 = vld [vmem:[#allocation15 + $0x78] sm:$0xff]
    %v1636 = vld [vmem:[#allocation16] sm:$0xff]
    %v1637 = vld [vmem:[#allocation16 + $0x8] sm:$0xff]
    %v1638 = vld [vmem:[#allocation16 + $0x10] sm:$0xff]
    %v1639 = vld [vmem:[#allocation16 + $0x18] sm:$0xff]
    %v1640 = vld [vmem:[#allocation16 + $0x20] sm:$0xff]
    %v1641 = vld [vmem:[#allocation16 + $0x28] sm:$0xff]
    %v1642 = vld [vmem:[#allocation16 + $0x30] sm:$0xff]
    %v1643 = vld [vmem:[#allocation16 + $0x38] sm:$0xff]
    %v1644 = vld [vmem:[#allocation16 + $0x40] sm:$0xff]
    %v1645 = vld [vmem:[#allocation16 + $0x48] sm:$0xff]
    %v1646 = vld [vmem:[#allocation16 + $0x50] sm:$0xff]
    %v1647 = vld [vmem:[#allocation16 + $0x58] sm:$0xff]
    %v1648 = vld [vmem:[#allocation16 + $0x60] sm:$0xff]
    %v1649 = vld [vmem:[#allocation16 + $0x68] sm:$0xff]
    %v1650 = vld [vmem:[#allocation16 + $0x70] sm:$0xff]
    %v1651 = vld [vmem:[#allocation16 + $0x78] sm:$0xff]
    %v1652 = vld [vmem:[%s29] sm:$0x3]
    %v1654 = vlaneseq
    %v1655 = vshrl.u32 %v1654, 7
    %v1656 = vsub.s32 0, %v1655
    %v1657 = vrot.slane %v1652, %v1656
    %v1658 = vlaneseq
    %v1659 = vshrl.u32 %v1658, 7
    %v1660 = vsub.s32 1, %v1659
    %v1661 = vrot.slane %v1652, %v1660
    %v1665 = vsel %vm613, %v1602, 0
    %v1668 = vsel %vm613, %v1603, 0
    %1670 = vmatprep.subr.mxu0 0.0
    %1671 = vmatpush1.msra.mxu0 0.0
    %1672 = vmatprep.subr.mxu0 0.0
    %1673 = vmatpush1.msra.mxu0 0.0
    %1674 = vmatprep.subr.mxu0 0.0
    %1675 = vmatpush1.msra.mxu0 0.0
    %1676 = vmatprep.subr.mxu0 0.0
    %1677 = vmatpush1.msra.mxu0 0.0
    %1678 = vmatprep.subr.mxu0 0.0
    %1679 = vmatpush1.msra.mxu0 0.0
    %1680 = vmatprep.subr.mxu0 0.0
    %1681 = vmatpush1.msra.mxu0 0.0
    %1682 = vmatprep.subr.mxu0 0.0
    %1683 = vmatpush1.msra.mxu0 0.0
    %1684 = vmatprep.subr.mxu0 0.0
    %1685 = vmatpush1.msra.mxu0 0.0
    %1686 = vmatprep.subr.mxu0 %v1619
    %1687 = vmatpush1.msra.mxu0 %v1618
    %1688 = vmatprep.subr.mxu0 %v1617
    %1689 = vmatpush1.msra.mxu0 %v1616
    %1690 = vmatprep.subr.mxu0 %v1615
    %1691 = vmatpush1.msra.mxu0 %v1614
    %1692 = vmatprep.subr.mxu0 %v1613
    %1693 = vmatpush1.msra.mxu0 %v1612
    %1694 = vmatprep.subr.mxu0 %v1611
    %1695 = vmatpush1.msra.mxu0 %v1610
    %1696 = vmatprep.subr.mxu0 %v1609
    %1697 = vmatpush1.msra.mxu0 %v1608
    %1698 = vmatprep.subr.mxu0 %v1607
    %1699 = vmatpush1.msra.mxu0 %v1606
    %1700 = vmatprep.subr.mxu0 %v1605
    %1701 = vmatpush1.msra.mxu0 %v1604
    %1702 = vmatprep.subr.mxu0 0.0
    %1703 = vmatpush2.msra.mxu0 0.0
    %1704 = vmatprep.subr.mxu0 0.0
    %1705 = vmatpush2.msra.mxu0 0.0
    %1706 = vmatprep.subr.mxu0 0.0
    %1707 = vmatpush2.msra.mxu0 0.0
    %1708 = vmatprep.subr.mxu0 0.0
    %1709 = vmatpush2.msra.mxu0 0.0
    %1710 = vmatprep.subr.mxu0 0.0
    %1711 = vmatpush2.msra.mxu0 0.0
    %1712 = vmatprep.subr.mxu0 0.0
    %1713 = vmatpush2.msra.mxu0 0.0
    %1714 = vmatprep.subr.mxu0 0.0
    %1715 = vmatpush2.msra.mxu0 0.0
    %1716 = vmatprep.subr.mxu0 0.0
    %1717 = vmatpush2.msra.mxu0 0.0
    %1718 = vmatprep.subr.mxu0 0.0
    %1719 = vmatpush2.msra.mxu0 0.0
    %1720 = vmatprep.subr.mxu0 0.0
    %1721 = vmatpush2.msra.mxu0 0.0
    %1722 = vmatprep.subr.mxu0 0.0
    %1723 = vmatpush2.msra.mxu0 0.0
    %1724 = vmatprep.subr.mxu0 0.0
    %1725 = vmatpush2.msra.mxu0 0.0
    %1726 = vmatprep.subr.mxu0 0.0
    %1727 = vmatpush2.msra.mxu0 0.0
    %1728 = vmatprep.subr.mxu0 0.0
    %1729 = vmatpush2.msra.mxu0 0.0
    %1730 = vmatprep.subr.mxu0 0.0
    %1731 = vmatpush2.msra.mxu0 0.0
    %1732 = vmatprep.subr.mxu0 0.0
    %1733 = vmatpush2.msra.mxu0 0.0
    %1734 = vmatprep.mubr.f32.mxu0 0.0
    %1735 = vmatmul.mubr.f32.gmra.mxu0 %v1665
    %v1736 = vpop.f32.mrf.mxu0
    %v1737 = vadd.f32 %v1657, %v1736
    %v1738 = vpop.f32.mrf.mxu0
    %v1739 = vadd.f32 %v1661, %v1738
    %1740 = vmatprep.mubr.f32.mxu0 0.0
    %1741 = vmatmul.mubr.f32.gmra.mxu0 %v1668
    %v1742 = vpop.f32.mrf.mxu0
    %v1743 = vadd.f32 %v1657, %v1742
    %v1744 = vpop.f32.mrf.mxu0
    %v1745 = vadd.f32 %v1661, %v1744
    %1746 = vdwg.mxu0
    %1747 = vmatprep.subr.mxu0 0.0
    %1748 = vmatpush1.msra.mxu0 0.0
    %1749 = vmatprep.subr.mxu0 0.0
    %1750 = vmatpush1.msra.mxu0 0.0
    %1751 = vmatprep.subr.mxu0 0.0
    %1752 = vmatpush1.msra.mxu0 0.0
    %1753 = vmatprep.subr.mxu0 0.0
    %1754 = vmatpush1.msra.mxu0 0.0
    %1755 = vmatprep.subr.mxu0 0.0
    %1756 = vmatpush1.msra.mxu0 0.0
    %1757 = vmatprep.subr.mxu0 0.0
    %1758 = vmatpush1.msra.mxu0 0.0
    %1759 = vmatprep.subr.mxu0 0.0
    %1760 = vmatpush1.msra.mxu0 0.0
    %1761 = vmatprep.subr.mxu0 0.0
    %1762 = vmatpush1.msra.mxu0 0.0
    %1763 = vmatprep.subr.mxu0 %v1635
    %1764 = vmatpush1.msra.mxu0 %v1634
    %1765 = vmatprep.subr.mxu0 %v1633
    %1766 = vmatpush1.msra.mxu0 %v1632
    %1767 = vmatprep.subr.mxu0 %v1631
    %1768 = vmatpush1.msra.mxu0 %v1630
    %1769 = vmatprep.subr.mxu0 %v1629
    %1770 = vmatpush1.msra.mxu0 %v1628
    %1771 = vmatprep.subr.mxu0 %v1627
    %1772 = vmatpush1.msra.mxu0 %v1626
    %1773 = vmatprep.subr.mxu0 %v1625
    %1774 = vmatpush1.msra.mxu0 %v1624
    %1775 = vmatprep.subr.mxu0 %v1623
    %1776 = vmatpush1.msra.mxu0 %v1622
    %1777 = vmatprep.subr.mxu0 %v1621
    %1778 = vmatpush1.msra.mxu0 %v1620
    %1779 = vmatprep.subr.mxu0 0.0
    %1780 = vmatpush2.msra.mxu0 0.0
    %1781 = vmatprep.subr.mxu0 0.0
    %1782 = vmatpush2.msra.mxu0 0.0
    %1783 = vmatprep.subr.mxu0 0.0
    %1784 = vmatpush2.msra.mxu0 0.0
    %1785 = vmatprep.subr.mxu0 0.0
    %1786 = vmatpush2.msra.mxu0 0.0
    %1787 = vmatprep.subr.mxu0 0.0
    %1788 = vmatpush2.msra.mxu0 0.0
    %1789 = vmatprep.subr.mxu0 0.0
    %1790 = vmatpush2.msra.mxu0 0.0
    %1791 = vmatprep.subr.mxu0 0.0
    %1792 = vmatpush2.msra.mxu0 0.0
    %1793 = vmatprep.subr.mxu0 0.0
    %1794 = vmatpush2.msra.mxu0 0.0
    %1795 = vmatprep.subr.mxu0 0.0
    %1796 = vmatpush2.msra.mxu0 0.0
    %1797 = vmatprep.subr.mxu0 0.0
    %1798 = vmatpush2.msra.mxu0 0.0
    %1799 = vmatprep.subr.mxu0 0.0
    %1800 = vmatpush2.msra.mxu0 0.0
    %1801 = vmatprep.subr.mxu0 0.0
    %1802 = vmatpush2.msra.mxu0 0.0
    %1803 = vmatprep.subr.mxu0 0.0
    %1804 = vmatpush2.msra.mxu0 0.0
    %1805 = vmatprep.subr.mxu0 0.0
    %1806 = vmatpush2.msra.mxu0 0.0
    %1807 = vmatprep.subr.mxu0 0.0
    %1808 = vmatpush2.msra.mxu0 0.0
    %1809 = vmatprep.subr.mxu0 0.0
    %1810 = vmatpush2.msra.mxu0 0.0
    %1811 = vmatprep.mubr.f32.mxu0 0.0
    %1812 = vmatmul.mubr.f32.gmra.mxu0 %v1665
    %v1813 = vpop.f32.mrf.mxu0
    %v1814 = vadd.f32 0.0, %v1813
    %v1815 = vpop.f32.mrf.mxu0
    %v1816 = vadd.f32 0.0, %v1815
    %1817 = vmatprep.mubr.f32.mxu0 0.0
    %1818 = vmatmul.mubr.f32.gmra.mxu0 %v1668
    %v1819 = vpop.f32.mrf.mxu0
    %v1820 = vadd.f32 0.0, %v1819
    %v1821 = vpop.f32.mrf.mxu0
    %v1822 = vadd.f32 0.0, %v1821
    %1823 = vdwg.mxu0
    %v1826 = vrot.slane %v1820, 6
    %v1827 = vrot.slane %v1822, 6
    %v1830 = vadd.f32 %v1737, %v1826
    %v1831 = vadd.f32 %v1739, %v1827
    %1832 = vmatprep.subr.mxu0 0.0
    %1833 = vmatpush1.msra.mxu0 0.0
    %1834 = vmatprep.subr.mxu0 0.0
    %1835 = vmatpush1.msra.mxu0 0.0
    %1836 = vmatprep.subr.mxu0 0.0
    %1837 = vmatpush1.msra.mxu0 0.0
    %1838 = vmatprep.subr.mxu0 0.0
    %1839 = vmatpush1.msra.mxu0 0.0
    %1840 = vmatprep.subr.mxu0 0.0
    %1841 = vmatpush1.msra.mxu0 0.0
    %1842 = vmatprep.subr.mxu0 0.0
    %1843 = vmatpush1.msra.mxu0 0.0
    %1844 = vmatprep.subr.mxu0 0.0
    %1845 = vmatpush1.msra.mxu0 0.0
    %1846 = vmatprep.subr.mxu0 0.0
    %1847 = vmatpush1.msra.mxu0 0.0
    %1848 = vmatprep.subr.mxu0 %v1651
    %1849 = vmatpush1.msra.mxu0 %v1650
    %1850 = vmatprep.subr.mxu0 %v1649
    %1851 = vmatpush1.msra.mxu0 %v1648
    %1852 = vmatprep.subr.mxu0 %v1647
    %1853 = vmatpush1.msra.mxu0 %v1646
    %1854 = vmatprep.subr.mxu0 %v1645
    %1855 = vmatpush1.msra.mxu0 %v1644
    %1856 = vmatprep.subr.mxu0 %v1643
    %1857 = vmatpush1.msra.mxu0 %v1642
    %1858 = vmatprep.subr.mxu0 %v1641
    %1859 = vmatpush1.msra.mxu0 %v1640
    %1860 = vmatprep.subr.mxu0 %v1639
    %1861 = vmatpush1.msra.mxu0 %v1638
    %1862 = vmatprep.subr.mxu0 %v1637
    %1863 = vmatpush1.msra.mxu0 %v1636
    %1864 = vmatprep.subr.mxu0 0.0
    %1865 = vmatpush2.msra.mxu0 0.0
    %1866 = vmatprep.subr.mxu0 0.0
    %1867 = vmatpush2.msra.mxu0 0.0
    %1868 = vmatprep.subr.mxu0 0.0
    %1869 = vmatpush2.msra.mxu0 0.0
    %1870 = vmatprep.subr.mxu0 0.0
    %1871 = vmatpush2.msra.mxu0 0.0
    %1872 = vmatprep.subr.mxu0 0.0
    %1873 = vmatpush2.msra.mxu0 0.0
    %1874 = vmatprep.subr.mxu0 0.0
    %1875 = vmatpush2.msra.mxu0 0.0
    %1876 = vmatprep.subr.mxu0 0.0
    %1877 = vmatpush2.msra.mxu0 0.0
    %1878 = vmatprep.subr.mxu0 0.0
    %1879 = vmatpush2.msra.mxu0 0.0
    %1880 = vmatprep.subr.mxu0 0.0
    %1881 = vmatpush2.msra.mxu0 0.0
    %1882 = vmatprep.subr.mxu0 0.0
    %1883 = vmatpush2.msra.mxu0 0.0
    %1884 = vmatprep.subr.mxu0 0.0
    %1885 = vmatpush2.msra.mxu0 0.0
    %1886 = vmatprep.subr.mxu0 0.0
    %1887 = vmatpush2.msra.mxu0 0.0
    %1888 = vmatprep.subr.mxu0 0.0
    %1889 = vmatpush2.msra.mxu0 0.0
    %1890 = vmatprep.subr.mxu0 0.0
    %1891 = vmatpush2.msra.mxu0 0.0
    %1892 = vmatprep.subr.mxu0 0.0
    %1893 = vmatpush2.msra.mxu0 0.0
    %1894 = vmatprep.subr.mxu0 0.0
    %1895 = vmatpush2.msra.mxu0 0.0
    %1896 = vmatprep.mubr.f32.mxu0 0.0
    %1897 = vmatmul.mubr.f32.gmra.mxu0 %v615
    %v1898 = vpop.f32.mrf.mxu0
    %v1899 = vadd.f32 0.0, %v1898
    %v1900 = vpop.f32.mrf.mxu0
    %v1901 = vadd.f32 0.0, %v1900
    %1902 = vdwg.mxu0
    %v1903 = vadd.f32 %v1830, %v1899
    %v1904 = vadd.f32 %v1831, %v1901
    %v1905 = vxor.u32 %v1903, 2147483648
    %v1906 = vxor.u32 %v1904, 2147483648
    %v1907 = vmul.f32 %v1905, 1.442695
    %v1908 = vpow.pop %v1907
    %v1909 = vmul.f32 %v1906, 1.442695
    %v1910 = vpow.pop %v1909
    %v1911 = vadd.f32 %v1908, 1.0
    %v1912 = vadd.f32 %v1910, 1.0
    %v1913 = vrcp.pop %v1911
    %v1914 = vmul.f32 1.0, %v1913
    %v1915 = vrcp.pop %v1912
    %v1916 = vmul.f32 1.0, %v1915
    %v1917 = vtanh.pop %v1904
    %v1918 = vmul.f32 %v1914, 0.0
    %1920 = vrot.lane.b32.xlu0 %v1917, 64
    %v1921 = vpop.permute.xlu0 %1920
    %v1923 = vmul.f32 %v1914, %v1921
    %1925 = vrot.lane.b32.xlu0 %v1923, 64
    %v1926 = vpop.permute.xlu0 %1925
    %v1928 = vadd.f32 %v1918, %v1926
    %v1929 = vtanh.pop %v1928
    %1931 = vrot.lane.b32.xlu0 %v1929, 64
    %v1932 = vpop.permute.xlu0 %1931
    %v1934 = vmul.f32 %v1916, %v1932
    %1935 = vst.msk [vmem:[#allocation2] sm:$0x3] %vm720, %v1934
    %1937 = vrot.lane.b32.xlu0 %v1934, 96
    %v1938 = vpop.permute.xlu0 %1937
    %1940 = vst.msk [vmem:[#allocation3 + $0xe] sm:$0x3] %vm720, %v1938
    %v1941 = vrot.slane %v1820, 2
    %v1942 = vrot.slane %v1822, 2
    %v1945 = vadd.f32 %v1737, %v1941
    %v1946 = vadd.f32 %v1739, %v1942
    %v1947 = vsel %vm613, %v1934, 0
    %1949 = vmatprep.subr.mxu0 0.0
    %1950 = vmatpush1.msra.mxu0 0.0
    %1951 = vmatprep.subr.mxu0 0.0
    %1952 = vmatpush1.msra.mxu0 0.0
    %1953 = vmatprep.subr.mxu0 0.0
    %1954 = vmatpush1.msra.mxu0 0.0
    %1955 = vmatprep.subr.mxu0 0.0
    %1956 = vmatpush1.msra.mxu0 0.0
    %1957 = vmatprep.subr.mxu0 0.0
    %1958 = vmatpush1.msra.mxu0 0.0
    %1959 = vmatprep.subr.mxu0 0.0
    %1960 = vmatpush1.msra.mxu0 0.0
    %1961 = vmatprep.subr.mxu0 0.0
    %1962 = vmatpush1.msra.mxu0 0.0
    %1963 = vmatprep.subr.mxu0 0.0
    %1964 = vmatpush1.msra.mxu0 0.0
    %1965 = vmatprep.subr.mxu0 %v1651
    %1966 = vmatpush1.msra.mxu0 %v1650
    %1967 = vmatprep.subr.mxu0 %v1649
    %1968 = vmatpush1.msra.mxu0 %v1648
    %1969 = vmatprep.subr.mxu0 %v1647
    %1970 = vmatpush1.msra.mxu0 %v1646
    %1971 = vmatprep.subr.mxu0 %v1645
    %1972 = vmatpush1.msra.mxu0 %v1644
    %1973 = vmatprep.subr.mxu0 %v1643
    %1974 = vmatpush1.msra.mxu0 %v1642
    %1975 = vmatprep.subr.mxu0 %v1641
    %1976 = vmatpush1.msra.mxu0 %v1640
    %1977 = vmatprep.subr.mxu0 %v1639
    %1978 = vmatpush1.msra.mxu0 %v1638
    %1979 = vmatprep.subr.mxu0 %v1637
    %1980 = vmatpush1.msra.mxu0 %v1636
    %1981 = vmatprep.subr.mxu0 0.0
    %1982 = vmatpush2.msra.mxu0 0.0
    %1983 = vmatprep.subr.mxu0 0.0
    %1984 = vmatpush2.msra.mxu0 0.0
    %1985 = vmatprep.subr.mxu0 0.0
    %1986 = vmatpush2.msra.mxu0 0.0
    %1987 = vmatprep.subr.mxu0 0.0
    %1988 = vmatpush2.msra.mxu0 0.0
    %1989 = vmatprep.subr.mxu0 0.0
    %1990 = vmatpush2.msra.mxu0 0.0
    %1991 = vmatprep.subr.mxu0 0.0
    %1992 = vmatpush2.msra.mxu0 0.0
    %1993 = vmatprep.subr.mxu0 0.0
    %1994 = vmatpush2.msra.mxu0 0.0
    %1995 = vmatprep.subr.mxu0 0.0
    %1996 = vmatpush2.msra.mxu0 0.0
    %1997 = vmatprep.subr.mxu0 0.0
    %1998 = vmatpush2.msra.mxu0 0.0
    %1999 = vmatprep.subr.mxu0 0.0
    %2000 = vmatpush2.msra.mxu0 0.0
    %2001 = vmatprep.subr.mxu0 0.0
    %2002 = vmatpush2.msra.mxu0 0.0
    %2003 = vmatprep.subr.mxu0 0.0
    %2004 = vmatpush2.msra.mxu0 0.0
    %2005 = vmatprep.subr.mxu0 0.0
    %2006 = vmatpush2.msra.mxu0 0.0
    %2007 = vmatprep.subr.mxu0 0.0
    %2008 = vmatpush2.msra.mxu0 0.0
    %2009 = vmatprep.subr.mxu0 0.0
    %2010 = vmatpush2.msra.mxu0 0.0
    %2011 = vmatprep.subr.mxu0 0.0
    %2012 = vmatpush2.msra.mxu0 0.0
    %2013 = vmatprep.mubr.f32.mxu0 0.0
    %2014 = vmatmul.mubr.f32.gmra.mxu0 %v1947
    %v2015 = vpop.f32.mrf.mxu0
    %v2016 = vadd.f32 0.0, %v2015
    %v2017 = vpop.f32.mrf.mxu0
    %v2018 = vadd.f32 0.0, %v2017
    %2019 = vdwg.mxu0
    %v2022 = vrot.slane %v2016, 6
    %v2023 = vrot.slane %v2018, 6
    %v2026 = vadd.f32 %v1945, %v2022
    %v2027 = vadd.f32 %v1946, %v2023
    %v2028 = vxor.u32 %v2026, 2147483648
    %v2029 = vxor.u32 %v2027, 2147483648
    %v2030 = vmul.f32 %v2028, 1.442695
    %v2031 = vpow.pop %v2030
    %v2032 = vmul.f32 %v2029, 1.442695
    %v2033 = vpow.pop %v2032
    %v2034 = vadd.f32 %v2031, 1.0
    %v2035 = vadd.f32 %v2033, 1.0
    %v2036 = vrcp.pop %v2034
    %v2037 = vmul.f32 1.0, %v2036
    %v2038 = vrcp.pop %v2035
    %v2039 = vmul.f32 1.0, %v2038
    %v2040 = vtanh.pop %v2027
    %v2042 = vrot.slane %v1928, 6
    %v2044 = vmul.f32 %v2037, %v2042
    %2046 = vrot.lane.b32.xlu0 %v2040, 64
    %v2047 = vpop.permute.xlu0 %2046
    %v2049 = vmul.f32 %v2037, %v2047
    %2051 = vrot.lane.b32.xlu0 %v2049, 64
    %v2052 = vpop.permute.xlu0 %2051
    %v2054 = vadd.f32 %v2044, %v2052
    %v2055 = vtanh.pop %v2054
    %2057 = vrot.lane.b32.xlu0 %v2055, 64
    %v2058 = vpop.permute.xlu0 %2057
    %v2060 = vmul.f32 %v2039, %v2058
    %2061 = vst.msk [vmem:[#allocation2] sm:$0xc] %vm847, %v2060
    %2063 = vrot.lane.b32.xlu0 %v2060, 96
    %v2064 = vpop.permute.xlu0 %2063
    %2066 = vst.msk [vmem:[#allocation3 + $0xa] sm:$0xc] %vm847, %v2064
    %v2067 = vrot.slane %v2060, 2
    %v2068 = vsel %vm613, %v2067, 0
    %2070 = vmatprep.subr.mxu0 0.0
    %2071 = vmatpush1.msra.mxu0 0.0
    %2072 = vmatprep.subr.mxu0 0.0
    %2073 = vmatpush1.msra.mxu0 0.0
    %2074 = vmatprep.subr.mxu0 0.0
    %2075 = vmatpush1.msra.mxu0 0.0
    %2076 = vmatprep.subr.mxu0 0.0
    %2077 = vmatpush1.msra.mxu0 0.0
    %2078 = vmatprep.subr.mxu0 0.0
    %2079 = vmatpush1.msra.mxu0 0.0
    %2080 = vmatprep.subr.mxu0 0.0
    %2081 = vmatpush1.msra.mxu0 0.0
    %2082 = vmatprep.subr.mxu0 0.0
    %2083 = vmatpush1.msra.mxu0 0.0
    %2084 = vmatprep.subr.mxu0 0.0
    %2085 = vmatpush1.msra.mxu0 0.0
    %2086 = vmatprep.subr.mxu0 %v1651
    %2087 = vmatpush1.msra.mxu0 %v1650
    %2088 = vmatprep.subr.mxu0 %v1649
    %2089 = vmatpush1.msra.mxu0 %v1648
    %2090 = vmatprep.subr.mxu0 %v1647
    %2091 = vmatpush1.msra.mxu0 %v1646
    %2092 = vmatprep.subr.mxu0 %v1645
    %2093 = vmatpush1.msra.mxu0 %v1644
    %2094 = vmatprep.subr.mxu0 %v1643
    %2095 = vmatpush1.msra.mxu0 %v1642
    %2096 = vmatprep.subr.mxu0 %v1641
    %2097 = vmatpush1.msra.mxu0 %v1640
    %2098 = vmatprep.subr.mxu0 %v1639
    %2099 = vmatpush1.msra.mxu0 %v1638
    %2100 = vmatprep.subr.mxu0 %v1637
    %2101 = vmatpush1.msra.mxu0 %v1636
    %2102 = vmatprep.subr.mxu0 0.0
    %2103 = vmatpush2.msra.mxu0 0.0
    %2104 = vmatprep.subr.mxu0 0.0
    %2105 = vmatpush2.msra.mxu0 0.0
    %2106 = vmatprep.subr.mxu0 0.0
    %2107 = vmatpush2.msra.mxu0 0.0
    %2108 = vmatprep.subr.mxu0 0.0
    %2109 = vmatpush2.msra.mxu0 0.0
    %2110 = vmatprep.subr.mxu0 0.0
    %2111 = vmatpush2.msra.mxu0 0.0
    %2112 = vmatprep.subr.mxu0 0.0
    %2113 = vmatpush2.msra.mxu0 0.0
    %2114 = vmatprep.subr.mxu0 0.0
    %2115 = vmatpush2.msra.mxu0 0.0
    %2116 = vmatprep.subr.mxu0 0.0
    %2117 = vmatpush2.msra.mxu0 0.0
    %2118 = vmatprep.subr.mxu0 0.0
    %2119 = vmatpush2.msra.mxu0 0.0
    %2120 = vmatprep.subr.mxu0 0.0
    %2121 = vmatpush2.msra.mxu0 0.0
    %2122 = vmatprep.subr.mxu0 0.0
    %2123 = vmatpush2.msra.mxu0 0.0
    %2124 = vmatprep.subr.mxu0 0.0
    %2125 = vmatpush2.msra.mxu0 0.0
    %2126 = vmatprep.subr.mxu0 0.0
    %2127 = vmatpush2.msra.mxu0 0.0
    %2128 = vmatprep.subr.mxu0 0.0
    %2129 = vmatpush2.msra.mxu0 0.0
    %2130 = vmatprep.subr.mxu0 0.0
    %2131 = vmatpush2.msra.mxu0 0.0
    %2132 = vmatprep.subr.mxu0 0.0
    %2133 = vmatpush2.msra.mxu0 0.0
    %2134 = vmatprep.mubr.f32.mxu0 0.0
    %2135 = vmatmul.mubr.f32.gmra.mxu0 %v2068
    %v2136 = vpop.f32.mrf.mxu0
    %v2137 = vadd.f32 0.0, %v2136
    %v2138 = vpop.f32.mrf.mxu0
    %v2139 = vadd.f32 0.0, %v2138
    %2140 = vdwg.mxu0
    %v2143 = vrot.slane %v2137, 4
    %v2144 = vrot.slane %v2139, 4
    %v2147 = vadd.f32 %v1830, %v2143
    %v2148 = vadd.f32 %v1831, %v2144
    %v2149 = vxor.u32 %v2147, 2147483648
    %v2150 = vxor.u32 %v2148, 2147483648
    %v2151 = vmul.f32 %v2149, 1.442695
    %v2152 = vpow.pop %v2151
    %v2153 = vmul.f32 %v2150, 1.442695
    %v2154 = vpow.pop %v2153
    %v2155 = vadd.f32 %v2152, 1.0
    %v2156 = vadd.f32 %v2154, 1.0
    %v2157 = vrcp.pop %v2155
    %v2158 = vmul.f32 1.0, %v2157
    %v2159 = vrcp.pop %v2156
    %v2160 = vmul.f32 1.0, %v2159
    %v2161 = vtanh.pop %v2148
    %v2163 = vrot.slane %v2054, 6
    %v2165 = vmul.f32 %v2158, %v2163
    %2167 = vrot.lane.b32.xlu0 %v2161, 64
    %v2168 = vpop.permute.xlu0 %2167
    %v2170 = vmul.f32 %v2158, %v2168
    %2172 = vrot.lane.b32.xlu0 %v2170, 64
    %v2173 = vpop.permute.xlu0 %2172
    %v2175 = vadd.f32 %v2165, %v2173
    %v2176 = vtanh.pop %v2175
    %2178 = vrot.lane.b32.xlu0 %v2176, 64
    %v2179 = vpop.permute.xlu0 %2178
    %v2181 = vmul.f32 %v2160, %v2179
    %2182 = vst.msk [vmem:[#allocation2] sm:$0x30] %vm969, %v2181
    %2184 = vrot.lane.b32.xlu0 %v2181, 96
    %v2185 = vpop.permute.xlu0 %2184
    %2187 = vst.msk [vmem:[#allocation3 + $0x6] sm:$0x30] %vm969, %v2185
    %v2188 = vrot.slane %v2181, 4
    %v2189 = vsel %vm613, %v2188, 0
    %2191 = vmatprep.subr.mxu0 0.0
    %2192 = vmatpush1.msra.mxu0 0.0
    %2193 = vmatprep.subr.mxu0 0.0
    %2194 = vmatpush1.msra.mxu0 0.0
    %2195 = vmatprep.subr.mxu0 0.0
    %2196 = vmatpush1.msra.mxu0 0.0
    %2197 = vmatprep.subr.mxu0 0.0
    %2198 = vmatpush1.msra.mxu0 0.0
    %2199 = vmatprep.subr.mxu0 0.0
    %2200 = vmatpush1.msra.mxu0 0.0
    %2201 = vmatprep.subr.mxu0 0.0
    %2202 = vmatpush1.msra.mxu0 0.0
    %2203 = vmatprep.subr.mxu0 0.0
    %2204 = vmatpush1.msra.mxu0 0.0
    %2205 = vmatprep.subr.mxu0 0.0
    %2206 = vmatpush1.msra.mxu0 0.0
    %2207 = vmatprep.subr.mxu0 %v1651
    %2208 = vmatpush1.msra.mxu0 %v1650
    %2209 = vmatprep.subr.mxu0 %v1649
    %2210 = vmatpush1.msra.mxu0 %v1648
    %2211 = vmatprep.subr.mxu0 %v1647
    %2212 = vmatpush1.msra.mxu0 %v1646
    %2213 = vmatprep.subr.mxu0 %v1645
    %2214 = vmatpush1.msra.mxu0 %v1644
    %2215 = vmatprep.subr.mxu0 %v1643
    %2216 = vmatpush1.msra.mxu0 %v1642
    %2217 = vmatprep.subr.mxu0 %v1641
    %2218 = vmatpush1.msra.mxu0 %v1640
    %2219 = vmatprep.subr.mxu0 %v1639
    %2220 = vmatpush1.msra.mxu0 %v1638
    %2221 = vmatprep.subr.mxu0 %v1637
    %2222 = vmatpush1.msra.mxu0 %v1636
    %2223 = vmatprep.subr.mxu0 0.0
    %2224 = vmatpush2.msra.mxu0 0.0
    %2225 = vmatprep.subr.mxu0 0.0
    %2226 = vmatpush2.msra.mxu0 0.0
    %2227 = vmatprep.subr.mxu0 0.0
    %2228 = vmatpush2.msra.mxu0 0.0
    %2229 = vmatprep.subr.mxu0 0.0
    %2230 = vmatpush2.msra.mxu0 0.0
    %2231 = vmatprep.subr.mxu0 0.0
    %2232 = vmatpush2.msra.mxu0 0.0
    %2233 = vmatprep.subr.mxu0 0.0
    %2234 = vmatpush2.msra.mxu0 0.0
    %2235 = vmatprep.subr.mxu0 0.0
    %2236 = vmatpush2.msra.mxu0 0.0
    %2237 = vmatprep.subr.mxu0 0.0
    %2238 = vmatpush2.msra.mxu0 0.0
    %2239 = vmatprep.subr.mxu0 0.0
    %2240 = vmatpush2.msra.mxu0 0.0
    %2241 = vmatprep.subr.mxu0 0.0
    %2242 = vmatpush2.msra.mxu0 0.0
    %2243 = vmatprep.subr.mxu0 0.0
    %2244 = vmatpush2.msra.mxu0 0.0
    %2245 = vmatprep.subr.mxu0 0.0
    %2246 = vmatpush2.msra.mxu0 0.0
    %2247 = vmatprep.subr.mxu0 0.0
    %2248 = vmatpush2.msra.mxu0 0.0
    %2249 = vmatprep.subr.mxu0 0.0
    %2250 = vmatpush2.msra.mxu0 0.0
    %2251 = vmatprep.subr.mxu0 0.0
    %2252 = vmatpush2.msra.mxu0 0.0
    %2253 = vmatprep.subr.mxu0 0.0
    %2254 = vmatpush2.msra.mxu0 0.0
    %2255 = vmatprep.mubr.f32.mxu0 0.0
    %2256 = vmatmul.mubr.f32.gmra.mxu0 %v2189
    %v2257 = vpop.f32.mrf.mxu0
    %v2258 = vadd.f32 0.0, %v2257
    %v2259 = vpop.f32.mrf.mxu0
    %v2260 = vadd.f32 0.0, %v2259
    %2261 = vdwg.mxu0
    %v2264 = vrot.slane %v2258, 2
    %v2265 = vrot.slane %v2260, 2
    %v2268 = vadd.f32 %v1945, %v2264
    %v2269 = vadd.f32 %v1946, %v2265
    %v2270 = vxor.u32 %v2268, 2147483648
    %v2271 = vxor.u32 %v2269, 2147483648
    %v2272 = vmul.f32 %v2270, 1.442695
    %v2273 = vpow.pop %v2272
    %v2274 = vmul.f32 %v2271, 1.442695
    %v2275 = vpow.pop %v2274
    %v2276 = vadd.f32 %v2273, 1.0
    %v2277 = vadd.f32 %v2275, 1.0
    %v2278 = vrcp.pop %v2276
    %v2279 = vmul.f32 1.0, %v2278
    %v2280 = vrcp.pop %v2277
    %v2281 = vmul.f32 1.0, %v2280
    %v2282 = vtanh.pop %v2269
    %v2284 = vrot.slane %v2175, 6
    %v2286 = vmul.f32 %v2279, %v2284
    %2288 = vrot.lane.b32.xlu0 %v2282, 64
    %v2289 = vpop.permute.xlu0 %2288
    %v2291 = vmul.f32 %v2279, %v2289
    %2293 = vrot.lane.b32.xlu0 %v2291, 64
    %v2294 = vpop.permute.xlu0 %2293
    %v2296 = vadd.f32 %v2286, %v2294
    %v2297 = vtanh.pop %v2296
    %2299 = vrot.lane.b32.xlu0 %v2297, 64
    %v2300 = vpop.permute.xlu0 %2299
    %v2302 = vmul.f32 %v2281, %v2300
    %2303 = vst.msk [vmem:[#allocation2] sm:$0xc0] %vm1091, %v2302
    %2305 = vrot.lane.b32.xlu0 %v2302, 96
    %v2306 = vpop.permute.xlu0 %2305
    %2308 = vst.msk [vmem:[#allocation3 + $0x2] sm:$0xc0] %vm1091, %v2306
    %v2311 = vrot.slane %v1814, 6
    %v2312 = vrot.slane %v1816, 6
    %v2315 = vadd.f32 %v1743, %v2311
    %v2316 = vadd.f32 %v1745, %v2312
    %v2317 = vrot.slane %v2302, 6
    %v2318 = vsel %vm613, %v2317, 0
    %2320 = vmatprep.subr.mxu0 0.0
    %2321 = vmatpush1.msra.mxu0 0.0
    %2322 = vmatprep.subr.mxu0 0.0
    %2323 = vmatpush1.msra.mxu0 0.0
    %2324 = vmatprep.subr.mxu0 0.0
    %2325 = vmatpush1.msra.mxu0 0.0
    %2326 = vmatprep.subr.mxu0 0.0
    %2327 = vmatpush1.msra.mxu0 0.0
    %2328 = vmatprep.subr.mxu0 0.0
    %2329 = vmatpush1.msra.mxu0 0.0
    %2330 = vmatprep.subr.mxu0 0.0
    %2331 = vmatpush1.msra.mxu0 0.0
    %2332 = vmatprep.subr.mxu0 0.0
    %2333 = vmatpush1.msra.mxu0 0.0
    %2334 = vmatprep.subr.mxu0 0.0
    %2335 = vmatpush1.msra.mxu0 0.0
    %2336 = vmatprep.subr.mxu0 %v1651
    %2337 = vmatpush1.msra.mxu0 %v1650
    %2338 = vmatprep.subr.mxu0 %v1649
    %2339 = vmatpush1.msra.mxu0 %v1648
    %2340 = vmatprep.subr.mxu0 %v1647
    %2341 = vmatpush1.msra.mxu0 %v1646
    %2342 = vmatprep.subr.mxu0 %v1645
    %2343 = vmatpush1.msra.mxu0 %v1644
    %2344 = vmatprep.subr.mxu0 %v1643
    %2345 = vmatpush1.msra.mxu0 %v1642
    %2346 = vmatprep.subr.mxu0 %v1641
    %2347 = vmatpush1.msra.mxu0 %v1640
    %2348 = vmatprep.subr.mxu0 %v1639
    %2349 = vmatpush1.msra.mxu0 %v1638
    %2350 = vmatprep.subr.mxu0 %v1637
    %2351 = vmatpush1.msra.mxu0 %v1636
    %2352 = vmatprep.subr.mxu0 0.0
    %2353 = vmatpush2.msra.mxu0 0.0
    %2354 = vmatprep.subr.mxu0 0.0
    %2355 = vmatpush2.msra.mxu0 0.0
    %2356 = vmatprep.subr.mxu0 0.0
    %2357 = vmatpush2.msra.mxu0 0.0
    %2358 = vmatprep.subr.mxu0 0.0
    %2359 = vmatpush2.msra.mxu0 0.0
    %2360 = vmatprep.subr.mxu0 0.0
    %2361 = vmatpush2.msra.mxu0 0.0
    %2362 = vmatprep.subr.mxu0 0.0
    %2363 = vmatpush2.msra.mxu0 0.0
    %2364 = vmatprep.subr.mxu0 0.0
    %2365 = vmatpush2.msra.mxu0 0.0
    %2366 = vmatprep.subr.mxu0 0.0
    %2367 = vmatpush2.msra.mxu0 0.0
    %2368 = vmatprep.subr.mxu0 0.0
    %2369 = vmatpush2.msra.mxu0 0.0
    %2370 = vmatprep.subr.mxu0 0.0
    %2371 = vmatpush2.msra.mxu0 0.0
    %2372 = vmatprep.subr.mxu0 0.0
    %2373 = vmatpush2.msra.mxu0 0.0
    %2374 = vmatprep.subr.mxu0 0.0
    %2375 = vmatpush2.msra.mxu0 0.0
    %2376 = vmatprep.subr.mxu0 0.0
    %2377 = vmatpush2.msra.mxu0 0.0
    %2378 = vmatprep.subr.mxu0 0.0
    %2379 = vmatpush2.msra.mxu0 0.0
    %2380 = vmatprep.subr.mxu0 0.0
    %2381 = vmatpush2.msra.mxu0 0.0
    %2382 = vmatprep.subr.mxu0 0.0
    %2383 = vmatpush2.msra.mxu0 0.0
    %2384 = vmatprep.mubr.f32.mxu0 0.0
    %2385 = vmatmul.mubr.f32.gmra.mxu0 %v2318
    %v2386 = vpop.f32.mrf.mxu0
    %v2387 = vadd.f32 0.0, %v2386
    %v2388 = vpop.f32.mrf.mxu0
    %v2389 = vadd.f32 0.0, %v2388
    %2390 = vdwg.mxu0
    %v2391 = vadd.f32 %v2315, %v2387
    %v2392 = vadd.f32 %v2316, %v2389
    %v2393 = vxor.u32 %v2391, 2147483648
    %v2394 = vxor.u32 %v2392, 2147483648
    %v2395 = vmul.f32 %v2393, 1.442695
    %v2396 = vpow.pop %v2395
    %v2397 = vmul.f32 %v2394, 1.442695
    %v2398 = vpow.pop %v2397
    %v2399 = vadd.f32 %v2396, 1.0
    %v2400 = vadd.f32 %v2398, 1.0
    %v2401 = vrcp.pop %v2399
    %v2402 = vmul.f32 1.0, %v2401
    %v2403 = vrcp.pop %v2400
    %v2404 = vmul.f32 1.0, %v2403
    %v2405 = vtanh.pop %v2392
    %v2407 = vrot.slane %v2296, 6
    %v2409 = vmul.f32 %v2402, %v2407
    %2411 = vrot.lane.b32.xlu0 %v2405, 64
    %v2412 = vpop.permute.xlu0 %2411
    %v2414 = vmul.f32 %v2402, %v2412
    %2416 = vrot.lane.b32.xlu0 %v2414, 64
    %v2417 = vpop.permute.xlu0 %2416
    %v2419 = vadd.f32 %v2409, %v2417
    %v2420 = vtanh.pop %v2419
    %2422 = vrot.lane.b32.xlu0 %v2420, 64
    %v2423 = vpop.permute.xlu0 %2422
    %v2425 = vmul.f32 %v2404, %v2423
    %2426 = vst.msk [vmem:[#allocation2 + $0x8] sm:$0x3] %vm720, %v2425
    %2428 = vrot.lane.b32.xlu0 %v2425, 96
    %v2429 = vpop.permute.xlu0 %2428
    %2431 = vst.msk [vmem:[#allocation3 + $0x6] sm:$0x3] %vm720, %v2429
    %v2432 = vrot.slane %v1814, 2
    %v2433 = vrot.slane %v1816, 2
    %v2436 = vadd.f32 %v1743, %v2432
    %v2437 = vadd.f32 %v1745, %v2433
    %v2438 = vsel %vm613, %v2425, 0
    %2440 = vmatprep.subr.mxu0 0.0
    %2441 = vmatpush1.msra.mxu0 0.0
    %2442 = vmatprep.subr.mxu0 0.0
    %2443 = vmatpush1.msra.mxu0 0.0
    %2444 = vmatprep.subr.mxu0 0.0
    %2445 = vmatpush1.msra.mxu0 0.0
    %2446 = vmatprep.subr.mxu0 0.0
    %2447 = vmatpush1.msra.mxu0 0.0
    %2448 = vmatprep.subr.mxu0 0.0
    %2449 = vmatpush1.msra.mxu0 0.0
    %2450 = vmatprep.subr.mxu0 0.0
    %2451 = vmatpush1.msra.mxu0 0.0
    %2452 = vmatprep.subr.mxu0 0.0
    %2453 = vmatpush1.msra.mxu0 0.0
    %2454 = vmatprep.subr.mxu0 0.0
    %2455 = vmatpush1.msra.mxu0 0.0
    %2456 = vmatprep.subr.mxu0 %v1651
    %2457 = vmatpush1.msra.mxu0 %v1650
    %2458 = vmatprep.subr.mxu0 %v1649
    %2459 = vmatpush1.msra.mxu0 %v1648
    %2460 = vmatprep.subr.mxu0 %v1647
    %2461 = vmatpush1.msra.mxu0 %v1646
    %2462 = vmatprep.subr.mxu0 %v1645
    %2463 = vmatpush1.msra.mxu0 %v1644
    %2464 = vmatprep.subr.mxu0 %v1643
    %2465 = vmatpush1.msra.mxu0 %v1642
    %2466 = vmatprep.subr.mxu0 %v1641
    %2467 = vmatpush1.msra.mxu0 %v1640
    %2468 = vmatprep.subr.mxu0 %v1639
    %2469 = vmatpush1.msra.mxu0 %v1638
    %2470 = vmatprep.subr.mxu0 %v1637
    %2471 = vmatpush1.msra.mxu0 %v1636
    %2472 = vmatprep.subr.mxu0 0.0
    %2473 = vmatpush2.msra.mxu0 0.0
    %2474 = vmatprep.subr.mxu0 0.0
    %2475 = vmatpush2.msra.mxu0 0.0
    %2476 = vmatprep.subr.mxu0 0.0
    %2477 = vmatpush2.msra.mxu0 0.0
    %2478 = vmatprep.subr.mxu0 0.0
    %2479 = vmatpush2.msra.mxu0 0.0
    %2480 = vmatprep.subr.mxu0 0.0
    %2481 = vmatpush2.msra.mxu0 0.0
    %2482 = vmatprep.subr.mxu0 0.0
    %2483 = vmatpush2.msra.mxu0 0.0
    %2484 = vmatprep.subr.mxu0 0.0
    %2485 = vmatpush2.msra.mxu0 0.0
    %2486 = vmatprep.subr.mxu0 0.0
    %2487 = vmatpush2.msra.mxu0 0.0
    %2488 = vmatprep.subr.mxu0 0.0
    %2489 = vmatpush2.msra.mxu0 0.0
    %2490 = vmatprep.subr.mxu0 0.0
    %2491 = vmatpush2.msra.mxu0 0.0
    %2492 = vmatprep.subr.mxu0 0.0
    %2493 = vmatpush2.msra.mxu0 0.0
    %2494 = vmatprep.subr.mxu0 0.0
    %2495 = vmatpush2.msra.mxu0 0.0
    %2496 = vmatprep.subr.mxu0 0.0
    %2497 = vmatpush2.msra.mxu0 0.0
    %2498 = vmatprep.subr.mxu0 0.0
    %2499 = vmatpush2.msra.mxu0 0.0
    %2500 = vmatprep.subr.mxu0 0.0
    %2501 = vmatpush2.msra.mxu0 0.0
    %2502 = vmatprep.subr.mxu0 0.0
    %2503 = vmatpush2.msra.mxu0 0.0
    %2504 = vmatprep.mubr.f32.mxu0 0.0
    %2505 = vmatmul.mubr.f32.gmra.mxu0 %v2438
    %v2506 = vpop.f32.mrf.mxu0
    %v2507 = vadd.f32 0.0, %v2506
    %v2508 = vpop.f32.mrf.mxu0
    %v2509 = vadd.f32 0.0, %v2508
    %2510 = vdwg.mxu0
    %v2513 = vrot.slane %v2507, 6
    %v2514 = vrot.slane %v2509, 6
    %v2517 = vadd.f32 %v2436, %v2513
    %v2518 = vadd.f32 %v2437, %v2514
    %v2519 = vxor.u32 %v2517, 2147483648
    %v2520 = vxor.u32 %v2518, 2147483648
    %v2521 = vmul.f32 %v2519, 1.442695
    %v2522 = vpow.pop %v2521
    %v2523 = vmul.f32 %v2520, 1.442695
    %v2524 = vpow.pop %v2523
    %v2525 = vadd.f32 %v2522, 1.0
    %v2526 = vadd.f32 %v2524, 1.0
    %v2527 = vrcp.pop %v2525
    %v2528 = vmul.f32 1.0, %v2527
    %v2529 = vrcp.pop %v2526
    %v2530 = vmul.f32 1.0, %v2529
    %v2531 = vtanh.pop %v2518
    %v2533 = vrot.slane %v2419, 6
    %v2535 = vmul.f32 %v2528, %v2533
    %2537 = vrot.lane.b32.xlu0 %v2531, 64
    %v2538 = vpop.permute.xlu0 %2537
    %v2540 = vmul.f32 %v2528, %v2538
    %2542 = vrot.lane.b32.xlu0 %v2540, 64
    %v2543 = vpop.permute.xlu0 %2542
    %v2545 = vadd.f32 %v2535, %v2543
    %v2546 = vtanh.pop %v2545
    %2548 = vrot.lane.b32.xlu0 %v2546, 64
    %v2549 = vpop.permute.xlu0 %2548
    %v2551 = vmul.f32 %v2530, %v2549
    %2552 = vst.msk [vmem:[#allocation2 + $0x8] sm:$0xc] %vm847, %v2551
    %2554 = vrot.lane.b32.xlu0 %v2551, 96
    %v2555 = vpop.permute.xlu0 %2554
    %2557 = vst.msk [vmem:[#allocation3 + $0x2] sm:$0xc] %vm847, %v2555
    %v2558 = vrot.slane %v2551, 2
    %v2559 = vsel %vm613, %v2558, 0
    %2561 = vmatprep.subr.mxu0 0.0
    %2562 = vmatpush1.msra.mxu0 0.0
    %2563 = vmatprep.subr.mxu0 0.0
    %2564 = vmatpush1.msra.mxu0 0.0
    %2565 = vmatprep.subr.mxu0 0.0
    %2566 = vmatpush1.msra.mxu0 0.0
    %2567 = vmatprep.subr.mxu0 0.0
    %2568 = vmatpush1.msra.mxu0 0.0
    %2569 = vmatprep.subr.mxu0 0.0
    %2570 = vmatpush1.msra.mxu0 0.0
    %2571 = vmatprep.subr.mxu0 0.0
    %2572 = vmatpush1.msra.mxu0 0.0
    %2573 = vmatprep.subr.mxu0 0.0
    %2574 = vmatpush1.msra.mxu0 0.0
    %2575 = vmatprep.subr.mxu0 0.0
    %2576 = vmatpush1.msra.mxu0 0.0
    %2577 = vmatprep.subr.mxu0 %v1651
    %2578 = vmatpush1.msra.mxu0 %v1650
    %2579 = vmatprep.subr.mxu0 %v1649
    %2580 = vmatpush1.msra.mxu0 %v1648
    %2581 = vmatprep.subr.mxu0 %v1647
    %2582 = vmatpush1.msra.mxu0 %v1646
    %2583 = vmatprep.subr.mxu0 %v1645
    %2584 = vmatpush1.msra.mxu0 %v1644
    %2585 = vmatprep.subr.mxu0 %v1643
    %2586 = vmatpush1.msra.mxu0 %v1642
    %2587 = vmatprep.subr.mxu0 %v1641
    %2588 = vmatpush1.msra.mxu0 %v1640
    %2589 = vmatprep.subr.mxu0 %v1639
    %2590 = vmatpush1.msra.mxu0 %v1638
    %2591 = vmatprep.subr.mxu0 %v1637
    %2592 = vmatpush1.msra.mxu0 %v1636
    %2593 = vmatprep.subr.mxu0 0.0
    %2594 = vmatpush2.msra.mxu0 0.0
    %2595 = vmatprep.subr.mxu0 0.0
    %2596 = vmatpush2.msra.mxu0 0.0
    %2597 = vmatprep.subr.mxu0 0.0
    %2598 = vmatpush2.msra.mxu0 0.0
    %2599 = vmatprep.subr.mxu0 0.0
    %2600 = vmatpush2.msra.mxu0 0.0
    %2601 = vmatprep.subr.mxu0 0.0
    %2602 = vmatpush2.msra.mxu0 0.0
    %2603 = vmatprep.subr.mxu0 0.0
    %2604 = vmatpush2.msra.mxu0 0.0
    %2605 = vmatprep.subr.mxu0 0.0
    %2606 = vmatpush2.msra.mxu0 0.0
    %2607 = vmatprep.subr.mxu0 0.0
    %2608 = vmatpush2.msra.mxu0 0.0
    %2609 = vmatprep.subr.mxu0 0.0
    %2610 = vmatpush2.msra.mxu0 0.0
    %2611 = vmatprep.subr.mxu0 0.0
    %2612 = vmatpush2.msra.mxu0 0.0
    %2613 = vmatprep.subr.mxu0 0.0
    %2614 = vmatpush2.msra.mxu0 0.0
    %2615 = vmatprep.subr.mxu0 0.0
    %2616 = vmatpush2.msra.mxu0 0.0
    %2617 = vmatprep.subr.mxu0 0.0
    %2618 = vmatpush2.msra.mxu0 0.0
    %2619 = vmatprep.subr.mxu0 0.0
    %2620 = vmatpush2.msra.mxu0 0.0
    %2621 = vmatprep.subr.mxu0 0.0
    %2622 = vmatpush2.msra.mxu0 0.0
    %2623 = vmatprep.subr.mxu0 0.0
    %2624 = vmatpush2.msra.mxu0 0.0
    %2625 = vmatprep.mubr.f32.mxu0 0.0
    %2626 = vmatmul.mubr.f32.gmra.mxu0 %v2559
    %v2627 = vpop.f32.mrf.mxu0
    %v2628 = vadd.f32 0.0, %v2627
    %v2629 = vpop.f32.mrf.mxu0
    %v2630 = vadd.f32 0.0, %v2629
    %2631 = vdwg.mxu0
    %v2634 = vrot.slane %v2628, 4
    %v2635 = vrot.slane %v2630, 4
    %v2638 = vadd.f32 %v2315, %v2634
    %v2639 = vadd.f32 %v2316, %v2635
    %v2640 = vxor.u32 %v2638, 2147483648
    %v2641 = vxor.u32 %v2639, 2147483648
    %v2642 = vmul.f32 %v2640, 1.442695
    %v2643 = vpow.pop %v2642
    %v2644 = vmul.f32 %v2641, 1.442695
    %v2645 = vpow.pop %v2644
    %v2646 = vadd.f32 %v2643, 1.0
    %v2647 = vadd.f32 %v2645, 1.0
    %v2648 = vrcp.pop %v2646
    %v2649 = vmul.f32 1.0, %v2648
    %v2650 = vrcp.pop %v2647
    %v2651 = vmul.f32 1.0, %v2650
    %v2652 = vtanh.pop %v2639
    %v2654 = vrot.slane %v2545, 6
    %v2656 = vmul.f32 %v2649, %v2654
    %2658 = vrot.lane.b32.xlu0 %v2652, 64
    %v2659 = vpop.permute.xlu0 %2658
    %v2661 = vmul.f32 %v2649, %v2659
    %2663 = vrot.lane.b32.xlu0 %v2661, 64
    %v2664 = vpop.permute.xlu0 %2663
    %v2666 = vadd.f32 %v2656, %v2664
    %v2667 = vtanh.pop %v2666
    %2669 = vrot.lane.b32.xlu0 %v2667, 64
    %v2670 = vpop.permute.xlu0 %2669
    %v2672 = vmul.f32 %v2651, %v2670
    %2673 = vst.msk [vmem:[#allocation2 + $0x8] sm:$0x30] %vm969, %v2672
    %2675 = vrot.lane.b32.xlu0 %v2672, 96
    %v2676 = vpop.permute.xlu0 %2675
    %2678 = vst.msk [vmem:[#allocation3 - $0x2] sm:$0x30] %vm969, %v2676
    %v2679 = vrot.slane %v2672, 4
    %v2680 = vsel %vm613, %v2679, 0
    %2682 = vmatprep.subr.mxu0 0.0
    %2683 = vmatpush1.msra.mxu0 0.0
    %2684 = vmatprep.subr.mxu0 0.0
    %2685 = vmatpush1.msra.mxu0 0.0
    %2686 = vmatprep.subr.mxu0 0.0
    %2687 = vmatpush1.msra.mxu0 0.0
    %2688 = vmatprep.subr.mxu0 0.0
    %2689 = vmatpush1.msra.mxu0 0.0
    %2690 = vmatprep.subr.mxu0 0.0
    %2691 = vmatpush1.msra.mxu0 0.0
    %2692 = vmatprep.subr.mxu0 0.0
    %2693 = vmatpush1.msra.mxu0 0.0
    %2694 = vmatprep.subr.mxu0 0.0
    %2695 = vmatpush1.msra.mxu0 0.0
    %2696 = vmatprep.subr.mxu0 0.0
    %2697 = vmatpush1.msra.mxu0 0.0
    %2698 = vmatprep.subr.mxu0 %v1651
    %2699 = vmatpush1.msra.mxu0 %v1650
    %2700 = vmatprep.subr.mxu0 %v1649
    %2701 = vmatpush1.msra.mxu0 %v1648
    %2702 = vmatprep.subr.mxu0 %v1647
    %2703 = vmatpush1.msra.mxu0 %v1646
    %2704 = vmatprep.subr.mxu0 %v1645
    %2705 = vmatpush1.msra.mxu0 %v1644
    %2706 = vmatprep.subr.mxu0 %v1643
    %2707 = vmatpush1.msra.mxu0 %v1642
    %2708 = vmatprep.subr.mxu0 %v1641
    %2709 = vmatpush1.msra.mxu0 %v1640
    %2710 = vmatprep.subr.mxu0 %v1639
    %2711 = vmatpush1.msra.mxu0 %v1638
    %2712 = vmatprep.subr.mxu0 %v1637
    %2713 = vmatpush1.msra.mxu0 %v1636
    %2714 = vmatprep.subr.mxu0 0.0
    %2715 = vmatpush2.msra.mxu0 0.0
    %2716 = vmatprep.subr.mxu0 0.0
    %2717 = vmatpush2.msra.mxu0 0.0
    %2718 = vmatprep.subr.mxu0 0.0
    %2719 = vmatpush2.msra.mxu0 0.0
    %2720 = vmatprep.subr.mxu0 0.0
    %2721 = vmatpush2.msra.mxu0 0.0
    %2722 = vmatprep.subr.mxu0 0.0
    %2723 = vmatpush2.msra.mxu0 0.0
    %2724 = vmatprep.subr.mxu0 0.0
    %2725 = vmatpush2.msra.mxu0 0.0
    %2726 = vmatprep.subr.mxu0 0.0
    %2727 = vmatpush2.msra.mxu0 0.0
    %2728 = vmatprep.subr.mxu0 0.0
    %2729 = vmatpush2.msra.mxu0 0.0
    %2730 = vmatprep.subr.mxu0 0.0
    %2731 = vmatpush2.msra.mxu0 0.0
    %2732 = vmatprep.subr.mxu0 0.0
    %2733 = vmatpush2.msra.mxu0 0.0
    %2734 = vmatprep.subr.mxu0 0.0
    %2735 = vmatpush2.msra.mxu0 0.0
    %2736 = vmatprep.subr.mxu0 0.0
    %2737 = vmatpush2.msra.mxu0 0.0
    %2738 = vmatprep.subr.mxu0 0.0
    %2739 = vmatpush2.msra.mxu0 0.0
    %2740 = vmatprep.subr.mxu0 0.0
    %2741 = vmatpush2.msra.mxu0 0.0
    %2742 = vmatprep.subr.mxu0 0.0
    %2743 = vmatpush2.msra.mxu0 0.0
    %2744 = vmatprep.subr.mxu0 0.0
    %2745 = vmatpush2.msra.mxu0 0.0
    %2746 = vmatprep.mubr.f32.mxu0 0.0
    %2747 = vmatmul.mubr.f32.gmra.mxu0 %v2680
    %v2748 = vpop.f32.mrf.mxu0
    %v2749 = vadd.f32 0.0, %v2748
    %v2750 = vpop.f32.mrf.mxu0
    %v2751 = vadd.f32 0.0, %v2750
    %2752 = vdwg.mxu0
    %v2755 = vrot.slane %v2749, 2
    %v2756 = vrot.slane %v2751, 2
    %v2759 = vadd.f32 %v2436, %v2755
    %v2760 = vadd.f32 %v2437, %v2756
    %v2761 = vxor.u32 %v2759, 2147483648
    %v2762 = vxor.u32 %v2760, 2147483648
    %v2763 = vmul.f32 %v2761, 1.442695
    %v2764 = vpow.pop %v2763
    %v2765 = vmul.f32 %v2762, 1.442695
    %v2766 = vpow.pop %v2765
    %v2767 = vadd.f32 %v2764, 1.0
    %v2768 = vadd.f32 %v2766, 1.0
    %v2769 = vrcp.pop %v2767
    %v2770 = vmul.f32 1.0, %v2769
    %v2771 = vrcp.pop %v2768
    %v2772 = vmul.f32 1.0, %v2771
    %v2773 = vtanh.pop %v2760
    %v2775 = vrot.slane %v2666, 6
    %v2777 = vmul.f32 %v2770, %v2775
    %2779 = vrot.lane.b32.xlu0 %v2773, 64
    %v2780 = vpop.permute.xlu0 %2779
    %v2782 = vmul.f32 %v2770, %v2780
    %2784 = vrot.lane.b32.xlu0 %v2782, 64
    %v2785 = vpop.permute.xlu0 %2784
    %v2787 = vadd.f32 %v2777, %v2785
    %v2788 = vtanh.pop %v2787
    %2790 = vrot.lane.b32.xlu0 %v2788, 64
    %v2791 = vpop.permute.xlu0 %2790
    %v2793 = vmul.f32 %v2772, %v2791
    %2794 = vst.msk [vmem:[#allocation2 + $0x8] sm:$0xc0] %vm1091, %v2793
    %2796 = vrot.lane.b32.xlu0 %v2793, 96
    %v2797 = vpop.permute.xlu0 %2796
    %2799 = vst.msk [vmem:[#allocation3 - $0x6] sm:$0xc0] %vm1091, %v2797
    %v2800 = vld [vmem:[#allocation2] sm:$0xff]
    %v2801 = vld [vmem:[#allocation2 + $0x8] sm:$0xff]
    %v2802 = vld [vmem:[#allocation3] sm:$0xff]
    %v2803 = vld [vmem:[#allocation3 + $0x8] sm:$0xff]
    %2806 = vrot.lane.b32.xlu0 %v2802, 32
    %v2807 = vpop.permute.xlu0 %2806
    %2808 = vrot.lane.b32.xlu0 %v2803, 32
    %v2809 = vpop.permute.xlu0 %2808
    %v2812 = vsel %vm1601, %v2800, %v2807
    %v2813 = vsel %vm1601, %v2801, %v2809
    %v2814 = vmax.f32 %v2812, 0.0
    %v2815 = vmax.f32 %v2813, 0.0
    %2816 = vrot.lane.b32.xlu0 %v394, 64
    %v2817 = vpop.permute.xlu0 %2816
    %2818 = vrot.lane.b32.xlu0 %v395, 64
    %v2819 = vpop.permute.xlu0 %2818
    %v2822 = vsel %vm613, %v2814, %v2817
    %v2823 = vsel %vm613, %v2815, %v2819
    %vm2824 = vcmask 605184
    %v2825 = vsel %vm2824, %v2822, 0.0
    %2826 = vadd.xlane.f32.xlu0 %v2825
    %v2827 = vpop.xlane.xlu0 %2826
    %v2828 = vsel %vm2824, %v2823, 0.0
    %2829 = vadd.xlane.f32.xlu0 %v2828
    %v2830 = vpop.xlane.xlu0 %2829
    %v2831 = vrcp.pop 74.0
    %v2832 = vmul.f32 %v2827, %v2831
    %v2833 = vmul.f32 %v2830, %v2831
    %v2834 = vsub.f32 %v2822, %v2832
    %v2835 = vsub.f32 %v2823, %v2833
    %v2836 = vmul.f32 %v2834, %v2834
    %v2837 = vmul.f32 %v2835, %v2835
    %v2838 = vsel %vm2824, %v2836, 0.0
    %2839 = vadd.xlane.f32.xlu0 %v2838
    %v2840 = vpop.xlane.xlu0 %2839
    %v2841 = vsel %vm2824, %v2837, 0.0
    %2842 = vadd.xlane.f32.xlu0 %v2841
    %v2843 = vpop.xlane.xlu0 %2842
    %v2844 = vmul.f32 %v2840, %v2831
    %v2845 = vmul.f32 %v2843, %v2831
    %v2846 = vadd.f32 %v2844, 1e-05
    %v2847 = vadd.f32 %v2845, 1e-05
    %v2848 = vrsqrt.pop %v2846
    %v2849 = vrsqrt.pop %v2847
    %v2850 = vmul.f32 %v2834, %v2848
    %v2851 = vmul.f32 %v2835, %v2849
    %v2852 = vld [vmem:[#allocation7] sm:$0x1]
    %v2854 = vlaneseq
    %v2855 = vshrl.u32 %v2854, 7
    %v2856 = vsub.s32 0, %v2855
    %v2857 = vrot.slane %v2852, %v2856
    %v2859 = vmul.f32 %v2850, %v2857
    %v2860 = vmul.f32 %v2851, %v2857
    %v2861 = vld [vmem:[#allocation9] sm:$0x1]
    %v2863 = vlaneseq
    %v2864 = vshrl.u32 %v2863, 7
    %v2865 = vsub.s32 0, %v2864
    %v2866 = vrot.slane %v2861, %v2865
    %v2868 = vadd.f32 %v2859, %v2866
    %v2869 = vadd.f32 %v2860, %v2866
    %v2870 = vld [vmem:[#allocation18] sm:$0xff]
    %v2871 = vld [vmem:[#allocation18 + $0x8] sm:$0xff]
    %v2872 = vld [vmem:[#allocation18 + $0x10] sm:$0xff]
    %v2873 = vld [vmem:[#allocation18 + $0x18] sm:$0xff]
    %v2874 = vld [vmem:[#allocation18 + $0x20] sm:$0xff]
    %v2875 = vld [vmem:[#allocation18 + $0x28] sm:$0xff]
    %v2876 = vld [vmem:[#allocation18 + $0x30] sm:$0xff]
    %v2877 = vld [vmem:[#allocation18 + $0x38] sm:$0xff]
    %v2878 = vld [vmem:[#allocation18 + $0x40] sm:$0xff]
    %v2879 = vld [vmem:[#allocation18 + $0x48] sm:$0xff]
    %v2880 = vld [vmem:[#allocation18 + $0x50] sm:$0xff]
    %v2881 = vld [vmem:[#allocation18 + $0x58] sm:$0xff]
    %v2882 = vld [vmem:[#allocation18 + $0x60] sm:$0xff]
    %v2883 = vld [vmem:[#allocation18 + $0x68] sm:$0xff]
    %v2884 = vld [vmem:[#allocation18 + $0x70] sm:$0xff]
    %v2885 = vld [vmem:[#allocation18 + $0x78] sm:$0xff]
    %v2886 = vld [vmem:[#allocation18 + $0x80] sm:$0xff]
    %v2887 = vld [vmem:[#allocation18 + $0x88] sm:$0xff]
    %v2888 = vld [vmem:[#allocation18 + $0x90] sm:$0x3]
    %v2889 = vld [vmem:[#allocation18 + $0x98] sm:$0x3]
    %v2890 = vld [vmem:[#allocation19] sm:$0xff]
    %v2891 = vld [vmem:[#allocation19 + $0x8] sm:$0xff]
    %v2892 = vld [vmem:[#allocation19 + $0x10] sm:$0xff]
    %v2893 = vld [vmem:[#allocation19 + $0x18] sm:$0xff]
    %v2894 = vld [vmem:[#allocation19 + $0x20] sm:$0xff]
    %v2895 = vld [vmem:[#allocation19 + $0x28] sm:$0xff]
    %v2896 = vld [vmem:[#allocation19 + $0x30] sm:$0xff]
    %v2897 = vld [vmem:[#allocation19 + $0x38] sm:$0xff]
    %v2898 = vld [vmem:[#allocation19 + $0x40] sm:$0xff]
    %v2899 = vld [vmem:[#allocation19 + $0x48] sm:$0xff]
    %v2900 = vld [vmem:[#allocation19 + $0x50] sm:$0xff]
    %v2901 = vld [vmem:[#allocation19 + $0x58] sm:$0xff]
    %v2902 = vld [vmem:[#allocation19 + $0x60] sm:$0xff]
    %v2903 = vld [vmem:[#allocation19 + $0x68] sm:$0xff]
    %v2904 = vld [vmem:[#allocation19 + $0x70] sm:$0xff]
    %v2905 = vld [vmem:[#allocation19 + $0x78] sm:$0xff]
    %v2906 = vld [vmem:[#allocation19 + $0x80] sm:$0xff]
    %v2907 = vld [vmem:[#allocation19 + $0x88] sm:$0xff]
    %v2908 = vld [vmem:[#allocation19 + $0x90] sm:$0x3]
    %v2909 = vld [vmem:[#allocation19 + $0x98] sm:$0x3]
    %v2910 = vld [vmem:[#allocation21] sm:$0xff]
    %v2911 = vld [vmem:[#allocation21 + $0x8] sm:$0xff]
    %v2912 = vld [vmem:[#allocation21 + $0x10] sm:$0xff]
    %v2913 = vld [vmem:[#allocation21 + $0x18] sm:$0xff]
    %v2914 = vld [vmem:[#allocation21 + $0x20] sm:$0xff]
    %v2915 = vld [vmem:[#allocation21 + $0x28] sm:$0xff]
    %v2916 = vld [vmem:[#allocation21 + $0x30] sm:$0xff]
    %v2917 = vld [vmem:[#allocation21 + $0x38] sm:$0xff]
    %v2918 = vld [vmem:[#allocation21 + $0x40] sm:$0xff]
    %v2919 = vld [vmem:[#allocation21 + $0x48] sm:$0xff]
    %v2920 = vld [vmem:[#allocation21 + $0x50] sm:$0xff]
    %v2921 = vld [vmem:[#allocation21 + $0x58] sm:$0xff]
    %v2922 = vld [vmem:[#allocation21 + $0x60] sm:$0xff]
    %v2923 = vld [vmem:[#allocation21 + $0x68] sm:$0xff]
    %v2924 = vld [vmem:[#allocation21 + $0x70] sm:$0xff]
    %v2925 = vld [vmem:[#allocation21 + $0x78] sm:$0xff]
    %v2926 = vld [vmem:[%s37] sm:$0x3]
    %v2928 = vlaneseq
    %v2929 = vshrl.u32 %v2928, 7
    %v2930 = vsub.s32 0, %v2929
    %v2931 = vrot.slane %v2926, %v2930
    %v2932 = vlaneseq
    %v2933 = vshrl.u32 %v2932, 7
    %v2934 = vsub.s32 1, %v2933
    %v2935 = vrot.slane %v2926, %v2934
    %v2939 = vsel %vm2824, %v2868, 0
    %v2942 = vsel %vm2824, %v2869, 0
    %v2945 = vsel %vm438, %v2888, 0
    %v2948 = vsel %vm438, %v2889, 0
    %2950 = vmatprep.subr.mxu0 0.0
    %2951 = vmatpush1.msra.mxu0 0.0
    %2952 = vmatprep.subr.mxu0 0.0
    %2953 = vmatpush1.msra.mxu0 0.0
    %2954 = vmatprep.subr.mxu0 0.0
    %2955 = vmatpush1.msra.mxu0 0.0
    %2956 = vmatprep.subr.mxu0 0.0
    %2957 = vmatpush1.msra.mxu0 0.0
    %2958 = vmatprep.subr.mxu0 0.0
    %2959 = vmatpush1.msra.mxu0 0.0
    %2960 = vmatprep.subr.mxu0 0.0
    %2961 = vmatpush1.msra.mxu0 0.0
    %2962 = vmatprep.subr.mxu0 %v2948
    %2963 = vmatpush1.msra.mxu0 %v2945
    %2964 = vmatprep.subr.mxu0 %v2887
    %2965 = vmatpush1.msra.mxu0 %v2886
    %2966 = vmatprep.subr.mxu0 %v2885
    %2967 = vmatpush1.msra.mxu0 %v2884
    %2968 = vmatprep.subr.mxu0 %v2883
    %2969 = vmatpush1.msra.mxu0 %v2882
    %2970 = vmatprep.subr.mxu0 %v2881
    %2971 = vmatpush1.msra.mxu0 %v2880
    %2972 = vmatprep.subr.mxu0 %v2879
    %2973 = vmatpush1.msra.mxu0 %v2878
    %2974 = vmatprep.subr.mxu0 %v2877
    %2975 = vmatpush1.msra.mxu0 %v2876
    %2976 = vmatprep.subr.mxu0 %v2875
    %2977 = vmatpush1.msra.mxu0 %v2874
    %2978 = vmatprep.subr.mxu0 %v2873
    %2979 = vmatpush1.msra.mxu0 %v2872
    %2980 = vmatprep.subr.mxu0 %v2871
    %2981 = vmatpush1.msra.mxu0 %v2870
    %2982 = vmatprep.subr.mxu0 0.0
    %2983 = vmatpush2.msra.mxu0 0.0
    %2984 = vmatprep.subr.mxu0 0.0
    %2985 = vmatpush2.msra.mxu0 0.0
    %2986 = vmatprep.subr.mxu0 0.0
    %2987 = vmatpush2.msra.mxu0 0.0
    %2988 = vmatprep.subr.mxu0 0.0
    %2989 = vmatpush2.msra.mxu0 0.0
    %2990 = vmatprep.subr.mxu0 0.0
    %2991 = vmatpush2.msra.mxu0 0.0
    %2992 = vmatprep.subr.mxu0 0.0
    %2993 = vmatpush2.msra.mxu0 0.0
    %2994 = vmatprep.subr.mxu0 0.0
    %2995 = vmatpush2.msra.mxu0 0.0
    %2996 = vmatprep.subr.mxu0 0.0
    %2997 = vmatpush2.msra.mxu0 0.0
    %2998 = vmatprep.subr.mxu0 0.0
    %2999 = vmatpush2.msra.mxu0 0.0
    %3000 = vmatprep.subr.mxu0 0.0
    %3001 = vmatpush2.msra.mxu0 0.0
    %3002 = vmatprep.subr.mxu0 0.0
    %3003 = vmatpush2.msra.mxu0 0.0
    %3004 = vmatprep.subr.mxu0 0.0
    %3005 = vmatpush2.msra.mxu0 0.0
    %3006 = vmatprep.subr.mxu0 0.0
    %3007 = vmatpush2.msra.mxu0 0.0
    %3008 = vmatprep.subr.mxu0 0.0
    %3009 = vmatpush2.msra.mxu0 0.0
    %3010 = vmatprep.subr.mxu0 0.0
    %3011 = vmatpush2.msra.mxu0 0.0
    %3012 = vmatprep.subr.mxu0 0.0
    %3013 = vmatpush2.msra.mxu0 0.0
    %3014 = vmatprep.mubr.f32.mxu0 0.0
    %3015 = vmatmul.mubr.f32.gmra.mxu0 %v2939
    %v3016 = vpop.f32.mrf.mxu0
    %v3017 = vadd.f32 %v2931, %v3016
    %v3018 = vpop.f32.mrf.mxu0
    %v3019 = vadd.f32 %v2935, %v3018
    %3020 = vmatprep.mubr.f32.mxu0 0.0
    %3021 = vmatmul.mubr.f32.gmra.mxu0 %v2942
    %v3022 = vpop.f32.mrf.mxu0
    %v3023 = vadd.f32 %v2931, %v3022
    %v3024 = vpop.f32.mrf.mxu0
    %v3025 = vadd.f32 %v2935, %v3024
    %3026 = vdwg.mxu0
    %v3028 = vsel %vm438, %v2908, 0
    %v3031 = vsel %vm438, %v2909, 0
    %3033 = vmatprep.subr.mxu0 0.0
    %3034 = vmatpush1.msra.mxu0 0.0
    %3035 = vmatprep.subr.mxu0 0.0
    %3036 = vmatpush1.msra.mxu0 0.0
    %3037 = vmatprep.subr.mxu0 0.0
    %3038 = vmatpush1.msra.mxu0 0.0
    %3039 = vmatprep.subr.mxu0 0.0
    %3040 = vmatpush1.msra.mxu0 0.0
    %3041 = vmatprep.subr.mxu0 0.0
    %3042 = vmatpush1.msra.mxu0 0.0
    %3043 = vmatprep.subr.mxu0 0.0
    %3044 = vmatpush1.msra.mxu0 0.0
    %3045 = vmatprep.subr.mxu0 %v3031
    %3046 = vmatpush1.msra.mxu0 %v3028
    %3047 = vmatprep.subr.mxu0 %v2907
    %3048 = vmatpush1.msra.mxu0 %v2906
    %3049 = vmatprep.subr.mxu0 %v2905
    %3050 = vmatpush1.msra.mxu0 %v2904
    %3051 = vmatprep.subr.mxu0 %v2903
    %3052 = vmatpush1.msra.mxu0 %v2902
    %3053 = vmatprep.subr.mxu0 %v2901
    %3054 = vmatpush1.msra.mxu0 %v2900
    %3055 = vmatprep.subr.mxu0 %v2899
    %3056 = vmatpush1.msra.mxu0 %v2898
    %3057 = vmatprep.subr.mxu0 %v2897
    %3058 = vmatpush1.msra.mxu0 %v2896
    %3059 = vmatprep.subr.mxu0 %v2895
    %3060 = vmatpush1.msra.mxu0 %v2894
    %3061 = vmatprep.subr.mxu0 %v2893
    %3062 = vmatpush1.msra.mxu0 %v2892
    %3063 = vmatprep.subr.mxu0 %v2891
    %3064 = vmatpush1.msra.mxu0 %v2890
    %3065 = vmatprep.subr.mxu0 0.0
    %3066 = vmatpush2.msra.mxu0 0.0
    %3067 = vmatprep.subr.mxu0 0.0
    %3068 = vmatpush2.msra.mxu0 0.0
    %3069 = vmatprep.subr.mxu0 0.0
    %3070 = vmatpush2.msra.mxu0 0.0
    %3071 = vmatprep.subr.mxu0 0.0
    %3072 = vmatpush2.msra.mxu0 0.0
    %3073 = vmatprep.subr.mxu0 0.0
    %3074 = vmatpush2.msra.mxu0 0.0
    %3075 = vmatprep.subr.mxu0 0.0
    %3076 = vmatpush2.msra.mxu0 0.0
    %3077 = vmatprep.subr.mxu0 0.0
    %3078 = vmatpush2.msra.mxu0 0.0
    %3079 = vmatprep.subr.mxu0 0.0
    %3080 = vmatpush2.msra.mxu0 0.0
    %3081 = vmatprep.subr.mxu0 0.0
    %3082 = vmatpush2.msra.mxu0 0.0
    %3083 = vmatprep.subr.mxu0 0.0
    %3084 = vmatpush2.msra.mxu0 0.0
    %3085 = vmatprep.subr.mxu0 0.0
    %3086 = vmatpush2.msra.mxu0 0.0
    %3087 = vmatprep.subr.mxu0 0.0
    %3088 = vmatpush2.msra.mxu0 0.0
    %3089 = vmatprep.subr.mxu0 0.0
    %3090 = vmatpush2.msra.mxu0 0.0
    %3091 = vmatprep.subr.mxu0 0.0
    %3092 = vmatpush2.msra.mxu0 0.0
    %3093 = vmatprep.subr.mxu0 0.0
    %3094 = vmatpush2.msra.mxu0 0.0
    %3095 = vmatprep.subr.mxu0 0.0
    %3096 = vmatpush2.msra.mxu0 0.0
    %3097 = vmatprep.mubr.f32.mxu0 0.0
    %3098 = vmatmul.mubr.f32.gmra.mxu0 %v2939
    %v3099 = vpop.f32.mrf.mxu0
    %v3100 = vadd.f32 0.0, %v3099
    %v3101 = vpop.f32.mrf.mxu0
    %v3102 = vadd.f32 0.0, %v3101
    %3103 = vmatprep.mubr.f32.mxu0 0.0
    %3104 = vmatmul.mubr.f32.gmra.mxu0 %v2942
    %v3105 = vpop.f32.mrf.mxu0
    %v3106 = vadd.f32 0.0, %v3105
    %v3107 = vpop.f32.mrf.mxu0
    %v3108 = vadd.f32 0.0, %v3107
    %3109 = vdwg.mxu0
    %v3112 = vrot.slane %v3106, 6
    %v3113 = vrot.slane %v3108, 6
    %v3116 = vadd.f32 %v3017, %v3112
    %v3117 = vadd.f32 %v3019, %v3113
    %3118 = vmatprep.subr.mxu0 0.0
    %3119 = vmatpush1.msra.mxu0 0.0
    %3120 = vmatprep.subr.mxu0 0.0
    %3121 = vmatpush1.msra.mxu0 0.0
    %3122 = vmatprep.subr.mxu0 0.0
    %3123 = vmatpush1.msra.mxu0 0.0
    %3124 = vmatprep.subr.mxu0 0.0
    %3125 = vmatpush1.msra.mxu0 0.0
    %3126 = vmatprep.subr.mxu0 0.0
    %3127 = vmatpush1.msra.mxu0 0.0
    %3128 = vmatprep.subr.mxu0 0.0
    %3129 = vmatpush1.msra.mxu0 0.0
    %3130 = vmatprep.subr.mxu0 0.0
    %3131 = vmatpush1.msra.mxu0 0.0
    %3132 = vmatprep.subr.mxu0 0.0
    %3133 = vmatpush1.msra.mxu0 0.0
    %3134 = vmatprep.subr.mxu0 %v2925
    %3135 = vmatpush1.msra.mxu0 %v2924
    %3136 = vmatprep.subr.mxu0 %v2923
    %3137 = vmatpush1.msra.mxu0 %v2922
    %3138 = vmatprep.subr.mxu0 %v2921
    %3139 = vmatpush1.msra.mxu0 %v2920
    %3140 = vmatprep.subr.mxu0 %v2919
    %3141 = vmatpush1.msra.mxu0 %v2918
    %3142 = vmatprep.subr.mxu0 %v2917
    %3143 = vmatpush1.msra.mxu0 %v2916
    %3144 = vmatprep.subr.mxu0 %v2915
    %3145 = vmatpush1.msra.mxu0 %v2914
    %3146 = vmatprep.subr.mxu0 %v2913
    %3147 = vmatpush1.msra.mxu0 %v2912
    %3148 = vmatprep.subr.mxu0 %v2911
    %3149 = vmatpush1.msra.mxu0 %v2910
    %3150 = vmatprep.subr.mxu0 0.0
    %3151 = vmatpush2.msra.mxu0 0.0
    %3152 = vmatprep.subr.mxu0 0.0
    %3153 = vmatpush2.msra.mxu0 0.0
    %3154 = vmatprep.subr.mxu0 0.0
    %3155 = vmatpush2.msra.mxu0 0.0
    %3156 = vmatprep.subr.mxu0 0.0
    %3157 = vmatpush2.msra.mxu0 0.0
    %3158 = vmatprep.subr.mxu0 0.0
    %3159 = vmatpush2.msra.mxu0 0.0
    %3160 = vmatprep.subr.mxu0 0.0
    %3161 = vmatpush2.msra.mxu0 0.0
    %3162 = vmatprep.subr.mxu0 0.0
    %3163 = vmatpush2.msra.mxu0 0.0
    %3164 = vmatprep.subr.mxu0 0.0
    %3165 = vmatpush2.msra.mxu0 0.0
    %3166 = vmatprep.subr.mxu0 0.0
    %3167 = vmatpush2.msra.mxu0 0.0
    %3168 = vmatprep.subr.mxu0 0.0
    %3169 = vmatpush2.msra.mxu0 0.0
    %3170 = vmatprep.subr.mxu0 0.0
    %3171 = vmatpush2.msra.mxu0 0.0
    %3172 = vmatprep.subr.mxu0 0.0
    %3173 = vmatpush2.msra.mxu0 0.0
    %3174 = vmatprep.subr.mxu0 0.0
    %3175 = vmatpush2.msra.mxu0 0.0
    %3176 = vmatprep.subr.mxu0 0.0
    %3177 = vmatpush2.msra.mxu0 0.0
    %3178 = vmatprep.subr.mxu0 0.0
    %3179 = vmatpush2.msra.mxu0 0.0
    %3180 = vmatprep.subr.mxu0 0.0
    %3181 = vmatpush2.msra.mxu0 0.0
    %3182 = vmatprep.mubr.f32.mxu0 0.0
    %3183 = vmatmul.mubr.f32.gmra.mxu0 %v615
    %v3184 = vpop.f32.mrf.mxu0
    %v3185 = vadd.f32 0.0, %v3184
    %v3186 = vpop.f32.mrf.mxu0
    %v3187 = vadd.f32 0.0, %v3186
    %3188 = vdwg.mxu0
    %v3189 = vadd.f32 %v3116, %v3185
    %v3190 = vadd.f32 %v3117, %v3187
    %v3191 = vxor.u32 %v3189, 2147483648
    %v3192 = vxor.u32 %v3190, 2147483648
    %v3193 = vmul.f32 %v3191, 1.442695
    %v3194 = vpow.pop %v3193
    %v3195 = vmul.f32 %v3192, 1.442695
    %v3196 = vpow.pop %v3195
    %v3197 = vadd.f32 %v3194, 1.0
    %v3198 = vadd.f32 %v3196, 1.0
    %v3199 = vrcp.pop %v3197
    %v3200 = vmul.f32 1.0, %v3199
    %v3201 = vrcp.pop %v3198
    %v3202 = vmul.f32 1.0, %v3201
    %v3203 = vtanh.pop %v3190
    %v3204 = vmul.f32 %v3200, 0.0
    %3206 = vrot.lane.b32.xlu0 %v3203, 64
    %v3207 = vpop.permute.xlu0 %3206
    %v3209 = vmul.f32 %v3200, %v3207
    %3211 = vrot.lane.b32.xlu0 %v3209, 64
    %v3212 = vpop.permute.xlu0 %3211
    %v3214 = vadd.f32 %v3204, %v3212
    %v3215 = vtanh.pop %v3214
    %3217 = vrot.lane.b32.xlu0 %v3215, 64
    %v3218 = vpop.permute.xlu0 %3217
    %v3220 = vmul.f32 %v3202, %v3218
    %3221 = vst.msk [vmem:[#allocation2] sm:$0x3] %vm720, %v3220
    %3223 = vrot.lane.b32.xlu0 %v3220, 96
    %v3224 = vpop.permute.xlu0 %3223
    %3226 = vst.msk [vmem:[#allocation3 + $0xe] sm:$0x3] %vm720, %v3224
    %v3227 = vrot.slane %v3106, 2
    %v3228 = vrot.slane %v3108, 2
    %v3231 = vadd.f32 %v3017, %v3227
    %v3232 = vadd.f32 %v3019, %v3228
    %v3233 = vsel %vm613, %v3220, 0
    %3235 = vmatprep.subr.mxu0 0.0
    %3236 = vmatpush1.msra.mxu0 0.0
    %3237 = vmatprep.subr.mxu0 0.0
    %3238 = vmatpush1.msra.mxu0 0.0
    %3239 = vmatprep.subr.mxu0 0.0
    %3240 = vmatpush1.msra.mxu0 0.0
    %3241 = vmatprep.subr.mxu0 0.0
    %3242 = vmatpush1.msra.mxu0 0.0
    %3243 = vmatprep.subr.mxu0 0.0
    %3244 = vmatpush1.msra.mxu0 0.0
    %3245 = vmatprep.subr.mxu0 0.0
    %3246 = vmatpush1.msra.mxu0 0.0
    %3247 = vmatprep.subr.mxu0 0.0
    %3248 = vmatpush1.msra.mxu0 0.0
    %3249 = vmatprep.subr.mxu0 0.0
    %3250 = vmatpush1.msra.mxu0 0.0
    %3251 = vmatprep.subr.mxu0 %v2925
    %3252 = vmatpush1.msra.mxu0 %v2924
    %3253 = vmatprep.subr.mxu0 %v2923
    %3254 = vmatpush1.msra.mxu0 %v2922
    %3255 = vmatprep.subr.mxu0 %v2921
    %3256 = vmatpush1.msra.mxu0 %v2920
    %3257 = vmatprep.subr.mxu0 %v2919
    %3258 = vmatpush1.msra.mxu0 %v2918
    %3259 = vmatprep.subr.mxu0 %v2917
    %3260 = vmatpush1.msra.mxu0 %v2916
    %3261 = vmatprep.subr.mxu0 %v2915
    %3262 = vmatpush1.msra.mxu0 %v2914
    %3263 = vmatprep.subr.mxu0 %v2913
    %3264 = vmatpush1.msra.mxu0 %v2912
    %3265 = vmatprep.subr.mxu0 %v2911
    %3266 = vmatpush1.msra.mxu0 %v2910
    %3267 = vmatprep.subr.mxu0 0.0
    %3268 = vmatpush2.msra.mxu0 0.0
    %3269 = vmatprep.subr.mxu0 0.0
    %3270 = vmatpush2.msra.mxu0 0.0
    %3271 = vmatprep.subr.mxu0 0.0
    %3272 = vmatpush2.msra.mxu0 0.0
    %3273 = vmatprep.subr.mxu0 0.0
    %3274 = vmatpush2.msra.mxu0 0.0
    %3275 = vmatprep.subr.mxu0 0.0
    %3276 = vmatpush2.msra.mxu0 0.0
    %3277 = vmatprep.subr.mxu0 0.0
    %3278 = vmatpush2.msra.mxu0 0.0
    %3279 = vmatprep.subr.mxu0 0.0
    %3280 = vmatpush2.msra.mxu0 0.0
    %3281 = vmatprep.subr.mxu0 0.0
    %3282 = vmatpush2.msra.mxu0 0.0
    %3283 = vmatprep.subr.mxu0 0.0
    %3284 = vmatpush2.msra.mxu0 0.0
    %3285 = vmatprep.subr.mxu0 0.0
    %3286 = vmatpush2.msra.mxu0 0.0
    %3287 = vmatprep.subr.mxu0 0.0
    %3288 = vmatpush2.msra.mxu0 0.0
    %3289 = vmatprep.subr.mxu0 0.0
    %3290 = vmatpush2.msra.mxu0 0.0
    %3291 = vmatprep.subr.mxu0 0.0
    %3292 = vmatpush2.msra.mxu0 0.0
    %3293 = vmatprep.subr.mxu0 0.0
    %3294 = vmatpush2.msra.mxu0 0.0
    %3295 = vmatprep.subr.mxu0 0.0
    %3296 = vmatpush2.msra.mxu0 0.0
    %3297 = vmatprep.subr.mxu0 0.0
    %3298 = vmatpush2.msra.mxu0 0.0
    %3299 = vmatprep.mubr.f32.mxu0 0.0
    %3300 = vmatmul.mubr.f32.gmra.mxu0 %v3233
    %v3301 = vpop.f32.mrf.mxu0
    %v3302 = vadd.f32 0.0, %v3301
    %v3303 = vpop.f32.mrf.mxu0
    %v3304 = vadd.f32 0.0, %v3303
    %3305 = vdwg.mxu0
    %v3308 = vrot.slane %v3302, 6
    %v3309 = vrot.slane %v3304, 6
    %v3312 = vadd.f32 %v3231, %v3308
    %v3313 = vadd.f32 %v3232, %v3309
    %v3314 = vxor.u32 %v3312, 2147483648
    %v3315 = vxor.u32 %v3313, 2147483648
    %v3316 = vmul.f32 %v3314, 1.442695
    %v3317 = vpow.pop %v3316
    %v3318 = vmul.f32 %v3315, 1.442695
    %v3319 = vpow.pop %v3318
    %v3320 = vadd.f32 %v3317, 1.0
    %v3321 = vadd.f32 %v3319, 1.0
    %v3322 = vrcp.pop %v3320
    %v3323 = vmul.f32 1.0, %v3322
    %v3324 = vrcp.pop %v3321
    %v3325 = vmul.f32 1.0, %v3324
    %v3326 = vtanh.pop %v3313
    %v3328 = vrot.slane %v3214, 6
    %v3330 = vmul.f32 %v3323, %v3328
    %3332 = vrot.lane.b32.xlu0 %v3326, 64
    %v3333 = vpop.permute.xlu0 %3332
    %v3335 = vmul.f32 %v3323, %v3333
    %3337 = vrot.lane.b32.xlu0 %v3335, 64
    %v3338 = vpop.permute.xlu0 %3337
    %v3340 = vadd.f32 %v3330, %v3338
    %v3341 = vtanh.pop %v3340
    %3343 = vrot.lane.b32.xlu0 %v3341, 64
    %v3344 = vpop.permute.xlu0 %3343
    %v3346 = vmul.f32 %v3325, %v3344
    %3347 = vst.msk [vmem:[#allocation2] sm:$0xc] %vm847, %v3346
    %3349 = vrot.lane.b32.xlu0 %v3346, 96
    %v3350 = vpop.permute.xlu0 %3349
    %3352 = vst.msk [vmem:[#allocation3 + $0xa] sm:$0xc] %vm847, %v3350
    %v3353 = vrot.slane %v3346, 2
    %v3354 = vsel %vm613, %v3353, 0
    %3356 = vmatprep.subr.mxu0 0.0
    %3357 = vmatpush1.msra.mxu0 0.0
    %3358 = vmatprep.subr.mxu0 0.0
    %3359 = vmatpush1.msra.mxu0 0.0
    %3360 = vmatprep.subr.mxu0 0.0
    %3361 = vmatpush1.msra.mxu0 0.0
    %3362 = vmatprep.subr.mxu0 0.0
    %3363 = vmatpush1.msra.mxu0 0.0
    %3364 = vmatprep.subr.mxu0 0.0
    %3365 = vmatpush1.msra.mxu0 0.0
    %3366 = vmatprep.subr.mxu0 0.0
    %3367 = vmatpush1.msra.mxu0 0.0
    %3368 = vmatprep.subr.mxu0 0.0
    %3369 = vmatpush1.msra.mxu0 0.0
    %3370 = vmatprep.subr.mxu0 0.0
    %3371 = vmatpush1.msra.mxu0 0.0
    %3372 = vmatprep.subr.mxu0 %v2925
    %3373 = vmatpush1.msra.mxu0 %v2924
    %3374 = vmatprep.subr.mxu0 %v2923
    %3375 = vmatpush1.msra.mxu0 %v2922
    %3376 = vmatprep.subr.mxu0 %v2921
    %3377 = vmatpush1.msra.mxu0 %v2920
    %3378 = vmatprep.subr.mxu0 %v2919
    %3379 = vmatpush1.msra.mxu0 %v2918
    %3380 = vmatprep.subr.mxu0 %v2917
    %3381 = vmatpush1.msra.mxu0 %v2916
    %3382 = vmatprep.subr.mxu0 %v2915
    %3383 = vmatpush1.msra.mxu0 %v2914
    %3384 = vmatprep.subr.mxu0 %v2913
    %3385 = vmatpush1.msra.mxu0 %v2912
    %3386 = vmatprep.subr.mxu0 %v2911
    %3387 = vmatpush1.msra.mxu0 %v2910
    %3388 = vmatprep.subr.mxu0 0.0
    %3389 = vmatpush2.msra.mxu0 0.0
    %3390 = vmatprep.subr.mxu0 0.0
    %3391 = vmatpush2.msra.mxu0 0.0
    %3392 = vmatprep.subr.mxu0 0.0
    %3393 = vmatpush2.msra.mxu0 0.0
    %3394 = vmatprep.subr.mxu0 0.0
    %3395 = vmatpush2.msra.mxu0 0.0
    %3396 = vmatprep.subr.mxu0 0.0
    %3397 = vmatpush2.msra.mxu0 0.0
    %3398 = vmatprep.subr.mxu0 0.0
    %3399 = vmatpush2.msra.mxu0 0.0
    %3400 = vmatprep.subr.mxu0 0.0
    %3401 = vmatpush2.msra.mxu0 0.0
    %3402 = vmatprep.subr.mxu0 0.0
    %3403 = vmatpush2.msra.mxu0 0.0
    %3404 = vmatprep.subr.mxu0 0.0
    %3405 = vmatpush2.msra.mxu0 0.0
    %3406 = vmatprep.subr.mxu0 0.0
    %3407 = vmatpush2.msra.mxu0 0.0
    %3408 = vmatprep.subr.mxu0 0.0
    %3409 = vmatpush2.msra.mxu0 0.0
    %3410 = vmatprep.subr.mxu0 0.0
    %3411 = vmatpush2.msra.mxu0 0.0
    %3412 = vmatprep.subr.mxu0 0.0
    %3413 = vmatpush2.msra.mxu0 0.0
    %3414 = vmatprep.subr.mxu0 0.0
    %3415 = vmatpush2.msra.mxu0 0.0
    %3416 = vmatprep.subr.mxu0 0.0
    %3417 = vmatpush2.msra.mxu0 0.0
    %3418 = vmatprep.subr.mxu0 0.0
    %3419 = vmatpush2.msra.mxu0 0.0
    %3420 = vmatprep.mubr.f32.mxu0 0.0
    %3421 = vmatmul.mubr.f32.gmra.mxu0 %v3354
    %v3422 = vpop.f32.mrf.mxu0
    %v3423 = vadd.f32 0.0, %v3422
    %v3424 = vpop.f32.mrf.mxu0
    %v3425 = vadd.f32 0.0, %v3424
    %3426 = vdwg.mxu0
    %v3429 = vrot.slane %v3423, 4
    %v3430 = vrot.slane %v3425, 4
    %v3433 = vadd.f32 %v3116, %v3429
    %v3434 = vadd.f32 %v3117, %v3430
    %v3435 = vxor.u32 %v3433, 2147483648
    %v3436 = vxor.u32 %v3434, 2147483648
    %v3437 = vmul.f32 %v3435, 1.442695
    %v3438 = vpow.pop %v3437
    %v3439 = vmul.f32 %v3436, 1.442695
    %v3440 = vpow.pop %v3439
    %v3441 = vadd.f32 %v3438, 1.0
    %v3442 = vadd.f32 %v3440, 1.0
    %v3443 = vrcp.pop %v3441
    %v3444 = vmul.f32 1.0, %v3443
    %v3445 = vrcp.pop %v3442
    %v3446 = vmul.f32 1.0, %v3445
    %v3447 = vtanh.pop %v3434
    %v3449 = vrot.slane %v3340, 6
    %v3451 = vmul.f32 %v3444, %v3449
    %3453 = vrot.lane.b32.xlu0 %v3447, 64
    %v3454 = vpop.permute.xlu0 %3453
    %v3456 = vmul.f32 %v3444, %v3454
    %3458 = vrot.lane.b32.xlu0 %v3456, 64
    %v3459 = vpop.permute.xlu0 %3458
    %v3461 = vadd.f32 %v3451, %v3459
    %v3462 = vtanh.pop %v3461
    %3464 = vrot.lane.b32.xlu0 %v3462, 64
    %v3465 = vpop.permute.xlu0 %3464
    %v3467 = vmul.f32 %v3446, %v3465
    %3468 = vst.msk [vmem:[#allocation2] sm:$0x30] %vm969, %v3467
    %3470 = vrot.lane.b32.xlu0 %v3467, 96
    %v3471 = vpop.permute.xlu0 %3470
    %3473 = vst.msk [vmem:[#allocation3 + $0x6] sm:$0x30] %vm969, %v3471
    %v3474 = vrot.slane %v3467, 4
    %v3475 = vsel %vm613, %v3474, 0
    %3477 = vmatprep.subr.mxu0 0.0
    %3478 = vmatpush1.msra.mxu0 0.0
    %3479 = vmatprep.subr.mxu0 0.0
    %3480 = vmatpush1.msra.mxu0 0.0
    %3481 = vmatprep.subr.mxu0 0.0
    %3482 = vmatpush1.msra.mxu0 0.0
    %3483 = vmatprep.subr.mxu0 0.0
    %3484 = vmatpush1.msra.mxu0 0.0
    %3485 = vmatprep.subr.mxu0 0.0
    %3486 = vmatpush1.msra.mxu0 0.0
    %3487 = vmatprep.subr.mxu0 0.0
    %3488 = vmatpush1.msra.mxu0 0.0
    %3489 = vmatprep.subr.mxu0 0.0
    %3490 = vmatpush1.msra.mxu0 0.0
    %3491 = vmatprep.subr.mxu0 0.0
    %3492 = vmatpush1.msra.mxu0 0.0
    %3493 = vmatprep.subr.mxu0 %v2925
    %3494 = vmatpush1.msra.mxu0 %v2924
    %3495 = vmatprep.subr.mxu0 %v2923
    %3496 = vmatpush1.msra.mxu0 %v2922
    %3497 = vmatprep.subr.mxu0 %v2921
    %3498 = vmatpush1.msra.mxu0 %v2920
    %3499 = vmatprep.subr.mxu0 %v2919
    %3500 = vmatpush1.msra.mxu0 %v2918
    %3501 = vmatprep.subr.mxu0 %v2917
    %3502 = vmatpush1.msra.mxu0 %v2916
    %3503 = vmatprep.subr.mxu0 %v2915
    %3504 = vmatpush1.msra.mxu0 %v2914
    %3505 = vmatprep.subr.mxu0 %v2913
    %3506 = vmatpush1.msra.mxu0 %v2912
    %3507 = vmatprep.subr.mxu0 %v2911
    %3508 = vmatpush1.msra.mxu0 %v2910
    %3509 = vmatprep.subr.mxu0 0.0
    %3510 = vmatpush2.msra.mxu0 0.0
    %3511 = vmatprep.subr.mxu0 0.0
    %3512 = vmatpush2.msra.mxu0 0.0
    %3513 = vmatprep.subr.mxu0 0.0
    %3514 = vmatpush2.msra.mxu0 0.0
    %3515 = vmatprep.subr.mxu0 0.0
    %3516 = vmatpush2.msra.mxu0 0.0
    %3517 = vmatprep.subr.mxu0 0.0
    %3518 = vmatpush2.msra.mxu0 0.0
    %3519 = vmatprep.subr.mxu0 0.0
    %3520 = vmatpush2.msra.mxu0 0.0
    %3521 = vmatprep.subr.mxu0 0.0
    %3522 = vmatpush2.msra.mxu0 0.0
    %3523 = vmatprep.subr.mxu0 0.0
    %3524 = vmatpush2.msra.mxu0 0.0
    %3525 = vmatprep.subr.mxu0 0.0
    %3526 = vmatpush2.msra.mxu0 0.0
    %3527 = vmatprep.subr.mxu0 0.0
    %3528 = vmatpush2.msra.mxu0 0.0
    %3529 = vmatprep.subr.mxu0 0.0
    %3530 = vmatpush2.msra.mxu0 0.0
    %3531 = vmatprep.subr.mxu0 0.0
    %3532 = vmatpush2.msra.mxu0 0.0
    %3533 = vmatprep.subr.mxu0 0.0
    %3534 = vmatpush2.msra.mxu0 0.0
    %3535 = vmatprep.subr.mxu0 0.0
    %3536 = vmatpush2.msra.mxu0 0.0
    %3537 = vmatprep.subr.mxu0 0.0
    %3538 = vmatpush2.msra.mxu0 0.0
    %3539 = vmatprep.subr.mxu0 0.0
    %3540 = vmatpush2.msra.mxu0 0.0
    %3541 = vmatprep.mubr.f32.mxu0 0.0
    %3542 = vmatmul.mubr.f32.gmra.mxu0 %v3475
    %v3543 = vpop.f32.mrf.mxu0
    %v3544 = vadd.f32 0.0, %v3543
    %v3545 = vpop.f32.mrf.mxu0
    %v3546 = vadd.f32 0.0, %v3545
    %3547 = vdwg.mxu0
    %v3550 = vrot.slane %v3544, 2
    %v3551 = vrot.slane %v3546, 2
    %v3554 = vadd.f32 %v3231, %v3550
    %v3555 = vadd.f32 %v3232, %v3551
    %v3556 = vxor.u32 %v3554, 2147483648
    %v3557 = vxor.u32 %v3555, 2147483648
    %v3558 = vmul.f32 %v3556, 1.442695
    %v3559 = vpow.pop %v3558
    %v3560 = vmul.f32 %v3557, 1.442695
    %v3561 = vpow.pop %v3560
    %v3562 = vadd.f32 %v3559, 1.0
    %v3563 = vadd.f32 %v3561, 1.0
    %v3564 = vrcp.pop %v3562
    %v3565 = vmul.f32 1.0, %v3564
    %v3566 = vrcp.pop %v3563
    %v3567 = vmul.f32 1.0, %v3566
    %v3568 = vtanh.pop %v3555
    %v3570 = vrot.slane %v3461, 6
    %v3572 = vmul.f32 %v3565, %v3570
    %3574 = vrot.lane.b32.xlu0 %v3568, 64
    %v3575 = vpop.permute.xlu0 %3574
    %v3577 = vmul.f32 %v3565, %v3575
    %3579 = vrot.lane.b32.xlu0 %v3577, 64
    %v3580 = vpop.permute.xlu0 %3579
    %v3582 = vadd.f32 %v3572, %v3580
    %v3583 = vtanh.pop %v3582
    %3585 = vrot.lane.b32.xlu0 %v3583, 64
    %v3586 = vpop.permute.xlu0 %3585
    %v3588 = vmul.f32 %v3567, %v3586
    %3589 = vst.msk [vmem:[#allocation2] sm:$0xc0] %vm1091, %v3588
    %3591 = vrot.lane.b32.xlu0 %v3588, 96
    %v3592 = vpop.permute.xlu0 %3591
    %3594 = vst.msk [vmem:[#allocation3 + $0x2] sm:$0xc0] %vm1091, %v3592
    %v3597 = vrot.slane %v3100, 6
    %v3598 = vrot.slane %v3102, 6
    %v3601 = vadd.f32 %v3023, %v3597
    %v3602 = vadd.f32 %v3025, %v3598
    %v3603 = vrot.slane %v3588, 6
    %v3604 = vsel %vm613, %v3603, 0
    %3606 = vmatprep.subr.mxu0 0.0
    %3607 = vmatpush1.msra.mxu0 0.0
    %3608 = vmatprep.subr.mxu0 0.0
    %3609 = vmatpush1.msra.mxu0 0.0
    %3610 = vmatprep.subr.mxu0 0.0
    %3611 = vmatpush1.msra.mxu0 0.0
    %3612 = vmatprep.subr.mxu0 0.0
    %3613 = vmatpush1.msra.mxu0 0.0
    %3614 = vmatprep.subr.mxu0 0.0
    %3615 = vmatpush1.msra.mxu0 0.0
    %3616 = vmatprep.subr.mxu0 0.0
    %3617 = vmatpush1.msra.mxu0 0.0
    %3618 = vmatprep.subr.mxu0 0.0
    %3619 = vmatpush1.msra.mxu0 0.0
    %3620 = vmatprep.subr.mxu0 0.0
    %3621 = vmatpush1.msra.mxu0 0.0
    %3622 = vmatprep.subr.mxu0 %v2925
    %3623 = vmatpush1.msra.mxu0 %v2924
    %3624 = vmatprep.subr.mxu0 %v2923
    %3625 = vmatpush1.msra.mxu0 %v2922
    %3626 = vmatprep.subr.mxu0 %v2921
    %3627 = vmatpush1.msra.mxu0 %v2920
    %3628 = vmatprep.subr.mxu0 %v2919
    %3629 = vmatpush1.msra.mxu0 %v2918
    %3630 = vmatprep.subr.mxu0 %v2917
    %3631 = vmatpush1.msra.mxu0 %v2916
    %3632 = vmatprep.subr.mxu0 %v2915
    %3633 = vmatpush1.msra.mxu0 %v2914
    %3634 = vmatprep.subr.mxu0 %v2913
    %3635 = vmatpush1.msra.mxu0 %v2912
    %3636 = vmatprep.subr.mxu0 %v2911
    %3637 = vmatpush1.msra.mxu0 %v2910
    %3638 = vmatprep.subr.mxu0 0.0
    %3639 = vmatpush2.msra.mxu0 0.0
    %3640 = vmatprep.subr.mxu0 0.0
    %3641 = vmatpush2.msra.mxu0 0.0
    %3642 = vmatprep.subr.mxu0 0.0
    %3643 = vmatpush2.msra.mxu0 0.0
    %3644 = vmatprep.subr.mxu0 0.0
    %3645 = vmatpush2.msra.mxu0 0.0
    %3646 = vmatprep.subr.mxu0 0.0
    %3647 = vmatpush2.msra.mxu0 0.0
    %3648 = vmatprep.subr.mxu0 0.0
    %3649 = vmatpush2.msra.mxu0 0.0
    %3650 = vmatprep.subr.mxu0 0.0
    %3651 = vmatpush2.msra.mxu0 0.0
    %3652 = vmatprep.subr.mxu0 0.0
    %3653 = vmatpush2.msra.mxu0 0.0
    %3654 = vmatprep.subr.mxu0 0.0
    %3655 = vmatpush2.msra.mxu0 0.0
    %3656 = vmatprep.subr.mxu0 0.0
    %3657 = vmatpush2.msra.mxu0 0.0
    %3658 = vmatprep.subr.mxu0 0.0
    %3659 = vmatpush2.msra.mxu0 0.0
    %3660 = vmatprep.subr.mxu0 0.0
    %3661 = vmatpush2.msra.mxu0 0.0
    %3662 = vmatprep.subr.mxu0 0.0
    %3663 = vmatpush2.msra.mxu0 0.0
    %3664 = vmatprep.subr.mxu0 0.0
    %3665 = vmatpush2.msra.mxu0 0.0
    %3666 = vmatprep.subr.mxu0 0.0
    %3667 = vmatpush2.msra.mxu0 0.0
    %3668 = vmatprep.subr.mxu0 0.0
    %3669 = vmatpush2.msra.mxu0 0.0
    %3670 = vmatprep.mubr.f32.mxu0 0.0
    %3671 = vmatmul.mubr.f32.gmra.mxu0 %v3604
    %v3672 = vpop.f32.mrf.mxu0
    %v3673 = vadd.f32 0.0, %v3672
    %v3674 = vpop.f32.mrf.mxu0
    %v3675 = vadd.f32 0.0, %v3674
    %3676 = vdwg.mxu0
    %v3677 = vadd.f32 %v3601, %v3673
    %v3678 = vadd.f32 %v3602, %v3675
    %v3679 = vxor.u32 %v3677, 2147483648
    %v3680 = vxor.u32 %v3678, 2147483648
    %v3681 = vmul.f32 %v3679, 1.442695
    %v3682 = vpow.pop %v3681
    %v3683 = vmul.f32 %v3680, 1.442695
    %v3684 = vpow.pop %v3683
    %v3685 = vadd.f32 %v3682, 1.0
    %v3686 = vadd.f32 %v3684, 1.0
    %v3687 = vrcp.pop %v3685
    %v3688 = vmul.f32 1.0, %v3687
    %v3689 = vrcp.pop %v3686
    %v3690 = vmul.f32 1.0, %v3689
    %v3691 = vtanh.pop %v3678
    %v3693 = vrot.slane %v3582, 6
    %v3695 = vmul.f32 %v3688, %v3693
    %3697 = vrot.lane.b32.xlu0 %v3691, 64
    %v3698 = vpop.permute.xlu0 %3697
    %v3700 = vmul.f32 %v3688, %v3698
    %3702 = vrot.lane.b32.xlu0 %v3700, 64
    %v3703 = vpop.permute.xlu0 %3702
    %v3705 = vadd.f32 %v3695, %v3703
    %v3706 = vtanh.pop %v3705
    %3708 = vrot.lane.b32.xlu0 %v3706, 64
    %v3709 = vpop.permute.xlu0 %3708
    %v3711 = vmul.f32 %v3690, %v3709
    %3712 = vst.msk [vmem:[#allocation2 + $0x8] sm:$0x3] %vm720, %v3711
    %3714 = vrot.lane.b32.xlu0 %v3711, 96
    %v3715 = vpop.permute.xlu0 %3714
    %3717 = vst.msk [vmem:[#allocation3 + $0x6] sm:$0x3] %vm720, %v3715
    %v3718 = vrot.slane %v3100, 2
    %v3719 = vrot.slane %v3102, 2
    %v3722 = vadd.f32 %v3023, %v3718
    %v3723 = vadd.f32 %v3025, %v3719
    %v3724 = vsel %vm613, %v3711, 0
    %3726 = vmatprep.subr.mxu0 0.0
    %3727 = vmatpush1.msra.mxu0 0.0
    %3728 = vmatprep.subr.mxu0 0.0
    %3729 = vmatpush1.msra.mxu0 0.0
    %3730 = vmatprep.subr.mxu0 0.0
    %3731 = vmatpush1.msra.mxu0 0.0
    %3732 = vmatprep.subr.mxu0 0.0
    %3733 = vmatpush1.msra.mxu0 0.0
    %3734 = vmatprep.subr.mxu0 0.0
    %3735 = vmatpush1.msra.mxu0 0.0
    %3736 = vmatprep.subr.mxu0 0.0
    %3737 = vmatpush1.msra.mxu0 0.0
    %3738 = vmatprep.subr.mxu0 0.0
    %3739 = vmatpush1.msra.mxu0 0.0
    %3740 = vmatprep.subr.mxu0 0.0
    %3741 = vmatpush1.msra.mxu0 0.0
    %3742 = vmatprep.subr.mxu0 %v2925
    %3743 = vmatpush1.msra.mxu0 %v2924
    %3744 = vmatprep.subr.mxu0 %v2923
    %3745 = vmatpush1.msra.mxu0 %v2922
    %3746 = vmatprep.subr.mxu0 %v2921
    %3747 = vmatpush1.msra.mxu0 %v2920
    %3748 = vmatprep.subr.mxu0 %v2919
    %3749 = vmatpush1.msra.mxu0 %v2918
    %3750 = vmatprep.subr.mxu0 %v2917
    %3751 = vmatpush1.msra.mxu0 %v2916
    %3752 = vmatprep.subr.mxu0 %v2915
    %3753 = vmatpush1.msra.mxu0 %v2914
    %3754 = vmatprep.subr.mxu0 %v2913
    %3755 = vmatpush1.msra.mxu0 %v2912
    %3756 = vmatprep.subr.mxu0 %v2911
    %3757 = vmatpush1.msra.mxu0 %v2910
    %3758 = vmatprep.subr.mxu0 0.0
    %3759 = vmatpush2.msra.mxu0 0.0
    %3760 = vmatprep.subr.mxu0 0.0
    %3761 = vmatpush2.msra.mxu0 0.0
    %3762 = vmatprep.subr.mxu0 0.0
    %3763 = vmatpush2.msra.mxu0 0.0
    %3764 = vmatprep.subr.mxu0 0.0
    %3765 = vmatpush2.msra.mxu0 0.0
    %3766 = vmatprep.subr.mxu0 0.0
    %3767 = vmatpush2.msra.mxu0 0.0
    %3768 = vmatprep.subr.mxu0 0.0
    %3769 = vmatpush2.msra.mxu0 0.0
    %3770 = vmatprep.subr.mxu0 0.0
    %3771 = vmatpush2.msra.mxu0 0.0
    %3772 = vmatprep.subr.mxu0 0.0
    %3773 = vmatpush2.msra.mxu0 0.0
    %3774 = vmatprep.subr.mxu0 0.0
    %3775 = vmatpush2.msra.mxu0 0.0
    %3776 = vmatprep.subr.mxu0 0.0
    %3777 = vmatpush2.msra.mxu0 0.0
    %3778 = vmatprep.subr.mxu0 0.0
    %3779 = vmatpush2.msra.mxu0 0.0
    %3780 = vmatprep.subr.mxu0 0.0
    %3781 = vmatpush2.msra.mxu0 0.0
    %3782 = vmatprep.subr.mxu0 0.0
    %3783 = vmatpush2.msra.mxu0 0.0
    %3784 = vmatprep.subr.mxu0 0.0
    %3785 = vmatpush2.msra.mxu0 0.0
    %3786 = vmatprep.subr.mxu0 0.0
    %3787 = vmatpush2.msra.mxu0 0.0
    %3788 = vmatprep.subr.mxu0 0.0
    %3789 = vmatpush2.msra.mxu0 0.0
    %3790 = vmatprep.mubr.f32.mxu0 0.0
    %3791 = vmatmul.mubr.f32.gmra.mxu0 %v3724
    %v3792 = vpop.f32.mrf.mxu0
    %v3793 = vadd.f32 0.0, %v3792
    %v3794 = vpop.f32.mrf.mxu0
    %v3795 = vadd.f32 0.0, %v3794
    %3796 = vdwg.mxu0
    %v3799 = vrot.slane %v3793, 6
    %v3800 = vrot.slane %v3795, 6
    %v3803 = vadd.f32 %v3722, %v3799
    %v3804 = vadd.f32 %v3723, %v3800
    %v3805 = vxor.u32 %v3803, 2147483648
    %v3806 = vxor.u32 %v3804, 2147483648
    %v3807 = vmul.f32 %v3805, 1.442695
    %v3808 = vpow.pop %v3807
    %v3809 = vmul.f32 %v3806, 1.442695
    %v3810 = vpow.pop %v3809
    %v3811 = vadd.f32 %v3808, 1.0
    %v3812 = vadd.f32 %v3810, 1.0
    %v3813 = vrcp.pop %v3811
    %v3814 = vmul.f32 1.0, %v3813
    %v3815 = vrcp.pop %v3812
    %v3816 = vmul.f32 1.0, %v3815
    %v3817 = vtanh.pop %v3804
    %v3819 = vrot.slane %v3705, 6
    %v3821 = vmul.f32 %v3814, %v3819
    %3823 = vrot.lane.b32.xlu0 %v3817, 64
    %v3824 = vpop.permute.xlu0 %3823
    %v3826 = vmul.f32 %v3814, %v3824
    %3828 = vrot.lane.b32.xlu0 %v3826, 64
    %v3829 = vpop.permute.xlu0 %3828
    %v3831 = vadd.f32 %v3821, %v3829
    %v3832 = vtanh.pop %v3831
    %3834 = vrot.lane.b32.xlu0 %v3832, 64
    %v3835 = vpop.permute.xlu0 %3834
    %v3837 = vmul.f32 %v3816, %v3835
    %3838 = vst.msk [vmem:[#allocation2 + $0x8] sm:$0xc] %vm847, %v3837
    %3840 = vrot.lane.b32.xlu0 %v3837, 96
    %v3841 = vpop.permute.xlu0 %3840
    %3843 = vst.msk [vmem:[#allocation3 + $0x2] sm:$0xc] %vm847, %v3841
    %v3844 = vrot.slane %v3837, 2
    %v3845 = vsel %vm613, %v3844, 0
    %3847 = vmatprep.subr.mxu0 0.0
    %3848 = vmatpush1.msra.mxu0 0.0
    %3849 = vmatprep.subr.mxu0 0.0
    %3850 = vmatpush1.msra.mxu0 0.0
    %3851 = vmatprep.subr.mxu0 0.0
    %3852 = vmatpush1.msra.mxu0 0.0
    %3853 = vmatprep.subr.mxu0 0.0
    %3854 = vmatpush1.msra.mxu0 0.0
    %3855 = vmatprep.subr.mxu0 0.0
    %3856 = vmatpush1.msra.mxu0 0.0
    %3857 = vmatprep.subr.mxu0 0.0
    %3858 = vmatpush1.msra.mxu0 0.0
    %3859 = vmatprep.subr.mxu0 0.0
    %3860 = vmatpush1.msra.mxu0 0.0
    %3861 = vmatprep.subr.mxu0 0.0
    %3862 = vmatpush1.msra.mxu0 0.0
    %3863 = vmatprep.subr.mxu0 %v2925
    %3864 = vmatpush1.msra.mxu0 %v2924
    %3865 = vmatprep.subr.mxu0 %v2923
    %3866 = vmatpush1.msra.mxu0 %v2922
    %3867 = vmatprep.subr.mxu0 %v2921
    %3868 = vmatpush1.msra.mxu0 %v2920
    %3869 = vmatprep.subr.mxu0 %v2919
    %3870 = vmatpush1.msra.mxu0 %v2918
    %3871 = vmatprep.subr.mxu0 %v2917
    %3872 = vmatpush1.msra.mxu0 %v2916
    %3873 = vmatprep.subr.mxu0 %v2915
    %3874 = vmatpush1.msra.mxu0 %v2914
    %3875 = vmatprep.subr.mxu0 %v2913
    %3876 = vmatpush1.msra.mxu0 %v2912
    %3877 = vmatprep.subr.mxu0 %v2911
    %3878 = vmatpush1.msra.mxu0 %v2910
    %3879 = vmatprep.subr.mxu0 0.0
    %3880 = vmatpush2.msra.mxu0 0.0
    %3881 = vmatprep.subr.mxu0 0.0
    %3882 = vmatpush2.msra.mxu0 0.0
    %3883 = vmatprep.subr.mxu0 0.0
    %3884 = vmatpush2.msra.mxu0 0.0
    %3885 = vmatprep.subr.mxu0 0.0
    %3886 = vmatpush2.msra.mxu0 0.0
    %3887 = vmatprep.subr.mxu0 0.0
    %3888 = vmatpush2.msra.mxu0 0.0
    %3889 = vmatprep.subr.mxu0 0.0
    %3890 = vmatpush2.msra.mxu0 0.0
    %3891 = vmatprep.subr.mxu0 0.0
    %3892 = vmatpush2.msra.mxu0 0.0
    %3893 = vmatprep.subr.mxu0 0.0
    %3894 = vmatpush2.msra.mxu0 0.0
    %3895 = vmatprep.subr.mxu0 0.0
    %3896 = vmatpush2.msra.mxu0 0.0
    %3897 = vmatprep.subr.mxu0 0.0
    %3898 = vmatpush2.msra.mxu0 0.0
    %3899 = vmatprep.subr.mxu0 0.0
    %3900 = vmatpush2.msra.mxu0 0.0
    %3901 = vmatprep.subr.mxu0 0.0
    %3902 = vmatpush2.msra.mxu0 0.0
    %3903 = vmatprep.subr.mxu0 0.0
    %3904 = vmatpush2.msra.mxu0 0.0
    %3905 = vmatprep.subr.mxu0 0.0
    %3906 = vmatpush2.msra.mxu0 0.0
    %3907 = vmatprep.subr.mxu0 0.0
    %3908 = vmatpush2.msra.mxu0 0.0
    %3909 = vmatprep.subr.mxu0 0.0
    %3910 = vmatpush2.msra.mxu0 0.0
    %3911 = vmatprep.mubr.f32.mxu0 0.0
    %3912 = vmatmul.mubr.f32.gmra.mxu0 %v3845
    %v3913 = vpop.f32.mrf.mxu0
    %v3914 = vadd.f32 0.0, %v3913
    %v3915 = vpop.f32.mrf.mxu0
    %v3916 = vadd.f32 0.0, %v3915
    %3917 = vdwg.mxu0
    %v3920 = vrot.slane %v3914, 4
    %v3921 = vrot.slane %v3916, 4
    %v3924 = vadd.f32 %v3601, %v3920
    %v3925 = vadd.f32 %v3602, %v3921
    %v3926 = vxor.u32 %v3924, 2147483648
    %v3927 = vxor.u32 %v3925, 2147483648
    %v3928 = vmul.f32 %v3926, 1.442695
    %v3929 = vpow.pop %v3928
    %v3930 = vmul.f32 %v3927, 1.442695
    %v3931 = vpow.pop %v3930
    %v3932 = vadd.f32 %v3929, 1.0
    %v3933 = vadd.f32 %v3931, 1.0
    %v3934 = vrcp.pop %v3932
    %v3935 = vmul.f32 1.0, %v3934
    %v3936 = vrcp.pop %v3933
    %v3937 = vmul.f32 1.0, %v3936
    %v3938 = vtanh.pop %v3925
    %v3940 = vrot.slane %v3831, 6
    %v3942 = vmul.f32 %v3935, %v3940
    %3944 = vrot.lane.b32.xlu0 %v3938, 64
    %v3945 = vpop.permute.xlu0 %3944
    %v3947 = vmul.f32 %v3935, %v3945
    %3949 = vrot.lane.b32.xlu0 %v3947, 64
    %v3950 = vpop.permute.xlu0 %3949
    %v3952 = vadd.f32 %v3942, %v3950
    %v3953 = vtanh.pop %v3952
    %3955 = vrot.lane.b32.xlu0 %v3953, 64
    %v3956 = vpop.permute.xlu0 %3955
    %v3958 = vmul.f32 %v3937, %v3956
    %3959 = vst.msk [vmem:[#allocation2 + $0x8] sm:$0x30] %vm969, %v3958
    %3961 = vrot.lane.b32.xlu0 %v3958, 96
    %v3962 = vpop.permute.xlu0 %3961
    %3964 = vst.msk [vmem:[#allocation3 - $0x2] sm:$0x30] %vm969, %v3962
    %v3965 = vrot.slane %v3958, 4
    %v3966 = vsel %vm613, %v3965, 0
    %3968 = vmatprep.subr.mxu0 0.0
    %3969 = vmatpush1.msra.mxu0 0.0
    %3970 = vmatprep.subr.mxu0 0.0
    %3971 = vmatpush1.msra.mxu0 0.0
    %3972 = vmatprep.subr.mxu0 0.0
    %3973 = vmatpush1.msra.mxu0 0.0
    %3974 = vmatprep.subr.mxu0 0.0
    %3975 = vmatpush1.msra.mxu0 0.0
    %3976 = vmatprep.subr.mxu0 0.0
    %3977 = vmatpush1.msra.mxu0 0.0
    %3978 = vmatprep.subr.mxu0 0.0
    %3979 = vmatpush1.msra.mxu0 0.0
    %3980 = vmatprep.subr.mxu0 0.0
    %3981 = vmatpush1.msra.mxu0 0.0
    %3982 = vmatprep.subr.mxu0 0.0
    %3983 = vmatpush1.msra.mxu0 0.0
    %3984 = vmatprep.subr.mxu0 %v2925
    %3985 = vmatpush1.msra.mxu0 %v2924
    %3986 = vmatprep.subr.mxu0 %v2923
    %3987 = vmatpush1.msra.mxu0 %v2922
    %3988 = vmatprep.subr.mxu0 %v2921
    %3989 = vmatpush1.msra.mxu0 %v2920
    %3990 = vmatprep.subr.mxu0 %v2919
    %3991 = vmatpush1.msra.mxu0 %v2918
    %3992 = vmatprep.subr.mxu0 %v2917
    %3993 = vmatpush1.msra.mxu0 %v2916
    %3994 = vmatprep.subr.mxu0 %v2915
    %3995 = vmatpush1.msra.mxu0 %v2914
    %3996 = vmatprep.subr.mxu0 %v2913
    %3997 = vmatpush1.msra.mxu0 %v2912
    %3998 = vmatprep.subr.mxu0 %v2911
    %3999 = vmatpush1.msra.mxu0 %v2910
    %4000 = vmatprep.subr.mxu0 0.0
    %4001 = vmatpush2.msra.mxu0 0.0
    %4002 = vmatprep.subr.mxu0 0.0
    %4003 = vmatpush2.msra.mxu0 0.0
    %4004 = vmatprep.subr.mxu0 0.0
    %4005 = vmatpush2.msra.mxu0 0.0
    %4006 = vmatprep.subr.mxu0 0.0
    %4007 = vmatpush2.msra.mxu0 0.0
    %4008 = vmatprep.subr.mxu0 0.0
    %4009 = vmatpush2.msra.mxu0 0.0
    %4010 = vmatprep.subr.mxu0 0.0
    %4011 = vmatpush2.msra.mxu0 0.0
    %4012 = vmatprep.subr.mxu0 0.0
    %4013 = vmatpush2.msra.mxu0 0.0
    %4014 = vmatprep.subr.mxu0 0.0
    %4015 = vmatpush2.msra.mxu0 0.0
    %4016 = vmatprep.subr.mxu0 0.0
    %4017 = vmatpush2.msra.mxu0 0.0
    %4018 = vmatprep.subr.mxu0 0.0
    %4019 = vmatpush2.msra.mxu0 0.0
    %4020 = vmatprep.subr.mxu0 0.0
    %4021 = vmatpush2.msra.mxu0 0.0
    %4022 = vmatprep.subr.mxu0 0.0
    %4023 = vmatpush2.msra.mxu0 0.0
    %4024 = vmatprep.subr.mxu0 0.0
    %4025 = vmatpush2.msra.mxu0 0.0
    %4026 = vmatprep.subr.mxu0 0.0
    %4027 = vmatpush2.msra.mxu0 0.0
    %4028 = vmatprep.subr.mxu0 0.0
    %4029 = vmatpush2.msra.mxu0 0.0
    %4030 = vmatprep.subr.mxu0 0.0
    %4031 = vmatpush2.msra.mxu0 0.0
    %4032 = vmatprep.mubr.f32.mxu0 0.0
    %4033 = vmatmul.mubr.f32.gmra.mxu0 %v3966
    %v4034 = vpop.f32.mrf.mxu0
    %v4035 = vadd.f32 0.0, %v4034
    %v4036 = vpop.f32.mrf.mxu0
    %v4037 = vadd.f32 0.0, %v4036
    %4038 = vdwg.mxu0
    %v4041 = vrot.slane %v4035, 2
    %v4042 = vrot.slane %v4037, 2
    %v4045 = vadd.f32 %v3722, %v4041
    %v4046 = vadd.f32 %v3723, %v4042
    %v4047 = vxor.u32 %v4045, 2147483648
    %v4048 = vxor.u32 %v4046, 2147483648
    %v4049 = vmul.f32 %v4047, 1.442695
    %v4050 = vpow.pop %v4049
    %v4051 = vmul.f32 %v4048, 1.442695
    %v4052 = vpow.pop %v4051
    %v4053 = vadd.f32 %v4050, 1.0
    %v4054 = vadd.f32 %v4052, 1.0
    %v4055 = vrcp.pop %v4053
    %v4056 = vmul.f32 1.0, %v4055
    %v4057 = vrcp.pop %v4054
    %v4058 = vmul.f32 1.0, %v4057
    %v4059 = vtanh.pop %v4046
    %v4061 = vrot.slane %v3952, 6
    %v4063 = vmul.f32 %v4056, %v4061
    %4065 = vrot.lane.b32.xlu0 %v4059, 64
    %v4066 = vpop.permute.xlu0 %4065
    %v4068 = vmul.f32 %v4056, %v4066
    %4070 = vrot.lane.b32.xlu0 %v4068, 64
    %v4071 = vpop.permute.xlu0 %4070
    %v4073 = vadd.f32 %v4063, %v4071
    %v4074 = vtanh.pop %v4073
    %4076 = vrot.lane.b32.xlu0 %v4074, 64
    %v4077 = vpop.permute.xlu0 %4076
    %v4079 = vmul.f32 %v4058, %v4077
    %4080 = vst.msk [vmem:[#allocation2 + $0x8] sm:$0xc0] %vm1091, %v4079
    %4082 = vrot.lane.b32.xlu0 %v4079, 96
    %v4083 = vpop.permute.xlu0 %4082
    %4085 = vst.msk [vmem:[#allocation3 - $0x6] sm:$0xc0] %vm1091, %v4083
    %v4086 = vld [vmem:[#allocation2] sm:$0xff]
    %v4087 = vld [vmem:[#allocation2 + $0x8] sm:$0xff]
    %v4088 = vld [vmem:[#allocation3] sm:$0xff]
    %v4089 = vld [vmem:[#allocation3 + $0x8] sm:$0xff]
    %4092 = vrot.lane.b32.xlu0 %v4088, 32
    %v4093 = vpop.permute.xlu0 %4092
    %4094 = vrot.lane.b32.xlu0 %v4089, 32
    %v4095 = vpop.permute.xlu0 %4094
    %v4098 = vsel %vm1601, %v4086, %v4093
    %v4099 = vsel %vm1601, %v4087, %v4095
    %v4100 = vld [vmem:[#allocation22] sm:$0xff]
    %v4101 = vld [vmem:[#allocation22 + $0x8] sm:$0xff]
    %v4102 = vld [vmem:[#allocation22 + $0x10] sm:$0xff]
    %v4103 = vld [vmem:[#allocation22 + $0x18] sm:$0xff]
    %v4104 = vld [vmem:[#allocation22 + $0x20] sm:$0xff]
    %v4105 = vld [vmem:[#allocation22 + $0x28] sm:$0xff]
    %v4106 = vld [vmem:[#allocation22 + $0x30] sm:$0xff]
    %v4107 = vld [vmem:[#allocation22 + $0x38] sm:$0xff]
    %v4108 = vld [vmem:[#allocation22 + $0x40] sm:$0xff]
    %v4109 = vld [vmem:[#allocation22 + $0x48] sm:$0xff]
    %v4110 = vld [vmem:[#allocation22 + $0x50] sm:$0xff]
    %v4111 = vld [vmem:[#allocation22 + $0x58] sm:$0xff]
    %v4112 = vld [vmem:[#allocation22 + $0x60] sm:$0xff]
    %v4113 = vld [vmem:[#allocation22 + $0x68] sm:$0xff]
    %v4114 = vld [vmem:[#allocation22 + $0x70] sm:$0xff]
    %v4115 = vld [vmem:[#allocation22 + $0x78] sm:$0xff]
    %v4116 = vld [vmem:[#allocation24] sm:$0xff]
    %v4117 = vld [vmem:[#allocation24 + $0x8] sm:$0xff]
    %v4118 = vld [vmem:[#allocation24 + $0x10] sm:$0xff]
    %v4119 = vld [vmem:[#allocation24 + $0x18] sm:$0xff]
    %v4120 = vld [vmem:[#allocation24 + $0x20] sm:$0xff]
    %v4121 = vld [vmem:[#allocation24 + $0x28] sm:$0xff]
    %v4122 = vld [vmem:[#allocation24 + $0x30] sm:$0xff]
    %v4123 = vld [vmem:[#allocation24 + $0x38] sm:$0xff]
    %v4124 = vld [vmem:[#allocation24 + $0x40] sm:$0xff]
    %v4125 = vld [vmem:[#allocation24 + $0x48] sm:$0xff]
    %v4126 = vld [vmem:[#allocation24 + $0x50] sm:$0xff]
    %v4127 = vld [vmem:[#allocation24 + $0x58] sm:$0xff]
    %v4128 = vld [vmem:[#allocation24 + $0x60] sm:$0xff]
    %v4129 = vld [vmem:[#allocation24 + $0x68] sm:$0xff]
    %v4130 = vld [vmem:[#allocation24 + $0x70] sm:$0xff]
    %v4131 = vld [vmem:[#allocation24 + $0x78] sm:$0xff]
    %v4132 = vld [vmem:[#allocation25] sm:$0xff]
    %v4133 = vld [vmem:[#allocation25 + $0x8] sm:$0xff]
    %v4134 = vld [vmem:[#allocation25 + $0x10] sm:$0xff]
    %v4135 = vld [vmem:[#allocation25 + $0x18] sm:$0xff]
    %v4136 = vld [vmem:[#allocation25 + $0x20] sm:$0xff]
    %v4137 = vld [vmem:[#allocation25 + $0x28] sm:$0xff]
    %v4138 = vld [vmem:[#allocation25 + $0x30] sm:$0xff]
    %v4139 = vld [vmem:[#allocation25 + $0x38] sm:$0xff]
    %v4140 = vld [vmem:[#allocation25 + $0x40] sm:$0xff]
    %v4141 = vld [vmem:[#allocation25 + $0x48] sm:$0xff]
    %v4142 = vld [vmem:[#allocation25 + $0x50] sm:$0xff]
    %v4143 = vld [vmem:[#allocation25 + $0x58] sm:$0xff]
    %v4144 = vld [vmem:[#allocation25 + $0x60] sm:$0xff]
    %v4145 = vld [vmem:[#allocation25 + $0x68] sm:$0xff]
    %v4146 = vld [vmem:[#allocation25 + $0x70] sm:$0xff]
    %v4147 = vld [vmem:[#allocation25 + $0x78] sm:$0xff]
    %v4148 = vld [vmem:[%s45] sm:$0x3]
    %v4150 = vlaneseq
    %v4151 = vshrl.u32 %v4150, 7
    %v4152 = vsub.s32 0, %v4151
    %v4153 = vrot.slane %v4148, %v4152
    %v4154 = vlaneseq
    %v4155 = vshrl.u32 %v4154, 7
    %v4156 = vsub.s32 1, %v4155
    %v4157 = vrot.slane %v4148, %v4156
    %v4161 = vsel %vm613, %v4098, 0
    %v4164 = vsel %vm613, %v4099, 0
    %4166 = vmatprep.subr.mxu0 0.0
    %4167 = vmatpush1.msra.mxu0 0.0
    %4168 = vmatprep.subr.mxu0 0.0
    %4169 = vmatpush1.msra.mxu0 0.0
    %4170 = vmatprep.subr.mxu0 0.0
    %4171 = vmatpush1.msra.mxu0 0.0
    %4172 = vmatprep.subr.mxu0 0.0
    %4173 = vmatpush1.msra.mxu0 0.0
    %4174 = vmatprep.subr.mxu0 0.0
    %4175 = vmatpush1.msra.mxu0 0.0
    %4176 = vmatprep.subr.mxu0 0.0
    %4177 = vmatpush1.msra.mxu0 0.0
    %4178 = vmatprep.subr.mxu0 0.0
    %4179 = vmatpush1.msra.mxu0 0.0
    %4180 = vmatprep.subr.mxu0 0.0
    %4181 = vmatpush1.msra.mxu0 0.0
    %4182 = vmatprep.subr.mxu0 %v4115
    %4183 = vmatpush1.msra.mxu0 %v4114
    %4184 = vmatprep.subr.mxu0 %v4113
    %4185 = vmatpush1.msra.mxu0 %v4112
    %4186 = vmatprep.subr.mxu0 %v4111
    %4187 = vmatpush1.msra.mxu0 %v4110
    %4188 = vmatprep.subr.mxu0 %v4109
    %4189 = vmatpush1.msra.mxu0 %v4108
    %4190 = vmatprep.subr.mxu0 %v4107
    %4191 = vmatpush1.msra.mxu0 %v4106
    %4192 = vmatprep.subr.mxu0 %v4105
    %4193 = vmatpush1.msra.mxu0 %v4104
    %4194 = vmatprep.subr.mxu0 %v4103
    %4195 = vmatpush1.msra.mxu0 %v4102
    %4196 = vmatprep.subr.mxu0 %v4101
    %4197 = vmatpush1.msra.mxu0 %v4100
    %4198 = vmatprep.subr.mxu0 0.0
    %4199 = vmatpush2.msra.mxu0 0.0
    %4200 = vmatprep.subr.mxu0 0.0
    %4201 = vmatpush2.msra.mxu0 0.0
    %4202 = vmatprep.subr.mxu0 0.0
    %4203 = vmatpush2.msra.mxu0 0.0
    %4204 = vmatprep.subr.mxu0 0.0
    %4205 = vmatpush2.msra.mxu0 0.0
    %4206 = vmatprep.subr.mxu0 0.0
    %4207 = vmatpush2.msra.mxu0 0.0
    %4208 = vmatprep.subr.mxu0 0.0
    %4209 = vmatpush2.msra.mxu0 0.0
    %4210 = vmatprep.subr.mxu0 0.0
    %4211 = vmatpush2.msra.mxu0 0.0
    %4212 = vmatprep.subr.mxu0 0.0
    %4213 = vmatpush2.msra.mxu0 0.0
    %4214 = vmatprep.subr.mxu0 0.0
    %4215 = vmatpush2.msra.mxu0 0.0
    %4216 = vmatprep.subr.mxu0 0.0
    %4217 = vmatpush2.msra.mxu0 0.0
    %4218 = vmatprep.subr.mxu0 0.0
    %4219 = vmatpush2.msra.mxu0 0.0
    %4220 = vmatprep.subr.mxu0 0.0
    %4221 = vmatpush2.msra.mxu0 0.0
    %4222 = vmatprep.subr.mxu0 0.0
    %4223 = vmatpush2.msra.mxu0 0.0
    %4224 = vmatprep.subr.mxu0 0.0
    %4225 = vmatpush2.msra.mxu0 0.0
    %4226 = vmatprep.subr.mxu0 0.0
    %4227 = vmatpush2.msra.mxu0 0.0
    %4228 = vmatprep.subr.mxu0 0.0
    %4229 = vmatpush2.msra.mxu0 0.0
    %4230 = vmatprep.mubr.f32.mxu0 0.0
    %4231 = vmatmul.mubr.f32.gmra.mxu0 %v4161
    %v4232 = vpop.f32.mrf.mxu0
    %v4233 = vadd.f32 %v4153, %v4232
    %v4234 = vpop.f32.mrf.mxu0
    %v4235 = vadd.f32 %v4157, %v4234
    %4236 = vmatprep.mubr.f32.mxu0 0.0
    %4237 = vmatmul.mubr.f32.gmra.mxu0 %v4164
    %v4238 = vpop.f32.mrf.mxu0
    %v4239 = vadd.f32 %v4153, %v4238
    %v4240 = vpop.f32.mrf.mxu0
    %v4241 = vadd.f32 %v4157, %v4240
    %4242 = vdwg.mxu0
    %4243 = vmatprep.subr.mxu0 0.0
    %4244 = vmatpush1.msra.mxu0 0.0
    %4245 = vmatprep.subr.mxu0 0.0
    %4246 = vmatpush1.msra.mxu0 0.0
    %4247 = vmatprep.subr.mxu0 0.0
    %4248 = vmatpush1.msra.mxu0 0.0
    %4249 = vmatprep.subr.mxu0 0.0
    %4250 = vmatpush1.msra.mxu0 0.0
    %4251 = vmatprep.subr.mxu0 0.0
    %4252 = vmatpush1.msra.mxu0 0.0
    %4253 = vmatprep.subr.mxu0 0.0
    %4254 = vmatpush1.msra.mxu0 0.0
    %4255 = vmatprep.subr.mxu0 0.0
    %4256 = vmatpush1.msra.mxu0 0.0
    %4257 = vmatprep.subr.mxu0 0.0
    %4258 = vmatpush1.msra.mxu0 0.0
    %4259 = vmatprep.subr.mxu0 %v4131
    %4260 = vmatpush1.msra.mxu0 %v4130
    %4261 = vmatprep.subr.mxu0 %v4129
    %4262 = vmatpush1.msra.mxu0 %v4128
    %4263 = vmatprep.subr.mxu0 %v4127
    %4264 = vmatpush1.msra.mxu0 %v4126
    %4265 = vmatprep.subr.mxu0 %v4125
    %4266 = vmatpush1.msra.mxu0 %v4124
    %4267 = vmatprep.subr.mxu0 %v4123
    %4268 = vmatpush1.msra.mxu0 %v4122
    %4269 = vmatprep.subr.mxu0 %v4121
    %4270 = vmatpush1.msra.mxu0 %v4120
    %4271 = vmatprep.subr.mxu0 %v4119
    %4272 = vmatpush1.msra.mxu0 %v4118
    %4273 = vmatprep.subr.mxu0 %v4117
    %4274 = vmatpush1.msra.mxu0 %v4116
    %4275 = vmatprep.subr.mxu0 0.0
    %4276 = vmatpush2.msra.mxu0 0.0
    %4277 = vmatprep.subr.mxu0 0.0
    %4278 = vmatpush2.msra.mxu0 0.0
    %4279 = vmatprep.subr.mxu0 0.0
    %4280 = vmatpush2.msra.mxu0 0.0
    %4281 = vmatprep.subr.mxu0 0.0
    %4282 = vmatpush2.msra.mxu0 0.0
    %4283 = vmatprep.subr.mxu0 0.0
    %4284 = vmatpush2.msra.mxu0 0.0
    %4285 = vmatprep.subr.mxu0 0.0
    %4286 = vmatpush2.msra.mxu0 0.0
    %4287 = vmatprep.subr.mxu0 0.0
    %4288 = vmatpush2.msra.mxu0 0.0
    %4289 = vmatprep.subr.mxu0 0.0
    %4290 = vmatpush2.msra.mxu0 0.0
    %4291 = vmatprep.subr.mxu0 0.0
    %4292 = vmatpush2.msra.mxu0 0.0
    %4293 = vmatprep.subr.mxu0 0.0
    %4294 = vmatpush2.msra.mxu0 0.0
    %4295 = vmatprep.subr.mxu0 0.0
    %4296 = vmatpush2.msra.mxu0 0.0
    %4297 = vmatprep.subr.mxu0 0.0
    %4298 = vmatpush2.msra.mxu0 0.0
    %4299 = vmatprep.subr.mxu0 0.0
    %4300 = vmatpush2.msra.mxu0 0.0
    %4301 = vmatprep.subr.mxu0 0.0
    %4302 = vmatpush2.msra.mxu0 0.0
    %4303 = vmatprep.subr.mxu0 0.0
    %4304 = vmatpush2.msra.mxu0 0.0
    %4305 = vmatprep.subr.mxu0 0.0
    %4306 = vmatpush2.msra.mxu0 0.0
    %4307 = vmatprep.mubr.f32.mxu0 0.0
    %4308 = vmatmul.mubr.f32.gmra.mxu0 %v4161
    %v4309 = vpop.f32.mrf.mxu0
    %v4310 = vadd.f32 0.0, %v4309
    %v4311 = vpop.f32.mrf.mxu0
    %v4312 = vadd.f32 0.0, %v4311
    %4313 = vmatprep.mubr.f32.mxu0 0.0
    %4314 = vmatmul.mubr.f32.gmra.mxu0 %v4164
    %v4315 = vpop.f32.mrf.mxu0
    %v4316 = vadd.f32 0.0, %v4315
    %v4317 = vpop.f32.mrf.mxu0
    %v4318 = vadd.f32 0.0, %v4317
    %4319 = vdwg.mxu0
    %v4322 = vrot.slane %v4316, 6
    %v4323 = vrot.slane %v4318, 6
    %v4326 = vadd.f32 %v4233, %v4322
    %v4327 = vadd.f32 %v4235, %v4323
    %4328 = vmatprep.subr.mxu0 0.0
    %4329 = vmatpush1.msra.mxu0 0.0
    %4330 = vmatprep.subr.mxu0 0.0
    %4331 = vmatpush1.msra.mxu0 0.0
    %4332 = vmatprep.subr.mxu0 0.0
    %4333 = vmatpush1.msra.mxu0 0.0
    %4334 = vmatprep.subr.mxu0 0.0
    %4335 = vmatpush1.msra.mxu0 0.0
    %4336 = vmatprep.subr.mxu0 0.0
    %4337 = vmatpush1.msra.mxu0 0.0
    %4338 = vmatprep.subr.mxu0 0.0
    %4339 = vmatpush1.msra.mxu0 0.0
    %4340 = vmatprep.subr.mxu0 0.0
    %4341 = vmatpush1.msra.mxu0 0.0
    %4342 = vmatprep.subr.mxu0 0.0
    %4343 = vmatpush1.msra.mxu0 0.0
    %4344 = vmatprep.subr.mxu0 %v4147
    %4345 = vmatpush1.msra.mxu0 %v4146
    %4346 = vmatprep.subr.mxu0 %v4145
    %4347 = vmatpush1.msra.mxu0 %v4144
    %4348 = vmatprep.subr.mxu0 %v4143
    %4349 = vmatpush1.msra.mxu0 %v4142
    %4350 = vmatprep.subr.mxu0 %v4141
    %4351 = vmatpush1.msra.mxu0 %v4140
    %4352 = vmatprep.subr.mxu0 %v4139
    %4353 = vmatpush1.msra.mxu0 %v4138
    %4354 = vmatprep.subr.mxu0 %v4137
    %4355 = vmatpush1.msra.mxu0 %v4136
    %4356 = vmatprep.subr.mxu0 %v4135
    %4357 = vmatpush1.msra.mxu0 %v4134
    %4358 = vmatprep.subr.mxu0 %v4133
    %4359 = vmatpush1.msra.mxu0 %v4132
    %4360 = vmatprep.subr.mxu0 0.0
    %4361 = vmatpush2.msra.mxu0 0.0
    %4362 = vmatprep.subr.mxu0 0.0
    %4363 = vmatpush2.msra.mxu0 0.0
    %4364 = vmatprep.subr.mxu0 0.0
    %4365 = vmatpush2.msra.mxu0 0.0
    %4366 = vmatprep.subr.mxu0 0.0
    %4367 = vmatpush2.msra.mxu0 0.0
    %4368 = vmatprep.subr.mxu0 0.0
    %4369 = vmatpush2.msra.mxu0 0.0
    %4370 = vmatprep.subr.mxu0 0.0
    %4371 = vmatpush2.msra.mxu0 0.0
    %4372 = vmatprep.subr.mxu0 0.0
    %4373 = vmatpush2.msra.mxu0 0.0
    %4374 = vmatprep.subr.mxu0 0.0
    %4375 = vmatpush2.msra.mxu0 0.0
    %4376 = vmatprep.subr.mxu0 0.0
    %4377 = vmatpush2.msra.mxu0 0.0
    %4378 = vmatprep.subr.mxu0 0.0
    %4379 = vmatpush2.msra.mxu0 0.0
    %4380 = vmatprep.subr.mxu0 0.0
    %4381 = vmatpush2.msra.mxu0 0.0
    %4382 = vmatprep.subr.mxu0 0.0
    %4383 = vmatpush2.msra.mxu0 0.0
    %4384 = vmatprep.subr.mxu0 0.0
    %4385 = vmatpush2.msra.mxu0 0.0
    %4386 = vmatprep.subr.mxu0 0.0
    %4387 = vmatpush2.msra.mxu0 0.0
    %4388 = vmatprep.subr.mxu0 0.0
    %4389 = vmatpush2.msra.mxu0 0.0
    %4390 = vmatprep.subr.mxu0 0.0
    %4391 = vmatpush2.msra.mxu0 0.0
    %4392 = vmatprep.mubr.f32.mxu0 0.0
    %4393 = vmatmul.mubr.f32.gmra.mxu0 %v615
    %v4394 = vpop.f32.mrf.mxu0
    %v4395 = vadd.f32 0.0, %v4394
    %v4396 = vpop.f32.mrf.mxu0
    %v4397 = vadd.f32 0.0, %v4396
    %4398 = vdwg.mxu0
    %v4399 = vadd.f32 %v4326, %v4395
    %v4400 = vadd.f32 %v4327, %v4397
    %v4401 = vxor.u32 %v4399, 2147483648
    %v4402 = vxor.u32 %v4400, 2147483648
    %v4403 = vmul.f32 %v4401, 1.442695
    %v4404 = vpow.pop %v4403
    %v4405 = vmul.f32 %v4402, 1.442695
    %v4406 = vpow.pop %v4405
    %v4407 = vadd.f32 %v4404, 1.0
    %v4408 = vadd.f32 %v4406, 1.0
    %v4409 = vrcp.pop %v4407
    %v4410 = vmul.f32 1.0, %v4409
    %v4411 = vrcp.pop %v4408
    %v4412 = vmul.f32 1.0, %v4411
    %v4413 = vtanh.pop %v4400
    %v4414 = vmul.f32 %v4410, 0.0
    %4416 = vrot.lane.b32.xlu0 %v4413, 64
    %v4417 = vpop.permute.xlu0 %4416
    %v4419 = vmul.f32 %v4410, %v4417
    %4421 = vrot.lane.b32.xlu0 %v4419, 64
    %v4422 = vpop.permute.xlu0 %4421
    %v4424 = vadd.f32 %v4414, %v4422
    %v4425 = vtanh.pop %v4424
    %4427 = vrot.lane.b32.xlu0 %v4425, 64
    %v4428 = vpop.permute.xlu0 %4427
    %v4430 = vmul.f32 %v4412, %v4428
    %4431 = vst.msk [vmem:[#allocation2] sm:$0x3] %vm720, %v4430
    %4433 = vrot.lane.b32.xlu0 %v4430, 96
    %v4434 = vpop.permute.xlu0 %4433
    %4436 = vst.msk [vmem:[#allocation3 + $0xe] sm:$0x3] %vm720, %v4434
    %v4437 = vrot.slane %v4316, 2
    %v4438 = vrot.slane %v4318, 2
    %v4441 = vadd.f32 %v4233, %v4437
    %v4442 = vadd.f32 %v4235, %v4438
    %v4443 = vsel %vm613, %v4430, 0
    %4445 = vmatprep.subr.mxu0 0.0
    %4446 = vmatpush1.msra.mxu0 0.0
    %4447 = vmatprep.subr.mxu0 0.0
    %4448 = vmatpush1.msra.mxu0 0.0
    %4449 = vmatprep.subr.mxu0 0.0
    %4450 = vmatpush1.msra.mxu0 0.0
    %4451 = vmatprep.subr.mxu0 0.0
    %4452 = vmatpush1.msra.mxu0 0.0
    %4453 = vmatprep.subr.mxu0 0.0
    %4454 = vmatpush1.msra.mxu0 0.0
    %4455 = vmatprep.subr.mxu0 0.0
    %4456 = vmatpush1.msra.mxu0 0.0
    %4457 = vmatprep.subr.mxu0 0.0
    %4458 = vmatpush1.msra.mxu0 0.0
    %4459 = vmatprep.subr.mxu0 0.0
    %4460 = vmatpush1.msra.mxu0 0.0
    %4461 = vmatprep.subr.mxu0 %v4147
    %4462 = vmatpush1.msra.mxu0 %v4146
    %4463 = vmatprep.subr.mxu0 %v4145
    %4464 = vmatpush1.msra.mxu0 %v4144
    %4465 = vmatprep.subr.mxu0 %v4143
    %4466 = vmatpush1.msra.mxu0 %v4142
    %4467 = vmatprep.subr.mxu0 %v4141
    %4468 = vmatpush1.msra.mxu0 %v4140
    %4469 = vmatprep.subr.mxu0 %v4139
    %4470 = vmatpush1.msra.mxu0 %v4138
    %4471 = vmatprep.subr.mxu0 %v4137
    %4472 = vmatpush1.msra.mxu0 %v4136
    %4473 = vmatprep.subr.mxu0 %v4135
    %4474 = vmatpush1.msra.mxu0 %v4134
    %4475 = vmatprep.subr.mxu0 %v4133
    %4476 = vmatpush1.msra.mxu0 %v4132
    %4477 = vmatprep.subr.mxu0 0.0
    %4478 = vmatpush2.msra.mxu0 0.0
    %4479 = vmatprep.subr.mxu0 0.0
    %4480 = vmatpush2.msra.mxu0 0.0
    %4481 = vmatprep.subr.mxu0 0.0
    %4482 = vmatpush2.msra.mxu0 0.0
    %4483 = vmatprep.subr.mxu0 0.0
    %4484 = vmatpush2.msra.mxu0 0.0
    %4485 = vmatprep.subr.mxu0 0.0
    %4486 = vmatpush2.msra.mxu0 0.0
    %4487 = vmatprep.subr.mxu0 0.0
    %4488 = vmatpush2.msra.mxu0 0.0
    %4489 = vmatprep.subr.mxu0 0.0
    %4490 = vmatpush2.msra.mxu0 0.0
    %4491 = vmatprep.subr.mxu0 0.0
    %4492 = vmatpush2.msra.mxu0 0.0
    %4493 = vmatprep.subr.mxu0 0.0
    %4494 = vmatpush2.msra.mxu0 0.0
    %4495 = vmatprep.subr.mxu0 0.0
    %4496 = vmatpush2.msra.mxu0 0.0
    %4497 = vmatprep.subr.mxu0 0.0
    %4498 = vmatpush2.msra.mxu0 0.0
    %4499 = vmatprep.subr.mxu0 0.0
    %4500 = vmatpush2.msra.mxu0 0.0
    %4501 = vmatprep.subr.mxu0 0.0
    %4502 = vmatpush2.msra.mxu0 0.0
    %4503 = vmatprep.subr.mxu0 0.0
    %4504 = vmatpush2.msra.mxu0 0.0
    %4505 = vmatprep.subr.mxu0 0.0
    %4506 = vmatpush2.msra.mxu0 0.0
    %4507 = vmatprep.subr.mxu0 0.0
    %4508 = vmatpush2.msra.mxu0 0.0
    %4509 = vmatprep.mubr.f32.mxu0 0.0
    %4510 = vmatmul.mubr.f32.gmra.mxu0 %v4443
    %v4511 = vpop.f32.mrf.mxu0
    %v4512 = vadd.f32 0.0, %v4511
    %v4513 = vpop.f32.mrf.mxu0
    %v4514 = vadd.f32 0.0, %v4513
    %4515 = vdwg.mxu0
    %v4518 = vrot.slane %v4512, 6
    %v4519 = vrot.slane %v4514, 6
    %v4522 = vadd.f32 %v4441, %v4518
    %v4523 = vadd.f32 %v4442, %v4519
    %v4524 = vxor.u32 %v4522, 2147483648
    %v4525 = vxor.u32 %v4523, 2147483648
    %v4526 = vmul.f32 %v4524, 1.442695
    %v4527 = vpow.pop %v4526
    %v4528 = vmul.f32 %v4525, 1.442695
    %v4529 = vpow.pop %v4528
    %v4530 = vadd.f32 %v4527, 1.0
    %v4531 = vadd.f32 %v4529, 1.0
    %v4532 = vrcp.pop %v4530
    %v4533 = vmul.f32 1.0, %v4532
    %v4534 = vrcp.pop %v4531
    %v4535 = vmul.f32 1.0, %v4534
    %v4536 = vtanh.pop %v4523
    %v4538 = vrot.slane %v4424, 6
    %v4540 = vmul.f32 %v4533, %v4538
    %4542 = vrot.lane.b32.xlu0 %v4536, 64
    %v4543 = vpop.permute.xlu0 %4542
    %v4545 = vmul.f32 %v4533, %v4543
    %4547 = vrot.lane.b32.xlu0 %v4545, 64
    %v4548 = vpop.permute.xlu0 %4547
    %v4550 = vadd.f32 %v4540, %v4548
    %v4551 = vtanh.pop %v4550
    %4553 = vrot.lane.b32.xlu0 %v4551, 64
    %v4554 = vpop.permute.xlu0 %4553
    %v4556 = vmul.f32 %v4535, %v4554
    %4557 = vst.msk [vmem:[#allocation2] sm:$0xc] %vm847, %v4556
    %4559 = vrot.lane.b32.xlu0 %v4556, 96
    %v4560 = vpop.permute.xlu0 %4559
    %4562 = vst.msk [vmem:[#allocation3 + $0xa] sm:$0xc] %vm847, %v4560
    %v4563 = vrot.slane %v4556, 2
    %v4564 = vsel %vm613, %v4563, 0
    %4566 = vmatprep.subr.mxu0 0.0
    %4567 = vmatpush1.msra.mxu0 0.0
    %4568 = vmatprep.subr.mxu0 0.0
    %4569 = vmatpush1.msra.mxu0 0.0
    %4570 = vmatprep.subr.mxu0 0.0
    %4571 = vmatpush1.msra.mxu0 0.0
    %4572 = vmatprep.subr.mxu0 0.0
    %4573 = vmatpush1.msra.mxu0 0.0
    %4574 = vmatprep.subr.mxu0 0.0
    %4575 = vmatpush1.msra.mxu0 0.0
    %4576 = vmatprep.subr.mxu0 0.0
    %4577 = vmatpush1.msra.mxu0 0.0
    %4578 = vmatprep.subr.mxu0 0.0
    %4579 = vmatpush1.msra.mxu0 0.0
    %4580 = vmatprep.subr.mxu0 0.0
    %4581 = vmatpush1.msra.mxu0 0.0
    %4582 = vmatprep.subr.mxu0 %v4147
    %4583 = vmatpush1.msra.mxu0 %v4146
    %4584 = vmatprep.subr.mxu0 %v4145
    %4585 = vmatpush1.msra.mxu0 %v4144
    %4586 = vmatprep.subr.mxu0 %v4143
    %4587 = vmatpush1.msra.mxu0 %v4142
    %4588 = vmatprep.subr.mxu0 %v4141
    %4589 = vmatpush1.msra.mxu0 %v4140
    %4590 = vmatprep.subr.mxu0 %v4139
    %4591 = vmatpush1.msra.mxu0 %v4138
    %4592 = vmatprep.subr.mxu0 %v4137
    %4593 = vmatpush1.msra.mxu0 %v4136
    %4594 = vmatprep.subr.mxu0 %v4135
    %4595 = vmatpush1.msra.mxu0 %v4134
    %4596 = vmatprep.subr.mxu0 %v4133
    %4597 = vmatpush1.msra.mxu0 %v4132
    %4598 = vmatprep.subr.mxu0 0.0
    %4599 = vmatpush2.msra.mxu0 0.0
    %4600 = vmatprep.subr.mxu0 0.0
    %4601 = vmatpush2.msra.mxu0 0.0
    %4602 = vmatprep.subr.mxu0 0.0
    %4603 = vmatpush2.msra.mxu0 0.0
    %4604 = vmatprep.subr.mxu0 0.0
    %4605 = vmatpush2.msra.mxu0 0.0
    %4606 = vmatprep.subr.mxu0 0.0
    %4607 = vmatpush2.msra.mxu0 0.0
    %4608 = vmatprep.subr.mxu0 0.0
    %4609 = vmatpush2.msra.mxu0 0.0
    %4610 = vmatprep.subr.mxu0 0.0
    %4611 = vmatpush2.msra.mxu0 0.0
    %4612 = vmatprep.subr.mxu0 0.0
    %4613 = vmatpush2.msra.mxu0 0.0
    %4614 = vmatprep.subr.mxu0 0.0
    %4615 = vmatpush2.msra.mxu0 0.0
    %4616 = vmatprep.subr.mxu0 0.0
    %4617 = vmatpush2.msra.mxu0 0.0
    %4618 = vmatprep.subr.mxu0 0.0
    %4619 = vmatpush2.msra.mxu0 0.0
    %4620 = vmatprep.subr.mxu0 0.0
    %4621 = vmatpush2.msra.mxu0 0.0
    %4622 = vmatprep.subr.mxu0 0.0
    %4623 = vmatpush2.msra.mxu0 0.0
    %4624 = vmatprep.subr.mxu0 0.0
    %4625 = vmatpush2.msra.mxu0 0.0
    %4626 = vmatprep.subr.mxu0 0.0
    %4627 = vmatpush2.msra.mxu0 0.0
    %4628 = vmatprep.subr.mxu0 0.0
    %4629 = vmatpush2.msra.mxu0 0.0
    %4630 = vmatprep.mubr.f32.mxu0 0.0
    %4631 = vmatmul.mubr.f32.gmra.mxu0 %v4564
    %v4632 = vpop.f32.mrf.mxu0
    %v4633 = vadd.f32 0.0, %v4632
    %v4634 = vpop.f32.mrf.mxu0
    %v4635 = vadd.f32 0.0, %v4634
    %4636 = vdwg.mxu0
    %v4639 = vrot.slane %v4633, 4
    %v4640 = vrot.slane %v4635, 4
    %v4643 = vadd.f32 %v4326, %v4639
    %v4644 = vadd.f32 %v4327, %v4640
    %v4645 = vxor.u32 %v4643, 2147483648
    %v4646 = vxor.u32 %v4644, 2147483648
    %v4647 = vmul.f32 %v4645, 1.442695
    %v4648 = vpow.pop %v4647
    %v4649 = vmul.f32 %v4646, 1.442695
    %v4650 = vpow.pop %v4649
    %v4651 = vadd.f32 %v4648, 1.0
    %v4652 = vadd.f32 %v4650, 1.0
    %v4653 = vrcp.pop %v4651
    %v4654 = vmul.f32 1.0, %v4653
    %v4655 = vrcp.pop %v4652
    %v4656 = vmul.f32 1.0, %v4655
    %v4657 = vtanh.pop %v4644
    %v4659 = vrot.slane %v4550, 6
    %v4661 = vmul.f32 %v4654, %v4659
    %4663 = vrot.lane.b32.xlu0 %v4657, 64
    %v4664 = vpop.permute.xlu0 %4663
    %v4666 = vmul.f32 %v4654, %v4664
    %4668 = vrot.lane.b32.xlu0 %v4666, 64
    %v4669 = vpop.permute.xlu0 %4668
    %v4671 = vadd.f32 %v4661, %v4669
    %v4672 = vtanh.pop %v4671
    %4674 = vrot.lane.b32.xlu0 %v4672, 64
    %v4675 = vpop.permute.xlu0 %4674
    %v4677 = vmul.f32 %v4656, %v4675
    %4678 = vst.msk [vmem:[#allocation2] sm:$0x30] %vm969, %v4677
    %4680 = vrot.lane.b32.xlu0 %v4677, 96
    %v4681 = vpop.permute.xlu0 %4680
    %4683 = vst.msk [vmem:[#allocation3 + $0x6] sm:$0x30] %vm969, %v4681
    %v4684 = vrot.slane %v4677, 4
    %v4685 = vsel %vm613, %v4684, 0
    %4687 = vmatprep.subr.mxu0 0.0
    %4688 = vmatpush1.msra.mxu0 0.0
    %4689 = vmatprep.subr.mxu0 0.0
    %4690 = vmatpush1.msra.mxu0 0.0
    %4691 = vmatprep.subr.mxu0 0.0
    %4692 = vmatpush1.msra.mxu0 0.0
    %4693 = vmatprep.subr.mxu0 0.0
    %4694 = vmatpush1.msra.mxu0 0.0
    %4695 = vmatprep.subr.mxu0 0.0
    %4696 = vmatpush1.msra.mxu0 0.0
    %4697 = vmatprep.subr.mxu0 0.0
    %4698 = vmatpush1.msra.mxu0 0.0
    %4699 = vmatprep.subr.mxu0 0.0
    %4700 = vmatpush1.msra.mxu0 0.0
    %4701 = vmatprep.subr.mxu0 0.0
    %4702 = vmatpush1.msra.mxu0 0.0
    %4703 = vmatprep.subr.mxu0 %v4147
    %4704 = vmatpush1.msra.mxu0 %v4146
    %4705 = vmatprep.subr.mxu0 %v4145
    %4706 = vmatpush1.msra.mxu0 %v4144
    %4707 = vmatprep.subr.mxu0 %v4143
    %4708 = vmatpush1.msra.mxu0 %v4142
    %4709 = vmatprep.subr.mxu0 %v4141
    %4710 = vmatpush1.msra.mxu0 %v4140
    %4711 = vmatprep.subr.mxu0 %v4139
    %4712 = vmatpush1.msra.mxu0 %v4138
    %4713 = vmatprep.subr.mxu0 %v4137
    %4714 = vmatpush1.msra.mxu0 %v4136
    %4715 = vmatprep.subr.mxu0 %v4135
    %4716 = vmatpush1.msra.mxu0 %v4134
    %4717 = vmatprep.subr.mxu0 %v4133
    %4718 = vmatpush1.msra.mxu0 %v4132
    %4719 = vmatprep.subr.mxu0 0.0
    %4720 = vmatpush2.msra.mxu0 0.0
    %4721 = vmatprep.subr.mxu0 0.0
    %4722 = vmatpush2.msra.mxu0 0.0
    %4723 = vmatprep.subr.mxu0 0.0
    %4724 = vmatpush2.msra.mxu0 0.0
    %4725 = vmatprep.subr.mxu0 0.0
    %4726 = vmatpush2.msra.mxu0 0.0
    %4727 = vmatprep.subr.mxu0 0.0
    %4728 = vmatpush2.msra.mxu0 0.0
    %4729 = vmatprep.subr.mxu0 0.0
    %4730 = vmatpush2.msra.mxu0 0.0
    %4731 = vmatprep.subr.mxu0 0.0
    %4732 = vmatpush2.msra.mxu0 0.0
    %4733 = vmatprep.subr.mxu0 0.0
    %4734 = vmatpush2.msra.mxu0 0.0
    %4735 = vmatprep.subr.mxu0 0.0
    %4736 = vmatpush2.msra.mxu0 0.0
    %4737 = vmatprep.subr.mxu0 0.0
    %4738 = vmatpush2.msra.mxu0 0.0
    %4739 = vmatprep.subr.mxu0 0.0
    %4740 = vmatpush2.msra.mxu0 0.0
    %4741 = vmatprep.subr.mxu0 0.0
    %4742 = vmatpush2.msra.mxu0 0.0
    %4743 = vmatprep.subr.mxu0 0.0
    %4744 = vmatpush2.msra.mxu0 0.0
    %4745 = vmatprep.subr.mxu0 0.0
    %4746 = vmatpush2.msra.mxu0 0.0
    %4747 = vmatprep.subr.mxu0 0.0
    %4748 = vmatpush2.msra.mxu0 0.0
    %4749 = vmatprep.subr.mxu0 0.0
    %4750 = vmatpush2.msra.mxu0 0.0
    %4751 = vmatprep.mubr.f32.mxu0 0.0
    %4752 = vmatmul.mubr.f32.gmra.mxu0 %v4685
    %v4753 = vpop.f32.mrf.mxu0
    %v4754 = vadd.f32 0.0, %v4753
    %v4755 = vpop.f32.mrf.mxu0
    %v4756 = vadd.f32 0.0, %v4755
    %4757 = vdwg.mxu0
    %v4760 = vrot.slane %v4754, 2
    %v4761 = vrot.slane %v4756, 2
    %v4764 = vadd.f32 %v4441, %v4760
    %v4765 = vadd.f32 %v4442, %v4761
    %v4766 = vxor.u32 %v4764, 2147483648
    %v4767 = vxor.u32 %v4765, 2147483648
    %v4768 = vmul.f32 %v4766, 1.442695
    %v4769 = vpow.pop %v4768
    %v4770 = vmul.f32 %v4767, 1.442695
    %v4771 = vpow.pop %v4770
    %v4772 = vadd.f32 %v4769, 1.0
    %v4773 = vadd.f32 %v4771, 1.0
    %v4774 = vrcp.pop %v4772
    %v4775 = vmul.f32 1.0, %v4774
    %v4776 = vrcp.pop %v4773
    %v4777 = vmul.f32 1.0, %v4776
    %v4778 = vtanh.pop %v4765
    %v4780 = vrot.slane %v4671, 6
    %v4782 = vmul.f32 %v4775, %v4780
    %4784 = vrot.lane.b32.xlu0 %v4778, 64
    %v4785 = vpop.permute.xlu0 %4784
    %v4787 = vmul.f32 %v4775, %v4785
    %4789 = vrot.lane.b32.xlu0 %v4787, 64
    %v4790 = vpop.permute.xlu0 %4789
    %v4792 = vadd.f32 %v4782, %v4790
    %v4793 = vtanh.pop %v4792
    %4795 = vrot.lane.b32.xlu0 %v4793, 64
    %v4796 = vpop.permute.xlu0 %4795
    %v4798 = vmul.f32 %v4777, %v4796
    %4799 = vst.msk [vmem:[#allocation2] sm:$0xc0] %vm1091, %v4798
    %4801 = vrot.lane.b32.xlu0 %v4798, 96
    %v4802 = vpop.permute.xlu0 %4801
    %4804 = vst.msk [vmem:[#allocation3 + $0x2] sm:$0xc0] %vm1091, %v4802
    %v4807 = vrot.slane %v4310, 6
    %v4808 = vrot.slane %v4312, 6
    %v4811 = vadd.f32 %v4239, %v4807
    %v4812 = vadd.f32 %v4241, %v4808
    %v4813 = vrot.slane %v4798, 6
    %v4814 = vsel %vm613, %v4813, 0
    %4816 = vmatprep.subr.mxu0 0.0
    %4817 = vmatpush1.msra.mxu0 0.0
    %4818 = vmatprep.subr.mxu0 0.0
    %4819 = vmatpush1.msra.mxu0 0.0
    %4820 = vmatprep.subr.mxu0 0.0
    %4821 = vmatpush1.msra.mxu0 0.0
    %4822 = vmatprep.subr.mxu0 0.0
    %4823 = vmatpush1.msra.mxu0 0.0
    %4824 = vmatprep.subr.mxu0 0.0
    %4825 = vmatpush1.msra.mxu0 0.0
    %4826 = vmatprep.subr.mxu0 0.0
    %4827 = vmatpush1.msra.mxu0 0.0
    %4828 = vmatprep.subr.mxu0 0.0
    %4829 = vmatpush1.msra.mxu0 0.0
    %4830 = vmatprep.subr.mxu0 0.0
    %4831 = vmatpush1.msra.mxu0 0.0
    %4832 = vmatprep.subr.mxu0 %v4147
    %4833 = vmatpush1.msra.mxu0 %v4146
    %4834 = vmatprep.subr.mxu0 %v4145
    %4835 = vmatpush1.msra.mxu0 %v4144
    %4836 = vmatprep.subr.mxu0 %v4143
    %4837 = vmatpush1.msra.mxu0 %v4142
    %4838 = vmatprep.subr.mxu0 %v4141
    %4839 = vmatpush1.msra.mxu0 %v4140
    %4840 = vmatprep.subr.mxu0 %v4139
    %4841 = vmatpush1.msra.mxu0 %v4138
    %4842 = vmatprep.subr.mxu0 %v4137
    %4843 = vmatpush1.msra.mxu0 %v4136
    %4844 = vmatprep.subr.mxu0 %v4135
    %4845 = vmatpush1.msra.mxu0 %v4134
    %4846 = vmatprep.subr.mxu0 %v4133
    %4847 = vmatpush1.msra.mxu0 %v4132
    %4848 = vmatprep.subr.mxu0 0.0
    %4849 = vmatpush2.msra.mxu0 0.0
    %4850 = vmatprep.subr.mxu0 0.0
    %4851 = vmatpush2.msra.mxu0 0.0
    %4852 = vmatprep.subr.mxu0 0.0
    %4853 = vmatpush2.msra.mxu0 0.0
    %4854 = vmatprep.subr.mxu0 0.0
    %4855 = vmatpush2.msra.mxu0 0.0
    %4856 = vmatprep.subr.mxu0 0.0
    %4857 = vmatpush2.msra.mxu0 0.0
    %4858 = vmatprep.subr.mxu0 0.0
    %4859 = vmatpush2.msra.mxu0 0.0
    %4860 = vmatprep.subr.mxu0 0.0
    %4861 = vmatpush2.msra.mxu0 0.0
    %4862 = vmatprep.subr.mxu0 0.0
    %4863 = vmatpush2.msra.mxu0 0.0
    %4864 = vmatprep.subr.mxu0 0.0
    %4865 = vmatpush2.msra.mxu0 0.0
    %4866 = vmatprep.subr.mxu0 0.0
    %4867 = vmatpush2.msra.mxu0 0.0
    %4868 = vmatprep.subr.mxu0 0.0
    %4869 = vmatpush2.msra.mxu0 0.0
    %4870 = vmatprep.subr.mxu0 0.0
    %4871 = vmatpush2.msra.mxu0 0.0
    %4872 = vmatprep.subr.mxu0 0.0
    %4873 = vmatpush2.msra.mxu0 0.0
    %4874 = vmatprep.subr.mxu0 0.0
    %4875 = vmatpush2.msra.mxu0 0.0
    %4876 = vmatprep.subr.mxu0 0.0
    %4877 = vmatpush2.msra.mxu0 0.0
    %4878 = vmatprep.subr.mxu0 0.0
    %4879 = vmatpush2.msra.mxu0 0.0
    %4880 = vmatprep.mubr.f32.mxu0 0.0
    %4881 = vmatmul.mubr.f32.gmra.mxu0 %v4814
    %v4882 = vpop.f32.mrf.mxu0
    %v4883 = vadd.f32 0.0, %v4882
    %v4884 = vpop.f32.mrf.mxu0
    %v4885 = vadd.f32 0.0, %v4884
    %4886 = vdwg.mxu0
    %v4887 = vadd.f32 %v4811, %v4883
    %v4888 = vadd.f32 %v4812, %v4885
    %v4889 = vxor.u32 %v4887, 2147483648
    %v4890 = vxor.u32 %v4888, 2147483648
    %v4891 = vmul.f32 %v4889, 1.442695
    %v4892 = vpow.pop %v4891
    %v4893 = vmul.f32 %v4890, 1.442695
    %v4894 = vpow.pop %v4893
    %v4895 = vadd.f32 %v4892, 1.0
    %v4896 = vadd.f32 %v4894, 1.0
    %v4897 = vrcp.pop %v4895
    %v4898 = vmul.f32 1.0, %v4897
    %v4899 = vrcp.pop %v4896
    %v4900 = vmul.f32 1.0, %v4899
    %v4901 = vtanh.pop %v4888
    %v4903 = vrot.slane %v4792, 6
    %v4905 = vmul.f32 %v4898, %v4903
    %4907 = vrot.lane.b32.xlu0 %v4901, 64
    %v4908 = vpop.permute.xlu0 %4907
    %v4910 = vmul.f32 %v4898, %v4908
    %4912 = vrot.lane.b32.xlu0 %v4910, 64
    %v4913 = vpop.permute.xlu0 %4912
    %v4915 = vadd.f32 %v4905, %v4913
    %v4916 = vtanh.pop %v4915
    %4918 = vrot.lane.b32.xlu0 %v4916, 64
    %v4919 = vpop.permute.xlu0 %4918
    %v4921 = vmul.f32 %v4900, %v4919
    %4922 = vst.msk [vmem:[#allocation2 + $0x8] sm:$0x3] %vm720, %v4921
    %4924 = vrot.lane.b32.xlu0 %v4921, 96
    %v4925 = vpop.permute.xlu0 %4924
    %4927 = vst.msk [vmem:[#allocation3 + $0x6] sm:$0x3] %vm720, %v4925
    %v4928 = vrot.slane %v4310, 2
    %v4929 = vrot.slane %v4312, 2
    %v4932 = vadd.f32 %v4239, %v4928
    %v4933 = vadd.f32 %v4241, %v4929
    %v4934 = vsel %vm613, %v4921, 0
    %4936 = vmatprep.subr.mxu0 0.0
    %4937 = vmatpush1.msra.mxu0 0.0
    %4938 = vmatprep.subr.mxu0 0.0
    %4939 = vmatpush1.msra.mxu0 0.0
    %4940 = vmatprep.subr.mxu0 0.0
    %4941 = vmatpush1.msra.mxu0 0.0
    %4942 = vmatprep.subr.mxu0 0.0
    %4943 = vmatpush1.msra.mxu0 0.0
    %4944 = vmatprep.subr.mxu0 0.0
    %4945 = vmatpush1.msra.mxu0 0.0
    %4946 = vmatprep.subr.mxu0 0.0
    %4947 = vmatpush1.msra.mxu0 0.0
    %4948 = vmatprep.subr.mxu0 0.0
    %4949 = vmatpush1.msra.mxu0 0.0
    %4950 = vmatprep.subr.mxu0 0.0
    %4951 = vmatpush1.msra.mxu0 0.0
    %4952 = vmatprep.subr.mxu0 %v4147
    %4953 = vmatpush1.msra.mxu0 %v4146
    %4954 = vmatprep.subr.mxu0 %v4145
    %4955 = vmatpush1.msra.mxu0 %v4144
    %4956 = vmatprep.subr.mxu0 %v4143
    %4957 = vmatpush1.msra.mxu0 %v4142
    %4958 = vmatprep.subr.mxu0 %v4141
    %4959 = vmatpush1.msra.mxu0 %v4140
    %4960 = vmatprep.subr.mxu0 %v4139
    %4961 = vmatpush1.msra.mxu0 %v4138
    %4962 = vmatprep.subr.mxu0 %v4137
    %4963 = vmatpush1.msra.mxu0 %v4136
    %4964 = vmatprep.subr.mxu0 %v4135
    %4965 = vmatpush1.msra.mxu0 %v4134
    %4966 = vmatprep.subr.mxu0 %v4133
    %4967 = vmatpush1.msra.mxu0 %v4132
    %4968 = vmatprep.subr.mxu0 0.0
    %4969 = vmatpush2.msra.mxu0 0.0
    %4970 = vmatprep.subr.mxu0 0.0
    %4971 = vmatpush2.msra.mxu0 0.0
    %4972 = vmatprep.subr.mxu0 0.0
    %4973 = vmatpush2.msra.mxu0 0.0
    %4974 = vmatprep.subr.mxu0 0.0
    %4975 = vmatpush2.msra.mxu0 0.0
    %4976 = vmatprep.subr.mxu0 0.0
    %4977 = vmatpush2.msra.mxu0 0.0
    %4978 = vmatprep.subr.mxu0 0.0
    %4979 = vmatpush2.msra.mxu0 0.0
    %4980 = vmatprep.subr.mxu0 0.0
    %4981 = vmatpush2.msra.mxu0 0.0
    %4982 = vmatprep.subr.mxu0 0.0
    %4983 = vmatpush2.msra.mxu0 0.0
    %4984 = vmatprep.subr.mxu0 0.0
    %4985 = vmatpush2.msra.mxu0 0.0
    %4986 = vmatprep.subr.mxu0 0.0
    %4987 = vmatpush2.msra.mxu0 0.0
    %4988 = vmatprep.subr.mxu0 0.0
    %4989 = vmatpush2.msra.mxu0 0.0
    %4990 = vmatprep.subr.mxu0 0.0
    %4991 = vmatpush2.msra.mxu0 0.0
    %4992 = vmatprep.subr.mxu0 0.0
    %4993 = vmatpush2.msra.mxu0 0.0
    %4994 = vmatprep.subr.mxu0 0.0
    %4995 = vmatpush2.msra.mxu0 0.0
    %4996 = vmatprep.subr.mxu0 0.0
    %4997 = vmatpush2.msra.mxu0 0.0
    %4998 = vmatprep.subr.mxu0 0.0
    %4999 = vmatpush2.msra.mxu0 0.0
    %5000 = vmatprep.mubr.f32.mxu0 0.0
    %5001 = vmatmul.mubr.f32.gmra.mxu0 %v4934
    %v5002 = vpop.f32.mrf.mxu0
    %v5003 = vadd.f32 0.0, %v5002
    %v5004 = vpop.f32.mrf.mxu0
    %v5005 = vadd.f32 0.0, %v5004
    %5006 = vdwg.mxu0
    %v5009 = vrot.slane %v5003, 6
    %v5010 = vrot.slane %v5005, 6
    %v5013 = vadd.f32 %v4932, %v5009
    %v5014 = vadd.f32 %v4933, %v5010
    %v5015 = vxor.u32 %v5013, 2147483648
    %v5016 = vxor.u32 %v5014, 2147483648
    %v5017 = vmul.f32 %v5015, 1.442695
    %v5018 = vpow.pop %v5017
    %v5019 = vmul.f32 %v5016, 1.442695
    %v5020 = vpow.pop %v5019
    %v5021 = vadd.f32 %v5018, 1.0
    %v5022 = vadd.f32 %v5020, 1.0
    %v5023 = vrcp.pop %v5021
    %v5024 = vmul.f32 1.0, %v5023
    %v5025 = vrcp.pop %v5022
    %v5026 = vmul.f32 1.0, %v5025
    %v5027 = vtanh.pop %v5014
    %v5029 = vrot.slane %v4915, 6
    %v5031 = vmul.f32 %v5024, %v5029
    %5033 = vrot.lane.b32.xlu0 %v5027, 64
    %v5034 = vpop.permute.xlu0 %5033
    %v5036 = vmul.f32 %v5024, %v5034
    %5038 = vrot.lane.b32.xlu0 %v5036, 64
    %v5039 = vpop.permute.xlu0 %5038
    %v5041 = vadd.f32 %v5031, %v5039
    %v5042 = vtanh.pop %v5041
    %5044 = vrot.lane.b32.xlu0 %v5042, 64
    %v5045 = vpop.permute.xlu0 %5044
    %v5047 = vmul.f32 %v5026, %v5045
    %5048 = vst.msk [vmem:[#allocation2 + $0x8] sm:$0xc] %vm847, %v5047
    %5050 = vrot.lane.b32.xlu0 %v5047, 96
    %v5051 = vpop.permute.xlu0 %5050
    %5053 = vst.msk [vmem:[#allocation3 + $0x2] sm:$0xc] %vm847, %v5051
    %v5054 = vrot.slane %v5047, 2
    %v5055 = vsel %vm613, %v5054, 0
    %5057 = vmatprep.subr.mxu0 0.0
    %5058 = vmatpush1.msra.mxu0 0.0
    %5059 = vmatprep.subr.mxu0 0.0
    %5060 = vmatpush1.msra.mxu0 0.0
    %5061 = vmatprep.subr.mxu0 0.0
    %5062 = vmatpush1.msra.mxu0 0.0
    %5063 = vmatprep.subr.mxu0 0.0
    %5064 = vmatpush1.msra.mxu0 0.0
    %5065 = vmatprep.subr.mxu0 0.0
    %5066 = vmatpush1.msra.mxu0 0.0
    %5067 = vmatprep.subr.mxu0 0.0
    %5068 = vmatpush1.msra.mxu0 0.0
    %5069 = vmatprep.subr.mxu0 0.0
    %5070 = vmatpush1.msra.mxu0 0.0
    %5071 = vmatprep.subr.mxu0 0.0
    %5072 = vmatpush1.msra.mxu0 0.0
    %5073 = vmatprep.subr.mxu0 %v4147
    %5074 = vmatpush1.msra.mxu0 %v4146
    %5075 = vmatprep.subr.mxu0 %v4145
    %5076 = vmatpush1.msra.mxu0 %v4144
    %5077 = vmatprep.subr.mxu0 %v4143
    %5078 = vmatpush1.msra.mxu0 %v4142
    %5079 = vmatprep.subr.mxu0 %v4141
    %5080 = vmatpush1.msra.mxu0 %v4140
    %5081 = vmatprep.subr.mxu0 %v4139
    %5082 = vmatpush1.msra.mxu0 %v4138
    %5083 = vmatprep.subr.mxu0 %v4137
    %5084 = vmatpush1.msra.mxu0 %v4136
    %5085 = vmatprep.subr.mxu0 %v4135
    %5086 = vmatpush1.msra.mxu0 %v4134
    %5087 = vmatprep.subr.mxu0 %v4133
    %5088 = vmatpush1.msra.mxu0 %v4132
    %5089 = vmatprep.subr.mxu0 0.0
    %5090 = vmatpush2.msra.mxu0 0.0
    %5091 = vmatprep.subr.mxu0 0.0
    %5092 = vmatpush2.msra.mxu0 0.0
    %5093 = vmatprep.subr.mxu0 0.0
    %5094 = vmatpush2.msra.mxu0 0.0
    %5095 = vmatprep.subr.mxu0 0.0
    %5096 = vmatpush2.msra.mxu0 0.0
    %5097 = vmatprep.subr.mxu0 0.0
    %5098 = vmatpush2.msra.mxu0 0.0
    %5099 = vmatprep.subr.mxu0 0.0
    %5100 = vmatpush2.msra.mxu0 0.0
    %5101 = vmatprep.subr.mxu0 0.0
    %5102 = vmatpush2.msra.mxu0 0.0
    %5103 = vmatprep.subr.mxu0 0.0
    %5104 = vmatpush2.msra.mxu0 0.0
    %5105 = vmatprep.subr.mxu0 0.0
    %5106 = vmatpush2.msra.mxu0 0.0
    %5107 = vmatprep.subr.mxu0 0.0
    %5108 = vmatpush2.msra.mxu0 0.0
    %5109 = vmatprep.subr.mxu0 0.0
    %5110 = vmatpush2.msra.mxu0 0.0
    %5111 = vmatprep.subr.mxu0 0.0
    %5112 = vmatpush2.msra.mxu0 0.0
    %5113 = vmatprep.subr.mxu0 0.0
    %5114 = vmatpush2.msra.mxu0 0.0
    %5115 = vmatprep.subr.mxu0 0.0
    %5116 = vmatpush2.msra.mxu0 0.0
    %5117 = vmatprep.subr.mxu0 0.0
    %5118 = vmatpush2.msra.mxu0 0.0
    %5119 = vmatprep.subr.mxu0 0.0
    %5120 = vmatpush2.msra.mxu0 0.0
    %5121 = vmatprep.mubr.f32.mxu0 0.0
    %5122 = vmatmul.mubr.f32.gmra.mxu0 %v5055
    %v5123 = vpop.f32.mrf.mxu0
    %v5124 = vadd.f32 0.0, %v5123
    %v5125 = vpop.f32.mrf.mxu0
    %v5126 = vadd.f32 0.0, %v5125
    %5127 = vdwg.mxu0
    %v5130 = vrot.slane %v5124, 4
    %v5131 = vrot.slane %v5126, 4
    %v5134 = vadd.f32 %v4811, %v5130
    %v5135 = vadd.f32 %v4812, %v5131
    %v5136 = vxor.u32 %v5134, 2147483648
    %v5137 = vxor.u32 %v5135, 2147483648
    %v5138 = vmul.f32 %v5136, 1.442695
    %v5139 = vpow.pop %v5138
    %v5140 = vmul.f32 %v5137, 1.442695
    %v5141 = vpow.pop %v5140
    %v5142 = vadd.f32 %v5139, 1.0
    %v5143 = vadd.f32 %v5141, 1.0
    %v5144 = vrcp.pop %v5142
    %v5145 = vmul.f32 1.0, %v5144
    %v5146 = vrcp.pop %v5143
    %v5147 = vmul.f32 1.0, %v5146
    %v5148 = vtanh.pop %v5135
    %v5150 = vrot.slane %v5041, 6
    %v5152 = vmul.f32 %v5145, %v5150
    %5154 = vrot.lane.b32.xlu0 %v5148, 64
    %v5155 = vpop.permute.xlu0 %5154
    %v5157 = vmul.f32 %v5145, %v5155
    %5159 = vrot.lane.b32.xlu0 %v5157, 64
    %v5160 = vpop.permute.xlu0 %5159
    %v5162 = vadd.f32 %v5152, %v5160
    %v5163 = vtanh.pop %v5162
    %5165 = vrot.lane.b32.xlu0 %v5163, 64
    %v5166 = vpop.permute.xlu0 %5165
    %v5168 = vmul.f32 %v5147, %v5166
    %5169 = vst.msk [vmem:[#allocation2 + $0x8] sm:$0x30] %vm969, %v5168
    %5171 = vrot.lane.b32.xlu0 %v5168, 96
    %v5172 = vpop.permute.xlu0 %5171
    %5174 = vst.msk [vmem:[#allocation3 - $0x2] sm:$0x30] %vm969, %v5172
    %v5175 = vrot.slane %v5168, 4
    %v5176 = vsel %vm613, %v5175, 0
    %5178 = vmatprep.subr.mxu0 0.0
    %5179 = vmatpush1.msra.mxu0 0.0
    %5180 = vmatprep.subr.mxu0 0.0
    %5181 = vmatpush1.msra.mxu0 0.0
    %5182 = vmatprep.subr.mxu0 0.0
    %5183 = vmatpush1.msra.mxu0 0.0
    %5184 = vmatprep.subr.mxu0 0.0
    %5185 = vmatpush1.msra.mxu0 0.0
    %5186 = vmatprep.subr.mxu0 0.0
    %5187 = vmatpush1.msra.mxu0 0.0
    %5188 = vmatprep.subr.mxu0 0.0
    %5189 = vmatpush1.msra.mxu0 0.0
    %5190 = vmatprep.subr.mxu0 0.0
    %5191 = vmatpush1.msra.mxu0 0.0
    %5192 = vmatprep.subr.mxu0 0.0
    %5193 = vmatpush1.msra.mxu0 0.0
    %5194 = vmatprep.subr.mxu0 %v4147
    %5195 = vmatpush1.msra.mxu0 %v4146
    %5196 = vmatprep.subr.mxu0 %v4145
    %5197 = vmatpush1.msra.mxu0 %v4144
    %5198 = vmatprep.subr.mxu0 %v4143
    %5199 = vmatpush1.msra.mxu0 %v4142
    %5200 = vmatprep.subr.mxu0 %v4141
    %5201 = vmatpush1.msra.mxu0 %v4140
    %5202 = vmatprep.subr.mxu0 %v4139
    %5203 = vmatpush1.msra.mxu0 %v4138
    %5204 = vmatprep.subr.mxu0 %v4137
    %5205 = vmatpush1.msra.mxu0 %v4136
    %5206 = vmatprep.subr.mxu0 %v4135
    %5207 = vmatpush1.msra.mxu0 %v4134
    %5208 = vmatprep.subr.mxu0 %v4133
    %5209 = vmatpush1.msra.mxu0 %v4132
    %5210 = vmatprep.subr.mxu0 0.0
    %5211 = vmatpush2.msra.mxu0 0.0
    %5212 = vmatprep.subr.mxu0 0.0
    %5213 = vmatpush2.msra.mxu0 0.0
    %5214 = vmatprep.subr.mxu0 0.0
    %5215 = vmatpush2.msra.mxu0 0.0
    %5216 = vmatprep.subr.mxu0 0.0
    %5217 = vmatpush2.msra.mxu0 0.0
    %5218 = vmatprep.subr.mxu0 0.0
    %5219 = vmatpush2.msra.mxu0 0.0
    %5220 = vmatprep.subr.mxu0 0.0
    %5221 = vmatpush2.msra.mxu0 0.0
    %5222 = vmatprep.subr.mxu0 0.0
    %5223 = vmatpush2.msra.mxu0 0.0
    %5224 = vmatprep.subr.mxu0 0.0
    %5225 = vmatpush2.msra.mxu0 0.0
    %5226 = vmatprep.subr.mxu0 0.0
    %5227 = vmatpush2.msra.mxu0 0.0
    %5228 = vmatprep.subr.mxu0 0.0
    %5229 = vmatpush2.msra.mxu0 0.0
    %5230 = vmatprep.subr.mxu0 0.0
    %5231 = vmatpush2.msra.mxu0 0.0
    %5232 = vmatprep.subr.mxu0 0.0
    %5233 = vmatpush2.msra.mxu0 0.0
    %5234 = vmatprep.subr.mxu0 0.0
    %5235 = vmatpush2.msra.mxu0 0.0
    %5236 = vmatprep.subr.mxu0 0.0
    %5237 = vmatpush2.msra.mxu0 0.0
    %5238 = vmatprep.subr.mxu0 0.0
    %5239 = vmatpush2.msra.mxu0 0.0
    %5240 = vmatprep.subr.mxu0 0.0
    %5241 = vmatpush2.msra.mxu0 0.0
    %5242 = vmatprep.mubr.f32.mxu0 0.0
    %5243 = vmatmul.mubr.f32.gmra.mxu0 %v5176
    %v5244 = vpop.f32.mrf.mxu0
    %v5245 = vadd.f32 0.0, %v5244
    %v5246 = vpop.f32.mrf.mxu0
    %v5247 = vadd.f32 0.0, %v5246
    %5248 = vdwg.mxu0
    %v5251 = vrot.slane %v5245, 2
    %v5252 = vrot.slane %v5247, 2
    %v5255 = vadd.f32 %v4932, %v5251
    %v5256 = vadd.f32 %v4933, %v5252
    %v5257 = vxor.u32 %v5255, 2147483648
    %v5258 = vxor.u32 %v5256, 2147483648
    %v5259 = vmul.f32 %v5257, 1.442695
    %v5260 = vpow.pop %v5259
    %v5261 = vmul.f32 %v5258, 1.442695
    %v5262 = vpow.pop %v5261
    %v5263 = vadd.f32 %v5260, 1.0
    %v5264 = vadd.f32 %v5262, 1.0
    %v5265 = vrcp.pop %v5263
    %v5266 = vmul.f32 1.0, %v5265
    %v5267 = vrcp.pop %v5264
    %v5268 = vmul.f32 1.0, %v5267
    %v5269 = vtanh.pop %v5256
    %v5271 = vrot.slane %v5162, 6
    %v5273 = vmul.f32 %v5266, %v5271
    %5275 = vrot.lane.b32.xlu0 %v5269, 64
    %v5276 = vpop.permute.xlu0 %5275
    %v5278 = vmul.f32 %v5266, %v5276
    %5280 = vrot.lane.b32.xlu0 %v5278, 64
    %v5281 = vpop.permute.xlu0 %5280
    %v5283 = vadd.f32 %v5273, %v5281
    %v5284 = vtanh.pop %v5283
    %5286 = vrot.lane.b32.xlu0 %v5284, 64
    %v5287 = vpop.permute.xlu0 %5286
    %v5289 = vmul.f32 %v5268, %v5287
    %5290 = vst.msk [vmem:[#allocation2 + $0x8] sm:$0xc0] %vm1091, %v5289
    %5292 = vrot.lane.b32.xlu0 %v5289, 96
    %v5293 = vpop.permute.xlu0 %5292
    %5295 = vst.msk [vmem:[#allocation3 - $0x6] sm:$0xc0] %vm1091, %v5293
    %v5296 = vld [vmem:[#allocation2] sm:$0xff]
    %v5297 = vld [vmem:[#allocation2 + $0x8] sm:$0xff]
    %v5298 = vld [vmem:[#allocation3] sm:$0xff]
    %v5299 = vld [vmem:[#allocation3 + $0x8] sm:$0xff]
    %5302 = vrot.lane.b32.xlu0 %v5298, 32
    %v5303 = vpop.permute.xlu0 %5302
    %5304 = vrot.lane.b32.xlu0 %v5299, 32
    %v5305 = vpop.permute.xlu0 %5304
    %v5308 = vsel %vm1601, %v5296, %v5303
    %v5309 = vsel %vm1601, %v5297, %v5305
    %v5310 = vmax.f32 %v5308, 0.0
    %v5311 = vmax.f32 %v5309, 0.0
    %5312 = vrot.lane.b32.xlu0 %v2868, 64
    %v5313 = vpop.permute.xlu0 %5312
    %5314 = vrot.lane.b32.xlu0 %v2869, 64
    %v5315 = vpop.permute.xlu0 %5314
    %v5318 = vsel %vm613, %v5310, %v5313
    %v5319 = vsel %vm613, %v5311, %v5315
    %v5320 = vsel %vm350, %v5313, 0.0
    %v5321 = vadd.f32 %v5318, %v5320
    %5322 = vadd.xlane.f32.xlu0 %v5321
    %v5323 = vpop.xlane.xlu0 %5322
    %v5324 = vsel %vm350, %v5315, 0.0
    %v5325 = vadd.f32 %v5319, %v5324
    %5326 = vadd.xlane.f32.xlu0 %v5325
    %v5327 = vpop.xlane.xlu0 %5326
    %v5328 = vrcp.pop 138.0
    %v5329 = vmul.f32 %v5323, %v5328
    %v5330 = vmul.f32 %v5327, %v5328
    %v5331 = vsub.f32 %v5318, %v5329
    %v5332 = vsub.f32 %v5313, %v5329
    %v5333 = vsub.f32 %v5319, %v5330
    %v5334 = vsub.f32 %v5315, %v5330
    %v5335 = vmul.f32 %v5331, %v5331
    %v5336 = vmul.f32 %v5332, %v5332
    %v5337 = vmul.f32 %v5333, %v5333
    %v5338 = vmul.f32 %v5334, %v5334
    %v5339 = vsel %vm350, %v5336, 0.0
    %v5340 = vadd.f32 %v5335, %v5339
    %5341 = vadd.xlane.f32.xlu0 %v5340
    %v5342 = vpop.xlane.xlu0 %5341
    %v5343 = vsel %vm350, %v5338, 0.0
    %v5344 = vadd.f32 %v5337, %v5343
    %5345 = vadd.xlane.f32.xlu0 %v5344
    %v5346 = vpop.xlane.xlu0 %5345
    %v5347 = vmul.f32 %v5342, %v5328
    %v5348 = vmul.f32 %v5346, %v5328
    %v5349 = vadd.f32 %v5347, 1e-05
    %v5350 = vadd.f32 %v5348, 1e-05
    %v5351 = vrsqrt.pop %v5349
    %v5352 = vrsqrt.pop %v5350
    %v5353 = vmul.f32 %v5331, %v5351
    %v5354 = vmul.f32 %v5332, %v5351
    %v5355 = vmul.f32 %v5333, %v5352
    %v5356 = vmul.f32 %v5334, %v5352
    %v5357 = vld [vmem:[%s11] sm:$0x3]
    %v5359 = vlaneseq
    %v5360 = vshrl.u32 %v5359, 7
    %v5361 = vsub.s32 0, %v5360
    %v5362 = vrot.slane %v5357, %v5361
    %v5363 = vlaneseq
    %v5364 = vshrl.u32 %v5363, 7
    %v5365 = vsub.s32 1, %v5364
    %v5366 = vrot.slane %v5357, %v5365
    %v5369 = vmul.f32 %v5353, %v5362
    %v5370 = vmul.f32 %v5354, %v5366
    %v5371 = vmul.f32 %v5355, %v5362
    %v5372 = vmul.f32 %v5356, %v5366
    %v5373 = vld [vmem:[%s13] sm:$0x3]
    %v5375 = vlaneseq
    %v5376 = vshrl.u32 %v5375, 7
    %v5377 = vsub.s32 0, %v5376
    %v5378 = vrot.slane %v5373, %v5377
    %v5379 = vlaneseq
    %v5380 = vshrl.u32 %v5379, 7
    %v5381 = vsub.s32 1, %v5380
    %v5382 = vrot.slane %v5373, %v5381
    %v5385 = vadd.f32 %v5369, %v5378
    %v5386 = vadd.f32 %v5370, %v5382
    %v5387 = vadd.f32 %v5371, %v5378
    %v5388 = vadd.f32 %v5372, %v5382
    %v5389 = vld [vmem:[#allocation27] sm:$0xff]
    %v5390 = vld [vmem:[#allocation27 + $0x8] sm:$0xff]
    %v5391 = vld [vmem:[#allocation27 + $0x10] sm:$0xff]
    %v5392 = vld [vmem:[#allocation27 + $0x18] sm:$0xff]
    %v5393 = vld [vmem:[#allocation27 + $0x20] sm:$0xff]
    %v5394 = vld [vmem:[#allocation27 + $0x28] sm:$0xff]
    %v5395 = vld [vmem:[#allocation27 + $0x30] sm:$0xff]
    %v5396 = vld [vmem:[#allocation27 + $0x38] sm:$0xff]
    %v5397 = vld [vmem:[#allocation27 + $0x40] sm:$0xff]
    %v5398 = vld [vmem:[#allocation27 + $0x48] sm:$0xff]
    %v5399 = vld [vmem:[#allocation27 + $0x50] sm:$0xff]
    %v5400 = vld [vmem:[#allocation27 + $0x58] sm:$0xff]
    %v5401 = vld [vmem:[#allocation27 + $0x60] sm:$0xff]
    %v5402 = vld [vmem:[#allocation27 + $0x68] sm:$0xff]
    %v5403 = vld [vmem:[#allocation27 + $0x70] sm:$0xff]
    %v5404 = vld [vmem:[#allocation27 + $0x78] sm:$0xff]
    %v5405 = vld [vmem:[#allocation27 + $0x80] sm:$0xff]
    %v5406 = vld [vmem:[#allocation27 + $0x88] sm:$0xff]
    %v5407 = vld [vmem:[#allocation27 + $0x90] sm:$0xff]
    %v5408 = vld [vmem:[#allocation27 + $0x98] sm:$0xff]
    %v5409 = vld [vmem:[#allocation27 + $0xa0] sm:$0xff]
    %v5410 = vld [vmem:[#allocation27 + $0xa8] sm:$0xff]
    %v5411 = vld [vmem:[#allocation27 + $0xb0] sm:$0xff]
    %v5412 = vld [vmem:[#allocation27 + $0xb8] sm:$0xff]
    %v5413 = vld [vmem:[#allocation27 + $0xc0] sm:$0xff]
    %v5414 = vld [vmem:[#allocation27 + $0xc8] sm:$0xff]
    %v5415 = vld [vmem:[#allocation27 + $0xd0] sm:$0xff]
    %v5416 = vld [vmem:[#allocation27 + $0xd8] sm:$0xff]
    %v5417 = vld [vmem:[#allocation27 + $0xe0] sm:$0xff]
    %v5418 = vld [vmem:[#allocation27 + $0xe8] sm:$0xff]
    %v5419 = vld [vmem:[#allocation27 + $0xf0] sm:$0xff]
    %v5420 = vld [vmem:[#allocation27 + $0xf8] sm:$0xff]
    %v5421 = vld [vmem:[#allocation27 + $0x100] sm:$0xff]
    %v5422 = vld [vmem:[#allocation27 + $0x108] sm:$0xff]
    %v5423 = vld [vmem:[#allocation27 + $0x110] sm:$0x3]
    %v5424 = vld [vmem:[#allocation27 + $0x118] sm:$0x3]
    %v5425 = vld [vmem:[#allocation28] sm:$0xff]
    %v5426 = vld [vmem:[#allocation28 + $0x8] sm:$0xff]
    %v5427 = vld [vmem:[#allocation28 + $0x10] sm:$0xff]
    %v5428 = vld [vmem:[#allocation28 + $0x18] sm:$0xff]
    %v5429 = vld [vmem:[#allocation28 + $0x20] sm:$0xff]
    %v5430 = vld [vmem:[#allocation28 + $0x28] sm:$0xff]
    %v5431 = vld [vmem:[#allocation28 + $0x30] sm:$0xff]
    %v5432 = vld [vmem:[#allocation28 + $0x38] sm:$0xff]
    %v5433 = vld [vmem:[#allocation28 + $0x40] sm:$0xff]
    %v5434 = vld [vmem:[#allocation28 + $0x48] sm:$0xff]
    %v5435 = vld [vmem:[#allocation28 + $0x50] sm:$0xff]
    %v5436 = vld [vmem:[#allocation28 + $0x58] sm:$0xff]
    %v5437 = vld [vmem:[#allocation28 + $0x60] sm:$0xff]
    %v5438 = vld [vmem:[#allocation28 + $0x68] sm:$0xff]
    %v5439 = vld [vmem:[#allocation28 + $0x70] sm:$0xff]
    %v5440 = vld [vmem:[#allocation28 + $0x78] sm:$0xff]
    %v5441 = vld [vmem:[#allocation28 + $0x80] sm:$0xff]
    %v5442 = vld [vmem:[#allocation28 + $0x88] sm:$0xff]
    %v5443 = vld [vmem:[#allocation28 + $0x90] sm:$0xff]
    %v5444 = vld [vmem:[#allocation28 + $0x98] sm:$0xff]
    %v5445 = vld [vmem:[#allocation28 + $0xa0] sm:$0xff]
    %v5446 = vld [vmem:[#allocation28 + $0xa8] sm:$0xff]
    %v5447 = vld [vmem:[#allocation28 + $0xb0] sm:$0xff]
    %v5448 = vld [vmem:[#allocation28 + $0xb8] sm:$0xff]
    %v5449 = vld [vmem:[#allocation28 + $0xc0] sm:$0xff]
    %v5450 = vld [vmem:[#allocation28 + $0xc8] sm:$0xff]
    %v5451 = vld [vmem:[#allocation28 + $0xd0] sm:$0xff]
    %v5452 = vld [vmem:[#allocation28 + $0xd8] sm:$0xff]
    %v5453 = vld [vmem:[#allocation28 + $0xe0] sm:$0xff]
    %v5454 = vld [vmem:[#allocation28 + $0xe8] sm:$0xff]
    %v5455 = vld [vmem:[#allocation28 + $0xf0] sm:$0xff]
    %v5456 = vld [vmem:[#allocation28 + $0xf8] sm:$0xff]
    %v5457 = vld [vmem:[#allocation28 + $0x100] sm:$0xff]
    %v5458 = vld [vmem:[#allocation28 + $0x108] sm:$0xff]
    %v5459 = vld [vmem:[#allocation28 + $0x110] sm:$0x3]
    %v5460 = vld [vmem:[#allocation28 + $0x118] sm:$0x3]
    %v5461 = vld [vmem:[#allocation30] sm:$0xff]
    %v5462 = vld [vmem:[#allocation30 + $0x8] sm:$0xff]
    %v5463 = vld [vmem:[#allocation30 + $0x10] sm:$0xff]
    %v5464 = vld [vmem:[#allocation30 + $0x18] sm:$0xff]
    %v5465 = vld [vmem:[#allocation30 + $0x20] sm:$0xff]
    %v5466 = vld [vmem:[#allocation30 + $0x28] sm:$0xff]
    %v5467 = vld [vmem:[#allocation30 + $0x30] sm:$0xff]
    %v5468 = vld [vmem:[#allocation30 + $0x38] sm:$0xff]
    %v5469 = vld [vmem:[#allocation30 + $0x40] sm:$0xff]
    %v5470 = vld [vmem:[#allocation30 + $0x48] sm:$0xff]
    %v5471 = vld [vmem:[#allocation30 + $0x50] sm:$0xff]
    %v5472 = vld [vmem:[#allocation30 + $0x58] sm:$0xff]
    %v5473 = vld [vmem:[#allocation30 + $0x60] sm:$0xff]
    %v5474 = vld [vmem:[#allocation30 + $0x68] sm:$0xff]
    %v5475 = vld [vmem:[#allocation30 + $0x70] sm:$0xff]
    %v5476 = vld [vmem:[#allocation30 + $0x78] sm:$0xff]
    %v5477 = vld [vmem:[%s53] sm:$0x3]
    %v5479 = vlaneseq
    %v5480 = vshrl.u32 %v5479, 7
    %v5481 = vsub.s32 0, %v5480
    %v5482 = vrot.slane %v5477, %v5481
    %v5483 = vlaneseq
    %v5484 = vshrl.u32 %v5483, 7
    %v5485 = vsub.s32 1, %v5484
    %v5486 = vrot.slane %v5477, %v5485
    %v5490 = vsel %vm350, %v5386, 0
    %v5493 = vsel %vm350, %v5388, 0
    %v5496 = vsel %vm438, %v5423, 0
    %v5499 = vsel %vm438, %v5424, 0
    %5501 = vmatprep.subr.mxu0 %v5420
    %5502 = vmatpush1.msra.mxu0 %v5419
    %5503 = vmatprep.subr.mxu0 %v5418
    %5504 = vmatpush1.msra.mxu0 %v5417
    %5505 = vmatprep.subr.mxu0 %v5416
    %5506 = vmatpush1.msra.mxu0 %v5415
    %5507 = vmatprep.subr.mxu0 %v5414
    %5508 = vmatpush1.msra.mxu0 %v5413
    %5509 = vmatprep.subr.mxu0 %v5412
    %5510 = vmatpush1.msra.mxu0 %v5411
    %5511 = vmatprep.subr.mxu0 %v5410
    %5512 = vmatpush1.msra.mxu0 %v5409
    %5513 = vmatprep.subr.mxu0 %v5408
    %5514 = vmatpush1.msra.mxu0 %v5407
    %5515 = vmatprep.subr.mxu0 %v5406
    %5516 = vmatpush1.msra.mxu0 %v5405
    %5517 = vmatprep.subr.mxu0 %v5404
    %5518 = vmatpush1.msra.mxu0 %v5403
    %5519 = vmatprep.subr.mxu0 %v5402
    %5520 = vmatpush1.msra.mxu0 %v5401
    %5521 = vmatprep.subr.mxu0 %v5400
    %5522 = vmatpush1.msra.mxu0 %v5399
    %5523 = vmatprep.subr.mxu0 %v5398
    %5524 = vmatpush1.msra.mxu0 %v5397
    %5525 = vmatprep.subr.mxu0 %v5396
    %5526 = vmatpush1.msra.mxu0 %v5395
    %5527 = vmatprep.subr.mxu0 %v5394
    %5528 = vmatpush1.msra.mxu0 %v5393
    %5529 = vmatprep.subr.mxu0 %v5392
    %5530 = vmatpush1.msra.mxu0 %v5391
    %5531 = vmatprep.subr.mxu0 %v5390
    %5532 = vmatpush1.msra.mxu0 %v5389
    %5533 = vmatprep.subr.mxu0 0.0
    %5534 = vmatpush2.msra.mxu0 0.0
    %5535 = vmatprep.subr.mxu0 0.0
    %5536 = vmatpush2.msra.mxu0 0.0
    %5537 = vmatprep.subr.mxu0 0.0
    %5538 = vmatpush2.msra.mxu0 0.0
    %5539 = vmatprep.subr.mxu0 0.0
    %5540 = vmatpush2.msra.mxu0 0.0
    %5541 = vmatprep.subr.mxu0 0.0
    %5542 = vmatpush2.msra.mxu0 0.0
    %5543 = vmatprep.subr.mxu0 0.0
    %5544 = vmatpush2.msra.mxu0 0.0
    %5545 = vmatprep.subr.mxu0 0.0
    %5546 = vmatpush2.msra.mxu0 0.0
    %5547 = vmatprep.subr.mxu0 0.0
    %5548 = vmatpush2.msra.mxu0 0.0
    %5549 = vmatprep.subr.mxu0 0.0
    %5550 = vmatpush2.msra.mxu0 0.0
    %5551 = vmatprep.subr.mxu0 0.0
    %5552 = vmatpush2.msra.mxu0 0.0
    %5553 = vmatprep.subr.mxu0 0.0
    %5554 = vmatpush2.msra.mxu0 0.0
    %5555 = vmatprep.subr.mxu0 0.0
    %5556 = vmatpush2.msra.mxu0 0.0
    %5557 = vmatprep.subr.mxu0 0.0
    %5558 = vmatpush2.msra.mxu0 0.0
    %5559 = vmatprep.subr.mxu0 0.0
    %5560 = vmatpush2.msra.mxu0 0.0
    %5561 = vmatprep.subr.mxu0 %v5499
    %5562 = vmatpush2.msra.mxu0 %v5496
    %5563 = vmatprep.subr.mxu0 %v5422
    %5564 = vmatpush2.msra.mxu0 %v5421
    %5565 = vmatprep.mubr.f32.mxu0 %v5490
    %5566 = vmatmul.mubr.f32.gmra.mxu0 %v5385
    %v5567 = vpop.f32.mrf.mxu0
    %v5568 = vadd.f32 %v5482, %v5567
    %v5569 = vpop.f32.mrf.mxu0
    %v5570 = vadd.f32 %v5486, %v5569
    %5571 = vmatprep.mubr.f32.mxu0 %v5493
    %5572 = vmatmul.mubr.f32.gmra.mxu0 %v5387
    %v5573 = vpop.f32.mrf.mxu0
    %v5574 = vadd.f32 %v5482, %v5573
    %v5575 = vpop.f32.mrf.mxu0
    %v5576 = vadd.f32 %v5486, %v5575
    %5577 = vdwg.mxu0
    %v5579 = vsel %vm438, %v5459, 0
    %v5582 = vsel %vm438, %v5460, 0
    %5584 = vmatprep.subr.mxu0 %v5456
    %5585 = vmatpush1.msra.mxu0 %v5455
    %5586 = vmatprep.subr.mxu0 %v5454
    %5587 = vmatpush1.msra.mxu0 %v5453
    %5588 = vmatprep.subr.mxu0 %v5452
    %5589 = vmatpush1.msra.mxu0 %v5451
    %5590 = vmatprep.subr.mxu0 %v5450
    %5591 = vmatpush1.msra.mxu0 %v5449
    %5592 = vmatprep.subr.mxu0 %v5448
    %5593 = vmatpush1.msra.mxu0 %v5447
    %5594 = vmatprep.subr.mxu0 %v5446
    %5595 = vmatpush1.msra.mxu0 %v5445
    %5596 = vmatprep.subr.mxu0 %v5444
    %5597 = vmatpush1.msra.mxu0 %v5443
    %5598 = vmatprep.subr.mxu0 %v5442
    %5599 = vmatpush1.msra.mxu0 %v5441
    %5600 = vmatprep.subr.mxu0 %v5440
    %5601 = vmatpush1.msra.mxu0 %v5439
    %5602 = vmatprep.subr.mxu0 %v5438
    %5603 = vmatpush1.msra.mxu0 %v5437
    %5604 = vmatprep.subr.mxu0 %v5436
    %5605 = vmatpush1.msra.mxu0 %v5435
    %5606 = vmatprep.subr.mxu0 %v5434
    %5607 = vmatpush1.msra.mxu0 %v5433
    %5608 = vmatprep.subr.mxu0 %v5432
    %5609 = vmatpush1.msra.mxu0 %v5431
    %5610 = vmatprep.subr.mxu0 %v5430
    %5611 = vmatpush1.msra.mxu0 %v5429
    %5612 = vmatprep.subr.mxu0 %v5428
    %5613 = vmatpush1.msra.mxu0 %v5427
    %5614 = vmatprep.subr.mxu0 %v5426
    %5615 = vmatpush1.msra.mxu0 %v5425
    %5616 = vmatprep.subr.mxu0 0.0
    %5617 = vmatpush2.msra.mxu0 0.0
    %5618 = vmatprep.subr.mxu0 0.0
    %5619 = vmatpush2.msra.mxu0 0.0
    %5620 = vmatprep.subr.mxu0 0.0
    %5621 = vmatpush2.msra.mxu0 0.0
    %5622 = vmatprep.subr.mxu0 0.0
    %5623 = vmatpush2.msra.mxu0 0.0
    %5624 = vmatprep.subr.mxu0 0.0
    %5625 = vmatpush2.msra.mxu0 0.0
    %5626 = vmatprep.subr.mxu0 0.0
    %5627 = vmatpush2.msra.mxu0 0.0
    %5628 = vmatprep.subr.mxu0 0.0
    %5629 = vmatpush2.msra.mxu0 0.0
    %5630 = vmatprep.subr.mxu0 0.0
    %5631 = vmatpush2.msra.mxu0 0.0
    %5632 = vmatprep.subr.mxu0 0.0
    %5633 = vmatpush2.msra.mxu0 0.0
    %5634 = vmatprep.subr.mxu0 0.0
    %5635 = vmatpush2.msra.mxu0 0.0
    %5636 = vmatprep.subr.mxu0 0.0
    %5637 = vmatpush2.msra.mxu0 0.0
    %5638 = vmatprep.subr.mxu0 0.0
    %5639 = vmatpush2.msra.mxu0 0.0
    %5640 = vmatprep.subr.mxu0 0.0
    %5641 = vmatpush2.msra.mxu0 0.0
    %5642 = vmatprep.subr.mxu0 0.0
    %5643 = vmatpush2.msra.mxu0 0.0
    %5644 = vmatprep.subr.mxu0 %v5582
    %5645 = vmatpush2.msra.mxu0 %v5579
    %5646 = vmatprep.subr.mxu0 %v5458
    %5647 = vmatpush2.msra.mxu0 %v5457
    %5648 = vmatprep.mubr.f32.mxu0 %v5490
    %5649 = vmatmul.mubr.f32.gmra.mxu0 %v5385
    %v5650 = vpop.f32.mrf.mxu0
    %v5651 = vadd.f32 0.0, %v5650
    %v5652 = vpop.f32.mrf.mxu0
    %v5653 = vadd.f32 0.0, %v5652
    %5654 = vmatprep.mubr.f32.mxu0 %v5493
    %5655 = vmatmul.mubr.f32.gmra.mxu0 %v5387
    %v5656 = vpop.f32.mrf.mxu0
    %v5657 = vadd.f32 0.0, %v5656
    %v5658 = vpop.f32.mrf.mxu0
    %v5659 = vadd.f32 0.0, %v5658
    %5660 = vdwg.mxu0
    %v5663 = vrot.slane %v5657, 6
    %v5664 = vrot.slane %v5659, 6
    %v5667 = vadd.f32 %v5568, %v5663
    %v5668 = vadd.f32 %v5570, %v5664
    %5669 = vmatprep.subr.mxu0 0.0
    %5670 = vmatpush1.msra.mxu0 0.0
    %5671 = vmatprep.subr.mxu0 0.0
    %5672 = vmatpush1.msra.mxu0 0.0
    %5673 = vmatprep.subr.mxu0 0.0
    %5674 = vmatpush1.msra.mxu0 0.0
    %5675 = vmatprep.subr.mxu0 0.0
    %5676 = vmatpush1.msra.mxu0 0.0
    %5677 = vmatprep.subr.mxu0 0.0
    %5678 = vmatpush1.msra.mxu0 0.0
    %5679 = vmatprep.subr.mxu0 0.0
    %5680 = vmatpush1.msra.mxu0 0.0
    %5681 = vmatprep.subr.mxu0 0.0
    %5682 = vmatpush1.msra.mxu0 0.0
    %5683 = vmatprep.subr.mxu0 0.0
    %5684 = vmatpush1.msra.mxu0 0.0
    %5685 = vmatprep.subr.mxu0 %v5476
    %5686 = vmatpush1.msra.mxu0 %v5475
    %5687 = vmatprep.subr.mxu0 %v5474
    %5688 = vmatpush1.msra.mxu0 %v5473
    %5689 = vmatprep.subr.mxu0 %v5472
    %5690 = vmatpush1.msra.mxu0 %v5471
    %5691 = vmatprep.subr.mxu0 %v5470
    %5692 = vmatpush1.msra.mxu0 %v5469
    %5693 = vmatprep.subr.mxu0 %v5468
    %5694 = vmatpush1.msra.mxu0 %v5467
    %5695 = vmatprep.subr.mxu0 %v5466
    %5696 = vmatpush1.msra.mxu0 %v5465
    %5697 = vmatprep.subr.mxu0 %v5464
    %5698 = vmatpush1.msra.mxu0 %v5463
    %5699 = vmatprep.subr.mxu0 %v5462
    %5700 = vmatpush1.msra.mxu0 %v5461
    %5701 = vmatprep.subr.mxu0 0.0
    %5702 = vmatpush2.msra.mxu0 0.0
    %5703 = vmatprep.subr.mxu0 0.0
    %5704 = vmatpush2.msra.mxu0 0.0
    %5705 = vmatprep.subr.mxu0 0.0
    %5706 = vmatpush2.msra.mxu0 0.0
    %5707 = vmatprep.subr.mxu0 0.0
    %5708 = vmatpush2.msra.mxu0 0.0
    %5709 = vmatprep.subr.mxu0 0.0
    %5710 = vmatpush2.msra.mxu0 0.0
    %5711 = vmatprep.subr.mxu0 0.0
    %5712 = vmatpush2.msra.mxu0 0.0
    %5713 = vmatprep.subr.mxu0 0.0
    %5714 = vmatpush2.msra.mxu0 0.0
    %5715 = vmatprep.subr.mxu0 0.0
    %5716 = vmatpush2.msra.mxu0 0.0
    %5717 = vmatprep.subr.mxu0 0.0
    %5718 = vmatpush2.msra.mxu0 0.0
    %5719 = vmatprep.subr.mxu0 0.0
    %5720 = vmatpush2.msra.mxu0 0.0
    %5721 = vmatprep.subr.mxu0 0.0
    %5722 = vmatpush2.msra.mxu0 0.0
    %5723 = vmatprep.subr.mxu0 0.0
    %5724 = vmatpush2.msra.mxu0 0.0
    %5725 = vmatprep.subr.mxu0 0.0
    %5726 = vmatpush2.msra.mxu0 0.0
    %5727 = vmatprep.subr.mxu0 0.0
    %5728 = vmatpush2.msra.mxu0 0.0
    %5729 = vmatprep.subr.mxu0 0.0
    %5730 = vmatpush2.msra.mxu0 0.0
    %5731 = vmatprep.subr.mxu0 0.0
    %5732 = vmatpush2.msra.mxu0 0.0
    %5733 = vmatprep.mubr.f32.mxu0 0.0
    %5734 = vmatmul.mubr.f32.gmra.mxu0 %v615
    %v5735 = vpop.f32.mrf.mxu0
    %v5736 = vadd.f32 0.0, %v5735
    %v5737 = vpop.f32.mrf.mxu0
    %v5738 = vadd.f32 0.0, %v5737
    %5739 = vdwg.mxu0
    %v5740 = vadd.f32 %v5667, %v5736
    %v5741 = vadd.f32 %v5668, %v5738
    %v5742 = vxor.u32 %v5740, 2147483648
    %v5743 = vxor.u32 %v5741, 2147483648
    %v5744 = vmul.f32 %v5742, 1.442695
    %v5745 = vpow.pop %v5744
    %v5746 = vmul.f32 %v5743, 1.442695
    %v5747 = vpow.pop %v5746
    %v5748 = vadd.f32 %v5745, 1.0
    %v5749 = vadd.f32 %v5747, 1.0
    %v5750 = vrcp.pop %v5748
    %v5751 = vmul.f32 1.0, %v5750
    %v5752 = vrcp.pop %v5749
    %v5753 = vmul.f32 1.0, %v5752
    %v5754 = vtanh.pop %v5741
    %v5755 = vmul.f32 %v5751, 0.0
    %5757 = vrot.lane.b32.xlu0 %v5754, 64
    %v5758 = vpop.permute.xlu0 %5757
    %v5760 = vmul.f32 %v5751, %v5758
    %5762 = vrot.lane.b32.xlu0 %v5760, 64
    %v5763 = vpop.permute.xlu0 %5762
    %v5765 = vadd.f32 %v5755, %v5763
    %v5766 = vtanh.pop %v5765
    %5768 = vrot.lane.b32.xlu0 %v5766, 64
    %v5769 = vpop.permute.xlu0 %5768
    %v5771 = vmul.f32 %v5753, %v5769
    %5772 = vst.msk [vmem:[#allocation2] sm:$0x3] %vm720, %v5771
    %5774 = vrot.lane.b32.xlu0 %v5771, 96
    %v5775 = vpop.permute.xlu0 %5774
    %5777 = vst.msk [vmem:[#allocation3 + $0xe] sm:$0x3] %vm720, %v5775
    %v5778 = vrot.slane %v5657, 2
    %v5779 = vrot.slane %v5659, 2
    %v5782 = vadd.f32 %v5568, %v5778
    %v5783 = vadd.f32 %v5570, %v5779
    %v5784 = vsel %vm613, %v5771, 0
    %5786 = vmatprep.subr.mxu0 0.0
    %5787 = vmatpush1.msra.mxu0 0.0
    %5788 = vmatprep.subr.mxu0 0.0
    %5789 = vmatpush1.msra.mxu0 0.0
    %5790 = vmatprep.subr.mxu0 0.0
    %5791 = vmatpush1.msra.mxu0 0.0
    %5792 = vmatprep.subr.mxu0 0.0
    %5793 = vmatpush1.msra.mxu0 0.0
    %5794 = vmatprep.subr.mxu0 0.0
    %5795 = vmatpush1.msra.mxu0 0.0
    %5796 = vmatprep.subr.mxu0 0.0
    %5797 = vmatpush1.msra.mxu0 0.0
    %5798 = vmatprep.subr.mxu0 0.0
    %5799 = vmatpush1.msra.mxu0 0.0
    %5800 = vmatprep.subr.mxu0 0.0
    %5801 = vmatpush1.msra.mxu0 0.0
    %5802 = vmatprep.subr.mxu0 %v5476
    %5803 = vmatpush1.msra.mxu0 %v5475
    %5804 = vmatprep.subr.mxu0 %v5474
    %5805 = vmatpush1.msra.mxu0 %v5473
    %5806 = vmatprep.subr.mxu0 %v5472
    %5807 = vmatpush1.msra.mxu0 %v5471
    %5808 = vmatprep.subr.mxu0 %v5470
    %5809 = vmatpush1.msra.mxu0 %v5469
    %5810 = vmatprep.subr.mxu0 %v5468
    %5811 = vmatpush1.msra.mxu0 %v5467
    %5812 = vmatprep.subr.mxu0 %v5466
    %5813 = vmatpush1.msra.mxu0 %v5465
    %5814 = vmatprep.subr.mxu0 %v5464
    %5815 = vmatpush1.msra.mxu0 %v5463
    %5816 = vmatprep.subr.mxu0 %v5462
    %5817 = vmatpush1.msra.mxu0 %v5461
    %5818 = vmatprep.subr.mxu0 0.0
    %5819 = vmatpush2.msra.mxu0 0.0
    %5820 = vmatprep.subr.mxu0 0.0
    %5821 = vmatpush2.msra.mxu0 0.0
    %5822 = vmatprep.subr.mxu0 0.0
    %5823 = vmatpush2.msra.mxu0 0.0
    %5824 = vmatprep.subr.mxu0 0.0
    %5825 = vmatpush2.msra.mxu0 0.0
    %5826 = vmatprep.subr.mxu0 0.0
    %5827 = vmatpush2.msra.mxu0 0.0
    %5828 = vmatprep.subr.mxu0 0.0
    %5829 = vmatpush2.msra.mxu0 0.0
    %5830 = vmatprep.subr.mxu0 0.0
    %5831 = vmatpush2.msra.mxu0 0.0
    %5832 = vmatprep.subr.mxu0 0.0
    %5833 = vmatpush2.msra.mxu0 0.0
    %5834 = vmatprep.subr.mxu0 0.0
    %5835 = vmatpush2.msra.mxu0 0.0
    %5836 = vmatprep.subr.mxu0 0.0
    %5837 = vmatpush2.msra.mxu0 0.0
    %5838 = vmatprep.subr.mxu0 0.0
    %5839 = vmatpush2.msra.mxu0 0.0
    %5840 = vmatprep.subr.mxu0 0.0
    %5841 = vmatpush2.msra.mxu0 0.0
    %5842 = vmatprep.subr.mxu0 0.0
    %5843 = vmatpush2.msra.mxu0 0.0
    %5844 = vmatprep.subr.mxu0 0.0
    %5845 = vmatpush2.msra.mxu0 0.0
    %5846 = vmatprep.subr.mxu0 0.0
    %5847 = vmatpush2.msra.mxu0 0.0
    %5848 = vmatprep.subr.mxu0 0.0
    %5849 = vmatpush2.msra.mxu0 0.0
    %5850 = vmatprep.mubr.f32.mxu0 0.0
    %5851 = vmatmul.mubr.f32.gmra.mxu0 %v5784
    %v5852 = vpop.f32.mrf.mxu0
    %v5853 = vadd.f32 0.0, %v5852
    %v5854 = vpop.f32.mrf.mxu0
    %v5855 = vadd.f32 0.0, %v5854
    %5856 = vdwg.mxu0
    %v5859 = vrot.slane %v5853, 6
    %v5860 = vrot.slane %v5855, 6
    %v5863 = vadd.f32 %v5782, %v5859
    %v5864 = vadd.f32 %v5783, %v5860
    %v5865 = vxor.u32 %v5863, 2147483648
    %v5866 = vxor.u32 %v5864, 2147483648
    %v5867 = vmul.f32 %v5865, 1.442695
    %v5868 = vpow.pop %v5867
    %v5869 = vmul.f32 %v5866, 1.442695
    %v5870 = vpow.pop %v5869
    %v5871 = vadd.f32 %v5868, 1.0
    %v5872 = vadd.f32 %v5870, 1.0
    %v5873 = vrcp.pop %v5871
    %v5874 = vmul.f32 1.0, %v5873
    %v5875 = vrcp.pop %v5872
    %v5876 = vmul.f32 1.0, %v5875
    %v5877 = vtanh.pop %v5864
    %v5879 = vrot.slane %v5765, 6
    %v5881 = vmul.f32 %v5874, %v5879
    %5883 = vrot.lane.b32.xlu0 %v5877, 64
    %v5884 = vpop.permute.xlu0 %5883
    %v5886 = vmul.f32 %v5874, %v5884
    %5888 = vrot.lane.b32.xlu0 %v5886, 64
    %v5889 = vpop.permute.xlu0 %5888
    %v5891 = vadd.f32 %v5881, %v5889
    %v5892 = vtanh.pop %v5891
    %5894 = vrot.lane.b32.xlu0 %v5892, 64
    %v5895 = vpop.permute.xlu0 %5894
    %v5897 = vmul.f32 %v5876, %v5895
    %5898 = vst.msk [vmem:[#allocation2] sm:$0xc] %vm847, %v5897
    %5900 = vrot.lane.b32.xlu0 %v5897, 96
    %v5901 = vpop.permute.xlu0 %5900
    %5903 = vst.msk [vmem:[#allocation3 + $0xa] sm:$0xc] %vm847, %v5901
    %v5904 = vrot.slane %v5897, 2
    %v5905 = vsel %vm613, %v5904, 0
    %5907 = vmatprep.subr.mxu0 0.0
    %5908 = vmatpush1.msra.mxu0 0.0
    %5909 = vmatprep.subr.mxu0 0.0
    %5910 = vmatpush1.msra.mxu0 0.0
    %5911 = vmatprep.subr.mxu0 0.0
    %5912 = vmatpush1.msra.mxu0 0.0
    %5913 = vmatprep.subr.mxu0 0.0
    %5914 = vmatpush1.msra.mxu0 0.0
    %5915 = vmatprep.subr.mxu0 0.0
    %5916 = vmatpush1.msra.mxu0 0.0
    %5917 = vmatprep.subr.mxu0 0.0
    %5918 = vmatpush1.msra.mxu0 0.0
    %5919 = vmatprep.subr.mxu0 0.0
    %5920 = vmatpush1.msra.mxu0 0.0
    %5921 = vmatprep.subr.mxu0 0.0
    %5922 = vmatpush1.msra.mxu0 0.0
    %5923 = vmatprep.subr.mxu0 %v5476
    %5924 = vmatpush1.msra.mxu0 %v5475
    %5925 = vmatprep.subr.mxu0 %v5474
    %5926 = vmatpush1.msra.mxu0 %v5473
    %5927 = vmatprep.subr.mxu0 %v5472
    %5928 = vmatpush1.msra.mxu0 %v5471
    %5929 = vmatprep.subr.mxu0 %v5470
    %5930 = vmatpush1.msra.mxu0 %v5469
    %5931 = vmatprep.subr.mxu0 %v5468
    %5932 = vmatpush1.msra.mxu0 %v5467
    %5933 = vmatprep.subr.mxu0 %v5466
    %5934 = vmatpush1.msra.mxu0 %v5465
    %5935 = vmatprep.subr.mxu0 %v5464
    %5936 = vmatpush1.msra.mxu0 %v5463
    %5937 = vmatprep.subr.mxu0 %v5462
    %5938 = vmatpush1.msra.mxu0 %v5461
    %5939 = vmatprep.subr.mxu0 0.0
    %5940 = vmatpush2.msra.mxu0 0.0
    %5941 = vmatprep.subr.mxu0 0.0
    %5942 = vmatpush2.msra.mxu0 0.0
    %5943 = vmatprep.subr.mxu0 0.0
    %5944 = vmatpush2.msra.mxu0 0.0
    %5945 = vmatprep.subr.mxu0 0.0
    %5946 = vmatpush2.msra.mxu0 0.0
    %5947 = vmatprep.subr.mxu0 0.0
    %5948 = vmatpush2.msra.mxu0 0.0
    %5949 = vmatprep.subr.mxu0 0.0
    %5950 = vmatpush2.msra.mxu0 0.0
    %5951 = vmatprep.subr.mxu0 0.0
    %5952 = vmatpush2.msra.mxu0 0.0
    %5953 = vmatprep.subr.mxu0 0.0
    %5954 = vmatpush2.msra.mxu0 0.0
    %5955 = vmatprep.subr.mxu0 0.0
    %5956 = vmatpush2.msra.mxu0 0.0
    %5957 = vmatprep.subr.mxu0 0.0
    %5958 = vmatpush2.msra.mxu0 0.0
    %5959 = vmatprep.subr.mxu0 0.0
    %5960 = vmatpush2.msra.mxu0 0.0
    %5961 = vmatprep.subr.mxu0 0.0
    %5962 = vmatpush2.msra.mxu0 0.0
    %5963 = vmatprep.subr.mxu0 0.0
    %5964 = vmatpush2.msra.mxu0 0.0
    %5965 = vmatprep.subr.mxu0 0.0
    %5966 = vmatpush2.msra.mxu0 0.0
    %5967 = vmatprep.subr.mxu0 0.0
    %5968 = vmatpush2.msra.mxu0 0.0
    %5969 = vmatprep.subr.mxu0 0.0
    %5970 = vmatpush2.msra.mxu0 0.0
    %5971 = vmatprep.mubr.f32.mxu0 0.0
    %5972 = vmatmul.mubr.f32.gmra.mxu0 %v5905
    %v5973 = vpop.f32.mrf.mxu0
    %v5974 = vadd.f32 0.0, %v5973
    %v5975 = vpop.f32.mrf.mxu0
    %v5976 = vadd.f32 0.0, %v5975
    %5977 = vdwg.mxu0
    %v5980 = vrot.slane %v5974, 4
    %v5981 = vrot.slane %v5976, 4
    %v5984 = vadd.f32 %v5667, %v5980
    %v5985 = vadd.f32 %v5668, %v5981
    %v5986 = vxor.u32 %v5984, 2147483648
    %v5987 = vxor.u32 %v5985, 2147483648
    %v5988 = vmul.f32 %v5986, 1.442695
    %v5989 = vpow.pop %v5988
    %v5990 = vmul.f32 %v5987, 1.442695
    %v5991 = vpow.pop %v5990
    %v5992 = vadd.f32 %v5989, 1.0
    %v5993 = vadd.f32 %v5991, 1.0
    %v5994 = vrcp.pop %v5992
    %v5995 = vmul.f32 1.0, %v5994
    %v5996 = vrcp.pop %v5993
    %v5997 = vmul.f32 1.0, %v5996
    %v5998 = vtanh.pop %v5985
    %v6000 = vrot.slane %v5891, 6
    %v6002 = vmul.f32 %v5995, %v6000
    %6004 = vrot.lane.b32.xlu0 %v5998, 64
    %v6005 = vpop.permute.xlu0 %6004
    %v6007 = vmul.f32 %v5995, %v6005
    %6009 = vrot.lane.b32.xlu0 %v6007, 64
    %v6010 = vpop.permute.xlu0 %6009
    %v6012 = vadd.f32 %v6002, %v6010
    %v6013 = vtanh.pop %v6012
    %6015 = vrot.lane.b32.xlu0 %v6013, 64
    %v6016 = vpop.permute.xlu0 %6015
    %v6018 = vmul.f32 %v5997, %v6016
    %6019 = vst.msk [vmem:[#allocation2] sm:$0x30] %vm969, %v6018
    %6021 = vrot.lane.b32.xlu0 %v6018, 96
    %v6022 = vpop.permute.xlu0 %6021
    %6024 = vst.msk [vmem:[#allocation3 + $0x6] sm:$0x30] %vm969, %v6022
    %v6025 = vrot.slane %v6018, 4
    %v6026 = vsel %vm613, %v6025, 0
    %6028 = vmatprep.subr.mxu0 0.0
    %6029 = vmatpush1.msra.mxu0 0.0
    %6030 = vmatprep.subr.mxu0 0.0
    %6031 = vmatpush1.msra.mxu0 0.0
    %6032 = vmatprep.subr.mxu0 0.0
    %6033 = vmatpush1.msra.mxu0 0.0
    %6034 = vmatprep.subr.mxu0 0.0
    %6035 = vmatpush1.msra.mxu0 0.0
    %6036 = vmatprep.subr.mxu0 0.0
    %6037 = vmatpush1.msra.mxu0 0.0
    %6038 = vmatprep.subr.mxu0 0.0
    %6039 = vmatpush1.msra.mxu0 0.0
    %6040 = vmatprep.subr.mxu0 0.0
    %6041 = vmatpush1.msra.mxu0 0.0
    %6042 = vmatprep.subr.mxu0 0.0
    %6043 = vmatpush1.msra.mxu0 0.0
    %6044 = vmatprep.subr.mxu0 %v5476
    %6045 = vmatpush1.msra.mxu0 %v5475
    %6046 = vmatprep.subr.mxu0 %v5474
    %6047 = vmatpush1.msra.mxu0 %v5473
    %6048 = vmatprep.subr.mxu0 %v5472
    %6049 = vmatpush1.msra.mxu0 %v5471
    %6050 = vmatprep.subr.mxu0 %v5470
    %6051 = vmatpush1.msra.mxu0 %v5469
    %6052 = vmatprep.subr.mxu0 %v5468
    %6053 = vmatpush1.msra.mxu0 %v5467
    %6054 = vmatprep.subr.mxu0 %v5466
    %6055 = vmatpush1.msra.mxu0 %v5465
    %6056 = vmatprep.subr.mxu0 %v5464
    %6057 = vmatpush1.msra.mxu0 %v5463
    %6058 = vmatprep.subr.mxu0 %v5462
    %6059 = vmatpush1.msra.mxu0 %v5461
    %6060 = vmatprep.subr.mxu0 0.0
    %6061 = vmatpush2.msra.mxu0 0.0
    %6062 = vmatprep.subr.mxu0 0.0
    %6063 = vmatpush2.msra.mxu0 0.0
    %6064 = vmatprep.subr.mxu0 0.0
    %6065 = vmatpush2.msra.mxu0 0.0
    %6066 = vmatprep.subr.mxu0 0.0
    %6067 = vmatpush2.msra.mxu0 0.0
    %6068 = vmatprep.subr.mxu0 0.0
    %6069 = vmatpush2.msra.mxu0 0.0
    %6070 = vmatprep.subr.mxu0 0.0
    %6071 = vmatpush2.msra.mxu0 0.0
    %6072 = vmatprep.subr.mxu0 0.0
    %6073 = vmatpush2.msra.mxu0 0.0
    %6074 = vmatprep.subr.mxu0 0.0
    %6075 = vmatpush2.msra.mxu0 0.0
    %6076 = vmatprep.subr.mxu0 0.0
    %6077 = vmatpush2.msra.mxu0 0.0
    %6078 = vmatprep.subr.mxu0 0.0
    %6079 = vmatpush2.msra.mxu0 0.0
    %6080 = vmatprep.subr.mxu0 0.0
    %6081 = vmatpush2.msra.mxu0 0.0
    %6082 = vmatprep.subr.mxu0 0.0
    %6083 = vmatpush2.msra.mxu0 0.0
    %6084 = vmatprep.subr.mxu0 0.0
    %6085 = vmatpush2.msra.mxu0 0.0
    %6086 = vmatprep.subr.mxu0 0.0
    %6087 = vmatpush2.msra.mxu0 0.0
    %6088 = vmatprep.subr.mxu0 0.0
    %6089 = vmatpush2.msra.mxu0 0.0
    %6090 = vmatprep.subr.mxu0 0.0
    %6091 = vmatpush2.msra.mxu0 0.0
    %6092 = vmatprep.mubr.f32.mxu0 0.0
    %6093 = vmatmul.mubr.f32.gmra.mxu0 %v6026
    %v6094 = vpop.f32.mrf.mxu0
    %v6095 = vadd.f32 0.0, %v6094
    %v6096 = vpop.f32.mrf.mxu0
    %v6097 = vadd.f32 0.0, %v6096
    %6098 = vdwg.mxu0
    %v6101 = vrot.slane %v6095, 2
    %v6102 = vrot.slane %v6097, 2
    %v6105 = vadd.f32 %v5782, %v6101
    %v6106 = vadd.f32 %v5783, %v6102
    %v6107 = vxor.u32 %v6105, 2147483648
    %v6108 = vxor.u32 %v6106, 2147483648
    %v6109 = vmul.f32 %v6107, 1.442695
    %v6110 = vpow.pop %v6109
    %v6111 = vmul.f32 %v6108, 1.442695
    %v6112 = vpow.pop %v6111
    %v6113 = vadd.f32 %v6110, 1.0
    %v6114 = vadd.f32 %v6112, 1.0
    %v6115 = vrcp.pop %v6113
    %v6116 = vmul.f32 1.0, %v6115
    %v6117 = vrcp.pop %v6114
    %v6118 = vmul.f32 1.0, %v6117
    %v6119 = vtanh.pop %v6106
    %v6121 = vrot.slane %v6012, 6
    %v6123 = vmul.f32 %v6116, %v6121
    %6125 = vrot.lane.b32.xlu0 %v6119, 64
    %v6126 = vpop.permute.xlu0 %6125
    %v6128 = vmul.f32 %v6116, %v6126
    %6130 = vrot.lane.b32.xlu0 %v6128, 64
    %v6131 = vpop.permute.xlu0 %6130
    %v6133 = vadd.f32 %v6123, %v6131
    %v6134 = vtanh.pop %v6133
    %6136 = vrot.lane.b32.xlu0 %v6134, 64
    %v6137 = vpop.permute.xlu0 %6136
    %v6139 = vmul.f32 %v6118, %v6137
    %6140 = vst.msk [vmem:[#allocation2] sm:$0xc0] %vm1091, %v6139
    %6142 = vrot.lane.b32.xlu0 %v6139, 96
    %v6143 = vpop.permute.xlu0 %6142
    %6145 = vst.msk [vmem:[#allocation3 + $0x2] sm:$0xc0] %vm1091, %v6143
    %v6148 = vrot.slane %v5651, 6
    %v6149 = vrot.slane %v5653, 6
    %v6152 = vadd.f32 %v5574, %v6148
    %v6153 = vadd.f32 %v5576, %v6149
    %v6154 = vrot.slane %v6139, 6
    %v6155 = vsel %vm613, %v6154, 0
    %6157 = vmatprep.subr.mxu0 0.0
    %6158 = vmatpush1.msra.mxu0 0.0
    %6159 = vmatprep.subr.mxu0 0.0
    %6160 = vmatpush1.msra.mxu0 0.0
    %6161 = vmatprep.subr.mxu0 0.0
    %6162 = vmatpush1.msra.mxu0 0.0
    %6163 = vmatprep.subr.mxu0 0.0
    %6164 = vmatpush1.msra.mxu0 0.0
    %6165 = vmatprep.subr.mxu0 0.0
    %6166 = vmatpush1.msra.mxu0 0.0
    %6167 = vmatprep.subr.mxu0 0.0
    %6168 = vmatpush1.msra.mxu0 0.0
    %6169 = vmatprep.subr.mxu0 0.0
    %6170 = vmatpush1.msra.mxu0 0.0
    %6171 = vmatprep.subr.mxu0 0.0
    %6172 = vmatpush1.msra.mxu0 0.0
    %6173 = vmatprep.subr.mxu0 %v5476
    %6174 = vmatpush1.msra.mxu0 %v5475
    %6175 = vmatprep.subr.mxu0 %v5474
    %6176 = vmatpush1.msra.mxu0 %v5473
    %6177 = vmatprep.subr.mxu0 %v5472
    %6178 = vmatpush1.msra.mxu0 %v5471
    %6179 = vmatprep.subr.mxu0 %v5470
    %6180 = vmatpush1.msra.mxu0 %v5469
    %6181 = vmatprep.subr.mxu0 %v5468
    %6182 = vmatpush1.msra.mxu0 %v5467
    %6183 = vmatprep.subr.mxu0 %v5466
    %6184 = vmatpush1.msra.mxu0 %v5465
    %6185 = vmatprep.subr.mxu0 %v5464
    %6186 = vmatpush1.msra.mxu0 %v5463
    %6187 = vmatprep.subr.mxu0 %v5462
    %6188 = vmatpush1.msra.mxu0 %v5461
    %6189 = vmatprep.subr.mxu0 0.0
    %6190 = vmatpush2.msra.mxu0 0.0
    %6191 = vmatprep.subr.mxu0 0.0
    %6192 = vmatpush2.msra.mxu0 0.0
    %6193 = vmatprep.subr.mxu0 0.0
    %6194 = vmatpush2.msra.mxu0 0.0
    %6195 = vmatprep.subr.mxu0 0.0
    %6196 = vmatpush2.msra.mxu0 0.0
    %6197 = vmatprep.subr.mxu0 0.0
    %6198 = vmatpush2.msra.mxu0 0.0
    %6199 = vmatprep.subr.mxu0 0.0
    %6200 = vmatpush2.msra.mxu0 0.0
    %6201 = vmatprep.subr.mxu0 0.0
    %6202 = vmatpush2.msra.mxu0 0.0
    %6203 = vmatprep.subr.mxu0 0.0
    %6204 = vmatpush2.msra.mxu0 0.0
    %6205 = vmatprep.subr.mxu0 0.0
    %6206 = vmatpush2.msra.mxu0 0.0
    %6207 = vmatprep.subr.mxu0 0.0
    %6208 = vmatpush2.msra.mxu0 0.0
    %6209 = vmatprep.subr.mxu0 0.0
    %6210 = vmatpush2.msra.mxu0 0.0
    %6211 = vmatprep.subr.mxu0 0.0
    %6212 = vmatpush2.msra.mxu0 0.0
    %6213 = vmatprep.subr.mxu0 0.0
    %6214 = vmatpush2.msra.mxu0 0.0
    %6215 = vmatprep.subr.mxu0 0.0
    %6216 = vmatpush2.msra.mxu0 0.0
    %6217 = vmatprep.subr.mxu0 0.0
    %6218 = vmatpush2.msra.mxu0 0.0
    %6219 = vmatprep.subr.mxu0 0.0
    %6220 = vmatpush2.msra.mxu0 0.0
    %6221 = vmatprep.mubr.f32.mxu0 0.0
    %6222 = vmatmul.mubr.f32.gmra.mxu0 %v6155
    %v6223 = vpop.f32.mrf.mxu0
    %v6224 = vadd.f32 0.0, %v6223
    %v6225 = vpop.f32.mrf.mxu0
    %v6226 = vadd.f32 0.0, %v6225
    %6227 = vdwg.mxu0
    %v6228 = vadd.f32 %v6152, %v6224
    %v6229 = vadd.f32 %v6153, %v6226
    %v6230 = vxor.u32 %v6228, 2147483648
    %v6231 = vxor.u32 %v6229, 2147483648
    %v6232 = vmul.f32 %v6230, 1.442695
    %v6233 = vpow.pop %v6232
    %v6234 = vmul.f32 %v6231, 1.442695
    %v6235 = vpow.pop %v6234
    %v6236 = vadd.f32 %v6233, 1.0
    %v6237 = vadd.f32 %v6235, 1.0
    %v6238 = vrcp.pop %v6236
    %v6239 = vmul.f32 1.0, %v6238
    %v6240 = vrcp.pop %v6237
    %v6241 = vmul.f32 1.0, %v6240
    %v6242 = vtanh.pop %v6229
    %v6244 = vrot.slane %v6133, 6
    %v6246 = vmul.f32 %v6239, %v6244
    %6248 = vrot.lane.b32.xlu0 %v6242, 64
    %v6249 = vpop.permute.xlu0 %6248
    %v6251 = vmul.f32 %v6239, %v6249
    %6253 = vrot.lane.b32.xlu0 %v6251, 64
    %v6254 = vpop.permute.xlu0 %6253
    %v6256 = vadd.f32 %v6246, %v6254
    %v6257 = vtanh.pop %v6256
    %6259 = vrot.lane.b32.xlu0 %v6257, 64
    %v6260 = vpop.permute.xlu0 %6259
    %v6262 = vmul.f32 %v6241, %v6260
    %6263 = vst.msk [vmem:[#allocation2 + $0x8] sm:$0x3] %vm720, %v6262
    %6265 = vrot.lane.b32.xlu0 %v6262, 96
    %v6266 = vpop.permute.xlu0 %6265
    %6268 = vst.msk [vmem:[#allocation3 + $0x6] sm:$0x3] %vm720, %v6266
    %v6269 = vrot.slane %v5651, 2
    %v6270 = vrot.slane %v5653, 2
    %v6273 = vadd.f32 %v5574, %v6269
    %v6274 = vadd.f32 %v5576, %v6270
    %v6275 = vsel %vm613, %v6262, 0
    %6277 = vmatprep.subr.mxu0 0.0
    %6278 = vmatpush1.msra.mxu0 0.0
    %6279 = vmatprep.subr.mxu0 0.0
    %6280 = vmatpush1.msra.mxu0 0.0
    %6281 = vmatprep.subr.mxu0 0.0
    %6282 = vmatpush1.msra.mxu0 0.0
    %6283 = vmatprep.subr.mxu0 0.0
    %6284 = vmatpush1.msra.mxu0 0.0
    %6285 = vmatprep.subr.mxu0 0.0
    %6286 = vmatpush1.msra.mxu0 0.0
    %6287 = vmatprep.subr.mxu0 0.0
    %6288 = vmatpush1.msra.mxu0 0.0
    %6289 = vmatprep.subr.mxu0 0.0
    %6290 = vmatpush1.msra.mxu0 0.0
    %6291 = vmatprep.subr.mxu0 0.0
    %6292 = vmatpush1.msra.mxu0 0.0
    %6293 = vmatprep.subr.mxu0 %v5476
    %6294 = vmatpush1.msra.mxu0 %v5475
    %6295 = vmatprep.subr.mxu0 %v5474
    %6296 = vmatpush1.msra.mxu0 %v5473
    %6297 = vmatprep.subr.mxu0 %v5472
    %6298 = vmatpush1.msra.mxu0 %v5471
    %6299 = vmatprep.subr.mxu0 %v5470
    %6300 = vmatpush1.msra.mxu0 %v5469
    %6301 = vmatprep.subr.mxu0 %v5468
    %6302 = vmatpush1.msra.mxu0 %v5467
    %6303 = vmatprep.subr.mxu0 %v5466
    %6304 = vmatpush1.msra.mxu0 %v5465
    %6305 = vmatprep.subr.mxu0 %v5464
    %6306 = vmatpush1.msra.mxu0 %v5463
    %6307 = vmatprep.subr.mxu0 %v5462
    %6308 = vmatpush1.msra.mxu0 %v5461
    %6309 = vmatprep.subr.mxu0 0.0
    %6310 = vmatpush2.msra.mxu0 0.0
    %6311 = vmatprep.subr.mxu0 0.0
    %6312 = vmatpush2.msra.mxu0 0.0
    %6313 = vmatprep.subr.mxu0 0.0
    %6314 = vmatpush2.msra.mxu0 0.0
    %6315 = vmatprep.subr.mxu0 0.0
    %6316 = vmatpush2.msra.mxu0 0.0
    %6317 = vmatprep.subr.mxu0 0.0
    %6318 = vmatpush2.msra.mxu0 0.0
    %6319 = vmatprep.subr.mxu0 0.0
    %6320 = vmatpush2.msra.mxu0 0.0
    %6321 = vmatprep.subr.mxu0 0.0
    %6322 = vmatpush2.msra.mxu0 0.0
    %6323 = vmatprep.subr.mxu0 0.0
    %6324 = vmatpush2.msra.mxu0 0.0
    %6325 = vmatprep.subr.mxu0 0.0
    %6326 = vmatpush2.msra.mxu0 0.0
    %6327 = vmatprep.subr.mxu0 0.0
    %6328 = vmatpush2.msra.mxu0 0.0
    %6329 = vmatprep.subr.mxu0 0.0
    %6330 = vmatpush2.msra.mxu0 0.0
    %6331 = vmatprep.subr.mxu0 0.0
    %6332 = vmatpush2.msra.mxu0 0.0
    %6333 = vmatprep.subr.mxu0 0.0
    %6334 = vmatpush2.msra.mxu0 0.0
    %6335 = vmatprep.subr.mxu0 0.0
    %6336 = vmatpush2.msra.mxu0 0.0
    %6337 = vmatprep.subr.mxu0 0.0
    %6338 = vmatpush2.msra.mxu0 0.0
    %6339 = vmatprep.subr.mxu0 0.0
    %6340 = vmatpush2.msra.mxu0 0.0
    %6341 = vmatprep.mubr.f32.mxu0 0.0
    %6342 = vmatmul.mubr.f32.gmra.mxu0 %v6275
    %v6343 = vpop.f32.mrf.mxu0
    %v6344 = vadd.f32 0.0, %v6343
    %v6345 = vpop.f32.mrf.mxu0
    %v6346 = vadd.f32 0.0, %v6345
    %6347 = vdwg.mxu0
    %v6350 = vrot.slane %v6344, 6
    %v6351 = vrot.slane %v6346, 6
    %v6354 = vadd.f32 %v6273, %v6350
    %v6355 = vadd.f32 %v6274, %v6351
    %v6356 = vxor.u32 %v6354, 2147483648
    %v6357 = vxor.u32 %v6355, 2147483648
    %v6358 = vmul.f32 %v6356, 1.442695
    %v6359 = vpow.pop %v6358
    %v6360 = vmul.f32 %v6357, 1.442695
    %v6361 = vpow.pop %v6360
    %v6362 = vadd.f32 %v6359, 1.0
    %v6363 = vadd.f32 %v6361, 1.0
    %v6364 = vrcp.pop %v6362
    %v6365 = vmul.f32 1.0, %v6364
    %v6366 = vrcp.pop %v6363
    %v6367 = vmul.f32 1.0, %v6366
    %v6368 = vtanh.pop %v6355
    %v6370 = vrot.slane %v6256, 6
    %v6372 = vmul.f32 %v6365, %v6370
    %6374 = vrot.lane.b32.xlu0 %v6368, 64
    %v6375 = vpop.permute.xlu0 %6374
    %v6377 = vmul.f32 %v6365, %v6375
    %6379 = vrot.lane.b32.xlu0 %v6377, 64
    %v6380 = vpop.permute.xlu0 %6379
    %v6382 = vadd.f32 %v6372, %v6380
    %v6383 = vtanh.pop %v6382
    %6385 = vrot.lane.b32.xlu0 %v6383, 64
    %v6386 = vpop.permute.xlu0 %6385
    %v6388 = vmul.f32 %v6367, %v6386
    %6389 = vst.msk [vmem:[#allocation2 + $0x8] sm:$0xc] %vm847, %v6388
    %6391 = vrot.lane.b32.xlu0 %v6388, 96
    %v6392 = vpop.permute.xlu0 %6391
    %6394 = vst.msk [vmem:[#allocation3 + $0x2] sm:$0xc] %vm847, %v6392
    %v6395 = vrot.slane %v6388, 2
    %v6396 = vsel %vm613, %v6395, 0
    %6398 = vmatprep.subr.mxu0 0.0
    %6399 = vmatpush1.msra.mxu0 0.0
    %6400 = vmatprep.subr.mxu0 0.0
    %6401 = vmatpush1.msra.mxu0 0.0
    %6402 = vmatprep.subr.mxu0 0.0
    %6403 = vmatpush1.msra.mxu0 0.0
    %6404 = vmatprep.subr.mxu0 0.0
    %6405 = vmatpush1.msra.mxu0 0.0
    %6406 = vmatprep.subr.mxu0 0.0
    %6407 = vmatpush1.msra.mxu0 0.0
    %6408 = vmatprep.subr.mxu0 0.0
    %6409 = vmatpush1.msra.mxu0 0.0
    %6410 = vmatprep.subr.mxu0 0.0
    %6411 = vmatpush1.msra.mxu0 0.0
    %6412 = vmatprep.subr.mxu0 0.0
    %6413 = vmatpush1.msra.mxu0 0.0
    %6414 = vmatprep.subr.mxu0 %v5476
    %6415 = vmatpush1.msra.mxu0 %v5475
    %6416 = vmatprep.subr.mxu0 %v5474
    %6417 = vmatpush1.msra.mxu0 %v5473
    %6418 = vmatprep.subr.mxu0 %v5472
    %6419 = vmatpush1.msra.mxu0 %v5471
    %6420 = vmatprep.subr.mxu0 %v5470
    %6421 = vmatpush1.msra.mxu0 %v5469
    %6422 = vmatprep.subr.mxu0 %v5468
    %6423 = vmatpush1.msra.mxu0 %v5467
    %6424 = vmatprep.subr.mxu0 %v5466
    %6425 = vmatpush1.msra.mxu0 %v5465
    %6426 = vmatprep.subr.mxu0 %v5464
    %6427 = vmatpush1.msra.mxu0 %v5463
    %6428 = vmatprep.subr.mxu0 %v5462
    %6429 = vmatpush1.msra.mxu0 %v5461
    %6430 = vmatprep.subr.mxu0 0.0
    %6431 = vmatpush2.msra.mxu0 0.0
    %6432 = vmatprep.subr.mxu0 0.0
    %6433 = vmatpush2.msra.mxu0 0.0
    %6434 = vmatprep.subr.mxu0 0.0
    %6435 = vmatpush2.msra.mxu0 0.0
    %6436 = vmatprep.subr.mxu0 0.0
    %6437 = vmatpush2.msra.mxu0 0.0
    %6438 = vmatprep.subr.mxu0 0.0
    %6439 = vmatpush2.msra.mxu0 0.0
    %6440 = vmatprep.subr.mxu0 0.0
    %6441 = vmatpush2.msra.mxu0 0.0
    %6442 = vmatprep.subr.mxu0 0.0
    %6443 = vmatpush2.msra.mxu0 0.0
    %6444 = vmatprep.subr.mxu0 0.0
    %6445 = vmatpush2.msra.mxu0 0.0
    %6446 = vmatprep.subr.mxu0 0.0
    %6447 = vmatpush2.msra.mxu0 0.0
    %6448 = vmatprep.subr.mxu0 0.0
    %6449 = vmatpush2.msra.mxu0 0.0
    %6450 = vmatprep.subr.mxu0 0.0
    %6451 = vmatpush2.msra.mxu0 0.0
    %6452 = vmatprep.subr.mxu0 0.0
    %6453 = vmatpush2.msra.mxu0 0.0
    %6454 = vmatprep.subr.mxu0 0.0
    %6455 = vmatpush2.msra.mxu0 0.0
    %6456 = vmatprep.subr.mxu0 0.0
    %6457 = vmatpush2.msra.mxu0 0.0
    %6458 = vmatprep.subr.mxu0 0.0
    %6459 = vmatpush2.msra.mxu0 0.0
    %6460 = vmatprep.subr.mxu0 0.0
    %6461 = vmatpush2.msra.mxu0 0.0
    %6462 = vmatprep.mubr.f32.mxu0 0.0
    %6463 = vmatmul.mubr.f32.gmra.mxu0 %v6396
    %v6464 = vpop.f32.mrf.mxu0
    %v6465 = vadd.f32 0.0, %v6464
    %v6466 = vpop.f32.mrf.mxu0
    %v6467 = vadd.f32 0.0, %v6466
    %6468 = vdwg.mxu0
    %v6471 = vrot.slane %v6465, 4
    %v6472 = vrot.slane %v6467, 4
    %v6475 = vadd.f32 %v6152, %v6471
    %v6476 = vadd.f32 %v6153, %v6472
    %v6477 = vxor.u32 %v6475, 2147483648
    %v6478 = vxor.u32 %v6476, 2147483648
    %v6479 = vmul.f32 %v6477, 1.442695
    %v6480 = vpow.pop %v6479
    %v6481 = vmul.f32 %v6478, 1.442695
    %v6482 = vpow.pop %v6481
    %v6483 = vadd.f32 %v6480, 1.0
    %v6484 = vadd.f32 %v6482, 1.0
    %v6485 = vrcp.pop %v6483
    %v6486 = vmul.f32 1.0, %v6485
    %v6487 = vrcp.pop %v6484
    %v6488 = vmul.f32 1.0, %v6487
    %v6489 = vtanh.pop %v6476
    %v6491 = vrot.slane %v6382, 6
    %v6493 = vmul.f32 %v6486, %v6491
    %6495 = vrot.lane.b32.xlu0 %v6489, 64
    %v6496 = vpop.permute.xlu0 %6495
    %v6498 = vmul.f32 %v6486, %v6496
    %6500 = vrot.lane.b32.xlu0 %v6498, 64
    %v6501 = vpop.permute.xlu0 %6500
    %v6503 = vadd.f32 %v6493, %v6501
    %v6504 = vtanh.pop %v6503
    %6506 = vrot.lane.b32.xlu0 %v6504, 64
    %v6507 = vpop.permute.xlu0 %6506
    %v6509 = vmul.f32 %v6488, %v6507
    %6510 = vst.msk [vmem:[#allocation2 + $0x8] sm:$0x30] %vm969, %v6509
    %6512 = vrot.lane.b32.xlu0 %v6509, 96
    %v6513 = vpop.permute.xlu0 %6512
    %6515 = vst.msk [vmem:[#allocation3 - $0x2] sm:$0x30] %vm969, %v6513
    %v6516 = vrot.slane %v6509, 4
    %v6517 = vsel %vm613, %v6516, 0
    %6519 = vmatprep.subr.mxu0 0.0
    %6520 = vmatpush1.msra.mxu0 0.0
    %6521 = vmatprep.subr.mxu0 0.0
    %6522 = vmatpush1.msra.mxu0 0.0
    %6523 = vmatprep.subr.mxu0 0.0
    %6524 = vmatpush1.msra.mxu0 0.0
    %6525 = vmatprep.subr.mxu0 0.0
    %6526 = vmatpush1.msra.mxu0 0.0
    %6527 = vmatprep.subr.mxu0 0.0
    %6528 = vmatpush1.msra.mxu0 0.0
    %6529 = vmatprep.subr.mxu0 0.0
    %6530 = vmatpush1.msra.mxu0 0.0
    %6531 = vmatprep.subr.mxu0 0.0
    %6532 = vmatpush1.msra.mxu0 0.0
    %6533 = vmatprep.subr.mxu0 0.0
    %6534 = vmatpush1.msra.mxu0 0.0
    %6535 = vmatprep.subr.mxu0 %v5476
    %6536 = vmatpush1.msra.mxu0 %v5475
    %6537 = vmatprep.subr.mxu0 %v5474
    %6538 = vmatpush1.msra.mxu0 %v5473
    %6539 = vmatprep.subr.mxu0 %v5472
    %6540 = vmatpush1.msra.mxu0 %v5471
    %6541 = vmatprep.subr.mxu0 %v5470
    %6542 = vmatpush1.msra.mxu0 %v5469
    %6543 = vmatprep.subr.mxu0 %v5468
    %6544 = vmatpush1.msra.mxu0 %v5467
    %6545 = vmatprep.subr.mxu0 %v5466
    %6546 = vmatpush1.msra.mxu0 %v5465
    %6547 = vmatprep.subr.mxu0 %v5464
    %6548 = vmatpush1.msra.mxu0 %v5463
    %6549 = vmatprep.subr.mxu0 %v5462
    %6550 = vmatpush1.msra.mxu0 %v5461
    %6551 = vmatprep.subr.mxu0 0.0
    %6552 = vmatpush2.msra.mxu0 0.0
    %6553 = vmatprep.subr.mxu0 0.0
    %6554 = vmatpush2.msra.mxu0 0.0
    %6555 = vmatprep.subr.mxu0 0.0
    %6556 = vmatpush2.msra.mxu0 0.0
    %6557 = vmatprep.subr.mxu0 0.0
    %6558 = vmatpush2.msra.mxu0 0.0
    %6559 = vmatprep.subr.mxu0 0.0
    %6560 = vmatpush2.msra.mxu0 0.0
    %6561 = vmatprep.subr.mxu0 0.0
    %6562 = vmatpush2.msra.mxu0 0.0
    %6563 = vmatprep.subr.mxu0 0.0
    %6564 = vmatpush2.msra.mxu0 0.0
    %6565 = vmatprep.subr.mxu0 0.0
    %6566 = vmatpush2.msra.mxu0 0.0
    %6567 = vmatprep.subr.mxu0 0.0
    %6568 = vmatpush2.msra.mxu0 0.0
    %6569 = vmatprep.subr.mxu0 0.0
    %6570 = vmatpush2.msra.mxu0 0.0
    %6571 = vmatprep.subr.mxu0 0.0
    %6572 = vmatpush2.msra.mxu0 0.0
    %6573 = vmatprep.subr.mxu0 0.0
    %6574 = vmatpush2.msra.mxu0 0.0
    %6575 = vmatprep.subr.mxu0 0.0
    %6576 = vmatpush2.msra.mxu0 0.0
    %6577 = vmatprep.subr.mxu0 0.0
    %6578 = vmatpush2.msra.mxu0 0.0
    %6579 = vmatprep.subr.mxu0 0.0
    %6580 = vmatpush2.msra.mxu0 0.0
    %6581 = vmatprep.subr.mxu0 0.0
    %6582 = vmatpush2.msra.mxu0 0.0
    %6583 = vmatprep.mubr.f32.mxu0 0.0
    %6584 = vmatmul.mubr.f32.gmra.mxu0 %v6517
    %v6585 = vpop.f32.mrf.mxu0
    %v6586 = vadd.f32 0.0, %v6585
    %v6587 = vpop.f32.mrf.mxu0
    %v6588 = vadd.f32 0.0, %v6587
    %6589 = vdwg.mxu0
    %v6592 = vrot.slane %v6586, 2
    %v6593 = vrot.slane %v6588, 2
    %v6596 = vadd.f32 %v6273, %v6592
    %v6597 = vadd.f32 %v6274, %v6593
    %v6598 = vxor.u32 %v6596, 2147483648
    %v6599 = vxor.u32 %v6597, 2147483648
    %v6600 = vmul.f32 %v6598, 1.442695
    %v6601 = vpow.pop %v6600
    %v6602 = vmul.f32 %v6599, 1.442695
    %v6603 = vpow.pop %v6602
    %v6604 = vadd.f32 %v6601, 1.0
    %v6605 = vadd.f32 %v6603, 1.0
    %v6606 = vrcp.pop %v6604
    %v6607 = vmul.f32 1.0, %v6606
    %v6608 = vrcp.pop %v6605
    %v6609 = vmul.f32 1.0, %v6608
    %v6610 = vtanh.pop %v6597
    %v6612 = vrot.slane %v6503, 6
    %v6614 = vmul.f32 %v6607, %v6612
    %6616 = vrot.lane.b32.xlu0 %v6610, 64
    %v6617 = vpop.permute.xlu0 %6616
    %v6619 = vmul.f32 %v6607, %v6617
    %6621 = vrot.lane.b32.xlu0 %v6619, 64
    %v6622 = vpop.permute.xlu0 %6621
    %v6624 = vadd.f32 %v6614, %v6622
    %v6625 = vtanh.pop %v6624
    %6627 = vrot.lane.b32.xlu0 %v6625, 64
    %v6628 = vpop.permute.xlu0 %6627
    %v6630 = vmul.f32 %v6609, %v6628
    %6631 = vst.msk [vmem:[#allocation2 + $0x8] sm:$0xc0] %vm1091, %v6630
    %6633 = vrot.lane.b32.xlu0 %v6630, 96
    %v6634 = vpop.permute.xlu0 %6633
    %6636 = vst.msk [vmem:[#allocation3 - $0x6] sm:$0xc0] %vm1091, %v6634
    %v6637 = vld [vmem:[#allocation2] sm:$0xff]
    %v6638 = vld [vmem:[#allocation2 + $0x8] sm:$0xff]
    %v6639 = vld [vmem:[#allocation3] sm:$0xff]
    %v6640 = vld [vmem:[#allocation3 + $0x8] sm:$0xff]
    %6643 = vrot.lane.b32.xlu0 %v6639, 32
    %v6644 = vpop.permute.xlu0 %6643
    %6645 = vrot.lane.b32.xlu0 %v6640, 32
    %v6646 = vpop.permute.xlu0 %6645
    %v6649 = vsel %vm1601, %v6637, %v6644
    %v6650 = vsel %vm1601, %v6638, %v6646
    %v6651 = vmax.f32 %v6649, 0.0
    %v6652 = vmax.f32 %v6650, 0.0
    %6655 = vrot.lane.b32.xlu0 %v5385, 64
    %v6656 = vpop.permute.xlu0 %6655
    %6657 = vrot.lane.b32.xlu0 %v5386, 64
    %v6658 = vpop.permute.xlu0 %6657
    %6659 = vrot.lane.b32.xlu0 %v5387, 64
    %v6660 = vpop.permute.xlu0 %6659
    %6661 = vrot.lane.b32.xlu0 %v5388, 64
    %v6662 = vpop.permute.xlu0 %6661
    %v6663 = vsel %vm613, %v6656, %v6658
    %v6664 = vsel %vm613, %v6660, %v6662
    %v6669 = vsel %vm613, %v6651, %v6656
    %v6670 = vsel %vm613, %v6652, %v6660
    %v6671 = vld [vmem:[%s55] sm:$0x3]
    %v6673 = vlaneseq
    %v6674 = vshrl.u32 %v6673, 7
    %v6675 = vsub.s32 0, %v6674
    %v6676 = vrot.slane %v6671, %v6675
    %v6677 = vlaneseq
    %v6678 = vshrl.u32 %v6677, 7
    %v6679 = vsub.s32 1, %v6678
    %v6680 = vrot.slane %v6671, %v6679
    %v6683 = vmul.f32 %v6669, %v6676
    %v6684 = vmul.f32 %v6663, %v6680
    %v6685 = vmul.f32 %v6670, %v6676
    %v6686 = vmul.f32 %v6664, %v6680
    %v6687 = vsel %vm2824, %v6684, 0.0
    %v6688 = vadd.f32 %v6683, %v6687
    %6689 = vadd.xlane.f32.xlu0 %v6688
    %v6690 = vpop.xlane.xlu0 %6689
    %v6691 = vsel %vm2824, %v6686, 0.0
    %v6692 = vadd.f32 %v6685, %v6691
    %6693 = vadd.xlane.f32.xlu0 %v6692
    %v6694 = vpop.xlane.xlu0 %6693
    %v6695 = vld [vmem:[#allocation4] sm:$0x1]
    %v6697 = vlaneseq
    %v6698 = vshrl.u32 %v6697, 7
    %v6699 = vsub.s32 0, %v6698
    %v6700 = vrot.slane %v6695, %v6699
    %v6702 = vadd.f32 %v6690, %v6700
    %v6703 = vadd.f32 %v6694, %v6700
    %vm6704 = vcmask 7168
    %6705 = vst.msk [vmem:[%s59] sm:$0xff] %vm6704, %v6702
    %6706 = vst.msk [vmem:[%s59 + $0x8] sm:$0xff] %vm6704, %v6703
    // Predicated region
    $region186: #{regression_forward.1} parent=1 // pred_check
      _
    $region187: #{regression_forward.1} parent=1 // pred_check_branch
      %6708 = sbr.rel (0) target = $region189
    $region188: #{regression_forward.1} parent=1 // pred_region
      _
    $region189: #{regression_forward.1} parent=1 // pred_fallthru
      _
    // Predicated region
    $region190: #{regression_forward.1} parent=1 // pred_check
      _
    $region191: #{regression_forward.1} parent=1 // pred_check_branch
      %6710 = sbr.rel (0) target = $region193
    $region192: #{regression_forward.1} parent=1 // pred_region
      _
    $region193: #{regression_forward.1} parent=1 // pred_fallthru
      _
    %6711 = vsyncpa [#allocation6], 1
    %6712 = vsyncpa [#allocation8], 1
    %6713 = vsyncpa [#allocation11], 1
    %6714 = vsyncpa [#allocation14], 1
    %6715 = vsyncpa [#allocation17], 1
    %6716 = vsyncpa [#allocation20], 1
    %6717 = vsyncpa [#allocation23], 1
    %6718 = vsyncpa [#allocation26], 1
    %6719 = vsyncpa [#allocation29], 1

</llo_original>
